<compile_context>
chip_gen: v5e
topology: v5e:2x2
jax: 0.10.0
libtpu: 0.0.40
codegen_flags: <defaults>
</compile_context>

<pallas_src>
import itertools

import jax
import jax.numpy as jnp
from jax.experimental import pallas as pl
from jax.experimental.pallas import tpu as pltpu


def build_adj(num_block_x, num_block_y):
    adjacency = []
    block_coord_to_block_id = lambda x, y: y * num_block_x + x
    for i, j in itertools.product(range(num_block_x), range(num_block_y)):
        for dx, dy in [(-1, 0), (0, -1), (0, 1), (1, 0)]:
            x, y = (i + dx, j + dy)
            if 0 <= x < num_block_x and 0 <= y < num_block_y:
                adjacency.append((block_coord_to_block_id(i, j),
                                  block_coord_to_block_id(x, y)))
    return adjacency


_MM_DTYPE = jnp.bfloat16   # MXU input dtype; accumulation/epilogue stay f32.


# ---------------------------------------------------------------------------
# Pallas kernels
# ---------------------------------------------------------------------------

def _stable_sigmoid(y):
    # exp(-|y|) in (0, 1]: no inf intermediates for large-magnitude logits.
    z = jnp.exp(-jnp.abs(y))
    inv = 1.0 / (1.0 + z)
    return jnp.where(y >= 0, inv, z * inv)


def _mm_bias_kernel(p_ref, w_ref, b_ref, o_ref):
    # (tm, K) @ (K, N) + (1, N) -> (tm, N), f32 accumulate.
    acc = jnp.dot(p_ref[...], w_ref[...], preferred_element_type=jnp.float32)
    o_ref[...] = (acc + b_ref[...]).astype(o_ref.dtype)


def _mm_bias_max4_kernel(p0_ref, p1_ref, p2_ref, p3_ref, w_ref, b_ref, o_ref):
    # Fused conv + MaxPool2d(2): one matmul per pooling phase, elementwise max, bias.
    w = w_ref[...]
    y0 = jnp.dot(p0_ref[...], w, preferred_element_type=jnp.float32)
    y1 = jnp.dot(p1_ref[...], w, preferred_element_type=jnp.float32)
    y2 = jnp.dot(p2_ref[...], w, preferred_element_type=jnp.float32)
    y3 = jnp.dot(p3_ref[...], w, preferred_element_type=jnp.float32)
    y = jnp.maximum(jnp.maximum(y0, y1), jnp.maximum(y2, y3))
    o_ref[...] = (y + b_ref[...]).astype(o_ref.dtype)


def _fc_head_kernel(emb_ref, w1_ref, b1_ref, w2_ref, b2_ref, wl_ref, bl_ref, o_ref):
    # Whole FC head in one kernel:
    #   h = relu(emb @ [W1_conn | W1_endp] + [b1_conn | b1_endp])            (B, 512)
    #   f = sigmoid(h @ blockdiag(W2_conn, W2_endp) + [b2_conn | b2_endp])   (B, 156)
    #   r = sigmoid(sum(f * last_w, lanes) + last_b)                         (B, 1)
    h = jnp.dot(emb_ref[...], w1_ref[...], preferred_element_type=jnp.float32)
    h = jnp.maximum(h + b1_ref[...], 0.0)
    f = jnp.dot(h.astype(w2_ref.dtype), w2_ref[...],
                preferred_element_type=jnp.float32) + b2_ref[...]
    f = _stable_sigmoid(f)
    r = jnp.sum(f * wl_ref[...], axis=-1, keepdims=True) + bl_ref[...]
    o_ref[...] = _stable_sigmoid(r).astype(o_ref.dtype)


# ---------------------------------------------------------------------------
# Pallas wrappers
# ---------------------------------------------------------------------------

def _choose_tm(m, cap=1024):
    """Row-tile size: full array when small, else the largest mult-of-16 divisor <= cap."""
    if m <= cap:
        return m
    for t in range(cap, 15, -1):
        if m % t == 0 and t % 16 == 0:
            return t
    return m


def _mm_bias(patches, wmat, bias):
    M, K = patches.shape
    _, N = wmat.shape
    tm = _choose_tm(M)
    return pl.pallas_call(
        _mm_bias_kernel,
        out_shape=jax.ShapeDtypeStruct((M, N), jnp.float32),
        grid=(M // tm,),
        in_specs=[pl.BlockSpec((tm, K), lambda i: (i, 0)),
                  pl.BlockSpec((K, N), lambda i: (0, 0)),
                  pl.BlockSpec((1, N), lambda i: (0, 0))],
        out_specs=pl.BlockSpec((tm, N), lambda i: (i, 0)),
        compiler_params=pltpu.CompilerParams(dimension_semantics=("parallel",)),
    )(patches.astype(_MM_DTYPE), wmat.astype(_MM_DTYPE),
      bias.reshape(1, N).astype(jnp.float32))


def _mm_bias_max4(phases, wmat, bias):
    M, K = phases[0].shape
    _, N = wmat.shape
    tm = _choose_tm(M)
    p_spec = pl.BlockSpec((tm, K), lambda i: (i, 0))
    return pl.pallas_call(
        _mm_bias_max4_kernel,
        out_shape=jax.ShapeDtypeStruct((M, N), jnp.float32),
        grid=(M // tm,),
        in_specs=[p_spec, p_spec, p_spec, p_spec,
                  pl.BlockSpec((K, N), lambda i: (0, 0)),
                  pl.BlockSpec((1, N), lambda i: (0, 0))],
        out_specs=pl.BlockSpec((tm, N), lambda i: (i, 0)),
        compiler_params=pltpu.CompilerParams(dimension_semantics=("parallel",)),
    )(*(p.astype(_MM_DTYPE) for p in phases),
      wmat.astype(_MM_DTYPE), bias.reshape(1, N).astype(jnp.float32))


def _im2col(x, kh_n, kw_n, oh, ow, row_off=0, col_off=0, stride=1):
    """(B*oh*ow, kh_n*kw_n*Cin) patch matrix; feature order (kh, kw, ci), rows (b, oh, ow)."""
    B, _, _, cin = x.shape
    cols = []
    for kh in range(kh_n):
        for kw in range(kw_n):
            h0 = row_off + kh
            w0 = col_off + kw
            cols.append(x[:, h0:h0 + stride * (oh - 1) + 1:stride,
                            w0:w0 + stride * (ow - 1) + 1:stride, :])
    return jnp.concatenate(cols, axis=-1).reshape(B * oh * ow, kh_n * kw_n * cin)


def conv2d(x, w, b, pad_k_to=None):
    """Valid, stride-1 cross-correlation (nn.Conv2d). x NHWC, w (KH,KW,Cin,Cout)."""
    B, H, W, Cin = x.shape
    KH, KW, _, Cout = w.shape
    OH, OW = H - KH + 1, W - KW + 1
    patches = _im2col(x, KH, KW, OH, OW)
    wmat = w.reshape(KH * KW * Cin, Cout)
    if pad_k_to is not None and pad_k_to > wmat.shape[0]:
        pad = pad_k_to - wmat.shape[0]
        patches = jnp.pad(patches, ((0, 0), (0, pad)))
        wmat = jnp.pad(wmat, ((0, pad), (0, 0)))
    out = _mm_bias(patches, wmat, b)
    return out.reshape(B, OH, OW, Cout)


def conv2d_maxpool2(x, w, b):
    """Conv (valid, stride 1) followed by MaxPool2d(2), fused into one Pallas kernel."""
    B, H, W, Cin = x.shape
    KH, KW, _, Cout = w.shape
    OH, OW = H - KH + 1, W - KW + 1
    PH, PW = OH // 2, OW // 2
    phases = [_im2col(x, KH, KW, PH, PW, row_off=dh, col_off=dw, stride=2)
              for dh in (0, 1) for dw in (0, 1)]
    wmat = w.reshape(KH * KW * Cin, Cout)
    out = _mm_bias_max4(phases, wmat, b)
    return out.reshape(B, PH, PW, Cout)


def fc_head(emb, params):
    """Entire FC head (both branches + concat + last Linear + sigmoids) in one kernel."""
    B, K = emb.shape
    n_conn = params["conn_fc2_w"].shape[1]
    n_end = params["endp_fc2_w"].shape[1]
    NF = n_conn + n_end
    H1 = params["conn_fc1_w"].shape[1] + params["endp_fc1_w"].shape[1]

    w1 = jnp.concatenate([params["conn_fc1_w"], params["endp_fc1_w"]], axis=1)   # (256, 512)
    b1 = jnp.concatenate([params["conn_fc1_b"], params["endp_fc1_b"]])           # (512,)
    w2 = jnp.block([
        [params["conn_fc2_w"],
         jnp.zeros((params["conn_fc2_w"].shape[0], n_end), jnp.float32)],
        [jnp.zeros((params["endp_fc2_w"].shape[0], n_conn), jnp.float32),
         params["endp_fc2_w"]],
    ])                                                                            # (512, 156)
    b2 = jnp.concatenate([params["conn_fc2_b"], params["endp_fc2_b"]])            # (156,)
    wl = params["last_w"].reshape(1, NF).astype(jnp.float32)                      # (1, 156)
    bl = params["last_b"].reshape(1, 1).astype(jnp.float32)

    out = pl.pallas_call(
        _fc_head_kernel,
        out_shape=jax.ShapeDtypeStruct((B, 1), jnp.float32),
        grid=(1,),
        in_specs=[pl.BlockSpec((B, K), lambda i: (0, 0)),
                  pl.BlockSpec((K, H1), lambda i: (0, 0)),
                  pl.BlockSpec((1, H1), lambda i: (0, 0)),
                  pl.BlockSpec((H1, NF), lambda i: (0, 0)),
                  pl.BlockSpec((1, NF), lambda i: (0, 0)),
                  pl.BlockSpec((1, NF), lambda i: (0, 0)),
                  pl.BlockSpec((1, 1), lambda i: (0, 0))],
        out_specs=pl.BlockSpec((B, 1), lambda i: (0, 0)),
    )(emb.astype(_MM_DTYPE), w1.astype(_MM_DTYPE),
      b1.reshape(1, H1).astype(jnp.float32),
      w2.astype(_MM_DTYPE), b2.reshape(1, NF).astype(jnp.float32), wl, bl)
    return out.reshape(-1)


# ---------------------------------------------------------------------------
# Parameters (deterministic synthetic init, PyTorch-default-style uniform)
# ---------------------------------------------------------------------------

def init_params(key, num_block_x=6, num_block_y=6):
    num_blocks = num_block_x * num_block_y
    num_adj = len(build_adj(num_block_x, num_block_y))

    keys = iter(jax.random.split(key, 32))

    def u(shape, fan_in):
        bound = 1.0 / jnp.sqrt(jnp.float32(fan_in))
        return jax.random.uniform(next(keys), shape, jnp.float32, -bound, bound)

    p = {}
    # conv weights stored as (KH, KW, Cin, Cout)
    p["conv1_w"], p["conv1_b"] = u((5, 5, 1, 32), 1 * 25),  u((32,), 1 * 25)
    p["conv2_w"], p["conv2_b"] = u((5, 5, 32, 32), 32 * 25), u((32,), 32 * 25)
    p["conv3_w"], p["conv3_b"] = u((5, 5, 32, 64), 32 * 25), u((64,), 32 * 25)
    p["conv4_w"], p["conv4_b"] = u((5, 5, 64, 64), 64 * 25), u((64,), 64 * 25)
    # linear weights stored as (in, out)
    p["conn_fc1_w"], p["conn_fc1_b"] = u((256, 256), 256), u((256,), 256)
    p["conn_fc2_w"], p["conn_fc2_b"] = u((256, num_adj), 256), u((num_adj,), 256)
    p["endp_fc1_w"], p["endp_fc1_b"] = u((256, 256), 256), u((256,), 256)
    p["endp_fc2_w"], p["endp_fc2_b"] = u((256, num_blocks), 256), u((num_blocks,), 256)
    p["last_w"], p["last_b"] = u((num_blocks + num_adj, 1), num_blocks + num_adj), \
                               u((1,), num_blocks + num_adj)
    return p


# ---------------------------------------------------------------------------
# Forward pass (matches PathFinderNet.forward)
# ---------------------------------------------------------------------------

def pathfinder_forward(params, image_nchw):
    # image_nchw: (B, 1, 32, 32) float32, same convention as the PyTorch module.
    x = jnp.transpose(image_nchw, (0, 2, 3, 1)).astype(jnp.float32)    # -> NHWC
    x = conv2d(x, params["conv1_w"], params["conv1_b"], pad_k_to=32)    # (B,28,28,32)
    x = conv2d_maxpool2(x, params["conv2_w"], params["conv2_b"])        # (B,12,12,32)
    x = conv2d(x, params["conv3_w"], params["conv3_b"])                 # (B, 8, 8,64)
    x = conv2d_maxpool2(x, params["conv4_w"], params["conv4_b"])        # (B, 2, 2,64)

    B = x.shape[0]
    # nn.Flatten on NCHW: channel-major flatten order -> transpose back then reshape.
    emb = jnp.transpose(x, (0, 3, 1, 2)).reshape(B, -1)                 # (B, 256)
    return fc_head(emb, params)                                         # (B,)


if __name__ == "__main__":
    root = jax.random.PRNGKey(0)
    k_params, k_input = jax.random.split(root)

    params = init_params(k_params)
    # Input spatial size must be 32x32 so that the CNN flatten yields 256 features.
    image = jax.random.normal(k_input, (2, 1, 32, 32), dtype=jnp.float32)

    fwd = jax.jit(pathfinder_forward)
    out = fwd(params, image)
    jax.block_until_ready(out)

    assert out.shape == (2,), out.shape
    assert jnp.all(jnp.isfinite(out)) and jnp.all(out >= 0.0) and jnp.all(out <= 1.0)
    print("KERNEL_OK")
</pallas_src>

<mosaic_0001>
module attributes {stable_mosaic.version = 11 : i64} {
  func.func @_mm_bias_kernel(%arg0: i32, %arg1: memref<784x32xbf16, #tpu.memory_space<vmem>>, %arg2: memref<32x32xbf16, #tpu.memory_space<vmem>>, %arg3: memref<1x32xf32, #tpu.memory_space<vmem>>, %arg4: memref<784x32xf32, #tpu.memory_space<vmem>>) attributes {dimension_semantics = [#tpu.dimension_semantics<parallel>], iteration_bounds = array<i64: 2>, scalar_prefetch = 0 : i64, scratch_operands = 0 : i64, tpu.core_type = #tpu.core_type<tc>, window_params = [{transform_indices = @transform_0, window_bounds = array<i64: 784, 32>}, {pipeline_mode = #tpu.pipeline_mode<synchronous>, transform_indices = @transform_1, window_bounds = array<i64: 32, 32>}, {pipeline_mode = #tpu.pipeline_mode<synchronous>, transform_indices = @transform_2, window_bounds = array<i64: 1, 32>}, {transform_indices = @transform_3, window_bounds = array<i64: 784, 32>}]} {
    %c0 = arith.constant 0 : index
    %c0_0 = arith.constant 0 : index
    %0 = vector.load %arg1[%c0, %c0_0] : memref<784x32xbf16, #tpu.memory_space<vmem>>, vector<784x32xbf16>
    %c0_1 = arith.constant 0 : index
    %c0_2 = arith.constant 0 : index
    %1 = vector.load %arg2[%c0_1, %c0_2] : memref<32x32xbf16, #tpu.memory_space<vmem>>, vector<32x32xbf16>
    %cst = arith.constant dense<0.000000e+00> : vector<784x32xf32>
    %2 = tpu.matmul %0, %1, %cst {dimension_numbers = #tpu.dot_dimension_numbers<[1], [0], [0], [1], [0, 0, 1, 1], [], []>} : vector<784x32xbf16>, vector<32x32xbf16>, vector<784x32xf32> -> vector<784x32xf32>
    %c0_3 = arith.constant 0 : index
    %c0_4 = arith.constant 0 : index
    %3 = vector.load %arg3[%c0_3, %c0_4] : memref<1x32xf32, #tpu.memory_space<vmem>>, vector<1x32xf32>
    %4 = vector.broadcast %3 : vector<1x32xf32> to vector<784x32xf32>
    %5 = arith.addf %2, %4 : vector<784x32xf32>
    %c0_5 = arith.constant 0 : index
    %c0_6 = arith.constant 0 : index
    %6 = vector.load %arg4[%c0_5, %c0_6] : memref<784x32xf32, #tpu.memory_space<vmem>>, vector<784x32xf32>
    tpu.vector_store %arg4[%c0_5, %c0_6], %5 {strides = array<i32>} : memref<784x32xf32, #tpu.memory_space<vmem>>, vector<784x32xf32>,
    return
  }
  func.func @transform_0(%arg0: i32) -> (i32, i32) {
    %c0_i32 = arith.constant 0 : i32
    %c0_i32_0 = arith.constant 0 : i32
    return %arg0, %c0_i32 : i32, i32
  }
  func.func @transform_1(%arg0: i32) -> (i32, i32) {
    %c0_i32 = arith.constant 0 : i32
    %c0_i32_0 = arith.constant 0 : i32
    %c0_i32_1 = arith.constant 0 : i32
    return %c0_i32, %c0_i32_0 : i32, i32
  }
  func.func @transform_2(%arg0: i32) -> (i32, i32) {
    %c0_i32 = arith.constant 0 : i32
    %c0_i32_0 = arith.constant 0 : i32
    %c0_i32_1 = arith.constant 0 : i32
    return %c0_i32, %c0_i32_0 : i32, i32
  }
  func.func @transform_3(%arg0: i32) -> (i32, i32) {
    %c0_i32 = arith.constant 0 : i32
    %c0_i32_0 = arith.constant 0 : i32
    return %arg0, %c0_i32 : i32, i32
  }
}

module attributes {stable_mosaic.version = 11 : i64} {
  func.func @_mm_bias_max4_kernel(%arg0: i32, %arg1: memref<288x800xbf16, #tpu.memory_space<vmem>>, %arg2: memref<288x800xbf16, #tpu.memory_space<vmem>>, %arg3: memref<288x800xbf16, #tpu.memory_space<vmem>>, %arg4: memref<288x800xbf16, #tpu.memory_space<vmem>>, %arg5: memref<800x32xbf16, #tpu.memory_space<vmem>>, %arg6: memref<1x32xf32, #tpu.memory_space<vmem>>, %arg7: memref<288x32xf32, #tpu.memory_space<vmem>>) attributes {dimension_semantics = [#tpu.dimension_semantics<parallel>], iteration_bounds = array<i64: 1>, scalar_prefetch = 0 : i64, scratch_operands = 0 : i64, tpu.core_type = #tpu.core_type<tc>, window_params = [{transform_indices = @transform_0, window_bounds = array<i64: 288, 800>}, {transform_indices = @transform_1, window_bounds = array<i64: 288, 800>}, {transform_indices = @transform_2, window_bounds = array<i64: 288, 800>}, {transform_indices = @transform_3, window_bounds = array<i64: 288, 800>}, {pipeline_mode = #tpu.pipeline_mode<synchronous>, transform_indices = @transform_4, window_bounds = array<i64: 800, 32>}, {pipeline_mode = #tpu.pipeline_mode<synchronous>, transform_indices = @transform_5, window_bounds = array<i64: 1, 32>}, {transform_indices = @transform_6, window_bounds = array<i64: 288, 32>}]} {
    %c0 = arith.constant 0 : index
    %c0_0 = arith.constant 0 : index
    %0 = vector.load %arg5[%c0, %c0_0] : memref<800x32xbf16, #tpu.memory_space<vmem>>, vector<800x32xbf16>
    %c0_1 = arith.constant 0 : index
    %c0_2 = arith.constant 0 : index
    %1 = vector.load %arg1[%c0_1, %c0_2] : memref<288x800xbf16, #tpu.memory_space<vmem>>, vector<288x800xbf16>
    %cst = arith.constant dense<0.000000e+00> : vector<288x32xf32>
    %2 = tpu.matmul %1, %0, %cst {dimension_numbers = #tpu.dot_dimension_numbers<[1], [0], [0], [1], [0, 0, 1, 1], [], []>} : vector<288x800xbf16>, vector<800x32xbf16>, vector<288x32xf32> -> vector<288x32xf32>
    %c0_3 = arith.constant 0 : index
    %c0_4 = arith.constant 0 : index
    %3 = vector.load %arg2[%c0_3, %c0_4] : memref<288x800xbf16, #tpu.memory_space<vmem>>, vector<288x800xbf16>
    %cst_5 = arith.constant dense<0.000000e+00> : vector<288x32xf32>
    %4 = tpu.matmul %3, %0, %cst_5 {dimension_numbers = #tpu.dot_dimension_numbers<[1], [0], [0], [1], [0, 0, 1, 1], [], []>} : vector<288x800xbf16>, vector<800x32xbf16>, vector<288x32xf32> -> vector<288x32xf32>
    %c0_6 = arith.constant 0 : index
    %c0_7 = arith.constant 0 : index
    %5 = vector.load %arg3[%c0_6, %c0_7] : memref<288x800xbf16, #tpu.memory_space<vmem>>, vector<288x800xbf16>
    %cst_8 = arith.constant dense<0.000000e+00> : vector<288x32xf32>
    %6 = tpu.matmul %5, %0, %cst_8 {dimension_numbers = #tpu.dot_dimension_numbers<[1], [0], [0], [1], [0, 0, 1, 1], [], []>} : vector<288x800xbf16>, vector<800x32xbf16>, vector<288x32xf32> -> vector<288x32xf32>
    %c0_9 = arith.constant 0 : index
    %c0_10 = arith.constant 0 : index
    %7 = vector.load %arg4[%c0_9, %c0_10] : memref<288x800xbf16, #tpu.memory_space<vmem>>, vector<288x800xbf16>
    %cst_11 = arith.constant dense<0.000000e+00> : vector<288x32xf32>
    %8 = tpu.matmul %7, %0, %cst_11 {dimension_numbers = #tpu.dot_dimension_numbers<[1], [0], [0], [1], [0, 0, 1, 1], [], []>} : vector<288x800xbf16>, vector<800x32xbf16>, vector<288x32xf32> -> vector<288x32xf32>
    %9 = arith.maximumf %2, %4 : vector<288x32xf32>
    %10 = arith.maximumf %6, %8 : vector<288x32xf32>
    %11 = arith.maximumf %9, %10 : vector<288x32xf32>
    %c0_12 = arith.constant 0 : index
    %c0_13 = arith.constant 0 : index
    %12 = vector.load %arg6[%c0_12, %c0_13] : memref<1x32xf32, #tpu.memory_space<vmem>>, vector<1x32xf32>
    %13 = vector.broadcast %12 : vector<1x32xf32> to vector<288x32xf32>
    %14 = arith.addf %11, %13 : vector<288x32xf32>
    %c0_14 = arith.constant 0 : index
    %c0_15 = arith.constant 0 : index
    %15 = vector.load %arg7[%c0_14, %c0_15] : memref<288x32xf32, #tpu.memory_space<vmem>>, vector<288x32xf32>
    tpu.vector_store %arg7[%c0_14, %c0_15], %14 {strides = array<i32>} : memref<288x32xf32, #tpu.memory_space<vmem>>, vector<288x32xf32>,
    return
  }
  func.func @transform_0(%arg0: i32) -> (i32, i32) {
    %c0_i32 = arith.constant 0 : i32
    %c0_i32_0 = arith.constant 0 : i32
    return %arg0, %c0_i32 : i32, i32
  }
  func.func @transform_1(%arg0: i32) -> (i32, i32) {
    %c0_i32 = arith.constant 0 : i32
    %c0_i32_0 = arith.constant 0 : i32
    return %arg0, %c0_i32 : i32, i32
  }
  func.func @transform_2(%arg0: i32) -> (i32, i32) {
    %c0_i32 = arith.constant 0 : i32
    %c0_i32_0 = arith.constant 0 : i32
    return %arg0, %c0_i32 : i32, i32
  }
  func.func @transform_3(%arg0: i32) -> (i32, i32) {
    %c0_i32 = arith.constant 0 : i32
    %c0_i32_0 = arith.constant 0 : i32
    return %arg0, %c0_i32 : i32, i32
  }
  func.func @transform_4(%arg0: i32) -> (i32, i32) {
    %c0_i32 = arith.constant 0 : i32
    %c0_i32_0 = arith.constant 0 : i32
    %c0_i32_1 = arith.constant 0 : i32
    return %c0_i32, %c0_i32_0 : i32, i32
  }
  func.func @transform_5(%arg0: i32) -> (i32, i32) {
    %c0_i32 = arith.constant 0 : i32
    %c0_i32_0 = arith.constant 0 : i32
    %c0_i32_1 = arith.constant 0 : i32
    return %c0_i32, %c0_i32_0 : i32, i32
  }
  func.func @transform_6(%arg0: i32) -> (i32, i32) {
    %c0_i32 = arith.constant 0 : i32
    %c0_i32_0 = arith.constant 0 : i32
    return %arg0, %c0_i32 : i32, i32
  }
}

module attributes {stable_mosaic.version = 11 : i64} {
  func.func @_mm_bias_kernel(%arg0: i32, %arg1: memref<128x800xbf16, #tpu.memory_space<vmem>>, %arg2: memref<800x64xbf16, #tpu.memory_space<vmem>>, %arg3: memref<1x64xf32, #tpu.memory_space<vmem>>, %arg4: memref<128x64xf32, #tpu.memory_space<vmem>>) attributes {dimension_semantics = [#tpu.dimension_semantics<parallel>], iteration_bounds = array<i64: 1>, scalar_prefetch = 0 : i64, scratch_operands = 0 : i64, tpu.core_type = #tpu.core_type<tc>, window_params = [{transform_indices = @transform_0, window_bounds = array<i64: 128, 800>}, {pipeline_mode = #tpu.pipeline_mode<synchronous>, transform_indices = @transform_1, window_bounds = array<i64: 800, 64>}, {pipeline_mode = #tpu.pipeline_mode<synchronous>, transform_indices = @transform_2, window_bounds = array<i64: 1, 64>}, {transform_indices = @transform_3, window_bounds = array<i64: 128, 64>}]} {
    %c0 = arith.constant 0 : index
    %c0_0 = arith.constant 0 : index
    %0 = vector.load %arg1[%c0, %c0_0] : memref<128x800xbf16, #tpu.memory_space<vmem>>, vector<128x800xbf16>
    %c0_1 = arith.constant 0 : index
    %c0_2 = arith.constant 0 : index
    %1 = vector.load %arg2[%c0_1, %c0_2] : memref<800x64xbf16, #tpu.memory_space<vmem>>, vector<800x64xbf16>
    %cst = arith.constant dense<0.000000e+00> : vector<128x64xf32>
    %2 = tpu.matmul %0, %1, %cst {dimension_numbers = #tpu.dot_dimension_numbers<[1], [0], [0], [1], [0, 0, 1, 1], [], []>} : vector<128x800xbf16>, vector<800x64xbf16>, vector<128x64xf32> -> vector<128x64xf32>
    %c0_3 = arith.constant 0 : index
    %c0_4 = arith.constant 0 : index
    %3 = vector.load %arg3[%c0_3, %c0_4] : memref<1x64xf32, #tpu.memory_space<vmem>>, vector<1x64xf32>
    %4 = vector.broadcast %3 : vector<1x64xf32> to vector<128x64xf32>
    %5 = arith.addf %2, %4 : vector<128x64xf32>
    %c0_5 = arith.constant 0 : index
    %c0_6 = arith.constant 0 : index
    %6 = vector.load %arg4[%c0_5, %c0_6] : memref<128x64xf32, #tpu.memory_space<vmem>>, vector<128x64xf32>
    tpu.vector_store %arg4[%c0_5, %c0_6], %5 {strides = array<i32>} : memref<128x64xf32, #tpu.memory_space<vmem>>, vector<128x64xf32>,
    return
  }
  func.func @transform_0(%arg0: i32) -> (i32, i32) {
    %c0_i32 = arith.constant 0 : i32
    %c0_i32_0 = arith.constant 0 : i32
    return %arg0, %c0_i32 : i32, i32
  }
  func.func @transform_1(%arg0: i32) -> (i32, i32) {
    %c0_i32 = arith.constant 0 : i32
    %c0_i32_0 = arith.constant 0 : i32
    %c0_i32_1 = arith.constant 0 : i32
    return %c0_i32, %c0_i32_0 : i32, i32
  }
  func.func @transform_2(%arg0: i32) -> (i32, i32) {
    %c0_i32 = arith.constant 0 : i32
    %c0_i32_0 = arith.constant 0 : i32
    %c0_i32_1 = arith.constant 0 : i32
    return %c0_i32, %c0_i32_0 : i32, i32
  }
  func.func @transform_3(%arg0: i32) -> (i32, i32) {
    %c0_i32 = arith.constant 0 : i32
    %c0_i32_0 = arith.constant 0 : i32
    return %arg0, %c0_i32 : i32, i32
  }
}

module attributes {stable_mosaic.version = 11 : i64} {
  func.func @_mm_bias_max4_kernel(%arg0: i32, %arg1: memref<8x1600xbf16, #tpu.memory_space<vmem>>, %arg2: memref<8x1600xbf16, #tpu.memory_space<vmem>>, %arg3: memref<8x1600xbf16, #tpu.memory_space<vmem>>, %arg4: memref<8x1600xbf16, #tpu.memory_space<vmem>>, %arg5: memref<1600x64xbf16, #tpu.memory_space<vmem>>, %arg6: memref<1x64xf32, #tpu.memory_space<vmem>>, %arg7: memref<8x64xf32, #tpu.memory_space<vmem>>) attributes {dimension_semantics = [#tpu.dimension_semantics<parallel>], iteration_bounds = array<i64: 1>, scalar_prefetch = 0 : i64, scratch_operands = 0 : i64, tpu.core_type = #tpu.core_type<tc>, window_params = [{transform_indices = @transform_0, window_bounds = array<i64: 8, 1600>}, {transform_indices = @transform_1, window_bounds = array<i64: 8, 1600>}, {transform_indices = @transform_2, window_bounds = array<i64: 8, 1600>}, {transform_indices = @transform_3, window_bounds = array<i64: 8, 1600>}, {pipeline_mode = #tpu.pipeline_mode<synchronous>, transform_indices = @transform_4, window_bounds = array<i64: 1600, 64>}, {pipeline_mode = #tpu.pipeline_mode<synchronous>, transform_indices = @transform_5, window_bounds = array<i64: 1, 64>}, {transform_indices = @transform_6, window_bounds = array<i64: 8, 64>}]} {
    %c0 = arith.constant 0 : index
    %c0_0 = arith.constant 0 : index
    %0 = vector.load %arg5[%c0, %c0_0] : memref<1600x64xbf16, #tpu.memory_space<vmem>>, vector<1600x64xbf16>
    %c0_1 = arith.constant 0 : index
    %c0_2 = arith.constant 0 : index
    %1 = vector.load %arg1[%c0_1, %c0_2] : memref<8x1600xbf16, #tpu.memory_space<vmem>>, vector<8x1600xbf16>
    %cst = arith.constant dense<0.000000e+00> : vector<8x64xf32>
    %2 = tpu.matmul %1, %0, %cst {dimension_numbers = #tpu.dot_dimension_numbers<[1], [0], [0], [1], [0, 0, 1, 1], [], []>} : vector<8x1600xbf16>, vector<1600x64xbf16>, vector<8x64xf32> -> vector<8x64xf32>
    %c0_3 = arith.constant 0 : index
    %c0_4 = arith.constant 0 : index
    %3 = vector.load %arg2[%c0_3, %c0_4] : memref<8x1600xbf16, #tpu.memory_space<vmem>>, vector<8x1600xbf16>
    %cst_5 = arith.constant dense<0.000000e+00> : vector<8x64xf32>
    %4 = tpu.matmul %3, %0, %cst_5 {dimension_numbers = #tpu.dot_dimension_numbers<[1], [0], [0], [1], [0, 0, 1, 1], [], []>} : vector<8x1600xbf16>, vector<1600x64xbf16>, vector<8x64xf32> -> vector<8x64xf32>
    %c0_6 = arith.constant 0 : index
    %c0_7 = arith.constant 0 : index
    %5 = vector.load %arg3[%c0_6, %c0_7] : memref<8x1600xbf16, #tpu.memory_space<vmem>>, vector<8x1600xbf16>
    %cst_8 = arith.constant dense<0.000000e+00> : vector<8x64xf32>
    %6 = tpu.matmul %5, %0, %cst_8 {dimension_numbers = #tpu.dot_dimension_numbers<[1], [0], [0], [1], [0, 0, 1, 1], [], []>} : vector<8x1600xbf16>, vector<1600x64xbf16>, vector<8x64xf32> -> vector<8x64xf32>
    %c0_9 = arith.constant 0 : index
    %c0_10 = arith.constant 0 : index
    %7 = vector.load %arg4[%c0_9, %c0_10] : memref<8x1600xbf16, #tpu.memory_space<vmem>>, vector<8x1600xbf16>
    %cst_11 = arith.constant dense<0.000000e+00> : vector<8x64xf32>
    %8 = tpu.matmul %7, %0, %cst_11 {dimension_numbers = #tpu.dot_dimension_numbers<[1], [0], [0], [1], [0, 0, 1, 1], [], []>} : vector<8x1600xbf16>, vector<1600x64xbf16>, vector<8x64xf32> -> vector<8x64xf32>
    %9 = arith.maximumf %2, %4 : vector<8x64xf32>
    %10 = arith.maximumf %6, %8 : vector<8x64xf32>
    %11 = arith.maximumf %9, %10 : vector<8x64xf32>
    %c0_12 = arith.constant 0 : index
    %c0_13 = arith.constant 0 : index
    %12 = vector.load %arg6[%c0_12, %c0_13] : memref<1x64xf32, #tpu.memory_space<vmem>>, vector<1x64xf32>
    %13 = vector.broadcast %12 : vector<1x64xf32> to vector<8x64xf32>
    %14 = arith.addf %11, %13 : vector<8x64xf32>
    %c0_14 = arith.constant 0 : index
    %c0_15 = arith.constant 0 : index
    %15 = vector.load %arg7[%c0_14, %c0_15] : memref<8x64xf32, #tpu.memory_space<vmem>>, vector<8x64xf32>
    tpu.vector_store %arg7[%c0_14, %c0_15], %14 {strides = array<i32>} : memref<8x64xf32, #tpu.memory_space<vmem>>, vector<8x64xf32>,
    return
  }
  func.func @transform_0(%arg0: i32) -> (i32, i32) {
    %c0_i32 = arith.constant 0 : i32
    %c0_i32_0 = arith.constant 0 : i32
    return %arg0, %c0_i32 : i32, i32
  }
  func.func @transform_1(%arg0: i32) -> (i32, i32) {
    %c0_i32 = arith.constant 0 : i32
    %c0_i32_0 = arith.constant 0 : i32
    return %arg0, %c0_i32 : i32, i32
  }
  func.func @transform_2(%arg0: i32) -> (i32, i32) {
    %c0_i32 = arith.constant 0 : i32
    %c0_i32_0 = arith.constant 0 : i32
    return %arg0, %c0_i32 : i32, i32
  }
  func.func @transform_3(%arg0: i32) -> (i32, i32) {
    %c0_i32 = arith.constant 0 : i32
    %c0_i32_0 = arith.constant 0 : i32
    return %arg0, %c0_i32 : i32, i32
  }
  func.func @transform_4(%arg0: i32) -> (i32, i32) {
    %c0_i32 = arith.constant 0 : i32
    %c0_i32_0 = arith.constant 0 : i32
    %c0_i32_1 = arith.constant 0 : i32
    return %c0_i32, %c0_i32_0 : i32, i32
  }
  func.func @transform_5(%arg0: i32) -> (i32, i32) {
    %c0_i32 = arith.constant 0 : i32
    %c0_i32_0 = arith.constant 0 : i32
    %c0_i32_1 = arith.constant 0 : i32
    return %c0_i32, %c0_i32_0 : i32, i32
  }
  func.func @transform_6(%arg0: i32) -> (i32, i32) {
    %c0_i32 = arith.constant 0 : i32
    %c0_i32_0 = arith.constant 0 : i32
    return %arg0, %c0_i32 : i32, i32
  }
}

module attributes {stable_mosaic.version = 11 : i64} {
  func.func @_fc_head_kernel(%arg0: i32, %arg1: memref<2x256xbf16, #tpu.memory_space<vmem>>, %arg2: memref<256x512xbf16, #tpu.memory_space<vmem>>, %arg3: memref<1x512xf32, #tpu.memory_space<vmem>>, %arg4: memref<512x156xbf16, #tpu.memory_space<vmem>>, %arg5: memref<1x156xf32, #tpu.memory_space<vmem>>, %arg6: memref<1x156xf32, #tpu.memory_space<vmem>>, %arg7: memref<1x1xf32, #tpu.memory_space<vmem>>, %arg8: memref<2x1xf32, #tpu.memory_space<vmem>>) attributes {dimension_semantics = [#tpu.dimension_semantics<arbitrary>], iteration_bounds = array<i64: 1>, scalar_prefetch = 0 : i64, scratch_operands = 0 : i64, tpu.core_type = #tpu.core_type<tc>, window_params = [{pipeline_mode = #tpu.pipeline_mode<synchronous>, transform_indices = @transform_0, window_bounds = array<i64: 2, 256>}, {pipeline_mode = #tpu.pipeline_mode<synchronous>, transform_indices = @transform_1, window_bounds = array<i64: 256, 512>}, {pipeline_mode = #tpu.pipeline_mode<synchronous>, transform_indices = @transform_2, window_bounds = array<i64: 1, 512>}, {pipeline_mode = #tpu.pipeline_mode<synchronous>, transform_indices = @transform_3, window_bounds = array<i64: 512, 156>}, {pipeline_mode = #tpu.pipeline_mode<synchronous>, transform_indices = @transform_4, window_bounds = array<i64: 1, 156>}, {pipeline_mode = #tpu.pipeline_mode<synchronous>, transform_indices = @transform_5, window_bounds = array<i64: 1, 156>}, {pipeline_mode = #tpu.pipeline_mode<synchronous>, transform_indices = @transform_6, window_bounds = array<i64: 1, 1>}, {pipeline_mode = #tpu.pipeline_mode<synchronous>, transform_indices = @transform_7, window_bounds = array<i64: 2, 1>}]} {
    %c0 = arith.constant 0 : index
    %c0_0 = arith.constant 0 : index
    %0 = vector.load %arg1[%c0, %c0_0] : memref<2x256xbf16, #tpu.memory_space<vmem>>, vector<2x256xbf16>
    %c0_1 = arith.constant 0 : index
    %c0_2 = arith.constant 0 : index
    %1 = vector.load %arg2[%c0_1, %c0_2] : memref<256x512xbf16, #tpu.memory_space<vmem>>, vector<256x512xbf16>
    %cst = arith.constant dense<0.000000e+00> : vector<2x512xf32>
    %2 = tpu.matmul %0, %1, %cst {dimension_numbers = #tpu.dot_dimension_numbers<[1], [0], [0], [1], [0, 0, 1, 1], [], []>} : vector<2x256xbf16>, vector<256x512xbf16>, vector<2x512xf32> -> vector<2x512xf32>
    %c0_3 = arith.constant 0 : index
    %c0_4 = arith.constant 0 : index
    %3 = vector.load %arg3[%c0_3, %c0_4] : memref<1x512xf32, #tpu.memory_space<vmem>>, vector<1x512xf32>
    %4 = vector.broadcast %3 : vector<1x512xf32> to vector<2x512xf32>
    %5 = arith.addf %2, %4 : vector<2x512xf32>
    %cst_5 = arith.constant 0.000000e+00 : f32
    %6 = vector.broadcast %cst_5 : f32 to vector<2x512xf32>
    %7 = arith.maximumf %5, %6 : vector<2x512xf32>
    %8 = arith.truncf %7 : vector<2x512xf32> to vector<2x512xbf16>
    %c0_6 = arith.constant 0 : index
    %c0_7 = arith.constant 0 : index
    %9 = vector.load %arg4[%c0_6, %c0_7] : memref<512x156xbf16, #tpu.memory_space<vmem>>, vector<512x156xbf16>
    %cst_8 = arith.constant dense<0.000000e+00> : vector<2x156xf32>
    %10 = tpu.matmul %8, %9, %cst_8 {dimension_numbers = #tpu.dot_dimension_numbers<[1], [0], [0], [1], [0, 0, 1, 1], [], []>} : vector<2x512xbf16>, vector<512x156xbf16>, vector<2x156xf32> -> vector<2x156xf32>
    %c0_9 = arith.constant 0 : index
    %c0_10 = arith.constant 0 : index
    %11 = vector.load %arg5[%c0_9, %c0_10] : memref<1x156xf32, #tpu.memory_space<vmem>>, vector<1x156xf32>
    %12 = vector.broadcast %11 : vector<1x156xf32> to vector<2x156xf32>
    %13 = arith.addf %10, %12 : vector<2x156xf32>
    %14 = math.absf %13 : vector<2x156xf32>
    %cst_11 = arith.constant 0.000000e+00 : f32
    %15 = vector.broadcast %cst_11 : f32 to vector<2x156xf32>
    %16 = arith.subf %15, %14 : vector<2x156xf32>
    %17 = math.exp %16 : vector<2x156xf32>
    %cst_12 = arith.constant 1.000000e+00 : f32
    %18 = vector.broadcast %cst_12 : f32 to vector<2x156xf32>
    %19 = arith.addf %18, %17 : vector<2x156xf32>
    %cst_13 = arith.constant 1.000000e+00 : f32
    %20 = vector.broadcast %cst_13 : f32 to vector<2x156xf32>
    %21 = arith.divf %20, %19 : vector<2x156xf32>
    %cst_14 = arith.constant 0.000000e+00 : f32
    %22 = vector.broadcast %cst_14 : f32 to vector<2x156xf32>
    %23 = arith.cmpf oge, %13, %22 : vector<2x156xf32>
    %24 = arith.mulf %17, %21 : vector<2x156xf32>
    %25 = arith.select %23, %21, %24 : vector<2x156xi1>, vector<2x156xf32>
    %c0_15 = arith.constant 0 : index
    %c0_16 = arith.constant 0 : index
    %26 = vector.load %arg6[%c0_15, %c0_16] : memref<1x156xf32, #tpu.memory_space<vmem>>, vector<1x156xf32>
    %27 = vector.broadcast %26 : vector<1x156xf32> to vector<2x156xf32>
    %28 = arith.mulf %25, %27 : vector<2x156xf32>
    %cst_17 = arith.constant dense<0.000000e+00> : vector<2xf32>
    %29 = vector.multi_reduction <add>, %28, %cst_17 [1] : vector<2x156xf32> to vector<2xf32>
    %30 = vector.shape_cast %29 : vector<2xf32> to vector<2x1xf32>
    %c0_18 = arith.constant 0 : index
    %c0_19 = arith.constant 0 : index
    %31 = vector.load %arg7[%c0_18, %c0_19] : memref<1x1xf32, #tpu.memory_space<vmem>>, vector<1x1xf32>
    %32 = vector.broadcast %31 : vector<1x1xf32> to vector<2x1xf32>
    %33 = arith.addf %30, %32 : vector<2x1xf32>
    %34 = math.absf %33 : vector<2x1xf32>
    %cst_20 = arith.constant 0.000000e+00 : f32
    %35 = vector.broadcast %cst_20 : f32 to vector<2x1xf32>
    %36 = arith.subf %35, %34 : vector<2x1xf32>
    %37 = math.exp %36 : vector<2x1xf32>
    %cst_21 = arith.constant 1.000000e+00 : f32
    %38 = vector.broadcast %cst_21 : f32 to vector<2x1xf32>
    %39 = arith.addf %38, %37 : vector<2x1xf32>
    %cst_22 = arith.constant 1.000000e+00 : f32
    %40 = vector.broadcast %cst_22 : f32 to vector<2x1xf32>
    %41 = arith.divf %40, %39 : vector<2x1xf32>
    %cst_23 = arith.constant 0.000000e+00 : f32
    %42 = vector.broadcast %cst_23 : f32 to vector<2x1xf32>
    %43 = arith.cmpf oge, %33, %42 : vector<2x1xf32>
    %44 = arith.mulf %37, %41 : vector<2x1xf32>
    %45 = arith.select %43, %41, %44 : vector<2x1xi1>, vector<2x1xf32>
    %c0_24 = arith.constant 0 : index
    %c0_25 = arith.constant 0 : index
    %46 = vector.load %arg8[%c0_24, %c0_25] : memref<2x1xf32, #tpu.memory_space<vmem>>, vector<2x1xf32>
    tpu.vector_store %arg8[%c0_24, %c0_25], %45 {strides = array<i32>} : memref<2x1xf32, #tpu.memory_space<vmem>>, vector<2x1xf32>,
    return
  }
  func.func @transform_0(%arg0: i32) -> (i32, i32) {
    %c0_i32 = arith.constant 0 : i32
    %c0_i32_0 = arith.constant 0 : i32
    %c0_i32_1 = arith.constant 0 : i32
    return %c0_i32, %c0_i32_0 : i32, i32
  }
  func.func @transform_1(%arg0: i32) -> (i32, i32) {
    %c0_i32 = arith.constant 0 : i32
    %c0_i32_0 = arith.constant 0 : i32
    %c0_i32_1 = arith.constant 0 : i32
    return %c0_i32, %c0_i32_0 : i32, i32
  }
  func.func @transform_2(%arg0: i32) -> (i32, i32) {
    %c0_i32 = arith.constant 0 : i32
    %c0_i32_0 = arith.constant 0 : i32
    %c0_i32_1 = arith.constant 0 : i32
    return %c0_i32, %c0_i32_0 : i32, i32
  }
  func.func @transform_3(%arg0: i32) -> (i32, i32) {
    %c0_i32 = arith.constant 0 : i32
    %c0_i32_0 = arith.constant 0 : i32
    %c0_i32_1 = arith.constant 0 : i32
    return %c0_i32, %c0_i32_0 : i32, i32
  }
  func.func @transform_4(%arg0: i32) -> (i32, i32) {
    %c0_i32 = arith.constant 0 : i32
    %c0_i32_0 = arith.constant 0 : i32
    %c0_i32_1 = arith.constant 0 : i32
    return %c0_i32, %c0_i32_0 : i32, i32
  }
  func.func @transform_5(%arg0: i32) -> (i32, i32) {
    %c0_i32 = arith.constant 0 : i32
    %c0_i32_0 = arith.constant 0 : i32
    %c0_i32_1 = arith.constant 0 : i32
    return %c0_i32, %c0_i32_0 : i32, i32
  }
  func.func @transform_6(%arg0: i32) -> (i32, i32) {
    %c0_i32 = arith.constant 0 : i32
    %c0_i32_0 = arith.constant 0 : i32
    %c0_i32_1 = arith.constant 0 : i32
    return %c0_i32, %c0_i32_0 : i32, i32
  }
  func.func @transform_7(%arg0: i32) -> (i32, i32) {
    %c0_i32 = arith.constant 0 : i32
    %c0_i32_0 = arith.constant 0 : i32
    %c0_i32_1 = arith.constant 0 : i32
    return %c0_i32, %c0_i32_0 : i32, i32
  }
}

</mosaic_0001>

<llo_original>
// kernel: pathfinder_forward.5
$region0: #{pathfinder_forward.5}
  #allocation0 [shape = 'u32[]', space=smem, size = 0x4, offset = 0x4, fixed_abs, tag = 'smem constant byte address 0x4 - core index']
  #allocation1 [shape = 'u32[72,128]{1,0:T(1,128)}', space=vmem, size = 0x9000, scoped, tag = 'internal scratch']
  %s0 = inlined_call_operand.vmem [shape: bf16[1568,32], index: 0, kind: input, shape index: {}]
  %s1 = inlined_call_operand.vmem [shape: bf16[32,32], index: 1, kind: input, shape index: {}]
  %s2 = inlined_call_operand.hbm [shape: f32[1,32], index: 2, kind: input, shape index: {}]
  %s3 = inlined_call_operand.vmem [shape: f32[1568,32], index: 3, kind: output, shape index: {}]
  %s4 = sld [smem:[#allocation0]]
  $region49: #{pathfinder_forward.5} parent=0
    _
  %s6 = ssub.s32 1, %s4
  %s7 = scalar_select 0, %s6, %s4
  $region1: #{pathfinder_forward.5} parent=0
    #allocation2 [shape = 'u8[512]{0}', space=vmem, size = 0x400, scoped, tag = 'input window, operand 2, single buffered']
    #allocation3 [shape = 's32[2]{0}', space=sflag, size = 0x8, scoped, tag = 'scoped memory for pathfinder_forward.5']
    %8 = vsyncpa [#allocation3], 0
    loop: start=0, step=1, limit=4
    $region2: #{pathfinder_forward.5} parent=1 // loop_pre_header
      _
    $region3: #{pathfinder_forward.5} parent=1 // loop_header
      %s10 = sphi 0, %s14
      %p11 = scmp.ge.s32.totalorder %s10, 4
      %s20 = sphi 0, %s22
      %s23 = sphi 0, %s20
      %s24 = sphi 0, %s23
      %s40 = sphi 0, %s24
      %s44 = sphi 0, %s44
      %s46 = sphi 0, %s44
      %s47 = sphi 0, %s46
      %s61 = sphi 0, %s47
      %s65 = sphi 0, %s65
      %s67 = sphi 0, %s65
      %s68 = sphi 0, %s67
      %s82 = sphi 0, %s68
      %s88 = sphi 0, %s90
      %s91 = sphi 0, %s88
      %s92 = sphi 0, %s91
      %s108 = sphi 0, %s92
    $region4: #{pathfinder_forward.5} parent=1 // loop_header_branch
      %13 = sbr.rel (%p11) target = $region8
    $region5: #{pathfinder_forward.5} parent=1 // loop_body
      %s15 = ssub.s32 %s10, 1
      %s16 = ssub.s32 %s10, 2
      %s17 = sadd.s32 %s10, 1
      %s18 = ssub.s32 %s10, %s17
      %p19 = scmp.eq.s32.totalorder %s18, 0
      %s21 = sadd.s32 %s20, 1
      %s22 = scalar_select %p19, %s20, %s21
      %p25 = pneg %p19
      %p26 = scmp.eq.s32.totalorder %s10, 1
      %p27 = por %p25, %p26
      %p28 = scmp.ne.s32.totalorder %s20, %s23
      %p29 = scmp.eq.s32.totalorder %s10, 0
      %p30 = por %p28, %p29
      %p31 = scmp.ne.s32.totalorder %s20, %s23
      %p32 = scmp.eq.s32.totalorder %s15, 1
      %p33 = por %p31, %p32
      %p34 = scmp.ne.s32.totalorder %s23, %s24
      %p35 = scmp.eq.s32.totalorder %s15, 0
      %p36 = por %p34, %p35
      %p37 = scmp.ne.s32.totalorder %s23, %s24
      %p38 = scmp.eq.s32.totalorder %s16, 1
      %p39 = por %p37, %p38
      %p41 = scmp.ne.s32.totalorder %s24, %s40
      %p42 = scmp.eq.s32.totalorder %s16, 0
      %p43 = por %p41, %p42
      %s45 = sadd.s32 %s44, 1
      %p48 = scmp.eq.s32.totalorder %s10, 1
      %p49 = scmp.ne.s32.totalorder %s44, %s46
      %p50 = scmp.eq.s32.totalorder %s10, 0
      %p51 = por %p49, %p50
      %p52 = scmp.ne.s32.totalorder %s44, %s46
      %p53 = scmp.eq.s32.totalorder %s15, 1
      %p54 = por %p52, %p53
      %p55 = scmp.ne.s32.totalorder %s46, %s47
      %p56 = scmp.eq.s32.totalorder %s15, 0
      %p57 = por %p55, %p56
      %p58 = scmp.ne.s32.totalorder %s46, %s47
      %p59 = scmp.eq.s32.totalorder %s16, 1
      %p60 = por %p58, %p59
      %p62 = scmp.ne.s32.totalorder %s47, %s61
      %p63 = scmp.eq.s32.totalorder %s16, 0
      %p64 = por %p62, %p63
      %s66 = sadd.s32 %s65, 1
      %p69 = scmp.eq.s32.totalorder %s10, 1
      %p70 = scmp.ne.s32.totalorder %s65, %s67
      %p71 = scmp.eq.s32.totalorder %s10, 0
      %p72 = por %p70, %p71
      %p73 = scmp.ne.s32.totalorder %s65, %s67
      %p74 = scmp.eq.s32.totalorder %s15, 1
      %p75 = por %p73, %p74
      %p76 = scmp.ne.s32.totalorder %s67, %s68
      %p77 = scmp.eq.s32.totalorder %s15, 0
      %p78 = por %p76, %p77
      %p79 = scmp.ne.s32.totalorder %s67, %s68
      %p80 = scmp.eq.s32.totalorder %s16, 1
      %p81 = por %p79, %p80
      %p83 = scmp.ne.s32.totalorder %s68, %s82
      %p84 = scmp.eq.s32.totalorder %s16, 0
      %p85 = por %p83, %p84
      %s86 = ssub.s32 %s10, %s17
      %p87 = scmp.eq.s32.totalorder %s86, 0
      %s89 = sadd.s32 %s88, 1
      %s90 = scalar_select %p87, %s88, %s89
      %p93 = pneg %p87
      %p94 = scmp.eq.s32.totalorder %s10, 1
      %p95 = por %p93, %p94
      %p96 = scmp.ne.s32.totalorder %s88, %s91
      %p97 = scmp.eq.s32.totalorder %s10, 0
      %p98 = por %p96, %p97
      %p99 = scmp.ne.s32.totalorder %s88, %s91
      %p100 = scmp.eq.s32.totalorder %s15, 1
      %p101 = por %p99, %p100
      %p102 = scmp.ne.s32.totalorder %s91, %s92
      %p103 = scmp.eq.s32.totalorder %s15, 0
      %p104 = por %p102, %p103
      %p105 = scmp.ne.s32.totalorder %s91, %s92
      %p106 = scmp.eq.s32.totalorder %s16, 1
      %p107 = por %p105, %p106
      %p109 = scmp.ne.s32.totalorder %s92, %s108
      %p110 = scmp.eq.s32.totalorder %s16, 0
      %p111 = por %p109, %p110
      %p112 = scmp.le.s32.totalorder 1, %s10
      %p113 = scmp.lt.s32.totalorder %s10, 3
      %p114 = pnand %p112, %p113
      %p115 = pneg %p114
      // Predicated region
      $region9: #{pathfinder_forward.5} parent=5 // pred_check
        _
      $region10: #{pathfinder_forward.5} parent=5 // pred_check_branch
        %117 = sbr.rel (%p114) target = $region12
      $region11: #{pathfinder_forward.5} parent=5 // pred_region
        %s118 = ssub.s32 %s10, 1
        // Predicated region
        $region13: #{pathfinder_forward.5} parent=11 // pred_check
          %p119 = pneg %p57
        $region14: #{pathfinder_forward.5} parent=11 // pred_check_branch
          %121 = sbr.rel (%p119) target = $region16
        $region15: #{pathfinder_forward.5} parent=11 // pred_region
          _
        $region16: #{pathfinder_forward.5} parent=11 // pred_fallthru
          _
        // Predicated region
        $region17: #{pathfinder_forward.5} parent=11 // pred_check
          %p122 = pneg %p78
        $region18: #{pathfinder_forward.5} parent=11 // pred_check_branch
          %124 = sbr.rel (%p122) target = $region20
        $region19: #{pathfinder_forward.5} parent=11 // pred_region
          %126 = vsyncadd [#allocation3], 0
          %s128 = sshll.u32 %s2, 4
          %s129 = int_to_ptr.hbm [resolvable:$true] %s128
          %s130 = sshll.u32 [#allocation2], 4
          %s131 = int_to_ptr.vmem [resolvable:$true] %s130
          %133 = dma.hbm_to_vmem [thread:$0]  %s129, 16, %s131, [#allocation3]
        $region20: #{pathfinder_forward.5} parent=11 // pred_fallthru
          _
      $region12: #{pathfinder_forward.5} parent=5 // pred_fallthru
        _
      %p134 = scmp.lt.s32.totalorder %s10, 2
      // Predicated region
      $region21: #{pathfinder_forward.5} parent=5 // pred_check
        %p135 = pneg %p134
      $region22: #{pathfinder_forward.5} parent=5 // pred_check_branch
        %137 = sbr.rel (%p135) target = $region24
      $region23: #{pathfinder_forward.5} parent=5 // pred_region
        // Predicated region
        $region25: #{pathfinder_forward.5} parent=23 // pred_check
          %p138 = pneg %p30
        $region26: #{pathfinder_forward.5} parent=23 // pred_check_branch
          %140 = sbr.rel (%p138) target = $region28
        $region27: #{pathfinder_forward.5} parent=23 // pred_region
          %s141 = smul.u32 98, %s10
          %p142 = scmp.lt.s32.totalorder %s141, 195
          %s143 = scalar_select %p142, %s141, 195
          %s144 = smul.addr %s143, 4
          %s145 = scalar_lea.vmem %s0, %s144
          %s146 = smul.u32 98, %s10
        $region28: #{pathfinder_forward.5} parent=23 // pred_fallthru
          _
      $region24: #{pathfinder_forward.5} parent=5 // pred_fallthru
        _
      %p147 = scmp.le.s32.totalorder 1, %s10
      %p148 = scmp.lt.s32.totalorder %s10, 3
      %p149 = pnand %p147, %p148
      %p150 = pneg %p149
      // Predicated region
      $region29: #{pathfinder_forward.5} parent=5 // pred_check
        _
      $region30: #{pathfinder_forward.5} parent=5 // pred_check_branch
        %152 = sbr.rel (%p149) target = $region32
      $region31: #{pathfinder_forward.5} parent=5 // pred_region
        %s153 = ssub.s32 %s10, 1
        // Predicated region
        $region33: #{pathfinder_forward.5} parent=31 // pred_check
          %p154 = pneg %p78
        $region34: #{pathfinder_forward.5} parent=31 // pred_check_branch
          %156 = sbr.rel (%p154) target = $region36
        $region35: #{pathfinder_forward.5} parent=31 // pred_region
          %158 = dma.done [#allocation3], 16
        $region36: #{pathfinder_forward.5} parent=31 // pred_fallthru
          _
        %s159 = smul.u32 98, %s15
        %p160 = scmp.lt.s32.totalorder %s159, 195
        %s161 = scalar_select %p160, %s159, 195
        %s162 = smul.addr %s161, 4
        %s163 = scalar_lea.vmem %s0, %s162
        %p164 = pneg %p36
        %p165 = pneg %p33
        %p166 = pneg %p57
        %p167 = pneg %p54
        %p168 = pneg %p78
        %p169 = pneg %p75
        %p170 = pneg %p104
        %p171 = pneg %p101
        %s172 = smul.u32 98, %s15
        %p173 = scmp.lt.s32.totalorder %s172, 195
        %s174 = scalar_select %p173, %s172, 195
        %s175 = smul.addr %s174, 8
        %s176 = scalar_lea.vmem %s3, %s175
        %s177 = smul.u32 98, %s15
        %p178 = scmp.lt.s32.totalorder %s177, 195
        %s179 = scalar_select %p178, %s177, 195
        %s180 = smul.addr %s179, 4
        %s181 = scalar_lea.vmem %s0, %s180
        %s182 = smul.u32 98, %s15
        %s183 = smul.u32 98, %s15
        %p184 = scmp.lt.s32.totalorder %s183, 195
        %s185 = scalar_select %p184, %s183, 195
        %s186 = smul.addr %s185, 8
        %s187 = scalar_lea.vmem %s3, %s186
        %s188 = smul.u32 98, %s15
        %v190 = vld [vmem:[%s181] sm:$0xf]
        %v191 = vld [vmem:[%s181 + $0x4] sm:$0xf]
        %v192 = vld [vmem:[%s181 + $0x8] sm:$0xf]
        %v193 = vld [vmem:[%s181 + $0xc] sm:$0xf]
        %v194 = vld [vmem:[%s181 + $0x10] sm:$0xf]
        %v195 = vld [vmem:[%s181 + $0x14] sm:$0xf]
        %v196 = vld [vmem:[%s181 + $0x18] sm:$0xf]
        %v197 = vld [vmem:[%s181 + $0x1c] sm:$0xf]
        %v198 = vld [vmem:[%s181 + $0x20] sm:$0xf]
        %v199 = vld [vmem:[%s181 + $0x24] sm:$0xf]
        %v200 = vld [vmem:[%s181 + $0x28] sm:$0xf]
        %v201 = vld [vmem:[%s181 + $0x2c] sm:$0xf]
        %v202 = vld [vmem:[%s181 + $0x30] sm:$0xf]
        %v203 = vld [vmem:[%s181 + $0x34] sm:$0xf]
        %v204 = vld [vmem:[%s181 + $0x38] sm:$0xf]
        %v205 = vld [vmem:[%s181 + $0x3c] sm:$0xf]
        %v206 = vld [vmem:[%s181 + $0x40] sm:$0xf]
        %v207 = vld [vmem:[%s181 + $0x44] sm:$0xf]
        %v208 = vld [vmem:[%s181 + $0x48] sm:$0xf]
        %v209 = vld [vmem:[%s181 + $0x4c] sm:$0xf]
        %v210 = vld [vmem:[%s181 + $0x50] sm:$0xf]
        %v211 = vld [vmem:[%s181 + $0x54] sm:$0xf]
        %v212 = vld [vmem:[%s181 + $0x58] sm:$0xf]
        %v213 = vld [vmem:[%s181 + $0x5c] sm:$0xf]
        %v214 = vld [vmem:[%s181 + $0x60] sm:$0xf]
        %v215 = vld [vmem:[%s181 + $0x64] sm:$0xf]
        %v216 = vld [vmem:[%s181 + $0x68] sm:$0xf]
        %v217 = vld [vmem:[%s181 + $0x6c] sm:$0xf]
        %v218 = vld [vmem:[%s181 + $0x70] sm:$0xf]
        %v219 = vld [vmem:[%s181 + $0x74] sm:$0xf]
        %v220 = vld [vmem:[%s181 + $0x78] sm:$0xf]
        %v221 = vld [vmem:[%s181 + $0x7c] sm:$0xf]
        %v222 = vld [vmem:[%s181 + $0x80] sm:$0xf]
        %v223 = vld [vmem:[%s181 + $0x84] sm:$0xf]
        %v224 = vld [vmem:[%s181 + $0x88] sm:$0xf]
        %v225 = vld [vmem:[%s181 + $0x8c] sm:$0xf]
        %v226 = vld [vmem:[%s181 + $0x90] sm:$0xf]
        %v227 = vld [vmem:[%s181 + $0x94] sm:$0xf]
        %v228 = vld [vmem:[%s181 + $0x98] sm:$0xf]
        %v229 = vld [vmem:[%s181 + $0x9c] sm:$0xf]
        %v230 = vld [vmem:[%s181 + $0xa0] sm:$0xf]
        %v231 = vld [vmem:[%s181 + $0xa4] sm:$0xf]
        %v232 = vld [vmem:[%s181 + $0xa8] sm:$0xf]
        %v233 = vld [vmem:[%s181 + $0xac] sm:$0xf]
        %v234 = vld [vmem:[%s181 + $0xb0] sm:$0xf]
        %v235 = vld [vmem:[%s181 + $0xb4] sm:$0xf]
        %v236 = vld [vmem:[%s181 + $0xb8] sm:$0xf]
        %v237 = vld [vmem:[%s181 + $0xbc] sm:$0xf]
        %v238 = vld [vmem:[%s181 + $0xc0] sm:$0xf]
        %v239 = vld [vmem:[%s181 + $0xc4] sm:$0xf]
        %v240 = vld [vmem:[%s181 + $0xc8] sm:$0xf]
        %v241 = vld [vmem:[%s181 + $0xcc] sm:$0xf]
        %v242 = vld [vmem:[%s181 + $0xd0] sm:$0xf]
        %v243 = vld [vmem:[%s181 + $0xd4] sm:$0xf]
        %v244 = vld [vmem:[%s181 + $0xd8] sm:$0xf]
        %v245 = vld [vmem:[%s181 + $0xdc] sm:$0xf]
        %v246 = vld [vmem:[%s181 + $0xe0] sm:$0xf]
        %v247 = vld [vmem:[%s181 + $0xe4] sm:$0xf]
        %v248 = vld [vmem:[%s181 + $0xe8] sm:$0xf]
        %v249 = vld [vmem:[%s181 + $0xec] sm:$0xf]
        %v250 = vld [vmem:[%s181 + $0xf0] sm:$0xf]
        %v251 = vld [vmem:[%s181 + $0xf4] sm:$0xf]
        %v252 = vld [vmem:[%s181 + $0xf8] sm:$0xf]
        %v253 = vld [vmem:[%s181 + $0xfc] sm:$0xf]
        %v254 = vld [vmem:[%s181 + $0x100] sm:$0xf]
        %v255 = vld [vmem:[%s181 + $0x104] sm:$0xf]
        %v256 = vld [vmem:[%s181 + $0x108] sm:$0xf]
        %v257 = vld [vmem:[%s181 + $0x10c] sm:$0xf]
        %v258 = vld [vmem:[%s181 + $0x110] sm:$0xf]
        %v259 = vld [vmem:[%s181 + $0x114] sm:$0xf]
        %v260 = vld [vmem:[%s181 + $0x118] sm:$0xf]
        %v261 = vld [vmem:[%s181 + $0x11c] sm:$0xf]
        %v262 = vld [vmem:[%s181 + $0x120] sm:$0xf]
        %v263 = vld [vmem:[%s181 + $0x124] sm:$0xf]
        %v264 = vld [vmem:[%s181 + $0x128] sm:$0xf]
        %v265 = vld [vmem:[%s181 + $0x12c] sm:$0xf]
        %v266 = vld [vmem:[%s181 + $0x130] sm:$0xf]
        %v267 = vld [vmem:[%s181 + $0x134] sm:$0xf]
        %v268 = vld [vmem:[%s181 + $0x138] sm:$0xf]
        %v269 = vld [vmem:[%s181 + $0x13c] sm:$0xf]
        %v270 = vld [vmem:[%s181 + $0x140] sm:$0xf]
        %v271 = vld [vmem:[%s181 + $0x144] sm:$0xf]
        %v272 = vld [vmem:[%s181 + $0x148] sm:$0xf]
        %v273 = vld [vmem:[%s181 + $0x14c] sm:$0xf]
        %v274 = vld [vmem:[%s181 + $0x150] sm:$0xf]
        %v275 = vld [vmem:[%s181 + $0x154] sm:$0xf]
        %v276 = vld [vmem:[%s181 + $0x158] sm:$0xf]
        %v277 = vld [vmem:[%s181 + $0x15c] sm:$0xf]
        %v278 = vld [vmem:[%s181 + $0x160] sm:$0xf]
        %v279 = vld [vmem:[%s181 + $0x164] sm:$0xf]
        %v280 = vld [vmem:[%s181 + $0x168] sm:$0xf]
        %v281 = vld [vmem:[%s181 + $0x16c] sm:$0xf]
        %v282 = vld [vmem:[%s181 + $0x170] sm:$0xf]
        %v283 = vld [vmem:[%s181 + $0x174] sm:$0xf]
        %v284 = vld [vmem:[%s181 + $0x178] sm:$0xf]
        %v285 = vld [vmem:[%s181 + $0x17c] sm:$0xf]
        %v286 = vld [vmem:[%s181 + $0x180] sm:$0xf]
        %v287 = vld [vmem:[%s181 + $0x184] sm:$0xf]
        %v288 = vld [vmem:[%s1] sm:$0xf]
        %v289 = vld [vmem:[%s1 + $0x4] sm:$0xf]
        %v290 = vld [vmem:[%s1 + $0x8] sm:$0xf]
        %v291 = vld [vmem:[%s1 + $0xc] sm:$0xf]
        %v292 = vld [vmem:[#allocation2] sm:$0x1]
        %v294 = vperm.slane %v292, 0
        %v394 = vunpack.c.l.b16 %v190
        %v395 = vunpack.c.l.b16 %v191
        %v396 = vunpack.c.l.b16 %v192
        %v397 = vunpack.c.l.b16 %v193
        %v398 = vunpack.c.l.b16 %v194
        %v399 = vunpack.c.l.b16 %v195
        %v400 = vunpack.c.l.b16 %v196
        %v401 = vunpack.c.l.b16 %v197
        %v402 = vunpack.c.l.b16 %v198
        %v403 = vunpack.c.l.b16 %v199
        %v404 = vunpack.c.l.b16 %v200
        %v405 = vunpack.c.l.b16 %v201
        %v406 = vunpack.c.l.b16 %v202
        %v407 = vunpack.c.l.b16 %v203
        %v408 = vunpack.c.l.b16 %v204
        %v409 = vunpack.c.l.b16 %v205
        %v410 = vunpack.c.l.b16 %v206
        %v411 = vunpack.c.l.b16 %v207
        %v412 = vunpack.c.l.b16 %v208
        %v413 = vunpack.c.l.b16 %v209
        %v414 = vunpack.c.l.b16 %v210
        %v415 = vunpack.c.l.b16 %v211
        %v416 = vunpack.c.l.b16 %v212
        %v417 = vunpack.c.l.b16 %v213
        %v418 = vunpack.c.l.b16 %v214
        %v419 = vunpack.c.l.b16 %v215
        %v420 = vunpack.c.l.b16 %v216
        %v421 = vunpack.c.l.b16 %v217
        %v422 = vunpack.c.l.b16 %v218
        %v423 = vunpack.c.l.b16 %v219
        %v424 = vunpack.c.l.b16 %v220
        %v425 = vunpack.c.l.b16 %v221
        %v426 = vunpack.c.l.b16 %v222
        %v427 = vunpack.c.l.b16 %v223
        %v428 = vunpack.c.l.b16 %v224
        %v429 = vunpack.c.l.b16 %v225
        %v430 = vunpack.c.l.b16 %v226
        %v431 = vunpack.c.l.b16 %v227
        %v432 = vunpack.c.l.b16 %v228
        %v433 = vunpack.c.l.b16 %v229
        %v434 = vunpack.c.l.b16 %v230
        %v435 = vunpack.c.l.b16 %v231
        %v436 = vunpack.c.l.b16 %v232
        %v437 = vunpack.c.l.b16 %v233
        %v438 = vunpack.c.l.b16 %v234
        %v439 = vunpack.c.l.b16 %v235
        %v440 = vunpack.c.l.b16 %v236
        %v441 = vunpack.c.l.b16 %v237
        %v442 = vunpack.c.l.b16 %v238
        %v443 = vunpack.c.l.b16 %v239
        %v444 = vunpack.c.l.b16 %v240
        %v445 = vunpack.c.l.b16 %v241
        %v446 = vunpack.c.l.b16 %v242
        %v447 = vunpack.c.l.b16 %v243
        %v448 = vunpack.c.l.b16 %v244
        %v449 = vunpack.c.l.b16 %v245
        %v450 = vunpack.c.l.b16 %v246
        %v451 = vunpack.c.l.b16 %v247
        %v452 = vunpack.c.l.b16 %v248
        %v453 = vunpack.c.l.b16 %v249
        %v454 = vunpack.c.l.b16 %v250
        %v455 = vunpack.c.l.b16 %v251
        %v456 = vunpack.c.l.b16 %v252
        %v457 = vunpack.c.l.b16 %v253
        %v458 = vunpack.c.l.b16 %v254
        %v459 = vunpack.c.l.b16 %v255
        %v460 = vunpack.c.l.b16 %v256
        %v461 = vunpack.c.l.b16 %v257
        %v462 = vunpack.c.l.b16 %v258
        %v463 = vunpack.c.l.b16 %v259
        %v464 = vunpack.c.l.b16 %v260
        %v465 = vunpack.c.l.b16 %v261
        %v466 = vunpack.c.l.b16 %v262
        %v467 = vunpack.c.l.b16 %v263
        %v468 = vunpack.c.l.b16 %v264
        %v469 = vunpack.c.l.b16 %v265
        %v470 = vunpack.c.l.b16 %v266
        %v471 = vunpack.c.l.b16 %v267
        %v472 = vunpack.c.l.b16 %v268
        %v473 = vunpack.c.l.b16 %v269
        %v474 = vunpack.c.l.b16 %v270
        %v475 = vunpack.c.l.b16 %v271
        %v476 = vunpack.c.l.b16 %v272
        %v477 = vunpack.c.l.b16 %v273
        %v478 = vunpack.c.l.b16 %v274
        %v479 = vunpack.c.l.b16 %v275
        %v480 = vunpack.c.l.b16 %v276
        %v481 = vunpack.c.l.b16 %v277
        %v482 = vunpack.c.l.b16 %v278
        %v483 = vunpack.c.l.b16 %v279
        %v484 = vunpack.c.l.b16 %v280
        %v485 = vunpack.c.l.b16 %v281
        %v486 = vunpack.c.l.b16 %v282
        %v487 = vunpack.c.l.b16 %v283
        %v488 = vunpack.c.l.b16 %v284
        %v489 = vunpack.c.l.b16 %v285
        %v490 = vunpack.c.l.b16 %v286
        %v491 = vunpack.c.l.b16 %v287
        %v492 = vpack.c.b16 %v395, %v394
        %v493 = vpack.c.b16 %v397, %v396
        %v494 = vpack.c.b16 %v399, %v398
        %v495 = vpack.c.b16 %v401, %v400
        %v496 = vpack.c.b16 %v403, %v402
        %v497 = vpack.c.b16 %v405, %v404
        %v498 = vpack.c.b16 %v407, %v406
        %v499 = vpack.c.b16 %v409, %v408
        %v500 = vpack.c.b16 %v411, %v410
        %v501 = vpack.c.b16 %v413, %v412
        %v502 = vpack.c.b16 %v415, %v414
        %v503 = vpack.c.b16 %v417, %v416
        %v504 = vpack.c.b16 %v419, %v418
        %v505 = vpack.c.b16 %v421, %v420
        %v506 = vpack.c.b16 %v423, %v422
        %v507 = vpack.c.b16 %v425, %v424
        %v508 = vpack.c.b16 %v427, %v426
        %v509 = vpack.c.b16 %v429, %v428
        %v510 = vpack.c.b16 %v431, %v430
        %v511 = vpack.c.b16 %v433, %v432
        %v512 = vpack.c.b16 %v435, %v434
        %v513 = vpack.c.b16 %v437, %v436
        %v514 = vpack.c.b16 %v439, %v438
        %v515 = vpack.c.b16 %v441, %v440
        %v516 = vpack.c.b16 %v443, %v442
        %v517 = vpack.c.b16 %v445, %v444
        %v518 = vpack.c.b16 %v447, %v446
        %v519 = vpack.c.b16 %v449, %v448
        %v520 = vpack.c.b16 %v451, %v450
        %v521 = vpack.c.b16 %v453, %v452
        %v522 = vpack.c.b16 %v455, %v454
        %v523 = vpack.c.b16 %v457, %v456
        %v524 = vpack.c.b16 %v459, %v458
        %v525 = vpack.c.b16 %v461, %v460
        %v526 = vpack.c.b16 %v463, %v462
        %v527 = vpack.c.b16 %v465, %v464
        %v528 = vpack.c.b16 %v467, %v466
        %v529 = vpack.c.b16 %v469, %v468
        %v530 = vpack.c.b16 %v471, %v470
        %v531 = vpack.c.b16 %v473, %v472
        %v532 = vpack.c.b16 %v475, %v474
        %v533 = vpack.c.b16 %v477, %v476
        %v534 = vpack.c.b16 %v479, %v478
        %v535 = vpack.c.b16 %v481, %v480
        %v536 = vpack.c.b16 %v483, %v482
        %v537 = vpack.c.b16 %v485, %v484
        %v538 = vpack.c.b16 %v487, %v486
        %v539 = vpack.c.b16 %v489, %v488
        %v540 = vpack.c.b16 %v491, %v490
        %v545 = vunpack.c.l.b16 %v288
        %v546 = vunpack.c.l.b16 %v289
        %v547 = vunpack.c.l.b16 %v290
        %v548 = vunpack.c.l.b16 %v291
        %v549 = vpack.c.b16 %v546, %v545
        %v550 = vpack.c.b16 %v548, %v547
        %vm553 = vcmask 261120
        %v555 = vsel %vm553, %v492, 0
        %v558 = vsel %vm553, %v493, 0
        %v561 = vsel %vm553, %v494, 0
        %v564 = vsel %vm553, %v495, 0
        %v567 = vsel %vm553, %v496, 0
        %v570 = vsel %vm553, %v497, 0
        %v573 = vsel %vm553, %v498, 0
        %v576 = vsel %vm553, %v499, 0
        %v579 = vsel %vm553, %v500, 0
        %v582 = vsel %vm553, %v501, 0
        %v585 = vsel %vm553, %v502, 0
        %v588 = vsel %vm553, %v503, 0
        %v591 = vsel %vm553, %v504, 0
        %v594 = vsel %vm553, %v505, 0
        %v597 = vsel %vm553, %v506, 0
        %v600 = vsel %vm553, %v507, 0
        %v603 = vsel %vm553, %v508, 0
        %v606 = vsel %vm553, %v509, 0
        %v609 = vsel %vm553, %v510, 0
        %v612 = vsel %vm553, %v511, 0
        %v615 = vsel %vm553, %v512, 0
        %v618 = vsel %vm553, %v513, 0
        %v621 = vsel %vm553, %v514, 0
        %v624 = vsel %vm553, %v515, 0
        %v627 = vsel %vm553, %v516, 0
        %v630 = vsel %vm553, %v517, 0
        %v633 = vsel %vm553, %v518, 0
        %v636 = vsel %vm553, %v519, 0
        %v639 = vsel %vm553, %v520, 0
        %v642 = vsel %vm553, %v521, 0
        %v645 = vsel %vm553, %v522, 0
        %v648 = vsel %vm553, %v523, 0
        %v651 = vsel %vm553, %v524, 0
        %v654 = vsel %vm553, %v525, 0
        %v657 = vsel %vm553, %v526, 0
        %v660 = vsel %vm553, %v527, 0
        %v663 = vsel %vm553, %v528, 0
        %v666 = vsel %vm553, %v529, 0
        %v669 = vsel %vm553, %v530, 0
        %v672 = vsel %vm553, %v531, 0
        %v675 = vsel %vm553, %v532, 0
        %v678 = vsel %vm553, %v533, 0
        %v681 = vsel %vm553, %v534, 0
        %v684 = vsel %vm553, %v535, 0
        %v687 = vsel %vm553, %v536, 0
        %v690 = vsel %vm553, %v537, 0
        %v693 = vsel %vm553, %v538, 0
        %v696 = vsel %vm553, %v539, 0
        %v699 = vsel %vm553, %v540, 0
        %701 = vmatpush.bf16.msra.mxu0 0
        %702 = vmatpush.bf16.msra.mxu0 0
        %703 = vmatpush.bf16.msra.mxu0 0
        %704 = vmatpush.bf16.msra.mxu0 0
        %705 = vmatpush.bf16.msra.mxu0 0
        %706 = vmatpush.bf16.msra.mxu0 0
        %707 = vmatpush.bf16.msra.mxu0 %v550
        %708 = vmatpush.bf16.msra.mxu0 %v549
        %709 = vmatmul.bf16.gmra.mxu0 %v555
        %v710 = vpop.f32.mrf.mxu0
        %v711 = vadd.f32 %v294, %v710
        %v712 = vpop.f32.mrf.mxu0
        %v713 = vadd.f32 %v294, %v712
        %714 = vmatmul.bf16.gmra.mxu0 %v558
        %v715 = vpop.f32.mrf.mxu0
        %v716 = vadd.f32 %v294, %v715
        %v717 = vpop.f32.mrf.mxu0
        %v718 = vadd.f32 %v294, %v717
        %719 = vmatmul.bf16.gmra.mxu0 %v561
        %v720 = vpop.f32.mrf.mxu0
        %v721 = vadd.f32 %v294, %v720
        %v722 = vpop.f32.mrf.mxu0
        %v723 = vadd.f32 %v294, %v722
        %724 = vmatmul.bf16.gmra.mxu0 %v564
        %v725 = vpop.f32.mrf.mxu0
        %v726 = vadd.f32 %v294, %v725
        %v727 = vpop.f32.mrf.mxu0
        %v728 = vadd.f32 %v294, %v727
        %729 = vmatmul.bf16.gmra.mxu0 %v567
        %v730 = vpop.f32.mrf.mxu0
        %v731 = vadd.f32 %v294, %v730
        %v732 = vpop.f32.mrf.mxu0
        %v733 = vadd.f32 %v294, %v732
        %734 = vmatmul.bf16.gmra.mxu0 %v570
        %v735 = vpop.f32.mrf.mxu0
        %v736 = vadd.f32 %v294, %v735
        %v737 = vpop.f32.mrf.mxu0
        %v738 = vadd.f32 %v294, %v737
        %739 = vmatmul.bf16.gmra.mxu0 %v573
        %v740 = vpop.f32.mrf.mxu0
        %v741 = vadd.f32 %v294, %v740
        %v742 = vpop.f32.mrf.mxu0
        %v743 = vadd.f32 %v294, %v742
        %744 = vmatmul.bf16.gmra.mxu0 %v576
        %v745 = vpop.f32.mrf.mxu0
        %v746 = vadd.f32 %v294, %v745
        %v747 = vpop.f32.mrf.mxu0
        %v748 = vadd.f32 %v294, %v747
        %749 = vmatmul.bf16.gmra.mxu0 %v579
        %v750 = vpop.f32.mrf.mxu0
        %v751 = vadd.f32 %v294, %v750
        %v752 = vpop.f32.mrf.mxu0
        %v753 = vadd.f32 %v294, %v752
        %754 = vmatmul.bf16.gmra.mxu0 %v582
        %v755 = vpop.f32.mrf.mxu0
        %v756 = vadd.f32 %v294, %v755
        %v757 = vpop.f32.mrf.mxu0
        %v758 = vadd.f32 %v294, %v757
        %759 = vmatmul.bf16.gmra.mxu0 %v585
        %v760 = vpop.f32.mrf.mxu0
        %v761 = vadd.f32 %v294, %v760
        %v762 = vpop.f32.mrf.mxu0
        %v763 = vadd.f32 %v294, %v762
        %764 = vmatmul.bf16.gmra.mxu0 %v588
        %v765 = vpop.f32.mrf.mxu0
        %v766 = vadd.f32 %v294, %v765
        %v767 = vpop.f32.mrf.mxu0
        %v768 = vadd.f32 %v294, %v767
        %769 = vmatmul.bf16.gmra.mxu0 %v591
        %v770 = vpop.f32.mrf.mxu0
        %v771 = vadd.f32 %v294, %v770
        %v772 = vpop.f32.mrf.mxu0
        %v773 = vadd.f32 %v294, %v772
        %774 = vmatmul.bf16.gmra.mxu0 %v594
        %v775 = vpop.f32.mrf.mxu0
        %v776 = vadd.f32 %v294, %v775
        %v777 = vpop.f32.mrf.mxu0
        %v778 = vadd.f32 %v294, %v777
        %779 = vmatmul.bf16.gmra.mxu0 %v597
        %v780 = vpop.f32.mrf.mxu0
        %v781 = vadd.f32 %v294, %v780
        %v782 = vpop.f32.mrf.mxu0
        %v783 = vadd.f32 %v294, %v782
        %784 = vmatmul.bf16.gmra.mxu0 %v600
        %v785 = vpop.f32.mrf.mxu0
        %v786 = vadd.f32 %v294, %v785
        %v787 = vpop.f32.mrf.mxu0
        %v788 = vadd.f32 %v294, %v787
        %789 = vmatmul.bf16.gmra.mxu0 %v603
        %v790 = vpop.f32.mrf.mxu0
        %v791 = vadd.f32 %v294, %v790
        %v792 = vpop.f32.mrf.mxu0
        %v793 = vadd.f32 %v294, %v792
        %794 = vmatmul.bf16.gmra.mxu0 %v606
        %v795 = vpop.f32.mrf.mxu0
        %v796 = vadd.f32 %v294, %v795
        %v797 = vpop.f32.mrf.mxu0
        %v798 = vadd.f32 %v294, %v797
        %799 = vmatmul.bf16.gmra.mxu0 %v609
        %v800 = vpop.f32.mrf.mxu0
        %v801 = vadd.f32 %v294, %v800
        %v802 = vpop.f32.mrf.mxu0
        %v803 = vadd.f32 %v294, %v802
        %804 = vmatmul.bf16.gmra.mxu0 %v612
        %v805 = vpop.f32.mrf.mxu0
        %v806 = vadd.f32 %v294, %v805
        %v807 = vpop.f32.mrf.mxu0
        %v808 = vadd.f32 %v294, %v807
        %809 = vmatmul.bf16.gmra.mxu0 %v615
        %v810 = vpop.f32.mrf.mxu0
        %v811 = vadd.f32 %v294, %v810
        %v812 = vpop.f32.mrf.mxu0
        %v813 = vadd.f32 %v294, %v812
        %814 = vmatmul.bf16.gmra.mxu0 %v618
        %v815 = vpop.f32.mrf.mxu0
        %v816 = vadd.f32 %v294, %v815
        %v817 = vpop.f32.mrf.mxu0
        %v818 = vadd.f32 %v294, %v817
        %819 = vmatmul.bf16.gmra.mxu0 %v621
        %v820 = vpop.f32.mrf.mxu0
        %v821 = vadd.f32 %v294, %v820
        %v822 = vpop.f32.mrf.mxu0
        %v823 = vadd.f32 %v294, %v822
        %824 = vmatmul.bf16.gmra.mxu0 %v624
        %v825 = vpop.f32.mrf.mxu0
        %v826 = vadd.f32 %v294, %v825
        %v827 = vpop.f32.mrf.mxu0
        %v828 = vadd.f32 %v294, %v827
        %829 = vmatmul.bf16.gmra.mxu0 %v627
        %v830 = vpop.f32.mrf.mxu0
        %v831 = vadd.f32 %v294, %v830
        %v832 = vpop.f32.mrf.mxu0
        %v833 = vadd.f32 %v294, %v832
        %834 = vmatmul.bf16.gmra.mxu0 %v630
        %v835 = vpop.f32.mrf.mxu0
        %v836 = vadd.f32 %v294, %v835
        %v837 = vpop.f32.mrf.mxu0
        %v838 = vadd.f32 %v294, %v837
        %839 = vmatmul.bf16.gmra.mxu0 %v633
        %v840 = vpop.f32.mrf.mxu0
        %v841 = vadd.f32 %v294, %v840
        %v842 = vpop.f32.mrf.mxu0
        %v843 = vadd.f32 %v294, %v842
        %844 = vmatmul.bf16.gmra.mxu0 %v636
        %v845 = vpop.f32.mrf.mxu0
        %v846 = vadd.f32 %v294, %v845
        %v847 = vpop.f32.mrf.mxu0
        %v848 = vadd.f32 %v294, %v847
        %849 = vmatmul.bf16.gmra.mxu0 %v639
        %v850 = vpop.f32.mrf.mxu0
        %v851 = vadd.f32 %v294, %v850
        %v852 = vpop.f32.mrf.mxu0
        %v853 = vadd.f32 %v294, %v852
        %854 = vmatmul.bf16.gmra.mxu0 %v642
        %v855 = vpop.f32.mrf.mxu0
        %v856 = vadd.f32 %v294, %v855
        %v857 = vpop.f32.mrf.mxu0
        %v858 = vadd.f32 %v294, %v857
        %859 = vmatmul.bf16.gmra.mxu0 %v645
        %v860 = vpop.f32.mrf.mxu0
        %v861 = vadd.f32 %v294, %v860
        %v862 = vpop.f32.mrf.mxu0
        %v863 = vadd.f32 %v294, %v862
        %864 = vmatmul.bf16.gmra.mxu0 %v648
        %v865 = vpop.f32.mrf.mxu0
        %v866 = vadd.f32 %v294, %v865
        %v867 = vpop.f32.mrf.mxu0
        %v868 = vadd.f32 %v294, %v867
        %869 = vmatmul.bf16.gmra.mxu0 %v651
        %v870 = vpop.f32.mrf.mxu0
        %v871 = vadd.f32 %v294, %v870
        %v872 = vpop.f32.mrf.mxu0
        %v873 = vadd.f32 %v294, %v872
        %874 = vmatmul.bf16.gmra.mxu0 %v654
        %v875 = vpop.f32.mrf.mxu0
        %v876 = vadd.f32 %v294, %v875
        %v877 = vpop.f32.mrf.mxu0
        %v878 = vadd.f32 %v294, %v877
        %879 = vmatmul.bf16.gmra.mxu0 %v657
        %v880 = vpop.f32.mrf.mxu0
        %v881 = vadd.f32 %v294, %v880
        %v882 = vpop.f32.mrf.mxu0
        %v883 = vadd.f32 %v294, %v882
        %884 = vmatmul.bf16.gmra.mxu0 %v660
        %v885 = vpop.f32.mrf.mxu0
        %v886 = vadd.f32 %v294, %v885
        %v887 = vpop.f32.mrf.mxu0
        %v888 = vadd.f32 %v294, %v887
        %889 = vmatmul.bf16.gmra.mxu0 %v663
        %v890 = vpop.f32.mrf.mxu0
        %v891 = vadd.f32 %v294, %v890
        %v892 = vpop.f32.mrf.mxu0
        %v893 = vadd.f32 %v294, %v892
        %894 = vmatmul.bf16.gmra.mxu0 %v666
        %v895 = vpop.f32.mrf.mxu0
        %v896 = vadd.f32 %v294, %v895
        %v897 = vpop.f32.mrf.mxu0
        %v898 = vadd.f32 %v294, %v897
        %899 = vmatmul.bf16.gmra.mxu0 %v669
        %v900 = vpop.f32.mrf.mxu0
        %v901 = vadd.f32 %v294, %v900
        %v902 = vpop.f32.mrf.mxu0
        %v903 = vadd.f32 %v294, %v902
        %904 = vmatmul.bf16.gmra.mxu0 %v672
        %v905 = vpop.f32.mrf.mxu0
        %v906 = vadd.f32 %v294, %v905
        %v907 = vpop.f32.mrf.mxu0
        %v908 = vadd.f32 %v294, %v907
        %909 = vmatmul.bf16.gmra.mxu0 %v675
        %v910 = vpop.f32.mrf.mxu0
        %v911 = vadd.f32 %v294, %v910
        %v912 = vpop.f32.mrf.mxu0
        %v913 = vadd.f32 %v294, %v912
        %914 = vmatmul.bf16.gmra.mxu0 %v678
        %v915 = vpop.f32.mrf.mxu0
        %v916 = vadd.f32 %v294, %v915
        %v917 = vpop.f32.mrf.mxu0
        %v918 = vadd.f32 %v294, %v917
        %919 = vmatmul.bf16.gmra.mxu0 %v681
        %v920 = vpop.f32.mrf.mxu0
        %v921 = vadd.f32 %v294, %v920
        %v922 = vpop.f32.mrf.mxu0
        %v923 = vadd.f32 %v294, %v922
        %924 = vmatmul.bf16.gmra.mxu0 %v684
        %v925 = vpop.f32.mrf.mxu0
        %v926 = vadd.f32 %v294, %v925
        %v927 = vpop.f32.mrf.mxu0
        %v928 = vadd.f32 %v294, %v927
        %929 = vmatmul.bf16.gmra.mxu0 %v687
        %v930 = vpop.f32.mrf.mxu0
        %v931 = vadd.f32 %v294, %v930
        %v932 = vpop.f32.mrf.mxu0
        %v933 = vadd.f32 %v294, %v932
        %934 = vmatmul.bf16.gmra.mxu0 %v690
        %v935 = vpop.f32.mrf.mxu0
        %v936 = vadd.f32 %v294, %v935
        %v937 = vpop.f32.mrf.mxu0
        %v938 = vadd.f32 %v294, %v937
        %939 = vmatmul.bf16.gmra.mxu0 %v693
        %v940 = vpop.f32.mrf.mxu0
        %v941 = vadd.f32 %v294, %v940
        %v942 = vpop.f32.mrf.mxu0
        %v943 = vadd.f32 %v294, %v942
        %944 = vmatmul.bf16.gmra.mxu0 %v696
        %v945 = vpop.f32.mrf.mxu0
        %v946 = vadd.f32 %v294, %v945
        %v947 = vpop.f32.mrf.mxu0
        %v948 = vadd.f32 %v294, %v947
        %949 = vmatmul.bf16.gmra.mxu0 %v699
        %v950 = vpop.f32.mrf.mxu0
        %v951 = vadd.f32 %v294, %v950
        %v952 = vpop.f32.mrf.mxu0
        %v953 = vadd.f32 %v294, %v952
        %954 = vdwg.mxu0
        %955 = vst.msk [vmem:[%s187] sm:$0xff] %vm553, %v711
        %956 = vst.msk [vmem:[%s187 + $0x8] sm:$0xff] %vm553, %v713
        %957 = vst.msk [vmem:[%s187 + $0x10] sm:$0xff] %vm553, %v716
        %958 = vst.msk [vmem:[%s187 + $0x18] sm:$0xff] %vm553, %v718
        %959 = vst.msk [vmem:[%s187 + $0x20] sm:$0xff] %vm553, %v721
        %960 = vst.msk [vmem:[%s187 + $0x28] sm:$0xff] %vm553, %v723
        %961 = vst.msk [vmem:[%s187 + $0x30] sm:$0xff] %vm553, %v726
        %962 = vst.msk [vmem:[%s187 + $0x38] sm:$0xff] %vm553, %v728
        %963 = vst.msk [vmem:[%s187 + $0x40] sm:$0xff] %vm553, %v731
        %964 = vst.msk [vmem:[%s187 + $0x48] sm:$0xff] %vm553, %v733
        %965 = vst.msk [vmem:[%s187 + $0x50] sm:$0xff] %vm553, %v736
        %966 = vst.msk [vmem:[%s187 + $0x58] sm:$0xff] %vm553, %v738
        %967 = vst.msk [vmem:[%s187 + $0x60] sm:$0xff] %vm553, %v741
        %968 = vst.msk [vmem:[%s187 + $0x68] sm:$0xff] %vm553, %v743
        %969 = vst.msk [vmem:[%s187 + $0x70] sm:$0xff] %vm553, %v746
        %970 = vst.msk [vmem:[%s187 + $0x78] sm:$0xff] %vm553, %v748
        %971 = vst.msk [vmem:[%s187 + $0x80] sm:$0xff] %vm553, %v751
        %972 = vst.msk [vmem:[%s187 + $0x88] sm:$0xff] %vm553, %v753
        %973 = vst.msk [vmem:[%s187 + $0x90] sm:$0xff] %vm553, %v756
        %974 = vst.msk [vmem:[%s187 + $0x98] sm:$0xff] %vm553, %v758
        %975 = vst.msk [vmem:[%s187 + $0xa0] sm:$0xff] %vm553, %v761
        %976 = vst.msk [vmem:[%s187 + $0xa8] sm:$0xff] %vm553, %v763
        %977 = vst.msk [vmem:[%s187 + $0xb0] sm:$0xff] %vm553, %v766
        %978 = vst.msk [vmem:[%s187 + $0xb8] sm:$0xff] %vm553, %v768
        %979 = vst.msk [vmem:[%s187 + $0xc0] sm:$0xff] %vm553, %v771
        %980 = vst.msk [vmem:[%s187 + $0xc8] sm:$0xff] %vm553, %v773
        %981 = vst.msk [vmem:[%s187 + $0xd0] sm:$0xff] %vm553, %v776
        %982 = vst.msk [vmem:[%s187 + $0xd8] sm:$0xff] %vm553, %v778
        %983 = vst.msk [vmem:[%s187 + $0xe0] sm:$0xff] %vm553, %v781
        %984 = vst.msk [vmem:[%s187 + $0xe8] sm:$0xff] %vm553, %v783
        %985 = vst.msk [vmem:[%s187 + $0xf0] sm:$0xff] %vm553, %v786
        %986 = vst.msk [vmem:[%s187 + $0xf8] sm:$0xff] %vm553, %v788
        %987 = vst.msk [vmem:[%s187 + $0x100] sm:$0xff] %vm553, %v791
        %988 = vst.msk [vmem:[%s187 + $0x108] sm:$0xff] %vm553, %v793
        %989 = vst.msk [vmem:[%s187 + $0x110] sm:$0xff] %vm553, %v796
        %990 = vst.msk [vmem:[%s187 + $0x118] sm:$0xff] %vm553, %v798
        %991 = vst.msk [vmem:[%s187 + $0x120] sm:$0xff] %vm553, %v801
        %992 = vst.msk [vmem:[%s187 + $0x128] sm:$0xff] %vm553, %v803
        %993 = vst.msk [vmem:[%s187 + $0x130] sm:$0xff] %vm553, %v806
        %994 = vst.msk [vmem:[%s187 + $0x138] sm:$0xff] %vm553, %v808
        %995 = vst.msk [vmem:[%s187 + $0x140] sm:$0xff] %vm553, %v811
        %996 = vst.msk [vmem:[%s187 + $0x148] sm:$0xff] %vm553, %v813
        %997 = vst.msk [vmem:[%s187 + $0x150] sm:$0xff] %vm553, %v816
        %998 = vst.msk [vmem:[%s187 + $0x158] sm:$0xff] %vm553, %v818
        %999 = vst.msk [vmem:[%s187 + $0x160] sm:$0xff] %vm553, %v821
        %1000 = vst.msk [vmem:[%s187 + $0x168] sm:$0xff] %vm553, %v823
        %1001 = vst.msk [vmem:[%s187 + $0x170] sm:$0xff] %vm553, %v826
        %1002 = vst.msk [vmem:[%s187 + $0x178] sm:$0xff] %vm553, %v828
        %1003 = vst.msk [vmem:[%s187 + $0x180] sm:$0xff] %vm553, %v831
        %1004 = vst.msk [vmem:[%s187 + $0x188] sm:$0xff] %vm553, %v833
        %1005 = vst.msk [vmem:[%s187 + $0x190] sm:$0xff] %vm553, %v836
        %1006 = vst.msk [vmem:[%s187 + $0x198] sm:$0xff] %vm553, %v838
        %1007 = vst.msk [vmem:[%s187 + $0x1a0] sm:$0xff] %vm553, %v841
        %1008 = vst.msk [vmem:[%s187 + $0x1a8] sm:$0xff] %vm553, %v843
        %1009 = vst.msk [vmem:[%s187 + $0x1b0] sm:$0xff] %vm553, %v846
        %1010 = vst.msk [vmem:[%s187 + $0x1b8] sm:$0xff] %vm553, %v848
        %1011 = vst.msk [vmem:[%s187 + $0x1c0] sm:$0xff] %vm553, %v851
        %1012 = vst.msk [vmem:[%s187 + $0x1c8] sm:$0xff] %vm553, %v853
        %1013 = vst.msk [vmem:[%s187 + $0x1d0] sm:$0xff] %vm553, %v856
        %1014 = vst.msk [vmem:[%s187 + $0x1d8] sm:$0xff] %vm553, %v858
        %1015 = vst.msk [vmem:[%s187 + $0x1e0] sm:$0xff] %vm553, %v861
        %1016 = vst.msk [vmem:[%s187 + $0x1e8] sm:$0xff] %vm553, %v863
        %1017 = vst.msk [vmem:[%s187 + $0x1f0] sm:$0xff] %vm553, %v866
        %1018 = vst.msk [vmem:[%s187 + $0x1f8] sm:$0xff] %vm553, %v868
        %1019 = vst.msk [vmem:[%s187 + $0x200] sm:$0xff] %vm553, %v871
        %1020 = vst.msk [vmem:[%s187 + $0x208] sm:$0xff] %vm553, %v873
        %1021 = vst.msk [vmem:[%s187 + $0x210] sm:$0xff] %vm553, %v876
        %1022 = vst.msk [vmem:[%s187 + $0x218] sm:$0xff] %vm553, %v878
        %1023 = vst.msk [vmem:[%s187 + $0x220] sm:$0xff] %vm553, %v881
        %1024 = vst.msk [vmem:[%s187 + $0x228] sm:$0xff] %vm553, %v883
        %1025 = vst.msk [vmem:[%s187 + $0x230] sm:$0xff] %vm553, %v886
        %1026 = vst.msk [vmem:[%s187 + $0x238] sm:$0xff] %vm553, %v888
        %1027 = vst.msk [vmem:[%s187 + $0x240] sm:$0xff] %vm553, %v891
        %1028 = vst.msk [vmem:[%s187 + $0x248] sm:$0xff] %vm553, %v893
        %1029 = vst.msk [vmem:[%s187 + $0x250] sm:$0xff] %vm553, %v896
        %1030 = vst.msk [vmem:[%s187 + $0x258] sm:$0xff] %vm553, %v898
        %1031 = vst.msk [vmem:[%s187 + $0x260] sm:$0xff] %vm553, %v901
        %1032 = vst.msk [vmem:[%s187 + $0x268] sm:$0xff] %vm553, %v903
        %1033 = vst.msk [vmem:[%s187 + $0x270] sm:$0xff] %vm553, %v906
        %1034 = vst.msk [vmem:[%s187 + $0x278] sm:$0xff] %vm553, %v908
        %1035 = vst.msk [vmem:[%s187 + $0x280] sm:$0xff] %vm553, %v911
        %1036 = vst.msk [vmem:[%s187 + $0x288] sm:$0xff] %vm553, %v913
        %1037 = vst.msk [vmem:[%s187 + $0x290] sm:$0xff] %vm553, %v916
        %1038 = vst.msk [vmem:[%s187 + $0x298] sm:$0xff] %vm553, %v918
        %1039 = vst.msk [vmem:[%s187 + $0x2a0] sm:$0xff] %vm553, %v921
        %1040 = vst.msk [vmem:[%s187 + $0x2a8] sm:$0xff] %vm553, %v923
        %1041 = vst.msk [vmem:[%s187 + $0x2b0] sm:$0xff] %vm553, %v926
        %1042 = vst.msk [vmem:[%s187 + $0x2b8] sm:$0xff] %vm553, %v928
        %1043 = vst.msk [vmem:[%s187 + $0x2c0] sm:$0xff] %vm553, %v931
        %1044 = vst.msk [vmem:[%s187 + $0x2c8] sm:$0xff] %vm553, %v933
        %1045 = vst.msk [vmem:[%s187 + $0x2d0] sm:$0xff] %vm553, %v936
        %1046 = vst.msk [vmem:[%s187 + $0x2d8] sm:$0xff] %vm553, %v938
        %1047 = vst.msk [vmem:[%s187 + $0x2e0] sm:$0xff] %vm553, %v941
        %1048 = vst.msk [vmem:[%s187 + $0x2e8] sm:$0xff] %vm553, %v943
        %1049 = vst.msk [vmem:[%s187 + $0x2f0] sm:$0xff] %vm553, %v946
        %1050 = vst.msk [vmem:[%s187 + $0x2f8] sm:$0xff] %vm553, %v948
        %1051 = vst.msk [vmem:[%s187 + $0x300] sm:$0xff] %vm553, %v951
        %1052 = vst.msk [vmem:[%s187 + $0x308] sm:$0xff] %vm553, %v953
        %s1053 = smul.u32 98, %s15
        %p1054 = scmp.lt.s32.totalorder %s1053, 195
        %s1055 = scalar_select %p1054, %s1053, 195
        %s1056 = smul.addr %s1055, 8
        %s1057 = scalar_lea.vmem %s3, %s1056
        // Predicated region
        $region37: #{pathfinder_forward.5} parent=31 // pred_check
          %p1058 = pneg %p101
        $region38: #{pathfinder_forward.5} parent=31 // pred_check_branch
          %1060 = sbr.rel (%p1058) target = $region40
        $region39: #{pathfinder_forward.5} parent=31 // pred_region
          %s1061 = smul.u32 98, %s15
        $region40: #{pathfinder_forward.5} parent=31 // pred_fallthru
          _
      $region32: #{pathfinder_forward.5} parent=5 // pred_fallthru
        _
      %p1062 = scmp.le.s32.totalorder 2, %s10
      // Predicated region
      $region41: #{pathfinder_forward.5} parent=5 // pred_check
        %p1063 = pneg %p1062
      $region42: #{pathfinder_forward.5} parent=5 // pred_check_branch
        %1065 = sbr.rel (%p1063) target = $region44
      $region43: #{pathfinder_forward.5} parent=5 // pred_region
        %s1066 = ssub.s32 %s10, 2
        // Predicated region
        $region45: #{pathfinder_forward.5} parent=43 // pred_check
          %p1067 = pneg %p107
        $region46: #{pathfinder_forward.5} parent=43 // pred_check_branch
          %1069 = sbr.rel (%p1067) target = $region48
        $region47: #{pathfinder_forward.5} parent=43 // pred_region
          %s1070 = smul.u32 98, %s16
          %p1071 = scmp.lt.s32.totalorder %s1070, 195
          %s1072 = scalar_select %p1071, %s1070, 195
          %s1073 = smul.addr %s1072, 8
          %s1074 = scalar_lea.vmem %s3, %s1073
        $region48: #{pathfinder_forward.5} parent=43 // pred_fallthru
          _
      $region44: #{pathfinder_forward.5} parent=5 // pred_fallthru
        _
    $region6: #{pathfinder_forward.5} parent=1 // loop_footer
      %s14 = sadd.s32 1, %s10
    $region7: #{pathfinder_forward.5} parent=1 // loop_footer_branch
      %9 = sbr.rel target = $region3
    $region8: #{pathfinder_forward.5} parent=1 // loop_exit
      _
    %1075 = vsyncpa [#allocation3], 1
    %s1076 = scalar_lea.sflag [#allocation3], 1
    %1077 = vsyncpa %s1076, 1

// kernel: pathfinder_forward.7
$region0: #{pathfinder_forward.7}
  #allocation0 [shape = 'u32[]', space=smem, size = 0x4, offset = 0x4, fixed_abs, tag = 'smem constant byte address 0x4 - core index']
  #allocation1 [shape = 'u32[72,128]{1,0:T(1,128)}', space=vmem, size = 0x9000, scoped, tag = 'internal scratch']
  %s0 = inlined_call_operand.vmem [shape: bf16[128,800], index: 0, kind: input, shape index: {}]
  %s1 = inlined_call_operand.vmem [shape: bf16[800,64], index: 1, kind: input, shape index: {}]
  %s2 = inlined_call_operand.vmem [shape: f32[1,64], index: 2, kind: input, shape index: {}]
  %s3 = inlined_call_operand.vmem [shape: f32[128,64], index: 3, kind: output, shape index: {}]
  %s4 = sld [smem:[#allocation0]]
  $region22: #{pathfinder_forward.7} parent=0
    _
  %s6 = ssub.s32 1, %s4
  %s7 = scalar_select 0, %s6, %s4
  // Predicated region
  $region2: #{pathfinder_forward.7} parent=0 // pred_check
    _
  $region3: #{pathfinder_forward.7} parent=0 // pred_check_branch
    %9 = sbr.rel (0) target = $region5
  $region4: #{pathfinder_forward.7} parent=0 // pred_region
    _
  $region5: #{pathfinder_forward.7} parent=0 // pred_fallthru
    _
  // Predicated region
  $region6: #{pathfinder_forward.7} parent=0 // pred_check
    _
  $region7: #{pathfinder_forward.7} parent=0 // pred_check_branch
    %11 = sbr.rel (0) target = $region9
  $region8: #{pathfinder_forward.7} parent=0 // pred_region
    _
  $region9: #{pathfinder_forward.7} parent=0 // pred_fallthru
    _
  // Predicated region
  $region10: #{pathfinder_forward.7} parent=0 // pred_check
    _
  $region11: #{pathfinder_forward.7} parent=0 // pred_check_branch
    %13 = sbr.rel (0) target = $region13
  $region12: #{pathfinder_forward.7} parent=0 // pred_region
    _
  $region13: #{pathfinder_forward.7} parent=0 // pred_fallthru
    _
  %v15 = vld [vmem:[%s0] sm:$0xff]
  %v16 = vld [vmem:[%s0 + $0x8] sm:$0xff]
  %v17 = vld [vmem:[%s0 + $0x10] sm:$0xff]
  %v18 = vld [vmem:[%s0 + $0x18] sm:$0xf]
  %v19 = vld [vmem:[%s0 + $0x1c] sm:$0xff]
  %v20 = vld [vmem:[%s0 + $0x24] sm:$0xff]
  %v21 = vld [vmem:[%s0 + $0x2c] sm:$0xff]
  %v22 = vld [vmem:[%s0 + $0x34] sm:$0xf]
  %v23 = vld [vmem:[%s0 + $0x38] sm:$0xff]
  %v24 = vld [vmem:[%s0 + $0x40] sm:$0xff]
  %v25 = vld [vmem:[%s0 + $0x48] sm:$0xff]
  %v26 = vld [vmem:[%s0 + $0x50] sm:$0xf]
  %v27 = vld [vmem:[%s0 + $0x54] sm:$0xff]
  %v28 = vld [vmem:[%s0 + $0x5c] sm:$0xff]
  %v29 = vld [vmem:[%s0 + $0x64] sm:$0xff]
  %v30 = vld [vmem:[%s0 + $0x6c] sm:$0xf]
  %v31 = vld [vmem:[%s0 + $0x70] sm:$0xff]
  %v32 = vld [vmem:[%s0 + $0x78] sm:$0xff]
  %v33 = vld [vmem:[%s0 + $0x80] sm:$0xff]
  %v34 = vld [vmem:[%s0 + $0x88] sm:$0xf]
  %v35 = vld [vmem:[%s0 + $0x8c] sm:$0xff]
  %v36 = vld [vmem:[%s0 + $0x94] sm:$0xff]
  %v37 = vld [vmem:[%s0 + $0x9c] sm:$0xff]
  %v38 = vld [vmem:[%s0 + $0xa4] sm:$0xf]
  %v39 = vld [vmem:[%s0 + $0xa8] sm:$0xff]
  %v40 = vld [vmem:[%s0 + $0xb0] sm:$0xff]
  %v41 = vld [vmem:[%s0 + $0xb8] sm:$0xff]
  %v42 = vld [vmem:[%s0 + $0xc0] sm:$0xf]
  %v43 = vld [vmem:[%s0 + $0xc4] sm:$0xff]
  %v44 = vld [vmem:[%s0 + $0xcc] sm:$0xff]
  %v45 = vld [vmem:[%s0 + $0xd4] sm:$0xff]
  %v46 = vld [vmem:[%s0 + $0xdc] sm:$0xf]
  %v47 = vld [vmem:[%s0 + $0xe0] sm:$0xff]
  %v48 = vld [vmem:[%s0 + $0xe8] sm:$0xff]
  %v49 = vld [vmem:[%s0 + $0xf0] sm:$0xff]
  %v50 = vld [vmem:[%s0 + $0xf8] sm:$0xf]
  %v51 = vld [vmem:[%s0 + $0xfc] sm:$0xff]
  %v52 = vld [vmem:[%s0 + $0x104] sm:$0xff]
  %v53 = vld [vmem:[%s0 + $0x10c] sm:$0xff]
  %v54 = vld [vmem:[%s0 + $0x114] sm:$0xf]
  %v55 = vld [vmem:[%s0 + $0x118] sm:$0xff]
  %v56 = vld [vmem:[%s0 + $0x120] sm:$0xff]
  %v57 = vld [vmem:[%s0 + $0x128] sm:$0xff]
  %v58 = vld [vmem:[%s0 + $0x130] sm:$0xf]
  %v59 = vld [vmem:[%s0 + $0x134] sm:$0xff]
  %v60 = vld [vmem:[%s0 + $0x13c] sm:$0xff]
  %v61 = vld [vmem:[%s0 + $0x144] sm:$0xff]
  %v62 = vld [vmem:[%s0 + $0x14c] sm:$0xf]
  %v63 = vld [vmem:[%s0 + $0x150] sm:$0xff]
  %v64 = vld [vmem:[%s0 + $0x158] sm:$0xff]
  %v65 = vld [vmem:[%s0 + $0x160] sm:$0xff]
  %v66 = vld [vmem:[%s0 + $0x168] sm:$0xf]
  %v67 = vld [vmem:[%s0 + $0x16c] sm:$0xff]
  %v68 = vld [vmem:[%s0 + $0x174] sm:$0xff]
  %v69 = vld [vmem:[%s0 + $0x17c] sm:$0xff]
  %v70 = vld [vmem:[%s0 + $0x184] sm:$0xf]
  %v71 = vld [vmem:[%s0 + $0x188] sm:$0xff]
  %v72 = vld [vmem:[%s0 + $0x190] sm:$0xff]
  %v73 = vld [vmem:[%s0 + $0x198] sm:$0xff]
  %v74 = vld [vmem:[%s0 + $0x1a0] sm:$0xf]
  %v75 = vld [vmem:[%s0 + $0x1a4] sm:$0xff]
  %v76 = vld [vmem:[%s0 + $0x1ac] sm:$0xff]
  %v77 = vld [vmem:[%s0 + $0x1b4] sm:$0xff]
  %v78 = vld [vmem:[%s0 + $0x1bc] sm:$0xf]
  %v79 = vld [vmem:[%s1] sm:$0xf]
  %v80 = vld [vmem:[%s1 + $0x4] sm:$0xf]
  %v81 = vld [vmem:[%s1 + $0x8] sm:$0xf]
  %v82 = vld [vmem:[%s1 + $0xc] sm:$0xf]
  %v83 = vld [vmem:[%s1 + $0x10] sm:$0xf]
  %v84 = vld [vmem:[%s1 + $0x14] sm:$0xf]
  %v85 = vld [vmem:[%s1 + $0x18] sm:$0xf]
  %v86 = vld [vmem:[%s1 + $0x1c] sm:$0xf]
  %v87 = vld [vmem:[%s1 + $0x20] sm:$0xf]
  %v88 = vld [vmem:[%s1 + $0x24] sm:$0xf]
  %v89 = vld [vmem:[%s1 + $0x28] sm:$0xf]
  %v90 = vld [vmem:[%s1 + $0x2c] sm:$0xf]
  %v91 = vld [vmem:[%s1 + $0x30] sm:$0xf]
  %v92 = vld [vmem:[%s1 + $0x34] sm:$0xf]
  %v93 = vld [vmem:[%s1 + $0x38] sm:$0xf]
  %v94 = vld [vmem:[%s1 + $0x3c] sm:$0xf]
  %v95 = vld [vmem:[%s1 + $0x40] sm:$0xf]
  %v96 = vld [vmem:[%s1 + $0x44] sm:$0xf]
  %v97 = vld [vmem:[%s1 + $0x48] sm:$0xf]
  %v98 = vld [vmem:[%s1 + $0x4c] sm:$0xf]
  %v99 = vld [vmem:[%s1 + $0x50] sm:$0xf]
  %v100 = vld [vmem:[%s1 + $0x54] sm:$0xf]
  %v101 = vld [vmem:[%s1 + $0x58] sm:$0xf]
  %v102 = vld [vmem:[%s1 + $0x5c] sm:$0xf]
  %v103 = vld [vmem:[%s1 + $0x60] sm:$0xf]
  %v104 = vld [vmem:[%s1 + $0x64] sm:$0xf]
  %v105 = vld [vmem:[%s1 + $0x68] sm:$0xf]
  %v106 = vld [vmem:[%s1 + $0x6c] sm:$0xf]
  %v107 = vld [vmem:[%s1 + $0x70] sm:$0xf]
  %v108 = vld [vmem:[%s1 + $0x74] sm:$0xf]
  %v109 = vld [vmem:[%s1 + $0x78] sm:$0xf]
  %v110 = vld [vmem:[%s1 + $0x7c] sm:$0xf]
  %v111 = vld [vmem:[%s1 + $0x80] sm:$0xf]
  %v112 = vld [vmem:[%s1 + $0x84] sm:$0xf]
  %v113 = vld [vmem:[%s1 + $0x88] sm:$0xf]
  %v114 = vld [vmem:[%s1 + $0x8c] sm:$0xf]
  %v115 = vld [vmem:[%s1 + $0x90] sm:$0xf]
  %v116 = vld [vmem:[%s1 + $0x94] sm:$0xf]
  %v117 = vld [vmem:[%s1 + $0x98] sm:$0xf]
  %v118 = vld [vmem:[%s1 + $0x9c] sm:$0xf]
  %v119 = vld [vmem:[%s1 + $0xa0] sm:$0xf]
  %v120 = vld [vmem:[%s1 + $0xa4] sm:$0xf]
  %v121 = vld [vmem:[%s1 + $0xa8] sm:$0xf]
  %v122 = vld [vmem:[%s1 + $0xac] sm:$0xf]
  %v123 = vld [vmem:[%s1 + $0xb0] sm:$0xf]
  %v124 = vld [vmem:[%s1 + $0xb4] sm:$0xf]
  %v125 = vld [vmem:[%s1 + $0xb8] sm:$0xf]
  %v126 = vld [vmem:[%s1 + $0xbc] sm:$0xf]
  %v127 = vld [vmem:[%s1 + $0xc0] sm:$0xf]
  %v128 = vld [vmem:[%s1 + $0xc4] sm:$0xf]
  %v129 = vld [vmem:[%s1 + $0xc8] sm:$0xf]
  %v130 = vld [vmem:[%s1 + $0xcc] sm:$0xf]
  %v131 = vld [vmem:[%s1 + $0xd0] sm:$0xf]
  %v132 = vld [vmem:[%s1 + $0xd4] sm:$0xf]
  %v133 = vld [vmem:[%s1 + $0xd8] sm:$0xf]
  %v134 = vld [vmem:[%s1 + $0xdc] sm:$0xf]
  %v135 = vld [vmem:[%s1 + $0xe0] sm:$0xf]
  %v136 = vld [vmem:[%s1 + $0xe4] sm:$0xf]
  %v137 = vld [vmem:[%s1 + $0xe8] sm:$0xf]
  %v138 = vld [vmem:[%s1 + $0xec] sm:$0xf]
  %v139 = vld [vmem:[%s1 + $0xf0] sm:$0xf]
  %v140 = vld [vmem:[%s1 + $0xf4] sm:$0xf]
  %v141 = vld [vmem:[%s1 + $0xf8] sm:$0xf]
  %v142 = vld [vmem:[%s1 + $0xfc] sm:$0xf]
  %v143 = vld [vmem:[%s1 + $0x100] sm:$0xf]
  %v144 = vld [vmem:[%s1 + $0x104] sm:$0xf]
  %v145 = vld [vmem:[%s1 + $0x108] sm:$0xf]
  %v146 = vld [vmem:[%s1 + $0x10c] sm:$0xf]
  %v147 = vld [vmem:[%s1 + $0x110] sm:$0xf]
  %v148 = vld [vmem:[%s1 + $0x114] sm:$0xf]
  %v149 = vld [vmem:[%s1 + $0x118] sm:$0xf]
  %v150 = vld [vmem:[%s1 + $0x11c] sm:$0xf]
  %v151 = vld [vmem:[%s1 + $0x120] sm:$0xf]
  %v152 = vld [vmem:[%s1 + $0x124] sm:$0xf]
  %v153 = vld [vmem:[%s1 + $0x128] sm:$0xf]
  %v154 = vld [vmem:[%s1 + $0x12c] sm:$0xf]
  %v155 = vld [vmem:[%s1 + $0x130] sm:$0xf]
  %v156 = vld [vmem:[%s1 + $0x134] sm:$0xf]
  %v157 = vld [vmem:[%s1 + $0x138] sm:$0xf]
  %v158 = vld [vmem:[%s1 + $0x13c] sm:$0xf]
  %v159 = vld [vmem:[%s1 + $0x140] sm:$0xf]
  %v160 = vld [vmem:[%s1 + $0x144] sm:$0xf]
  %v161 = vld [vmem:[%s1 + $0x148] sm:$0xf]
  %v162 = vld [vmem:[%s1 + $0x14c] sm:$0xf]
  %v163 = vld [vmem:[%s1 + $0x150] sm:$0xf]
  %v164 = vld [vmem:[%s1 + $0x154] sm:$0xf]
  %v165 = vld [vmem:[%s1 + $0x158] sm:$0xf]
  %v166 = vld [vmem:[%s1 + $0x15c] sm:$0xf]
  %v167 = vld [vmem:[%s1 + $0x160] sm:$0xf]
  %v168 = vld [vmem:[%s1 + $0x164] sm:$0xf]
  %v169 = vld [vmem:[%s1 + $0x168] sm:$0xf]
  %v170 = vld [vmem:[%s1 + $0x16c] sm:$0xf]
  %v171 = vld [vmem:[%s1 + $0x170] sm:$0xf]
  %v172 = vld [vmem:[%s1 + $0x174] sm:$0xf]
  %v173 = vld [vmem:[%s1 + $0x178] sm:$0xf]
  %v174 = vld [vmem:[%s1 + $0x17c] sm:$0xf]
  %v175 = vld [vmem:[%s1 + $0x180] sm:$0xf]
  %v176 = vld [vmem:[%s1 + $0x184] sm:$0xf]
  %v177 = vld [vmem:[%s1 + $0x188] sm:$0xf]
  %v178 = vld [vmem:[%s1 + $0x18c] sm:$0xf]
  %v179 = vld [vmem:[%s2] sm:$0x1]
  %v181 = vperm.slane %v179, 0
  %v247 = vunpack.c.l.b16 %v15
  %v248 = vunpack.c.h.b16 %v15
  %v249 = vunpack.c.l.b16 %v16
  %v250 = vunpack.c.h.b16 %v16
  %v251 = vunpack.c.l.b16 %v17
  %v252 = vunpack.c.h.b16 %v17
  %v253 = vunpack.c.l.b16 %v18
  %v254 = vunpack.c.l.b16 %v19
  %v255 = vunpack.c.h.b16 %v19
  %v256 = vunpack.c.l.b16 %v20
  %v257 = vunpack.c.h.b16 %v20
  %v258 = vunpack.c.l.b16 %v21
  %v259 = vunpack.c.h.b16 %v21
  %v260 = vunpack.c.l.b16 %v22
  %v261 = vunpack.c.l.b16 %v23
  %v262 = vunpack.c.h.b16 %v23
  %v263 = vunpack.c.l.b16 %v24
  %v264 = vunpack.c.h.b16 %v24
  %v265 = vunpack.c.l.b16 %v25
  %v266 = vunpack.c.h.b16 %v25
  %v267 = vunpack.c.l.b16 %v26
  %v268 = vunpack.c.l.b16 %v27
  %v269 = vunpack.c.h.b16 %v27
  %v270 = vunpack.c.l.b16 %v28
  %v271 = vunpack.c.h.b16 %v28
  %v272 = vunpack.c.l.b16 %v29
  %v273 = vunpack.c.h.b16 %v29
  %v274 = vunpack.c.l.b16 %v30
  %v275 = vunpack.c.l.b16 %v31
  %v276 = vunpack.c.h.b16 %v31
  %v277 = vunpack.c.l.b16 %v32
  %v278 = vunpack.c.h.b16 %v32
  %v279 = vunpack.c.l.b16 %v33
  %v280 = vunpack.c.h.b16 %v33
  %v281 = vunpack.c.l.b16 %v34
  %v282 = vunpack.c.l.b16 %v35
  %v283 = vunpack.c.h.b16 %v35
  %v284 = vunpack.c.l.b16 %v36
  %v285 = vunpack.c.h.b16 %v36
  %v286 = vunpack.c.l.b16 %v37
  %v287 = vunpack.c.h.b16 %v37
  %v288 = vunpack.c.l.b16 %v38
  %v289 = vunpack.c.l.b16 %v39
  %v290 = vunpack.c.h.b16 %v39
  %v291 = vunpack.c.l.b16 %v40
  %v292 = vunpack.c.h.b16 %v40
  %v293 = vunpack.c.l.b16 %v41
  %v294 = vunpack.c.h.b16 %v41
  %v295 = vunpack.c.l.b16 %v42
  %v296 = vunpack.c.l.b16 %v43
  %v297 = vunpack.c.h.b16 %v43
  %v298 = vunpack.c.l.b16 %v44
  %v299 = vunpack.c.h.b16 %v44
  %v300 = vunpack.c.l.b16 %v45
  %v301 = vunpack.c.h.b16 %v45
  %v302 = vunpack.c.l.b16 %v46
  %v303 = vunpack.c.l.b16 %v47
  %v304 = vunpack.c.h.b16 %v47
  %v305 = vunpack.c.l.b16 %v48
  %v306 = vunpack.c.h.b16 %v48
  %v307 = vunpack.c.l.b16 %v49
  %v308 = vunpack.c.h.b16 %v49
  %v309 = vunpack.c.l.b16 %v50
  %v310 = vunpack.c.l.b16 %v51
  %v311 = vunpack.c.h.b16 %v51
  %v312 = vunpack.c.l.b16 %v52
  %v313 = vunpack.c.h.b16 %v52
  %v314 = vunpack.c.l.b16 %v53
  %v315 = vunpack.c.h.b16 %v53
  %v316 = vunpack.c.l.b16 %v54
  %v317 = vunpack.c.l.b16 %v55
  %v318 = vunpack.c.h.b16 %v55
  %v319 = vunpack.c.l.b16 %v56
  %v320 = vunpack.c.h.b16 %v56
  %v321 = vunpack.c.l.b16 %v57
  %v322 = vunpack.c.h.b16 %v57
  %v323 = vunpack.c.l.b16 %v58
  %v324 = vunpack.c.l.b16 %v59
  %v325 = vunpack.c.h.b16 %v59
  %v326 = vunpack.c.l.b16 %v60
  %v327 = vunpack.c.h.b16 %v60
  %v328 = vunpack.c.l.b16 %v61
  %v329 = vunpack.c.h.b16 %v61
  %v330 = vunpack.c.l.b16 %v62
  %v331 = vunpack.c.l.b16 %v63
  %v332 = vunpack.c.h.b16 %v63
  %v333 = vunpack.c.l.b16 %v64
  %v334 = vunpack.c.h.b16 %v64
  %v335 = vunpack.c.l.b16 %v65
  %v336 = vunpack.c.h.b16 %v65
  %v337 = vunpack.c.l.b16 %v66
  %v338 = vunpack.c.l.b16 %v67
  %v339 = vunpack.c.h.b16 %v67
  %v340 = vunpack.c.l.b16 %v68
  %v341 = vunpack.c.h.b16 %v68
  %v342 = vunpack.c.l.b16 %v69
  %v343 = vunpack.c.h.b16 %v69
  %v344 = vunpack.c.l.b16 %v70
  %v345 = vunpack.c.l.b16 %v71
  %v346 = vunpack.c.h.b16 %v71
  %v347 = vunpack.c.l.b16 %v72
  %v348 = vunpack.c.h.b16 %v72
  %v349 = vunpack.c.l.b16 %v73
  %v350 = vunpack.c.h.b16 %v73
  %v351 = vunpack.c.l.b16 %v74
  %v352 = vunpack.c.l.b16 %v75
  %v353 = vunpack.c.h.b16 %v75
  %v354 = vunpack.c.l.b16 %v76
  %v355 = vunpack.c.h.b16 %v76
  %v356 = vunpack.c.l.b16 %v77
  %v357 = vunpack.c.h.b16 %v77
  %v358 = vunpack.c.l.b16 %v78
  %v359 = vpack.c.b16 %v254, %v247
  %v360 = vpack.c.b16 %v255, %v248
  %v361 = vpack.c.b16 %v256, %v249
  %v362 = vpack.c.b16 %v257, %v250
  %v363 = vpack.c.b16 %v258, %v251
  %v364 = vpack.c.b16 %v259, %v252
  %v365 = vpack.c.b16 %v260, %v253
  %v366 = vpack.c.b16 %v268, %v261
  %v367 = vpack.c.b16 %v269, %v262
  %v368 = vpack.c.b16 %v270, %v263
  %v369 = vpack.c.b16 %v271, %v264
  %v370 = vpack.c.b16 %v272, %v265
  %v371 = vpack.c.b16 %v273, %v266
  %v372 = vpack.c.b16 %v274, %v267
  %v373 = vpack.c.b16 %v282, %v275
  %v374 = vpack.c.b16 %v283, %v276
  %v375 = vpack.c.b16 %v284, %v277
  %v376 = vpack.c.b16 %v285, %v278
  %v377 = vpack.c.b16 %v286, %v279
  %v378 = vpack.c.b16 %v287, %v280
  %v379 = vpack.c.b16 %v288, %v281
  %v380 = vpack.c.b16 %v296, %v289
  %v381 = vpack.c.b16 %v297, %v290
  %v382 = vpack.c.b16 %v298, %v291
  %v383 = vpack.c.b16 %v299, %v292
  %v384 = vpack.c.b16 %v300, %v293
  %v385 = vpack.c.b16 %v301, %v294
  %v386 = vpack.c.b16 %v302, %v295
  %v387 = vpack.c.b16 %v310, %v303
  %v388 = vpack.c.b16 %v311, %v304
  %v389 = vpack.c.b16 %v312, %v305
  %v390 = vpack.c.b16 %v313, %v306
  %v391 = vpack.c.b16 %v314, %v307
  %v392 = vpack.c.b16 %v315, %v308
  %v393 = vpack.c.b16 %v316, %v309
  %v394 = vpack.c.b16 %v324, %v317
  %v395 = vpack.c.b16 %v325, %v318
  %v396 = vpack.c.b16 %v326, %v319
  %v397 = vpack.c.b16 %v327, %v320
  %v398 = vpack.c.b16 %v328, %v321
  %v399 = vpack.c.b16 %v329, %v322
  %v400 = vpack.c.b16 %v330, %v323
  %v401 = vpack.c.b16 %v338, %v331
  %v402 = vpack.c.b16 %v339, %v332
  %v403 = vpack.c.b16 %v340, %v333
  %v404 = vpack.c.b16 %v341, %v334
  %v405 = vpack.c.b16 %v342, %v335
  %v406 = vpack.c.b16 %v343, %v336
  %v407 = vpack.c.b16 %v344, %v337
  %v408 = vpack.c.b16 %v352, %v345
  %v409 = vpack.c.b16 %v353, %v346
  %v410 = vpack.c.b16 %v354, %v347
  %v411 = vpack.c.b16 %v355, %v348
  %v412 = vpack.c.b16 %v356, %v349
  %v413 = vpack.c.b16 %v357, %v350
  %v414 = vpack.c.b16 %v358, %v351
  %v563 = vunpack.c.l.b16 %v79
  %v564 = vunpack.c.l.b16 %v80
  %v565 = vunpack.c.l.b16 %v81
  %v566 = vunpack.c.l.b16 %v82
  %v567 = vunpack.c.l.b16 %v83
  %v568 = vunpack.c.l.b16 %v84
  %v569 = vunpack.c.l.b16 %v85
  %v570 = vunpack.c.l.b16 %v86
  %v571 = vunpack.c.l.b16 %v87
  %v572 = vunpack.c.l.b16 %v88
  %v573 = vunpack.c.l.b16 %v89
  %v574 = vunpack.c.l.b16 %v90
  %v575 = vunpack.c.l.b16 %v91
  %v576 = vunpack.c.l.b16 %v92
  %v577 = vunpack.c.l.b16 %v93
  %v578 = vunpack.c.l.b16 %v94
  %v579 = vunpack.c.l.b16 %v95
  %v580 = vunpack.c.l.b16 %v96
  %v581 = vunpack.c.l.b16 %v97
  %v582 = vunpack.c.l.b16 %v98
  %v583 = vunpack.c.l.b16 %v99
  %v584 = vunpack.c.l.b16 %v100
  %v585 = vunpack.c.l.b16 %v101
  %v586 = vunpack.c.l.b16 %v102
  %v587 = vunpack.c.l.b16 %v103
  %v588 = vunpack.c.l.b16 %v104
  %v589 = vunpack.c.l.b16 %v105
  %v590 = vunpack.c.l.b16 %v106
  %v591 = vunpack.c.l.b16 %v107
  %v592 = vunpack.c.l.b16 %v108
  %v593 = vunpack.c.l.b16 %v109
  %v594 = vunpack.c.l.b16 %v110
  %v595 = vunpack.c.l.b16 %v111
  %v596 = vunpack.c.l.b16 %v112
  %v597 = vunpack.c.l.b16 %v113
  %v598 = vunpack.c.l.b16 %v114
  %v599 = vunpack.c.l.b16 %v115
  %v600 = vunpack.c.l.b16 %v116
  %v601 = vunpack.c.l.b16 %v117
  %v602 = vunpack.c.l.b16 %v118
  %v603 = vunpack.c.l.b16 %v119
  %v604 = vunpack.c.l.b16 %v120
  %v605 = vunpack.c.l.b16 %v121
  %v606 = vunpack.c.l.b16 %v122
  %v607 = vunpack.c.l.b16 %v123
  %v608 = vunpack.c.l.b16 %v124
  %v609 = vunpack.c.l.b16 %v125
  %v610 = vunpack.c.l.b16 %v126
  %v611 = vunpack.c.l.b16 %v127
  %v612 = vunpack.c.l.b16 %v128
  %v613 = vunpack.c.l.b16 %v129
  %v614 = vunpack.c.l.b16 %v130
  %v615 = vunpack.c.l.b16 %v131
  %v616 = vunpack.c.l.b16 %v132
  %v617 = vunpack.c.l.b16 %v133
  %v618 = vunpack.c.l.b16 %v134
  %v619 = vunpack.c.l.b16 %v135
  %v620 = vunpack.c.l.b16 %v136
  %v621 = vunpack.c.l.b16 %v137
  %v622 = vunpack.c.l.b16 %v138
  %v623 = vunpack.c.l.b16 %v139
  %v624 = vunpack.c.l.b16 %v140
  %v625 = vunpack.c.l.b16 %v141
  %v626 = vunpack.c.l.b16 %v142
  %v627 = vunpack.c.l.b16 %v143
  %v628 = vunpack.c.l.b16 %v144
  %v629 = vunpack.c.l.b16 %v145
  %v630 = vunpack.c.l.b16 %v146
  %v631 = vunpack.c.l.b16 %v147
  %v632 = vunpack.c.l.b16 %v148
  %v633 = vunpack.c.l.b16 %v149
  %v634 = vunpack.c.l.b16 %v150
  %v635 = vunpack.c.l.b16 %v151
  %v636 = vunpack.c.l.b16 %v152
  %v637 = vunpack.c.l.b16 %v153
  %v638 = vunpack.c.l.b16 %v154
  %v639 = vunpack.c.l.b16 %v155
  %v640 = vunpack.c.l.b16 %v156
  %v641 = vunpack.c.l.b16 %v157
  %v642 = vunpack.c.l.b16 %v158
  %v643 = vunpack.c.l.b16 %v159
  %v644 = vunpack.c.l.b16 %v160
  %v645 = vunpack.c.l.b16 %v161
  %v646 = vunpack.c.l.b16 %v162
  %v647 = vunpack.c.l.b16 %v163
  %v648 = vunpack.c.l.b16 %v164
  %v649 = vunpack.c.l.b16 %v165
  %v650 = vunpack.c.l.b16 %v166
  %v651 = vunpack.c.l.b16 %v167
  %v652 = vunpack.c.l.b16 %v168
  %v653 = vunpack.c.l.b16 %v169
  %v654 = vunpack.c.l.b16 %v170
  %v655 = vunpack.c.l.b16 %v171
  %v656 = vunpack.c.l.b16 %v172
  %v657 = vunpack.c.l.b16 %v173
  %v658 = vunpack.c.l.b16 %v174
  %v659 = vunpack.c.l.b16 %v175
  %v660 = vunpack.c.l.b16 %v176
  %v661 = vunpack.c.l.b16 %v177
  %v662 = vunpack.c.l.b16 %v178
  %v663 = vpack.c.b16 %v564, %v563
  %v664 = vpack.c.b16 %v566, %v565
  %v665 = vpack.c.b16 %v568, %v567
  %v666 = vpack.c.b16 %v570, %v569
  %v667 = vpack.c.b16 %v572, %v571
  %v668 = vpack.c.b16 %v574, %v573
  %v669 = vpack.c.b16 %v576, %v575
  %v670 = vpack.c.b16 %v578, %v577
  %v671 = vpack.c.b16 %v580, %v579
  %v672 = vpack.c.b16 %v582, %v581
  %v673 = vpack.c.b16 %v584, %v583
  %v674 = vpack.c.b16 %v586, %v585
  %v675 = vpack.c.b16 %v588, %v587
  %v676 = vpack.c.b16 %v590, %v589
  %v677 = vpack.c.b16 %v592, %v591
  %v678 = vpack.c.b16 %v594, %v593
  %v679 = vpack.c.b16 %v596, %v595
  %v680 = vpack.c.b16 %v598, %v597
  %v681 = vpack.c.b16 %v600, %v599
  %v682 = vpack.c.b16 %v602, %v601
  %v683 = vpack.c.b16 %v604, %v603
  %v684 = vpack.c.b16 %v606, %v605
  %v685 = vpack.c.b16 %v608, %v607
  %v686 = vpack.c.b16 %v610, %v609
  %v687 = vpack.c.b16 %v612, %v611
  %v688 = vpack.c.b16 %v614, %v613
  %v689 = vpack.c.b16 %v616, %v615
  %v690 = vpack.c.b16 %v618, %v617
  %v691 = vpack.c.b16 %v620, %v619
  %v692 = vpack.c.b16 %v622, %v621
  %v693 = vpack.c.b16 %v624, %v623
  %v694 = vpack.c.b16 %v626, %v625
  %v695 = vpack.c.b16 %v628, %v627
  %v696 = vpack.c.b16 %v630, %v629
  %v697 = vpack.c.b16 %v632, %v631
  %v698 = vpack.c.b16 %v634, %v633
  %v699 = vpack.c.b16 %v636, %v635
  %v700 = vpack.c.b16 %v638, %v637
  %v701 = vpack.c.b16 %v640, %v639
  %v702 = vpack.c.b16 %v642, %v641
  %v703 = vpack.c.b16 %v644, %v643
  %v704 = vpack.c.b16 %v646, %v645
  %v705 = vpack.c.b16 %v648, %v647
  %v706 = vpack.c.b16 %v650, %v649
  %v707 = vpack.c.b16 %v652, %v651
  %v708 = vpack.c.b16 %v654, %v653
  %v709 = vpack.c.b16 %v656, %v655
  %v710 = vpack.c.b16 %v658, %v657
  %v711 = vpack.c.b16 %v660, %v659
  %v712 = vpack.c.b16 %v662, %v661
  %vm763 = vcmask 261120
  %v765 = vsel %vm763, %v365, 0
  %v768 = vsel %vm763, %v372, 0
  %v771 = vsel %vm763, %v379, 0
  %v774 = vsel %vm763, %v386, 0
  %v777 = vsel %vm763, %v393, 0
  %v780 = vsel %vm763, %v400, 0
  %v783 = vsel %vm763, %v407, 0
  %v786 = vsel %vm763, %v414, 0
  %788 = vmatpush.bf16.msra.mxu0 %v670
  %789 = vmatpush.bf16.msra.mxu0 %v669
  %790 = vmatpush.bf16.msra.mxu0 %v668
  %791 = vmatpush.bf16.msra.mxu0 %v667
  %792 = vmatpush.bf16.msra.mxu0 %v666
  %793 = vmatpush.bf16.msra.mxu0 %v665
  %794 = vmatpush.bf16.msra.mxu0 %v664
  %795 = vmatpush.bf16.msra.mxu0 %v663
  %796 = vmatmul.bf16.gmra.mxu0 %v359
  %v797 = vpop.f32.mrf.mxu0
  %v798 = vadd.f32 %v181, %v797
  %v799 = vpop.f32.mrf.mxu0
  %v800 = vadd.f32 %v181, %v799
  %801 = vmatmul.bf16.gmra.mxu0 %v366
  %v802 = vpop.f32.mrf.mxu0
  %v803 = vadd.f32 %v181, %v802
  %v804 = vpop.f32.mrf.mxu0
  %v805 = vadd.f32 %v181, %v804
  %806 = vmatmul.bf16.gmra.mxu0 %v373
  %v807 = vpop.f32.mrf.mxu0
  %v808 = vadd.f32 %v181, %v807
  %v809 = vpop.f32.mrf.mxu0
  %v810 = vadd.f32 %v181, %v809
  %811 = vmatmul.bf16.gmra.mxu0 %v380
  %v812 = vpop.f32.mrf.mxu0
  %v813 = vadd.f32 %v181, %v812
  %v814 = vpop.f32.mrf.mxu0
  %v815 = vadd.f32 %v181, %v814
  %816 = vmatmul.bf16.gmra.mxu0 %v387
  %v817 = vpop.f32.mrf.mxu0
  %v818 = vadd.f32 %v181, %v817
  %v819 = vpop.f32.mrf.mxu0
  %v820 = vadd.f32 %v181, %v819
  %821 = vmatmul.bf16.gmra.mxu0 %v394
  %v822 = vpop.f32.mrf.mxu0
  %v823 = vadd.f32 %v181, %v822
  %v824 = vpop.f32.mrf.mxu0
  %v825 = vadd.f32 %v181, %v824
  %826 = vmatmul.bf16.gmra.mxu0 %v401
  %v827 = vpop.f32.mrf.mxu0
  %v828 = vadd.f32 %v181, %v827
  %v829 = vpop.f32.mrf.mxu0
  %v830 = vadd.f32 %v181, %v829
  %831 = vmatmul.bf16.gmra.mxu0 %v408
  %v832 = vpop.f32.mrf.mxu0
  %v833 = vadd.f32 %v181, %v832
  %v834 = vpop.f32.mrf.mxu0
  %v835 = vadd.f32 %v181, %v834
  %836 = vdwg.mxu0
  %837 = vmatpush.bf16.msra.mxu0 %v678
  %838 = vmatpush.bf16.msra.mxu0 %v677
  %839 = vmatpush.bf16.msra.mxu0 %v676
  %840 = vmatpush.bf16.msra.mxu0 %v675
  %841 = vmatpush.bf16.msra.mxu0 %v674
  %842 = vmatpush.bf16.msra.mxu0 %v673
  %843 = vmatpush.bf16.msra.mxu0 %v672
  %844 = vmatpush.bf16.msra.mxu0 %v671
  %845 = vmatmul.bf16.gmra.mxu0 %v360
  %v846 = vpop.f32.mrf.mxu0
  %v847 = vadd.f32 %v798, %v846
  %v848 = vpop.f32.mrf.mxu0
  %v849 = vadd.f32 %v800, %v848
  %850 = vmatmul.bf16.gmra.mxu0 %v367
  %v851 = vpop.f32.mrf.mxu0
  %v852 = vadd.f32 %v803, %v851
  %v853 = vpop.f32.mrf.mxu0
  %v854 = vadd.f32 %v805, %v853
  %855 = vmatmul.bf16.gmra.mxu0 %v374
  %v856 = vpop.f32.mrf.mxu0
  %v857 = vadd.f32 %v808, %v856
  %v858 = vpop.f32.mrf.mxu0
  %v859 = vadd.f32 %v810, %v858
  %860 = vmatmul.bf16.gmra.mxu0 %v381
  %v861 = vpop.f32.mrf.mxu0
  %v862 = vadd.f32 %v813, %v861
  %v863 = vpop.f32.mrf.mxu0
  %v864 = vadd.f32 %v815, %v863
  %865 = vmatmul.bf16.gmra.mxu0 %v388
  %v866 = vpop.f32.mrf.mxu0
  %v867 = vadd.f32 %v818, %v866
  %v868 = vpop.f32.mrf.mxu0
  %v869 = vadd.f32 %v820, %v868
  %870 = vmatmul.bf16.gmra.mxu0 %v395
  %v871 = vpop.f32.mrf.mxu0
  %v872 = vadd.f32 %v823, %v871
  %v873 = vpop.f32.mrf.mxu0
  %v874 = vadd.f32 %v825, %v873
  %875 = vmatmul.bf16.gmra.mxu0 %v402
  %v876 = vpop.f32.mrf.mxu0
  %v877 = vadd.f32 %v828, %v876
  %v878 = vpop.f32.mrf.mxu0
  %v879 = vadd.f32 %v830, %v878
  %880 = vmatmul.bf16.gmra.mxu0 %v409
  %v881 = vpop.f32.mrf.mxu0
  %v882 = vadd.f32 %v833, %v881
  %v883 = vpop.f32.mrf.mxu0
  %v884 = vadd.f32 %v835, %v883
  %885 = vdwg.mxu0
  %886 = vmatpush.bf16.msra.mxu0 %v686
  %887 = vmatpush.bf16.msra.mxu0 %v685
  %888 = vmatpush.bf16.msra.mxu0 %v684
  %889 = vmatpush.bf16.msra.mxu0 %v683
  %890 = vmatpush.bf16.msra.mxu0 %v682
  %891 = vmatpush.bf16.msra.mxu0 %v681
  %892 = vmatpush.bf16.msra.mxu0 %v680
  %893 = vmatpush.bf16.msra.mxu0 %v679
  %894 = vmatmul.bf16.gmra.mxu0 %v361
  %v895 = vpop.f32.mrf.mxu0
  %v896 = vadd.f32 %v847, %v895
  %v897 = vpop.f32.mrf.mxu0
  %v898 = vadd.f32 %v849, %v897
  %899 = vmatmul.bf16.gmra.mxu0 %v368
  %v900 = vpop.f32.mrf.mxu0
  %v901 = vadd.f32 %v852, %v900
  %v902 = vpop.f32.mrf.mxu0
  %v903 = vadd.f32 %v854, %v902
  %904 = vmatmul.bf16.gmra.mxu0 %v375
  %v905 = vpop.f32.mrf.mxu0
  %v906 = vadd.f32 %v857, %v905
  %v907 = vpop.f32.mrf.mxu0
  %v908 = vadd.f32 %v859, %v907
  %909 = vmatmul.bf16.gmra.mxu0 %v382
  %v910 = vpop.f32.mrf.mxu0
  %v911 = vadd.f32 %v862, %v910
  %v912 = vpop.f32.mrf.mxu0
  %v913 = vadd.f32 %v864, %v912
  %914 = vmatmul.bf16.gmra.mxu0 %v389
  %v915 = vpop.f32.mrf.mxu0
  %v916 = vadd.f32 %v867, %v915
  %v917 = vpop.f32.mrf.mxu0
  %v918 = vadd.f32 %v869, %v917
  %919 = vmatmul.bf16.gmra.mxu0 %v396
  %v920 = vpop.f32.mrf.mxu0
  %v921 = vadd.f32 %v872, %v920
  %v922 = vpop.f32.mrf.mxu0
  %v923 = vadd.f32 %v874, %v922
  %924 = vmatmul.bf16.gmra.mxu0 %v403
  %v925 = vpop.f32.mrf.mxu0
  %v926 = vadd.f32 %v877, %v925
  %v927 = vpop.f32.mrf.mxu0
  %v928 = vadd.f32 %v879, %v927
  %929 = vmatmul.bf16.gmra.mxu0 %v410
  %v930 = vpop.f32.mrf.mxu0
  %v931 = vadd.f32 %v882, %v930
  %v932 = vpop.f32.mrf.mxu0
  %v933 = vadd.f32 %v884, %v932
  %934 = vdwg.mxu0
  %935 = vmatpush.bf16.msra.mxu0 %v694
  %936 = vmatpush.bf16.msra.mxu0 %v693
  %937 = vmatpush.bf16.msra.mxu0 %v692
  %938 = vmatpush.bf16.msra.mxu0 %v691
  %939 = vmatpush.bf16.msra.mxu0 %v690
  %940 = vmatpush.bf16.msra.mxu0 %v689
  %941 = vmatpush.bf16.msra.mxu0 %v688
  %942 = vmatpush.bf16.msra.mxu0 %v687
  %943 = vmatmul.bf16.gmra.mxu0 %v362
  %v944 = vpop.f32.mrf.mxu0
  %v945 = vadd.f32 %v896, %v944
  %v946 = vpop.f32.mrf.mxu0
  %v947 = vadd.f32 %v898, %v946
  %948 = vmatmul.bf16.gmra.mxu0 %v369
  %v949 = vpop.f32.mrf.mxu0
  %v950 = vadd.f32 %v901, %v949
  %v951 = vpop.f32.mrf.mxu0
  %v952 = vadd.f32 %v903, %v951
  %953 = vmatmul.bf16.gmra.mxu0 %v376
  %v954 = vpop.f32.mrf.mxu0
  %v955 = vadd.f32 %v906, %v954
  %v956 = vpop.f32.mrf.mxu0
  %v957 = vadd.f32 %v908, %v956
  %958 = vmatmul.bf16.gmra.mxu0 %v383
  %v959 = vpop.f32.mrf.mxu0
  %v960 = vadd.f32 %v911, %v959
  %v961 = vpop.f32.mrf.mxu0
  %v962 = vadd.f32 %v913, %v961
  %963 = vmatmul.bf16.gmra.mxu0 %v390
  %v964 = vpop.f32.mrf.mxu0
  %v965 = vadd.f32 %v916, %v964
  %v966 = vpop.f32.mrf.mxu0
  %v967 = vadd.f32 %v918, %v966
  %968 = vmatmul.bf16.gmra.mxu0 %v397
  %v969 = vpop.f32.mrf.mxu0
  %v970 = vadd.f32 %v921, %v969
  %v971 = vpop.f32.mrf.mxu0
  %v972 = vadd.f32 %v923, %v971
  %973 = vmatmul.bf16.gmra.mxu0 %v404
  %v974 = vpop.f32.mrf.mxu0
  %v975 = vadd.f32 %v926, %v974
  %v976 = vpop.f32.mrf.mxu0
  %v977 = vadd.f32 %v928, %v976
  %978 = vmatmul.bf16.gmra.mxu0 %v411
  %v979 = vpop.f32.mrf.mxu0
  %v980 = vadd.f32 %v931, %v979
  %v981 = vpop.f32.mrf.mxu0
  %v982 = vadd.f32 %v933, %v981
  %983 = vdwg.mxu0
  %984 = vmatpush.bf16.msra.mxu0 %v702
  %985 = vmatpush.bf16.msra.mxu0 %v701
  %986 = vmatpush.bf16.msra.mxu0 %v700
  %987 = vmatpush.bf16.msra.mxu0 %v699
  %988 = vmatpush.bf16.msra.mxu0 %v698
  %989 = vmatpush.bf16.msra.mxu0 %v697
  %990 = vmatpush.bf16.msra.mxu0 %v696
  %991 = vmatpush.bf16.msra.mxu0 %v695
  %992 = vmatmul.bf16.gmra.mxu0 %v363
  %v993 = vpop.f32.mrf.mxu0
  %v994 = vadd.f32 %v945, %v993
  %v995 = vpop.f32.mrf.mxu0
  %v996 = vadd.f32 %v947, %v995
  %997 = vmatmul.bf16.gmra.mxu0 %v370
  %v998 = vpop.f32.mrf.mxu0
  %v999 = vadd.f32 %v950, %v998
  %v1000 = vpop.f32.mrf.mxu0
  %v1001 = vadd.f32 %v952, %v1000
  %1002 = vmatmul.bf16.gmra.mxu0 %v377
  %v1003 = vpop.f32.mrf.mxu0
  %v1004 = vadd.f32 %v955, %v1003
  %v1005 = vpop.f32.mrf.mxu0
  %v1006 = vadd.f32 %v957, %v1005
  %1007 = vmatmul.bf16.gmra.mxu0 %v384
  %v1008 = vpop.f32.mrf.mxu0
  %v1009 = vadd.f32 %v960, %v1008
  %v1010 = vpop.f32.mrf.mxu0
  %v1011 = vadd.f32 %v962, %v1010
  %1012 = vmatmul.bf16.gmra.mxu0 %v391
  %v1013 = vpop.f32.mrf.mxu0
  %v1014 = vadd.f32 %v965, %v1013
  %v1015 = vpop.f32.mrf.mxu0
  %v1016 = vadd.f32 %v967, %v1015
  %1017 = vmatmul.bf16.gmra.mxu0 %v398
  %v1018 = vpop.f32.mrf.mxu0
  %v1019 = vadd.f32 %v970, %v1018
  %v1020 = vpop.f32.mrf.mxu0
  %v1021 = vadd.f32 %v972, %v1020
  %1022 = vmatmul.bf16.gmra.mxu0 %v405
  %v1023 = vpop.f32.mrf.mxu0
  %v1024 = vadd.f32 %v975, %v1023
  %v1025 = vpop.f32.mrf.mxu0
  %v1026 = vadd.f32 %v977, %v1025
  %1027 = vmatmul.bf16.gmra.mxu0 %v412
  %v1028 = vpop.f32.mrf.mxu0
  %v1029 = vadd.f32 %v980, %v1028
  %v1030 = vpop.f32.mrf.mxu0
  %v1031 = vadd.f32 %v982, %v1030
  %1032 = vdwg.mxu0
  %1033 = vmatpush.bf16.msra.mxu0 %v710
  %1034 = vmatpush.bf16.msra.mxu0 %v709
  %1035 = vmatpush.bf16.msra.mxu0 %v708
  %1036 = vmatpush.bf16.msra.mxu0 %v707
  %1037 = vmatpush.bf16.msra.mxu0 %v706
  %1038 = vmatpush.bf16.msra.mxu0 %v705
  %1039 = vmatpush.bf16.msra.mxu0 %v704
  %1040 = vmatpush.bf16.msra.mxu0 %v703
  %1041 = vmatmul.bf16.gmra.mxu0 %v364
  %v1042 = vpop.f32.mrf.mxu0
  %v1043 = vadd.f32 %v994, %v1042
  %v1044 = vpop.f32.mrf.mxu0
  %v1045 = vadd.f32 %v996, %v1044
  %1046 = vmatmul.bf16.gmra.mxu0 %v371
  %v1047 = vpop.f32.mrf.mxu0
  %v1048 = vadd.f32 %v999, %v1047
  %v1049 = vpop.f32.mrf.mxu0
  %v1050 = vadd.f32 %v1001, %v1049
  %1051 = vmatmul.bf16.gmra.mxu0 %v378
  %v1052 = vpop.f32.mrf.mxu0
  %v1053 = vadd.f32 %v1004, %v1052
  %v1054 = vpop.f32.mrf.mxu0
  %v1055 = vadd.f32 %v1006, %v1054
  %1056 = vmatmul.bf16.gmra.mxu0 %v385
  %v1057 = vpop.f32.mrf.mxu0
  %v1058 = vadd.f32 %v1009, %v1057
  %v1059 = vpop.f32.mrf.mxu0
  %v1060 = vadd.f32 %v1011, %v1059
  %1061 = vmatmul.bf16.gmra.mxu0 %v392
  %v1062 = vpop.f32.mrf.mxu0
  %v1063 = vadd.f32 %v1014, %v1062
  %v1064 = vpop.f32.mrf.mxu0
  %v1065 = vadd.f32 %v1016, %v1064
  %1066 = vmatmul.bf16.gmra.mxu0 %v399
  %v1067 = vpop.f32.mrf.mxu0
  %v1068 = vadd.f32 %v1019, %v1067
  %v1069 = vpop.f32.mrf.mxu0
  %v1070 = vadd.f32 %v1021, %v1069
  %1071 = vmatmul.bf16.gmra.mxu0 %v406
  %v1072 = vpop.f32.mrf.mxu0
  %v1073 = vadd.f32 %v1024, %v1072
  %v1074 = vpop.f32.mrf.mxu0
  %v1075 = vadd.f32 %v1026, %v1074
  %1076 = vmatmul.bf16.gmra.mxu0 %v413
  %v1077 = vpop.f32.mrf.mxu0
  %v1078 = vadd.f32 %v1029, %v1077
  %v1079 = vpop.f32.mrf.mxu0
  %v1080 = vadd.f32 %v1031, %v1079
  %1081 = vdwg.mxu0
  %1082 = vmatpush.bf16.msra.mxu0 0
  %1083 = vmatpush.bf16.msra.mxu0 0
  %1084 = vmatpush.bf16.msra.mxu0 0
  %1085 = vmatpush.bf16.msra.mxu0 0
  %1086 = vmatpush.bf16.msra.mxu0 0
  %1087 = vmatpush.bf16.msra.mxu0 0
  %1088 = vmatpush.bf16.msra.mxu0 %v712
  %1089 = vmatpush.bf16.msra.mxu0 %v711
  %1090 = vmatmul.bf16.gmra.mxu0 %v765
  %v1091 = vpop.f32.mrf.mxu0
  %v1092 = vadd.f32 %v1043, %v1091
  %v1093 = vpop.f32.mrf.mxu0
  %v1094 = vadd.f32 %v1045, %v1093
  %1095 = vmatmul.bf16.gmra.mxu0 %v768
  %v1096 = vpop.f32.mrf.mxu0
  %v1097 = vadd.f32 %v1048, %v1096
  %v1098 = vpop.f32.mrf.mxu0
  %v1099 = vadd.f32 %v1050, %v1098
  %1100 = vmatmul.bf16.gmra.mxu0 %v771
  %v1101 = vpop.f32.mrf.mxu0
  %v1102 = vadd.f32 %v1053, %v1101
  %v1103 = vpop.f32.mrf.mxu0
  %v1104 = vadd.f32 %v1055, %v1103
  %1105 = vmatmul.bf16.gmra.mxu0 %v774
  %v1106 = vpop.f32.mrf.mxu0
  %v1107 = vadd.f32 %v1058, %v1106
  %v1108 = vpop.f32.mrf.mxu0
  %v1109 = vadd.f32 %v1060, %v1108
  %1110 = vmatmul.bf16.gmra.mxu0 %v777
  %v1111 = vpop.f32.mrf.mxu0
  %v1112 = vadd.f32 %v1063, %v1111
  %v1113 = vpop.f32.mrf.mxu0
  %v1114 = vadd.f32 %v1065, %v1113
  %1115 = vmatmul.bf16.gmra.mxu0 %v780
  %v1116 = vpop.f32.mrf.mxu0
  %v1117 = vadd.f32 %v1068, %v1116
  %v1118 = vpop.f32.mrf.mxu0
  %v1119 = vadd.f32 %v1070, %v1118
  %1120 = vmatmul.bf16.gmra.mxu0 %v783
  %v1121 = vpop.f32.mrf.mxu0
  %v1122 = vadd.f32 %v1073, %v1121
  %v1123 = vpop.f32.mrf.mxu0
  %v1124 = vadd.f32 %v1075, %v1123
  %1125 = vmatmul.bf16.gmra.mxu0 %v786
  %v1126 = vpop.f32.mrf.mxu0
  %v1127 = vadd.f32 %v1078, %v1126
  %v1128 = vpop.f32.mrf.mxu0
  %v1129 = vadd.f32 %v1080, %v1128
  %1130 = vdwg.mxu0
  %vm1131 = vcmask 523264
  %1132 = vst.msk [vmem:[%s3] sm:$0xff] %vm1131, %v1092
  %1133 = vst.msk [vmem:[%s3 + $0x8] sm:$0xff] %vm1131, %v1094
  %1134 = vst.msk [vmem:[%s3 + $0x10] sm:$0xff] %vm1131, %v1097
  %1135 = vst.msk [vmem:[%s3 + $0x18] sm:$0xff] %vm1131, %v1099
  %1136 = vst.msk [vmem:[%s3 + $0x20] sm:$0xff] %vm1131, %v1102
  %1137 = vst.msk [vmem:[%s3 + $0x28] sm:$0xff] %vm1131, %v1104
  %1138 = vst.msk [vmem:[%s3 + $0x30] sm:$0xff] %vm1131, %v1107
  %1139 = vst.msk [vmem:[%s3 + $0x38] sm:$0xff] %vm1131, %v1109
  %1140 = vst.msk [vmem:[%s3 + $0x40] sm:$0xff] %vm1131, %v1112
  %1141 = vst.msk [vmem:[%s3 + $0x48] sm:$0xff] %vm1131, %v1114
  %1142 = vst.msk [vmem:[%s3 + $0x50] sm:$0xff] %vm1131, %v1117
  %1143 = vst.msk [vmem:[%s3 + $0x58] sm:$0xff] %vm1131, %v1119
  %1144 = vst.msk [vmem:[%s3 + $0x60] sm:$0xff] %vm1131, %v1122
  %1145 = vst.msk [vmem:[%s3 + $0x68] sm:$0xff] %vm1131, %v1124
  %1146 = vst.msk [vmem:[%s3 + $0x70] sm:$0xff] %vm1131, %v1127
  %1147 = vst.msk [vmem:[%s3 + $0x78] sm:$0xff] %vm1131, %v1129
  // Predicated region
  $region14: #{pathfinder_forward.7} parent=0 // pred_check
    _
  $region15: #{pathfinder_forward.7} parent=0 // pred_check_branch
    %1149 = sbr.rel (0) target = $region17
  $region16: #{pathfinder_forward.7} parent=0 // pred_region
    _
  $region17: #{pathfinder_forward.7} parent=0 // pred_fallthru
    _
  // Predicated region
  $region18: #{pathfinder_forward.7} parent=0 // pred_check
    _
  $region19: #{pathfinder_forward.7} parent=0 // pred_check_branch
    %1151 = sbr.rel (0) target = $region21
  $region20: #{pathfinder_forward.7} parent=0 // pred_region
    _
  $region21: #{pathfinder_forward.7} parent=0 // pred_fallthru
    _

// kernel: pathfinder_forward.6
$region0: #{pathfinder_forward.6}
  #allocation0 [shape = 'u32[]', space=smem, size = 0x4, offset = 0x4, fixed_abs, tag = 'smem constant byte address 0x4 - core index']
  #allocation1 [shape = 'u32[72,128]{1,0:T(1,128)}', space=vmem, size = 0x9000, scoped, tag = 'internal scratch']
  %s0 = inlined_call_operand.vmem [shape: bf16[288,800], index: 0, kind: input, shape index: {}]
  %s1 = inlined_call_operand.vmem [shape: bf16[288,800], index: 1, kind: input, shape index: {}]
  %s2 = inlined_call_operand.vmem [shape: bf16[288,800], index: 2, kind: input, shape index: {}]
  %s3 = inlined_call_operand.vmem [shape: bf16[288,800], index: 3, kind: input, shape index: {}]
  %s4 = inlined_call_operand.vmem [shape: bf16[800,32], index: 4, kind: input, shape index: {}]
  %s5 = inlined_call_operand.vmem [shape: f32[1,32], index: 5, kind: input, shape index: {}]
  %s6 = inlined_call_operand.vmem [shape: f32[288,32], index: 6, kind: output, shape index: {}]
  %s7 = sld [smem:[#allocation0]]
  $region34: #{pathfinder_forward.6} parent=0
    _
  %s9 = ssub.s32 1, %s7
  %s10 = scalar_select 0, %s9, %s7
  // Predicated region
  $region2: #{pathfinder_forward.6} parent=0 // pred_check
    _
  $region3: #{pathfinder_forward.6} parent=0 // pred_check_branch
    %12 = sbr.rel (0) target = $region5
  $region4: #{pathfinder_forward.6} parent=0 // pred_region
    _
  $region5: #{pathfinder_forward.6} parent=0 // pred_fallthru
    _
  // Predicated region
  $region6: #{pathfinder_forward.6} parent=0 // pred_check
    _
  $region7: #{pathfinder_forward.6} parent=0 // pred_check_branch
    %14 = sbr.rel (0) target = $region9
  $region8: #{pathfinder_forward.6} parent=0 // pred_region
    _
  $region9: #{pathfinder_forward.6} parent=0 // pred_fallthru
    _
  // Predicated region
  $region10: #{pathfinder_forward.6} parent=0 // pred_check
    _
  $region11: #{pathfinder_forward.6} parent=0 // pred_check_branch
    %16 = sbr.rel (0) target = $region13
  $region12: #{pathfinder_forward.6} parent=0 // pred_region
    _
  $region13: #{pathfinder_forward.6} parent=0 // pred_fallthru
    _
  // Predicated region
  $region14: #{pathfinder_forward.6} parent=0 // pred_check
    _
  $region15: #{pathfinder_forward.6} parent=0 // pred_check_branch
    %18 = sbr.rel (0) target = $region17
  $region16: #{pathfinder_forward.6} parent=0 // pred_region
    _
  $region17: #{pathfinder_forward.6} parent=0 // pred_fallthru
    _
  // Predicated region
  $region18: #{pathfinder_forward.6} parent=0 // pred_check
    _
  $region19: #{pathfinder_forward.6} parent=0 // pred_check_branch
    %20 = sbr.rel (0) target = $region21
  $region20: #{pathfinder_forward.6} parent=0 // pred_region
    _
  $region21: #{pathfinder_forward.6} parent=0 // pred_fallthru
    _
  // Predicated region
  $region22: #{pathfinder_forward.6} parent=0 // pred_check
    _
  $region23: #{pathfinder_forward.6} parent=0 // pred_check_branch
    %22 = sbr.rel (0) target = $region25
  $region24: #{pathfinder_forward.6} parent=0 // pred_region
    _
  $region25: #{pathfinder_forward.6} parent=0 // pred_fallthru
    _
  %v24 = vld [vmem:[%s4] sm:$0xf]
  %v25 = vld [vmem:[%s4 + $0x4] sm:$0xf]
  %v26 = vld [vmem:[%s4 + $0x8] sm:$0xf]
  %v27 = vld [vmem:[%s4 + $0xc] sm:$0xf]
  %v28 = vld [vmem:[%s4 + $0x10] sm:$0xf]
  %v29 = vld [vmem:[%s4 + $0x14] sm:$0xf]
  %v30 = vld [vmem:[%s4 + $0x18] sm:$0xf]
  %v31 = vld [vmem:[%s4 + $0x1c] sm:$0xf]
  %v32 = vld [vmem:[%s4 + $0x20] sm:$0xf]
  %v33 = vld [vmem:[%s4 + $0x24] sm:$0xf]
  %v34 = vld [vmem:[%s4 + $0x28] sm:$0xf]
  %v35 = vld [vmem:[%s4 + $0x2c] sm:$0xf]
  %v36 = vld [vmem:[%s4 + $0x30] sm:$0xf]
  %v37 = vld [vmem:[%s4 + $0x34] sm:$0xf]
  %v38 = vld [vmem:[%s4 + $0x38] sm:$0xf]
  %v39 = vld [vmem:[%s4 + $0x3c] sm:$0xf]
  %v40 = vld [vmem:[%s4 + $0x40] sm:$0xf]
  %v41 = vld [vmem:[%s4 + $0x44] sm:$0xf]
  %v42 = vld [vmem:[%s4 + $0x48] sm:$0xf]
  %v43 = vld [vmem:[%s4 + $0x4c] sm:$0xf]
  %v44 = vld [vmem:[%s4 + $0x50] sm:$0xf]
  %v45 = vld [vmem:[%s4 + $0x54] sm:$0xf]
  %v46 = vld [vmem:[%s4 + $0x58] sm:$0xf]
  %v47 = vld [vmem:[%s4 + $0x5c] sm:$0xf]
  %v48 = vld [vmem:[%s4 + $0x60] sm:$0xf]
  %v49 = vld [vmem:[%s4 + $0x64] sm:$0xf]
  %v50 = vld [vmem:[%s4 + $0x68] sm:$0xf]
  %v51 = vld [vmem:[%s4 + $0x6c] sm:$0xf]
  %v52 = vld [vmem:[%s4 + $0x70] sm:$0xf]
  %v53 = vld [vmem:[%s4 + $0x74] sm:$0xf]
  %v54 = vld [vmem:[%s4 + $0x78] sm:$0xf]
  %v55 = vld [vmem:[%s4 + $0x7c] sm:$0xf]
  %v56 = vld [vmem:[%s4 + $0x80] sm:$0xf]
  %v57 = vld [vmem:[%s4 + $0x84] sm:$0xf]
  %v58 = vld [vmem:[%s4 + $0x88] sm:$0xf]
  %v59 = vld [vmem:[%s4 + $0x8c] sm:$0xf]
  %v60 = vld [vmem:[%s4 + $0x90] sm:$0xf]
  %v61 = vld [vmem:[%s4 + $0x94] sm:$0xf]
  %v62 = vld [vmem:[%s4 + $0x98] sm:$0xf]
  %v63 = vld [vmem:[%s4 + $0x9c] sm:$0xf]
  %v64 = vld [vmem:[%s4 + $0xa0] sm:$0xf]
  %v65 = vld [vmem:[%s4 + $0xa4] sm:$0xf]
  %v66 = vld [vmem:[%s4 + $0xa8] sm:$0xf]
  %v67 = vld [vmem:[%s4 + $0xac] sm:$0xf]
  %v68 = vld [vmem:[%s4 + $0xb0] sm:$0xf]
  %v69 = vld [vmem:[%s4 + $0xb4] sm:$0xf]
  %v70 = vld [vmem:[%s4 + $0xb8] sm:$0xf]
  %v71 = vld [vmem:[%s4 + $0xbc] sm:$0xf]
  %v72 = vld [vmem:[%s4 + $0xc0] sm:$0xf]
  %v73 = vld [vmem:[%s4 + $0xc4] sm:$0xf]
  %v74 = vld [vmem:[%s4 + $0xc8] sm:$0xf]
  %v75 = vld [vmem:[%s4 + $0xcc] sm:$0xf]
  %v76 = vld [vmem:[%s4 + $0xd0] sm:$0xf]
  %v77 = vld [vmem:[%s4 + $0xd4] sm:$0xf]
  %v78 = vld [vmem:[%s4 + $0xd8] sm:$0xf]
  %v79 = vld [vmem:[%s4 + $0xdc] sm:$0xf]
  %v80 = vld [vmem:[%s4 + $0xe0] sm:$0xf]
  %v81 = vld [vmem:[%s4 + $0xe4] sm:$0xf]
  %v82 = vld [vmem:[%s4 + $0xe8] sm:$0xf]
  %v83 = vld [vmem:[%s4 + $0xec] sm:$0xf]
  %v84 = vld [vmem:[%s4 + $0xf0] sm:$0xf]
  %v85 = vld [vmem:[%s4 + $0xf4] sm:$0xf]
  %v86 = vld [vmem:[%s4 + $0xf8] sm:$0xf]
  %v87 = vld [vmem:[%s4 + $0xfc] sm:$0xf]
  %v88 = vld [vmem:[%s4 + $0x100] sm:$0xf]
  %v89 = vld [vmem:[%s4 + $0x104] sm:$0xf]
  %v90 = vld [vmem:[%s4 + $0x108] sm:$0xf]
  %v91 = vld [vmem:[%s4 + $0x10c] sm:$0xf]
  %v92 = vld [vmem:[%s4 + $0x110] sm:$0xf]
  %v93 = vld [vmem:[%s4 + $0x114] sm:$0xf]
  %v94 = vld [vmem:[%s4 + $0x118] sm:$0xf]
  %v95 = vld [vmem:[%s4 + $0x11c] sm:$0xf]
  %v96 = vld [vmem:[%s4 + $0x120] sm:$0xf]
  %v97 = vld [vmem:[%s4 + $0x124] sm:$0xf]
  %v98 = vld [vmem:[%s4 + $0x128] sm:$0xf]
  %v99 = vld [vmem:[%s4 + $0x12c] sm:$0xf]
  %v100 = vld [vmem:[%s4 + $0x130] sm:$0xf]
  %v101 = vld [vmem:[%s4 + $0x134] sm:$0xf]
  %v102 = vld [vmem:[%s4 + $0x138] sm:$0xf]
  %v103 = vld [vmem:[%s4 + $0x13c] sm:$0xf]
  %v104 = vld [vmem:[%s4 + $0x140] sm:$0xf]
  %v105 = vld [vmem:[%s4 + $0x144] sm:$0xf]
  %v106 = vld [vmem:[%s4 + $0x148] sm:$0xf]
  %v107 = vld [vmem:[%s4 + $0x14c] sm:$0xf]
  %v108 = vld [vmem:[%s4 + $0x150] sm:$0xf]
  %v109 = vld [vmem:[%s4 + $0x154] sm:$0xf]
  %v110 = vld [vmem:[%s4 + $0x158] sm:$0xf]
  %v111 = vld [vmem:[%s4 + $0x15c] sm:$0xf]
  %v112 = vld [vmem:[%s4 + $0x160] sm:$0xf]
  %v113 = vld [vmem:[%s4 + $0x164] sm:$0xf]
  %v114 = vld [vmem:[%s4 + $0x168] sm:$0xf]
  %v115 = vld [vmem:[%s4 + $0x16c] sm:$0xf]
  %v116 = vld [vmem:[%s4 + $0x170] sm:$0xf]
  %v117 = vld [vmem:[%s4 + $0x174] sm:$0xf]
  %v118 = vld [vmem:[%s4 + $0x178] sm:$0xf]
  %v119 = vld [vmem:[%s4 + $0x17c] sm:$0xf]
  %v120 = vld [vmem:[%s4 + $0x180] sm:$0xf]
  %v121 = vld [vmem:[%s4 + $0x184] sm:$0xf]
  %v122 = vld [vmem:[%s4 + $0x188] sm:$0xf]
  %v123 = vld [vmem:[%s4 + $0x18c] sm:$0xf]
  %v124 = vld [vmem:[%s0] sm:$0xff]
  %v125 = vld [vmem:[%s0 + $0x8] sm:$0xff]
  %v126 = vld [vmem:[%s0 + $0x10] sm:$0xff]
  %v127 = vld [vmem:[%s0 + $0x18] sm:$0xf]
  %v128 = vld [vmem:[%s0 + $0x1c] sm:$0xff]
  %v129 = vld [vmem:[%s0 + $0x24] sm:$0xff]
  %v130 = vld [vmem:[%s0 + $0x2c] sm:$0xff]
  %v131 = vld [vmem:[%s0 + $0x34] sm:$0xf]
  %v132 = vld [vmem:[%s0 + $0x38] sm:$0xff]
  %v133 = vld [vmem:[%s0 + $0x40] sm:$0xff]
  %v134 = vld [vmem:[%s0 + $0x48] sm:$0xff]
  %v135 = vld [vmem:[%s0 + $0x50] sm:$0xf]
  %v136 = vld [vmem:[%s0 + $0x54] sm:$0xff]
  %v137 = vld [vmem:[%s0 + $0x5c] sm:$0xff]
  %v138 = vld [vmem:[%s0 + $0x64] sm:$0xff]
  %v139 = vld [vmem:[%s0 + $0x6c] sm:$0xf]
  %v140 = vld [vmem:[%s0 + $0x70] sm:$0xff]
  %v141 = vld [vmem:[%s0 + $0x78] sm:$0xff]
  %v142 = vld [vmem:[%s0 + $0x80] sm:$0xff]
  %v143 = vld [vmem:[%s0 + $0x88] sm:$0xf]
  %v144 = vld [vmem:[%s0 + $0x8c] sm:$0xff]
  %v145 = vld [vmem:[%s0 + $0x94] sm:$0xff]
  %v146 = vld [vmem:[%s0 + $0x9c] sm:$0xff]
  %v147 = vld [vmem:[%s0 + $0xa4] sm:$0xf]
  %v148 = vld [vmem:[%s0 + $0xa8] sm:$0xff]
  %v149 = vld [vmem:[%s0 + $0xb0] sm:$0xff]
  %v150 = vld [vmem:[%s0 + $0xb8] sm:$0xff]
  %v151 = vld [vmem:[%s0 + $0xc0] sm:$0xf]
  %v152 = vld [vmem:[%s0 + $0xc4] sm:$0xff]
  %v153 = vld [vmem:[%s0 + $0xcc] sm:$0xff]
  %v154 = vld [vmem:[%s0 + $0xd4] sm:$0xff]
  %v155 = vld [vmem:[%s0 + $0xdc] sm:$0xf]
  %v156 = vld [vmem:[%s0 + $0xe0] sm:$0xff]
  %v157 = vld [vmem:[%s0 + $0xe8] sm:$0xff]
  %v158 = vld [vmem:[%s0 + $0xf0] sm:$0xff]
  %v159 = vld [vmem:[%s0 + $0xf8] sm:$0xf]
  %v160 = vld [vmem:[%s0 + $0xfc] sm:$0xff]
  %v161 = vld [vmem:[%s0 + $0x104] sm:$0xff]
  %v162 = vld [vmem:[%s0 + $0x10c] sm:$0xff]
  %v163 = vld [vmem:[%s0 + $0x114] sm:$0xf]
  %v164 = vld [vmem:[%s0 + $0x118] sm:$0xff]
  %v165 = vld [vmem:[%s0 + $0x120] sm:$0xff]
  %v166 = vld [vmem:[%s0 + $0x128] sm:$0xff]
  %v167 = vld [vmem:[%s0 + $0x130] sm:$0xf]
  %v168 = vld [vmem:[%s0 + $0x134] sm:$0xff]
  %v169 = vld [vmem:[%s0 + $0x13c] sm:$0xff]
  %v170 = vld [vmem:[%s0 + $0x144] sm:$0xff]
  %v171 = vld [vmem:[%s0 + $0x14c] sm:$0xf]
  %v172 = vld [vmem:[%s0 + $0x150] sm:$0xff]
  %v173 = vld [vmem:[%s0 + $0x158] sm:$0xff]
  %v174 = vld [vmem:[%s0 + $0x160] sm:$0xff]
  %v175 = vld [vmem:[%s0 + $0x168] sm:$0xf]
  %v176 = vld [vmem:[%s0 + $0x16c] sm:$0xff]
  %v177 = vld [vmem:[%s0 + $0x174] sm:$0xff]
  %v178 = vld [vmem:[%s0 + $0x17c] sm:$0xff]
  %v179 = vld [vmem:[%s0 + $0x184] sm:$0xf]
  %v180 = vld [vmem:[%s0 + $0x188] sm:$0xff]
  %v181 = vld [vmem:[%s0 + $0x190] sm:$0xff]
  %v182 = vld [vmem:[%s0 + $0x198] sm:$0xff]
  %v183 = vld [vmem:[%s0 + $0x1a0] sm:$0xf]
  %v184 = vld [vmem:[%s0 + $0x1a4] sm:$0xff]
  %v185 = vld [vmem:[%s0 + $0x1ac] sm:$0xff]
  %v186 = vld [vmem:[%s0 + $0x1b4] sm:$0xff]
  %v187 = vld [vmem:[%s0 + $0x1bc] sm:$0xf]
  %v188 = vld [vmem:[%s0 + $0x1c0] sm:$0xff]
  %v189 = vld [vmem:[%s0 + $0x1c8] sm:$0xff]
  %v190 = vld [vmem:[%s0 + $0x1d0] sm:$0xff]
  %v191 = vld [vmem:[%s0 + $0x1d8] sm:$0xf]
  %v192 = vld [vmem:[%s0 + $0x1dc] sm:$0xff]
  %v193 = vld [vmem:[%s0 + $0x1e4] sm:$0xff]
  %v194 = vld [vmem:[%s0 + $0x1ec] sm:$0xff]
  %v195 = vld [vmem:[%s0 + $0x1f4] sm:$0xf]
  %v196 = vld [vmem:[%s0 + $0x1f8] sm:$0xff]
  %v197 = vld [vmem:[%s0 + $0x200] sm:$0xff]
  %v198 = vld [vmem:[%s0 + $0x208] sm:$0xff]
  %v199 = vld [vmem:[%s0 + $0x210] sm:$0xf]
  %v200 = vld [vmem:[%s0 + $0x214] sm:$0xff]
  %v201 = vld [vmem:[%s0 + $0x21c] sm:$0xff]
  %v202 = vld [vmem:[%s0 + $0x224] sm:$0xff]
  %v203 = vld [vmem:[%s0 + $0x22c] sm:$0xf]
  %v204 = vld [vmem:[%s0 + $0x230] sm:$0xff]
  %v205 = vld [vmem:[%s0 + $0x238] sm:$0xff]
  %v206 = vld [vmem:[%s0 + $0x240] sm:$0xff]
  %v207 = vld [vmem:[%s0 + $0x248] sm:$0xf]
  %v208 = vld [vmem:[%s0 + $0x24c] sm:$0xff]
  %v209 = vld [vmem:[%s0 + $0x254] sm:$0xff]
  %v210 = vld [vmem:[%s0 + $0x25c] sm:$0xff]
  %v211 = vld [vmem:[%s0 + $0x264] sm:$0xf]
  %v212 = vld [vmem:[%s0 + $0x268] sm:$0xff]
  %v213 = vld [vmem:[%s0 + $0x270] sm:$0xff]
  %v214 = vld [vmem:[%s0 + $0x278] sm:$0xff]
  %v215 = vld [vmem:[%s0 + $0x280] sm:$0xf]
  %v216 = vld [vmem:[%s0 + $0x284] sm:$0xff]
  %v217 = vld [vmem:[%s0 + $0x28c] sm:$0xff]
  %v218 = vld [vmem:[%s0 + $0x294] sm:$0xff]
  %v219 = vld [vmem:[%s0 + $0x29c] sm:$0xf]
  %v220 = vld [vmem:[%s0 + $0x2a0] sm:$0xff]
  %v221 = vld [vmem:[%s0 + $0x2a8] sm:$0xff]
  %v222 = vld [vmem:[%s0 + $0x2b0] sm:$0xff]
  %v223 = vld [vmem:[%s0 + $0x2b8] sm:$0xf]
  %v224 = vld [vmem:[%s0 + $0x2bc] sm:$0xff]
  %v225 = vld [vmem:[%s0 + $0x2c4] sm:$0xff]
  %v226 = vld [vmem:[%s0 + $0x2cc] sm:$0xff]
  %v227 = vld [vmem:[%s0 + $0x2d4] sm:$0xf]
  %v228 = vld [vmem:[%s0 + $0x2d8] sm:$0xff]
  %v229 = vld [vmem:[%s0 + $0x2e0] sm:$0xff]
  %v230 = vld [vmem:[%s0 + $0x2e8] sm:$0xff]
  %v231 = vld [vmem:[%s0 + $0x2f0] sm:$0xf]
  %v232 = vld [vmem:[%s0 + $0x2f4] sm:$0xff]
  %v233 = vld [vmem:[%s0 + $0x2fc] sm:$0xff]
  %v234 = vld [vmem:[%s0 + $0x304] sm:$0xff]
  %v235 = vld [vmem:[%s0 + $0x30c] sm:$0xf]
  %v236 = vld [vmem:[%s0 + $0x310] sm:$0xff]
  %v237 = vld [vmem:[%s0 + $0x318] sm:$0xff]
  %v238 = vld [vmem:[%s0 + $0x320] sm:$0xff]
  %v239 = vld [vmem:[%s0 + $0x328] sm:$0xf]
  %v240 = vld [vmem:[%s0 + $0x32c] sm:$0xff]
  %v241 = vld [vmem:[%s0 + $0x334] sm:$0xff]
  %v242 = vld [vmem:[%s0 + $0x33c] sm:$0xff]
  %v243 = vld [vmem:[%s0 + $0x344] sm:$0xf]
  %v244 = vld [vmem:[%s0 + $0x348] sm:$0xff]
  %v245 = vld [vmem:[%s0 + $0x350] sm:$0xff]
  %v246 = vld [vmem:[%s0 + $0x358] sm:$0xff]
  %v247 = vld [vmem:[%s0 + $0x360] sm:$0xf]
  %v248 = vld [vmem:[%s0 + $0x364] sm:$0xff]
  %v249 = vld [vmem:[%s0 + $0x36c] sm:$0xff]
  %v250 = vld [vmem:[%s0 + $0x374] sm:$0xff]
  %v251 = vld [vmem:[%s0 + $0x37c] sm:$0xf]
  %v252 = vld [vmem:[%s0 + $0x380] sm:$0xff]
  %v253 = vld [vmem:[%s0 + $0x388] sm:$0xff]
  %v254 = vld [vmem:[%s0 + $0x390] sm:$0xff]
  %v255 = vld [vmem:[%s0 + $0x398] sm:$0xf]
  %v256 = vld [vmem:[%s0 + $0x39c] sm:$0xff]
  %v257 = vld [vmem:[%s0 + $0x3a4] sm:$0xff]
  %v258 = vld [vmem:[%s0 + $0x3ac] sm:$0xff]
  %v259 = vld [vmem:[%s0 + $0x3b4] sm:$0xf]
  %v260 = vld [vmem:[%s0 + $0x3b8] sm:$0xff]
  %v261 = vld [vmem:[%s0 + $0x3c0] sm:$0xff]
  %v262 = vld [vmem:[%s0 + $0x3c8] sm:$0xff]
  %v263 = vld [vmem:[%s0 + $0x3d0] sm:$0xf]
  %v264 = vld [vmem:[%s0 + $0x3d4] sm:$0xff]
  %v265 = vld [vmem:[%s0 + $0x3dc] sm:$0xff]
  %v266 = vld [vmem:[%s0 + $0x3e4] sm:$0xff]
  %v267 = vld [vmem:[%s0 + $0x3ec] sm:$0xf]
  %v412 = vunpack.c.l.b16 %v124
  %v413 = vunpack.c.h.b16 %v124
  %v414 = vunpack.c.l.b16 %v125
  %v415 = vunpack.c.h.b16 %v125
  %v416 = vunpack.c.l.b16 %v126
  %v417 = vunpack.c.h.b16 %v126
  %v418 = vunpack.c.l.b16 %v127
  %v419 = vunpack.c.l.b16 %v128
  %v420 = vunpack.c.h.b16 %v128
  %v421 = vunpack.c.l.b16 %v129
  %v422 = vunpack.c.h.b16 %v129
  %v423 = vunpack.c.l.b16 %v130
  %v424 = vunpack.c.h.b16 %v130
  %v425 = vunpack.c.l.b16 %v131
  %v426 = vunpack.c.l.b16 %v132
  %v427 = vunpack.c.h.b16 %v132
  %v428 = vunpack.c.l.b16 %v133
  %v429 = vunpack.c.h.b16 %v133
  %v430 = vunpack.c.l.b16 %v134
  %v431 = vunpack.c.h.b16 %v134
  %v432 = vunpack.c.l.b16 %v135
  %v433 = vunpack.c.l.b16 %v136
  %v434 = vunpack.c.h.b16 %v136
  %v435 = vunpack.c.l.b16 %v137
  %v436 = vunpack.c.h.b16 %v137
  %v437 = vunpack.c.l.b16 %v138
  %v438 = vunpack.c.h.b16 %v138
  %v439 = vunpack.c.l.b16 %v139
  %v440 = vunpack.c.l.b16 %v140
  %v441 = vunpack.c.h.b16 %v140
  %v442 = vunpack.c.l.b16 %v141
  %v443 = vunpack.c.h.b16 %v141
  %v444 = vunpack.c.l.b16 %v142
  %v445 = vunpack.c.h.b16 %v142
  %v446 = vunpack.c.l.b16 %v143
  %v447 = vunpack.c.l.b16 %v144
  %v448 = vunpack.c.h.b16 %v144
  %v449 = vunpack.c.l.b16 %v145
  %v450 = vunpack.c.h.b16 %v145
  %v451 = vunpack.c.l.b16 %v146
  %v452 = vunpack.c.h.b16 %v146
  %v453 = vunpack.c.l.b16 %v147
  %v454 = vunpack.c.l.b16 %v148
  %v455 = vunpack.c.h.b16 %v148
  %v456 = vunpack.c.l.b16 %v149
  %v457 = vunpack.c.h.b16 %v149
  %v458 = vunpack.c.l.b16 %v150
  %v459 = vunpack.c.h.b16 %v150
  %v460 = vunpack.c.l.b16 %v151
  %v461 = vunpack.c.l.b16 %v152
  %v462 = vunpack.c.h.b16 %v152
  %v463 = vunpack.c.l.b16 %v153
  %v464 = vunpack.c.h.b16 %v153
  %v465 = vunpack.c.l.b16 %v154
  %v466 = vunpack.c.h.b16 %v154
  %v467 = vunpack.c.l.b16 %v155
  %v468 = vunpack.c.l.b16 %v156
  %v469 = vunpack.c.h.b16 %v156
  %v470 = vunpack.c.l.b16 %v157
  %v471 = vunpack.c.h.b16 %v157
  %v472 = vunpack.c.l.b16 %v158
  %v473 = vunpack.c.h.b16 %v158
  %v474 = vunpack.c.l.b16 %v159
  %v475 = vunpack.c.l.b16 %v160
  %v476 = vunpack.c.h.b16 %v160
  %v477 = vunpack.c.l.b16 %v161
  %v478 = vunpack.c.h.b16 %v161
  %v479 = vunpack.c.l.b16 %v162
  %v480 = vunpack.c.h.b16 %v162
  %v481 = vunpack.c.l.b16 %v163
  %v482 = vunpack.c.l.b16 %v164
  %v483 = vunpack.c.h.b16 %v164
  %v484 = vunpack.c.l.b16 %v165
  %v485 = vunpack.c.h.b16 %v165
  %v486 = vunpack.c.l.b16 %v166
  %v487 = vunpack.c.h.b16 %v166
  %v488 = vunpack.c.l.b16 %v167
  %v489 = vunpack.c.l.b16 %v168
  %v490 = vunpack.c.h.b16 %v168
  %v491 = vunpack.c.l.b16 %v169
  %v492 = vunpack.c.h.b16 %v169
  %v493 = vunpack.c.l.b16 %v170
  %v494 = vunpack.c.h.b16 %v170
  %v495 = vunpack.c.l.b16 %v171
  %v496 = vunpack.c.l.b16 %v172
  %v497 = vunpack.c.h.b16 %v172
  %v498 = vunpack.c.l.b16 %v173
  %v499 = vunpack.c.h.b16 %v173
  %v500 = vunpack.c.l.b16 %v174
  %v501 = vunpack.c.h.b16 %v174
  %v502 = vunpack.c.l.b16 %v175
  %v503 = vunpack.c.l.b16 %v176
  %v504 = vunpack.c.h.b16 %v176
  %v505 = vunpack.c.l.b16 %v177
  %v506 = vunpack.c.h.b16 %v177
  %v507 = vunpack.c.l.b16 %v178
  %v508 = vunpack.c.h.b16 %v178
  %v509 = vunpack.c.l.b16 %v179
  %v510 = vunpack.c.l.b16 %v180
  %v511 = vunpack.c.h.b16 %v180
  %v512 = vunpack.c.l.b16 %v181
  %v513 = vunpack.c.h.b16 %v181
  %v514 = vunpack.c.l.b16 %v182
  %v515 = vunpack.c.h.b16 %v182
  %v516 = vunpack.c.l.b16 %v183
  %v517 = vunpack.c.l.b16 %v184
  %v518 = vunpack.c.h.b16 %v184
  %v519 = vunpack.c.l.b16 %v185
  %v520 = vunpack.c.h.b16 %v185
  %v521 = vunpack.c.l.b16 %v186
  %v522 = vunpack.c.h.b16 %v186
  %v523 = vunpack.c.l.b16 %v187
  %v524 = vunpack.c.l.b16 %v188
  %v525 = vunpack.c.h.b16 %v188
  %v526 = vunpack.c.l.b16 %v189
  %v527 = vunpack.c.h.b16 %v189
  %v528 = vunpack.c.l.b16 %v190
  %v529 = vunpack.c.h.b16 %v190
  %v530 = vunpack.c.l.b16 %v191
  %v531 = vunpack.c.l.b16 %v192
  %v532 = vunpack.c.h.b16 %v192
  %v533 = vunpack.c.l.b16 %v193
  %v534 = vunpack.c.h.b16 %v193
  %v535 = vunpack.c.l.b16 %v194
  %v536 = vunpack.c.h.b16 %v194
  %v537 = vunpack.c.l.b16 %v195
  %v538 = vunpack.c.l.b16 %v196
  %v539 = vunpack.c.h.b16 %v196
  %v540 = vunpack.c.l.b16 %v197
  %v541 = vunpack.c.h.b16 %v197
  %v542 = vunpack.c.l.b16 %v198
  %v543 = vunpack.c.h.b16 %v198
  %v544 = vunpack.c.l.b16 %v199
  %v545 = vunpack.c.l.b16 %v200
  %v546 = vunpack.c.h.b16 %v200
  %v547 = vunpack.c.l.b16 %v201
  %v548 = vunpack.c.h.b16 %v201
  %v549 = vunpack.c.l.b16 %v202
  %v550 = vunpack.c.h.b16 %v202
  %v551 = vunpack.c.l.b16 %v203
  %v552 = vunpack.c.l.b16 %v204
  %v553 = vunpack.c.h.b16 %v204
  %v554 = vunpack.c.l.b16 %v205
  %v555 = vunpack.c.h.b16 %v205
  %v556 = vunpack.c.l.b16 %v206
  %v557 = vunpack.c.h.b16 %v206
  %v558 = vunpack.c.l.b16 %v207
  %v559 = vunpack.c.l.b16 %v208
  %v560 = vunpack.c.h.b16 %v208
  %v561 = vunpack.c.l.b16 %v209
  %v562 = vunpack.c.h.b16 %v209
  %v563 = vunpack.c.l.b16 %v210
  %v564 = vunpack.c.h.b16 %v210
  %v565 = vunpack.c.l.b16 %v211
  %v566 = vunpack.c.l.b16 %v212
  %v567 = vunpack.c.h.b16 %v212
  %v568 = vunpack.c.l.b16 %v213
  %v569 = vunpack.c.h.b16 %v213
  %v570 = vunpack.c.l.b16 %v214
  %v571 = vunpack.c.h.b16 %v214
  %v572 = vunpack.c.l.b16 %v215
  %v573 = vunpack.c.l.b16 %v216
  %v574 = vunpack.c.h.b16 %v216
  %v575 = vunpack.c.l.b16 %v217
  %v576 = vunpack.c.h.b16 %v217
  %v577 = vunpack.c.l.b16 %v218
  %v578 = vunpack.c.h.b16 %v218
  %v579 = vunpack.c.l.b16 %v219
  %v580 = vunpack.c.l.b16 %v220
  %v581 = vunpack.c.h.b16 %v220
  %v582 = vunpack.c.l.b16 %v221
  %v583 = vunpack.c.h.b16 %v221
  %v584 = vunpack.c.l.b16 %v222
  %v585 = vunpack.c.h.b16 %v222
  %v586 = vunpack.c.l.b16 %v223
  %v587 = vunpack.c.l.b16 %v224
  %v588 = vunpack.c.h.b16 %v224
  %v589 = vunpack.c.l.b16 %v225
  %v590 = vunpack.c.h.b16 %v225
  %v591 = vunpack.c.l.b16 %v226
  %v592 = vunpack.c.h.b16 %v226
  %v593 = vunpack.c.l.b16 %v227
  %v594 = vunpack.c.l.b16 %v228
  %v595 = vunpack.c.h.b16 %v228
  %v596 = vunpack.c.l.b16 %v229
  %v597 = vunpack.c.h.b16 %v229
  %v598 = vunpack.c.l.b16 %v230
  %v599 = vunpack.c.h.b16 %v230
  %v600 = vunpack.c.l.b16 %v231
  %v601 = vunpack.c.l.b16 %v232
  %v602 = vunpack.c.h.b16 %v232
  %v603 = vunpack.c.l.b16 %v233
  %v604 = vunpack.c.h.b16 %v233
  %v605 = vunpack.c.l.b16 %v234
  %v606 = vunpack.c.h.b16 %v234
  %v607 = vunpack.c.l.b16 %v235
  %v608 = vunpack.c.l.b16 %v236
  %v609 = vunpack.c.h.b16 %v236
  %v610 = vunpack.c.l.b16 %v237
  %v611 = vunpack.c.h.b16 %v237
  %v612 = vunpack.c.l.b16 %v238
  %v613 = vunpack.c.h.b16 %v238
  %v614 = vunpack.c.l.b16 %v239
  %v615 = vunpack.c.l.b16 %v240
  %v616 = vunpack.c.h.b16 %v240
  %v617 = vunpack.c.l.b16 %v241
  %v618 = vunpack.c.h.b16 %v241
  %v619 = vunpack.c.l.b16 %v242
  %v620 = vunpack.c.h.b16 %v242
  %v621 = vunpack.c.l.b16 %v243
  %v622 = vunpack.c.l.b16 %v244
  %v623 = vunpack.c.h.b16 %v244
  %v624 = vunpack.c.l.b16 %v245
  %v625 = vunpack.c.h.b16 %v245
  %v626 = vunpack.c.l.b16 %v246
  %v627 = vunpack.c.h.b16 %v246
  %v628 = vunpack.c.l.b16 %v247
  %v629 = vunpack.c.l.b16 %v248
  %v630 = vunpack.c.h.b16 %v248
  %v631 = vunpack.c.l.b16 %v249
  %v632 = vunpack.c.h.b16 %v249
  %v633 = vunpack.c.l.b16 %v250
  %v634 = vunpack.c.h.b16 %v250
  %v635 = vunpack.c.l.b16 %v251
  %v636 = vunpack.c.l.b16 %v252
  %v637 = vunpack.c.h.b16 %v252
  %v638 = vunpack.c.l.b16 %v253
  %v639 = vunpack.c.h.b16 %v253
  %v640 = vunpack.c.l.b16 %v254
  %v641 = vunpack.c.h.b16 %v254
  %v642 = vunpack.c.l.b16 %v255
  %v643 = vunpack.c.l.b16 %v256
  %v644 = vunpack.c.h.b16 %v256
  %v645 = vunpack.c.l.b16 %v257
  %v646 = vunpack.c.h.b16 %v257
  %v647 = vunpack.c.l.b16 %v258
  %v648 = vunpack.c.h.b16 %v258
  %v649 = vunpack.c.l.b16 %v259
  %v650 = vunpack.c.l.b16 %v260
  %v651 = vunpack.c.h.b16 %v260
  %v652 = vunpack.c.l.b16 %v261
  %v653 = vunpack.c.h.b16 %v261
  %v654 = vunpack.c.l.b16 %v262
  %v655 = vunpack.c.h.b16 %v262
  %v656 = vunpack.c.l.b16 %v263
  %v657 = vunpack.c.l.b16 %v264
  %v658 = vunpack.c.h.b16 %v264
  %v659 = vunpack.c.l.b16 %v265
  %v660 = vunpack.c.h.b16 %v265
  %v661 = vunpack.c.l.b16 %v266
  %v662 = vunpack.c.h.b16 %v266
  %v663 = vunpack.c.l.b16 %v267
  %v664 = vpack.c.b16 %v419, %v412
  %v665 = vpack.c.b16 %v420, %v413
  %v666 = vpack.c.b16 %v421, %v414
  %v667 = vpack.c.b16 %v422, %v415
  %v668 = vpack.c.b16 %v423, %v416
  %v669 = vpack.c.b16 %v424, %v417
  %v670 = vpack.c.b16 %v425, %v418
  %v671 = vpack.c.b16 %v433, %v426
  %v672 = vpack.c.b16 %v434, %v427
  %v673 = vpack.c.b16 %v435, %v428
  %v674 = vpack.c.b16 %v436, %v429
  %v675 = vpack.c.b16 %v437, %v430
  %v676 = vpack.c.b16 %v438, %v431
  %v677 = vpack.c.b16 %v439, %v432
  %v678 = vpack.c.b16 %v447, %v440
  %v679 = vpack.c.b16 %v448, %v441
  %v680 = vpack.c.b16 %v449, %v442
  %v681 = vpack.c.b16 %v450, %v443
  %v682 = vpack.c.b16 %v451, %v444
  %v683 = vpack.c.b16 %v452, %v445
  %v684 = vpack.c.b16 %v453, %v446
  %v685 = vpack.c.b16 %v461, %v454
  %v686 = vpack.c.b16 %v462, %v455
  %v687 = vpack.c.b16 %v463, %v456
  %v688 = vpack.c.b16 %v464, %v457
  %v689 = vpack.c.b16 %v465, %v458
  %v690 = vpack.c.b16 %v466, %v459
  %v691 = vpack.c.b16 %v467, %v460
  %v692 = vpack.c.b16 %v475, %v468
  %v693 = vpack.c.b16 %v476, %v469
  %v694 = vpack.c.b16 %v477, %v470
  %v695 = vpack.c.b16 %v478, %v471
  %v696 = vpack.c.b16 %v479, %v472
  %v697 = vpack.c.b16 %v480, %v473
  %v698 = vpack.c.b16 %v481, %v474
  %v699 = vpack.c.b16 %v489, %v482
  %v700 = vpack.c.b16 %v490, %v483
  %v701 = vpack.c.b16 %v491, %v484
  %v702 = vpack.c.b16 %v492, %v485
  %v703 = vpack.c.b16 %v493, %v486
  %v704 = vpack.c.b16 %v494, %v487
  %v705 = vpack.c.b16 %v495, %v488
  %v706 = vpack.c.b16 %v503, %v496
  %v707 = vpack.c.b16 %v504, %v497
  %v708 = vpack.c.b16 %v505, %v498
  %v709 = vpack.c.b16 %v506, %v499
  %v710 = vpack.c.b16 %v507, %v500
  %v711 = vpack.c.b16 %v508, %v501
  %v712 = vpack.c.b16 %v509, %v502
  %v713 = vpack.c.b16 %v517, %v510
  %v714 = vpack.c.b16 %v518, %v511
  %v715 = vpack.c.b16 %v519, %v512
  %v716 = vpack.c.b16 %v520, %v513
  %v717 = vpack.c.b16 %v521, %v514
  %v718 = vpack.c.b16 %v522, %v515
  %v719 = vpack.c.b16 %v523, %v516
  %v720 = vpack.c.b16 %v531, %v524
  %v721 = vpack.c.b16 %v532, %v525
  %v722 = vpack.c.b16 %v533, %v526
  %v723 = vpack.c.b16 %v534, %v527
  %v724 = vpack.c.b16 %v535, %v528
  %v725 = vpack.c.b16 %v536, %v529
  %v726 = vpack.c.b16 %v537, %v530
  %v727 = vpack.c.b16 %v545, %v538
  %v728 = vpack.c.b16 %v546, %v539
  %v729 = vpack.c.b16 %v547, %v540
  %v730 = vpack.c.b16 %v548, %v541
  %v731 = vpack.c.b16 %v549, %v542
  %v732 = vpack.c.b16 %v550, %v543
  %v733 = vpack.c.b16 %v551, %v544
  %v734 = vpack.c.b16 %v559, %v552
  %v735 = vpack.c.b16 %v560, %v553
  %v736 = vpack.c.b16 %v561, %v554
  %v737 = vpack.c.b16 %v562, %v555
  %v738 = vpack.c.b16 %v563, %v556
  %v739 = vpack.c.b16 %v564, %v557
  %v740 = vpack.c.b16 %v565, %v558
  %v741 = vpack.c.b16 %v573, %v566
  %v742 = vpack.c.b16 %v574, %v567
  %v743 = vpack.c.b16 %v575, %v568
  %v744 = vpack.c.b16 %v576, %v569
  %v745 = vpack.c.b16 %v577, %v570
  %v746 = vpack.c.b16 %v578, %v571
  %v747 = vpack.c.b16 %v579, %v572
  %v748 = vpack.c.b16 %v587, %v580
  %v749 = vpack.c.b16 %v588, %v581
  %v750 = vpack.c.b16 %v589, %v582
  %v751 = vpack.c.b16 %v590, %v583
  %v752 = vpack.c.b16 %v591, %v584
  %v753 = vpack.c.b16 %v592, %v585
  %v754 = vpack.c.b16 %v593, %v586
  %v755 = vpack.c.b16 %v601, %v594
  %v756 = vpack.c.b16 %v602, %v595
  %v757 = vpack.c.b16 %v603, %v596
  %v758 = vpack.c.b16 %v604, %v597
  %v759 = vpack.c.b16 %v605, %v598
  %v760 = vpack.c.b16 %v606, %v599
  %v761 = vpack.c.b16 %v607, %v600
  %v762 = vpack.c.b16 %v615, %v608
  %v763 = vpack.c.b16 %v616, %v609
  %v764 = vpack.c.b16 %v617, %v610
  %v765 = vpack.c.b16 %v618, %v611
  %v766 = vpack.c.b16 %v619, %v612
  %v767 = vpack.c.b16 %v620, %v613
  %v768 = vpack.c.b16 %v621, %v614
  %v769 = vpack.c.b16 %v629, %v622
  %v770 = vpack.c.b16 %v630, %v623
  %v771 = vpack.c.b16 %v631, %v624
  %v772 = vpack.c.b16 %v632, %v625
  %v773 = vpack.c.b16 %v633, %v626
  %v774 = vpack.c.b16 %v634, %v627
  %v775 = vpack.c.b16 %v635, %v628
  %v776 = vpack.c.b16 %v643, %v636
  %v777 = vpack.c.b16 %v644, %v637
  %v778 = vpack.c.b16 %v645, %v638
  %v779 = vpack.c.b16 %v646, %v639
  %v780 = vpack.c.b16 %v647, %v640
  %v781 = vpack.c.b16 %v648, %v641
  %v782 = vpack.c.b16 %v649, %v642
  %v783 = vpack.c.b16 %v657, %v650
  %v784 = vpack.c.b16 %v658, %v651
  %v785 = vpack.c.b16 %v659, %v652
  %v786 = vpack.c.b16 %v660, %v653
  %v787 = vpack.c.b16 %v661, %v654
  %v788 = vpack.c.b16 %v662, %v655
  %v789 = vpack.c.b16 %v663, %v656
  %v998 = vunpack.c.l.b16 %v24
  %v999 = vunpack.c.l.b16 %v25
  %v1000 = vunpack.c.l.b16 %v26
  %v1001 = vunpack.c.l.b16 %v27
  %v1002 = vunpack.c.l.b16 %v28
  %v1003 = vunpack.c.l.b16 %v29
  %v1004 = vunpack.c.l.b16 %v30
  %v1005 = vunpack.c.l.b16 %v31
  %v1006 = vunpack.c.l.b16 %v32
  %v1007 = vunpack.c.l.b16 %v33
  %v1008 = vunpack.c.l.b16 %v34
  %v1009 = vunpack.c.l.b16 %v35
  %v1010 = vunpack.c.l.b16 %v36
  %v1011 = vunpack.c.l.b16 %v37
  %v1012 = vunpack.c.l.b16 %v38
  %v1013 = vunpack.c.l.b16 %v39
  %v1014 = vunpack.c.l.b16 %v40
  %v1015 = vunpack.c.l.b16 %v41
  %v1016 = vunpack.c.l.b16 %v42
  %v1017 = vunpack.c.l.b16 %v43
  %v1018 = vunpack.c.l.b16 %v44
  %v1019 = vunpack.c.l.b16 %v45
  %v1020 = vunpack.c.l.b16 %v46
  %v1021 = vunpack.c.l.b16 %v47
  %v1022 = vunpack.c.l.b16 %v48
  %v1023 = vunpack.c.l.b16 %v49
  %v1024 = vunpack.c.l.b16 %v50
  %v1025 = vunpack.c.l.b16 %v51
  %v1026 = vunpack.c.l.b16 %v52
  %v1027 = vunpack.c.l.b16 %v53
  %v1028 = vunpack.c.l.b16 %v54
  %v1029 = vunpack.c.l.b16 %v55
  %v1030 = vunpack.c.l.b16 %v56
  %v1031 = vunpack.c.l.b16 %v57
  %v1032 = vunpack.c.l.b16 %v58
  %v1033 = vunpack.c.l.b16 %v59
  %v1034 = vunpack.c.l.b16 %v60
  %v1035 = vunpack.c.l.b16 %v61
  %v1036 = vunpack.c.l.b16 %v62
  %v1037 = vunpack.c.l.b16 %v63
  %v1038 = vunpack.c.l.b16 %v64
  %v1039 = vunpack.c.l.b16 %v65
  %v1040 = vunpack.c.l.b16 %v66
  %v1041 = vunpack.c.l.b16 %v67
  %v1042 = vunpack.c.l.b16 %v68
  %v1043 = vunpack.c.l.b16 %v69
  %v1044 = vunpack.c.l.b16 %v70
  %v1045 = vunpack.c.l.b16 %v71
  %v1046 = vunpack.c.l.b16 %v72
  %v1047 = vunpack.c.l.b16 %v73
  %v1048 = vunpack.c.l.b16 %v74
  %v1049 = vunpack.c.l.b16 %v75
  %v1050 = vunpack.c.l.b16 %v76
  %v1051 = vunpack.c.l.b16 %v77
  %v1052 = vunpack.c.l.b16 %v78
  %v1053 = vunpack.c.l.b16 %v79
  %v1054 = vunpack.c.l.b16 %v80
  %v1055 = vunpack.c.l.b16 %v81
  %v1056 = vunpack.c.l.b16 %v82
  %v1057 = vunpack.c.l.b16 %v83
  %v1058 = vunpack.c.l.b16 %v84
  %v1059 = vunpack.c.l.b16 %v85
  %v1060 = vunpack.c.l.b16 %v86
  %v1061 = vunpack.c.l.b16 %v87
  %v1062 = vunpack.c.l.b16 %v88
  %v1063 = vunpack.c.l.b16 %v89
  %v1064 = vunpack.c.l.b16 %v90
  %v1065 = vunpack.c.l.b16 %v91
  %v1066 = vunpack.c.l.b16 %v92
  %v1067 = vunpack.c.l.b16 %v93
  %v1068 = vunpack.c.l.b16 %v94
  %v1069 = vunpack.c.l.b16 %v95
  %v1070 = vunpack.c.l.b16 %v96
  %v1071 = vunpack.c.l.b16 %v97
  %v1072 = vunpack.c.l.b16 %v98
  %v1073 = vunpack.c.l.b16 %v99
  %v1074 = vunpack.c.l.b16 %v100
  %v1075 = vunpack.c.l.b16 %v101
  %v1076 = vunpack.c.l.b16 %v102
  %v1077 = vunpack.c.l.b16 %v103
  %v1078 = vunpack.c.l.b16 %v104
  %v1079 = vunpack.c.l.b16 %v105
  %v1080 = vunpack.c.l.b16 %v106
  %v1081 = vunpack.c.l.b16 %v107
  %v1082 = vunpack.c.l.b16 %v108
  %v1083 = vunpack.c.l.b16 %v109
  %v1084 = vunpack.c.l.b16 %v110
  %v1085 = vunpack.c.l.b16 %v111
  %v1086 = vunpack.c.l.b16 %v112
  %v1087 = vunpack.c.l.b16 %v113
  %v1088 = vunpack.c.l.b16 %v114
  %v1089 = vunpack.c.l.b16 %v115
  %v1090 = vunpack.c.l.b16 %v116
  %v1091 = vunpack.c.l.b16 %v117
  %v1092 = vunpack.c.l.b16 %v118
  %v1093 = vunpack.c.l.b16 %v119
  %v1094 = vunpack.c.l.b16 %v120
  %v1095 = vunpack.c.l.b16 %v121
  %v1096 = vunpack.c.l.b16 %v122
  %v1097 = vunpack.c.l.b16 %v123
  %v1098 = vpack.c.b16 %v999, %v998
  %v1099 = vpack.c.b16 %v1001, %v1000
  %v1100 = vpack.c.b16 %v1003, %v1002
  %v1101 = vpack.c.b16 %v1005, %v1004
  %v1102 = vpack.c.b16 %v1007, %v1006
  %v1103 = vpack.c.b16 %v1009, %v1008
  %v1104 = vpack.c.b16 %v1011, %v1010
  %v1105 = vpack.c.b16 %v1013, %v1012
  %v1106 = vpack.c.b16 %v1015, %v1014
  %v1107 = vpack.c.b16 %v1017, %v1016
  %v1108 = vpack.c.b16 %v1019, %v1018
  %v1109 = vpack.c.b16 %v1021, %v1020
  %v1110 = vpack.c.b16 %v1023, %v1022
  %v1111 = vpack.c.b16 %v1025, %v1024
  %v1112 = vpack.c.b16 %v1027, %v1026
  %v1113 = vpack.c.b16 %v1029, %v1028
  %v1114 = vpack.c.b16 %v1031, %v1030
  %v1115 = vpack.c.b16 %v1033, %v1032
  %v1116 = vpack.c.b16 %v1035, %v1034
  %v1117 = vpack.c.b16 %v1037, %v1036
  %v1118 = vpack.c.b16 %v1039, %v1038
  %v1119 = vpack.c.b16 %v1041, %v1040
  %v1120 = vpack.c.b16 %v1043, %v1042
  %v1121 = vpack.c.b16 %v1045, %v1044
  %v1122 = vpack.c.b16 %v1047, %v1046
  %v1123 = vpack.c.b16 %v1049, %v1048
  %v1124 = vpack.c.b16 %v1051, %v1050
  %v1125 = vpack.c.b16 %v1053, %v1052
  %v1126 = vpack.c.b16 %v1055, %v1054
  %v1127 = vpack.c.b16 %v1057, %v1056
  %v1128 = vpack.c.b16 %v1059, %v1058
  %v1129 = vpack.c.b16 %v1061, %v1060
  %v1130 = vpack.c.b16 %v1063, %v1062
  %v1131 = vpack.c.b16 %v1065, %v1064
  %v1132 = vpack.c.b16 %v1067, %v1066
  %v1133 = vpack.c.b16 %v1069, %v1068
  %v1134 = vpack.c.b16 %v1071, %v1070
  %v1135 = vpack.c.b16 %v1073, %v1072
  %v1136 = vpack.c.b16 %v1075, %v1074
  %v1137 = vpack.c.b16 %v1077, %v1076
  %v1138 = vpack.c.b16 %v1079, %v1078
  %v1139 = vpack.c.b16 %v1081, %v1080
  %v1140 = vpack.c.b16 %v1083, %v1082
  %v1141 = vpack.c.b16 %v1085, %v1084
  %v1142 = vpack.c.b16 %v1087, %v1086
  %v1143 = vpack.c.b16 %v1089, %v1088
  %v1144 = vpack.c.b16 %v1091, %v1090
  %v1145 = vpack.c.b16 %v1093, %v1092
  %v1146 = vpack.c.b16 %v1095, %v1094
  %v1147 = vpack.c.b16 %v1097, %v1096
  %vm1198 = vcmask 261120
  %v1200 = vsel %vm1198, %v670, 0
  %v1203 = vsel %vm1198, %v677, 0
  %v1206 = vsel %vm1198, %v684, 0
  %v1209 = vsel %vm1198, %v691, 0
  %v1212 = vsel %vm1198, %v698, 0
  %v1215 = vsel %vm1198, %v705, 0
  %v1218 = vsel %vm1198, %v712, 0
  %v1221 = vsel %vm1198, %v719, 0
  %v1224 = vsel %vm1198, %v726, 0
  %v1227 = vsel %vm1198, %v733, 0
  %v1230 = vsel %vm1198, %v740, 0
  %v1233 = vsel %vm1198, %v747, 0
  %v1236 = vsel %vm1198, %v754, 0
  %v1239 = vsel %vm1198, %v761, 0
  %v1242 = vsel %vm1198, %v768, 0
  %v1245 = vsel %vm1198, %v775, 0
  %v1248 = vsel %vm1198, %v782, 0
  %v1251 = vsel %vm1198, %v789, 0
  %1253 = vmatpush.bf16.msra.mxu0 %v1105
  %1254 = vmatpush.bf16.msra.mxu0 %v1104
  %1255 = vmatpush.bf16.msra.mxu0 %v1103
  %1256 = vmatpush.bf16.msra.mxu0 %v1102
  %1257 = vmatpush.bf16.msra.mxu0 %v1101
  %1258 = vmatpush.bf16.msra.mxu0 %v1100
  %1259 = vmatpush.bf16.msra.mxu0 %v1099
  %1260 = vmatpush.bf16.msra.mxu0 %v1098
  %1261 = vmatmul.bf16.gmra.mxu0 %v664
  %v1262 = vpop.f32.mrf.mxu0
  %v1263 = vadd.f32 0.0, %v1262
  %v1264 = vpop.f32.mrf.mxu0
  %v1265 = vadd.f32 0.0, %v1264
  %1266 = vmatmul.bf16.gmra.mxu0 %v671
  %v1267 = vpop.f32.mrf.mxu0
  %v1268 = vadd.f32 0.0, %v1267
  %v1269 = vpop.f32.mrf.mxu0
  %v1270 = vadd.f32 0.0, %v1269
  %1271 = vmatmul.bf16.gmra.mxu0 %v678
  %v1272 = vpop.f32.mrf.mxu0
  %v1273 = vadd.f32 0.0, %v1272
  %v1274 = vpop.f32.mrf.mxu0
  %v1275 = vadd.f32 0.0, %v1274
  %1276 = vmatmul.bf16.gmra.mxu0 %v685
  %v1277 = vpop.f32.mrf.mxu0
  %v1278 = vadd.f32 0.0, %v1277
  %v1279 = vpop.f32.mrf.mxu0
  %v1280 = vadd.f32 0.0, %v1279
  %1281 = vmatmul.bf16.gmra.mxu0 %v692
  %v1282 = vpop.f32.mrf.mxu0
  %v1283 = vadd.f32 0.0, %v1282
  %v1284 = vpop.f32.mrf.mxu0
  %v1285 = vadd.f32 0.0, %v1284
  %1286 = vmatmul.bf16.gmra.mxu0 %v699
  %v1287 = vpop.f32.mrf.mxu0
  %v1288 = vadd.f32 0.0, %v1287
  %v1289 = vpop.f32.mrf.mxu0
  %v1290 = vadd.f32 0.0, %v1289
  %1291 = vmatmul.bf16.gmra.mxu0 %v706
  %v1292 = vpop.f32.mrf.mxu0
  %v1293 = vadd.f32 0.0, %v1292
  %v1294 = vpop.f32.mrf.mxu0
  %v1295 = vadd.f32 0.0, %v1294
  %1296 = vmatmul.bf16.gmra.mxu0 %v713
  %v1297 = vpop.f32.mrf.mxu0
  %v1298 = vadd.f32 0.0, %v1297
  %v1299 = vpop.f32.mrf.mxu0
  %v1300 = vadd.f32 0.0, %v1299
  %1301 = vmatmul.bf16.gmra.mxu0 %v720
  %v1302 = vpop.f32.mrf.mxu0
  %v1303 = vadd.f32 0.0, %v1302
  %v1304 = vpop.f32.mrf.mxu0
  %v1305 = vadd.f32 0.0, %v1304
  %1306 = vmatmul.bf16.gmra.mxu0 %v727
  %v1307 = vpop.f32.mrf.mxu0
  %v1308 = vadd.f32 0.0, %v1307
  %v1309 = vpop.f32.mrf.mxu0
  %v1310 = vadd.f32 0.0, %v1309
  %1311 = vmatmul.bf16.gmra.mxu0 %v734
  %v1312 = vpop.f32.mrf.mxu0
  %v1313 = vadd.f32 0.0, %v1312
  %v1314 = vpop.f32.mrf.mxu0
  %v1315 = vadd.f32 0.0, %v1314
  %1316 = vmatmul.bf16.gmra.mxu0 %v741
  %v1317 = vpop.f32.mrf.mxu0
  %v1318 = vadd.f32 0.0, %v1317
  %v1319 = vpop.f32.mrf.mxu0
  %v1320 = vadd.f32 0.0, %v1319
  %1321 = vmatmul.bf16.gmra.mxu0 %v748
  %v1322 = vpop.f32.mrf.mxu0
  %v1323 = vadd.f32 0.0, %v1322
  %v1324 = vpop.f32.mrf.mxu0
  %v1325 = vadd.f32 0.0, %v1324
  %1326 = vmatmul.bf16.gmra.mxu0 %v755
  %v1327 = vpop.f32.mrf.mxu0
  %v1328 = vadd.f32 0.0, %v1327
  %v1329 = vpop.f32.mrf.mxu0
  %v1330 = vadd.f32 0.0, %v1329
  %1331 = vmatmul.bf16.gmra.mxu0 %v762
  %v1332 = vpop.f32.mrf.mxu0
  %v1333 = vadd.f32 0.0, %v1332
  %v1334 = vpop.f32.mrf.mxu0
  %v1335 = vadd.f32 0.0, %v1334
  %1336 = vmatmul.bf16.gmra.mxu0 %v769
  %v1337 = vpop.f32.mrf.mxu0
  %v1338 = vadd.f32 0.0, %v1337
  %v1339 = vpop.f32.mrf.mxu0
  %v1340 = vadd.f32 0.0, %v1339
  %1341 = vmatmul.bf16.gmra.mxu0 %v776
  %v1342 = vpop.f32.mrf.mxu0
  %v1343 = vadd.f32 0.0, %v1342
  %v1344 = vpop.f32.mrf.mxu0
  %v1345 = vadd.f32 0.0, %v1344
  %1346 = vmatmul.bf16.gmra.mxu0 %v783
  %v1347 = vpop.f32.mrf.mxu0
  %v1348 = vadd.f32 0.0, %v1347
  %v1349 = vpop.f32.mrf.mxu0
  %v1350 = vadd.f32 0.0, %v1349
  %1351 = vdwg.mxu0
  %1352 = vmatpush.bf16.msra.mxu0 %v1113
  %1353 = vmatpush.bf16.msra.mxu0 %v1112
  %1354 = vmatpush.bf16.msra.mxu0 %v1111
  %1355 = vmatpush.bf16.msra.mxu0 %v1110
  %1356 = vmatpush.bf16.msra.mxu0 %v1109
  %1357 = vmatpush.bf16.msra.mxu0 %v1108
  %1358 = vmatpush.bf16.msra.mxu0 %v1107
  %1359 = vmatpush.bf16.msra.mxu0 %v1106
  %1360 = vmatmul.bf16.gmra.mxu0 %v665
  %v1361 = vpop.f32.mrf.mxu0
  %v1362 = vadd.f32 %v1263, %v1361
  %v1363 = vpop.f32.mrf.mxu0
  %v1364 = vadd.f32 %v1265, %v1363
  %1365 = vmatmul.bf16.gmra.mxu0 %v672
  %v1366 = vpop.f32.mrf.mxu0
  %v1367 = vadd.f32 %v1268, %v1366
  %v1368 = vpop.f32.mrf.mxu0
  %v1369 = vadd.f32 %v1270, %v1368
  %1370 = vmatmul.bf16.gmra.mxu0 %v679
  %v1371 = vpop.f32.mrf.mxu0
  %v1372 = vadd.f32 %v1273, %v1371
  %v1373 = vpop.f32.mrf.mxu0
  %v1374 = vadd.f32 %v1275, %v1373
  %1375 = vmatmul.bf16.gmra.mxu0 %v686
  %v1376 = vpop.f32.mrf.mxu0
  %v1377 = vadd.f32 %v1278, %v1376
  %v1378 = vpop.f32.mrf.mxu0
  %v1379 = vadd.f32 %v1280, %v1378
  %1380 = vmatmul.bf16.gmra.mxu0 %v693
  %v1381 = vpop.f32.mrf.mxu0
  %v1382 = vadd.f32 %v1283, %v1381
  %v1383 = vpop.f32.mrf.mxu0
  %v1384 = vadd.f32 %v1285, %v1383
  %1385 = vmatmul.bf16.gmra.mxu0 %v700
  %v1386 = vpop.f32.mrf.mxu0
  %v1387 = vadd.f32 %v1288, %v1386
  %v1388 = vpop.f32.mrf.mxu0
  %v1389 = vadd.f32 %v1290, %v1388
  %1390 = vmatmul.bf16.gmra.mxu0 %v707
  %v1391 = vpop.f32.mrf.mxu0
  %v1392 = vadd.f32 %v1293, %v1391
  %v1393 = vpop.f32.mrf.mxu0
  %v1394 = vadd.f32 %v1295, %v1393
  %1395 = vmatmul.bf16.gmra.mxu0 %v714
  %v1396 = vpop.f32.mrf.mxu0
  %v1397 = vadd.f32 %v1298, %v1396
  %v1398 = vpop.f32.mrf.mxu0
  %v1399 = vadd.f32 %v1300, %v1398
  %1400 = vmatmul.bf16.gmra.mxu0 %v721
  %v1401 = vpop.f32.mrf.mxu0
  %v1402 = vadd.f32 %v1303, %v1401
  %v1403 = vpop.f32.mrf.mxu0
  %v1404 = vadd.f32 %v1305, %v1403
  %1405 = vmatmul.bf16.gmra.mxu0 %v728
  %v1406 = vpop.f32.mrf.mxu0
  %v1407 = vadd.f32 %v1308, %v1406
  %v1408 = vpop.f32.mrf.mxu0
  %v1409 = vadd.f32 %v1310, %v1408
  %1410 = vmatmul.bf16.gmra.mxu0 %v735
  %v1411 = vpop.f32.mrf.mxu0
  %v1412 = vadd.f32 %v1313, %v1411
  %v1413 = vpop.f32.mrf.mxu0
  %v1414 = vadd.f32 %v1315, %v1413
  %1415 = vmatmul.bf16.gmra.mxu0 %v742
  %v1416 = vpop.f32.mrf.mxu0
  %v1417 = vadd.f32 %v1318, %v1416
  %v1418 = vpop.f32.mrf.mxu0
  %v1419 = vadd.f32 %v1320, %v1418
  %1420 = vmatmul.bf16.gmra.mxu0 %v749
  %v1421 = vpop.f32.mrf.mxu0
  %v1422 = vadd.f32 %v1323, %v1421
  %v1423 = vpop.f32.mrf.mxu0
  %v1424 = vadd.f32 %v1325, %v1423
  %1425 = vmatmul.bf16.gmra.mxu0 %v756
  %v1426 = vpop.f32.mrf.mxu0
  %v1427 = vadd.f32 %v1328, %v1426
  %v1428 = vpop.f32.mrf.mxu0
  %v1429 = vadd.f32 %v1330, %v1428
  %1430 = vmatmul.bf16.gmra.mxu0 %v763
  %v1431 = vpop.f32.mrf.mxu0
  %v1432 = vadd.f32 %v1333, %v1431
  %v1433 = vpop.f32.mrf.mxu0
  %v1434 = vadd.f32 %v1335, %v1433
  %1435 = vmatmul.bf16.gmra.mxu0 %v770
  %v1436 = vpop.f32.mrf.mxu0
  %v1437 = vadd.f32 %v1338, %v1436
  %v1438 = vpop.f32.mrf.mxu0
  %v1439 = vadd.f32 %v1340, %v1438
  %1440 = vmatmul.bf16.gmra.mxu0 %v777
  %v1441 = vpop.f32.mrf.mxu0
  %v1442 = vadd.f32 %v1343, %v1441
  %v1443 = vpop.f32.mrf.mxu0
  %v1444 = vadd.f32 %v1345, %v1443
  %1445 = vmatmul.bf16.gmra.mxu0 %v784
  %v1446 = vpop.f32.mrf.mxu0
  %v1447 = vadd.f32 %v1348, %v1446
  %v1448 = vpop.f32.mrf.mxu0
  %v1449 = vadd.f32 %v1350, %v1448
  %1450 = vdwg.mxu0
  %1451 = vmatpush.bf16.msra.mxu0 %v1121
  %1452 = vmatpush.bf16.msra.mxu0 %v1120
  %1453 = vmatpush.bf16.msra.mxu0 %v1119
  %1454 = vmatpush.bf16.msra.mxu0 %v1118
  %1455 = vmatpush.bf16.msra.mxu0 %v1117
  %1456 = vmatpush.bf16.msra.mxu0 %v1116
  %1457 = vmatpush.bf16.msra.mxu0 %v1115
  %1458 = vmatpush.bf16.msra.mxu0 %v1114
  %1459 = vmatmul.bf16.gmra.mxu0 %v666
  %v1460 = vpop.f32.mrf.mxu0
  %v1461 = vadd.f32 %v1362, %v1460
  %v1462 = vpop.f32.mrf.mxu0
  %v1463 = vadd.f32 %v1364, %v1462
  %1464 = vmatmul.bf16.gmra.mxu0 %v673
  %v1465 = vpop.f32.mrf.mxu0
  %v1466 = vadd.f32 %v1367, %v1465
  %v1467 = vpop.f32.mrf.mxu0
  %v1468 = vadd.f32 %v1369, %v1467
  %1469 = vmatmul.bf16.gmra.mxu0 %v680
  %v1470 = vpop.f32.mrf.mxu0
  %v1471 = vadd.f32 %v1372, %v1470
  %v1472 = vpop.f32.mrf.mxu0
  %v1473 = vadd.f32 %v1374, %v1472
  %1474 = vmatmul.bf16.gmra.mxu0 %v687
  %v1475 = vpop.f32.mrf.mxu0
  %v1476 = vadd.f32 %v1377, %v1475
  %v1477 = vpop.f32.mrf.mxu0
  %v1478 = vadd.f32 %v1379, %v1477
  %1479 = vmatmul.bf16.gmra.mxu0 %v694
  %v1480 = vpop.f32.mrf.mxu0
  %v1481 = vadd.f32 %v1382, %v1480
  %v1482 = vpop.f32.mrf.mxu0
  %v1483 = vadd.f32 %v1384, %v1482
  %1484 = vmatmul.bf16.gmra.mxu0 %v701
  %v1485 = vpop.f32.mrf.mxu0
  %v1486 = vadd.f32 %v1387, %v1485
  %v1487 = vpop.f32.mrf.mxu0
  %v1488 = vadd.f32 %v1389, %v1487
  %1489 = vmatmul.bf16.gmra.mxu0 %v708
  %v1490 = vpop.f32.mrf.mxu0
  %v1491 = vadd.f32 %v1392, %v1490
  %v1492 = vpop.f32.mrf.mxu0
  %v1493 = vadd.f32 %v1394, %v1492
  %1494 = vmatmul.bf16.gmra.mxu0 %v715
  %v1495 = vpop.f32.mrf.mxu0
  %v1496 = vadd.f32 %v1397, %v1495
  %v1497 = vpop.f32.mrf.mxu0
  %v1498 = vadd.f32 %v1399, %v1497
  %1499 = vmatmul.bf16.gmra.mxu0 %v722
  %v1500 = vpop.f32.mrf.mxu0
  %v1501 = vadd.f32 %v1402, %v1500
  %v1502 = vpop.f32.mrf.mxu0
  %v1503 = vadd.f32 %v1404, %v1502
  %1504 = vmatmul.bf16.gmra.mxu0 %v729
  %v1505 = vpop.f32.mrf.mxu0
  %v1506 = vadd.f32 %v1407, %v1505
  %v1507 = vpop.f32.mrf.mxu0
  %v1508 = vadd.f32 %v1409, %v1507
  %1509 = vmatmul.bf16.gmra.mxu0 %v736
  %v1510 = vpop.f32.mrf.mxu0
  %v1511 = vadd.f32 %v1412, %v1510
  %v1512 = vpop.f32.mrf.mxu0
  %v1513 = vadd.f32 %v1414, %v1512
  %1514 = vmatmul.bf16.gmra.mxu0 %v743
  %v1515 = vpop.f32.mrf.mxu0
  %v1516 = vadd.f32 %v1417, %v1515
  %v1517 = vpop.f32.mrf.mxu0
  %v1518 = vadd.f32 %v1419, %v1517
  %1519 = vmatmul.bf16.gmra.mxu0 %v750
  %v1520 = vpop.f32.mrf.mxu0
  %v1521 = vadd.f32 %v1422, %v1520
  %v1522 = vpop.f32.mrf.mxu0
  %v1523 = vadd.f32 %v1424, %v1522
  %1524 = vmatmul.bf16.gmra.mxu0 %v757
  %v1525 = vpop.f32.mrf.mxu0
  %v1526 = vadd.f32 %v1427, %v1525
  %v1527 = vpop.f32.mrf.mxu0
  %v1528 = vadd.f32 %v1429, %v1527
  %1529 = vmatmul.bf16.gmra.mxu0 %v764
  %v1530 = vpop.f32.mrf.mxu0
  %v1531 = vadd.f32 %v1432, %v1530
  %v1532 = vpop.f32.mrf.mxu0
  %v1533 = vadd.f32 %v1434, %v1532
  %1534 = vmatmul.bf16.gmra.mxu0 %v771
  %v1535 = vpop.f32.mrf.mxu0
  %v1536 = vadd.f32 %v1437, %v1535
  %v1537 = vpop.f32.mrf.mxu0
  %v1538 = vadd.f32 %v1439, %v1537
  %1539 = vmatmul.bf16.gmra.mxu0 %v778
  %v1540 = vpop.f32.mrf.mxu0
  %v1541 = vadd.f32 %v1442, %v1540
  %v1542 = vpop.f32.mrf.mxu0
  %v1543 = vadd.f32 %v1444, %v1542
  %1544 = vmatmul.bf16.gmra.mxu0 %v785
  %v1545 = vpop.f32.mrf.mxu0
  %v1546 = vadd.f32 %v1447, %v1545
  %v1547 = vpop.f32.mrf.mxu0
  %v1548 = vadd.f32 %v1449, %v1547
  %1549 = vdwg.mxu0
  %1550 = vmatpush.bf16.msra.mxu0 %v1129
  %1551 = vmatpush.bf16.msra.mxu0 %v1128
  %1552 = vmatpush.bf16.msra.mxu0 %v1127
  %1553 = vmatpush.bf16.msra.mxu0 %v1126
  %1554 = vmatpush.bf16.msra.mxu0 %v1125
  %1555 = vmatpush.bf16.msra.mxu0 %v1124
  %1556 = vmatpush.bf16.msra.mxu0 %v1123
  %1557 = vmatpush.bf16.msra.mxu0 %v1122
  %1558 = vmatmul.bf16.gmra.mxu0 %v667
  %v1559 = vpop.f32.mrf.mxu0
  %v1560 = vadd.f32 %v1461, %v1559
  %v1561 = vpop.f32.mrf.mxu0
  %v1562 = vadd.f32 %v1463, %v1561
  %1563 = vmatmul.bf16.gmra.mxu0 %v674
  %v1564 = vpop.f32.mrf.mxu0
  %v1565 = vadd.f32 %v1466, %v1564
  %v1566 = vpop.f32.mrf.mxu0
  %v1567 = vadd.f32 %v1468, %v1566
  %1568 = vmatmul.bf16.gmra.mxu0 %v681
  %v1569 = vpop.f32.mrf.mxu0
  %v1570 = vadd.f32 %v1471, %v1569
  %v1571 = vpop.f32.mrf.mxu0
  %v1572 = vadd.f32 %v1473, %v1571
  %1573 = vmatmul.bf16.gmra.mxu0 %v688
  %v1574 = vpop.f32.mrf.mxu0
  %v1575 = vadd.f32 %v1476, %v1574
  %v1576 = vpop.f32.mrf.mxu0
  %v1577 = vadd.f32 %v1478, %v1576
  %1578 = vmatmul.bf16.gmra.mxu0 %v695
  %v1579 = vpop.f32.mrf.mxu0
  %v1580 = vadd.f32 %v1481, %v1579
  %v1581 = vpop.f32.mrf.mxu0
  %v1582 = vadd.f32 %v1483, %v1581
  %1583 = vmatmul.bf16.gmra.mxu0 %v702
  %v1584 = vpop.f32.mrf.mxu0
  %v1585 = vadd.f32 %v1486, %v1584
  %v1586 = vpop.f32.mrf.mxu0
  %v1587 = vadd.f32 %v1488, %v1586
  %1588 = vmatmul.bf16.gmra.mxu0 %v709
  %v1589 = vpop.f32.mrf.mxu0
  %v1590 = vadd.f32 %v1491, %v1589
  %v1591 = vpop.f32.mrf.mxu0
  %v1592 = vadd.f32 %v1493, %v1591
  %1593 = vmatmul.bf16.gmra.mxu0 %v716
  %v1594 = vpop.f32.mrf.mxu0
  %v1595 = vadd.f32 %v1496, %v1594
  %v1596 = vpop.f32.mrf.mxu0
  %v1597 = vadd.f32 %v1498, %v1596
  %1598 = vmatmul.bf16.gmra.mxu0 %v723
  %v1599 = vpop.f32.mrf.mxu0
  %v1600 = vadd.f32 %v1501, %v1599
  %v1601 = vpop.f32.mrf.mxu0
  %v1602 = vadd.f32 %v1503, %v1601
  %1603 = vmatmul.bf16.gmra.mxu0 %v730
  %v1604 = vpop.f32.mrf.mxu0
  %v1605 = vadd.f32 %v1506, %v1604
  %v1606 = vpop.f32.mrf.mxu0
  %v1607 = vadd.f32 %v1508, %v1606
  %1608 = vmatmul.bf16.gmra.mxu0 %v737
  %v1609 = vpop.f32.mrf.mxu0
  %v1610 = vadd.f32 %v1511, %v1609
  %v1611 = vpop.f32.mrf.mxu0
  %v1612 = vadd.f32 %v1513, %v1611
  %1613 = vmatmul.bf16.gmra.mxu0 %v744
  %v1614 = vpop.f32.mrf.mxu0
  %v1615 = vadd.f32 %v1516, %v1614
  %v1616 = vpop.f32.mrf.mxu0
  %v1617 = vadd.f32 %v1518, %v1616
  %1618 = vmatmul.bf16.gmra.mxu0 %v751
  %v1619 = vpop.f32.mrf.mxu0
  %v1620 = vadd.f32 %v1521, %v1619
  %v1621 = vpop.f32.mrf.mxu0
  %v1622 = vadd.f32 %v1523, %v1621
  %1623 = vmatmul.bf16.gmra.mxu0 %v758
  %v1624 = vpop.f32.mrf.mxu0
  %v1625 = vadd.f32 %v1526, %v1624
  %v1626 = vpop.f32.mrf.mxu0
  %v1627 = vadd.f32 %v1528, %v1626
  %1628 = vmatmul.bf16.gmra.mxu0 %v765
  %v1629 = vpop.f32.mrf.mxu0
  %v1630 = vadd.f32 %v1531, %v1629
  %v1631 = vpop.f32.mrf.mxu0
  %v1632 = vadd.f32 %v1533, %v1631
  %1633 = vmatmul.bf16.gmra.mxu0 %v772
  %v1634 = vpop.f32.mrf.mxu0
  %v1635 = vadd.f32 %v1536, %v1634
  %v1636 = vpop.f32.mrf.mxu0
  %v1637 = vadd.f32 %v1538, %v1636
  %1638 = vmatmul.bf16.gmra.mxu0 %v779
  %v1639 = vpop.f32.mrf.mxu0
  %v1640 = vadd.f32 %v1541, %v1639
  %v1641 = vpop.f32.mrf.mxu0
  %v1642 = vadd.f32 %v1543, %v1641
  %1643 = vmatmul.bf16.gmra.mxu0 %v786
  %v1644 = vpop.f32.mrf.mxu0
  %v1645 = vadd.f32 %v1546, %v1644
  %v1646 = vpop.f32.mrf.mxu0
  %v1647 = vadd.f32 %v1548, %v1646
  %1648 = vdwg.mxu0
  %1649 = vmatpush.bf16.msra.mxu0 %v1137
  %1650 = vmatpush.bf16.msra.mxu0 %v1136
  %1651 = vmatpush.bf16.msra.mxu0 %v1135
  %1652 = vmatpush.bf16.msra.mxu0 %v1134
  %1653 = vmatpush.bf16.msra.mxu0 %v1133
  %1654 = vmatpush.bf16.msra.mxu0 %v1132
  %1655 = vmatpush.bf16.msra.mxu0 %v1131
  %1656 = vmatpush.bf16.msra.mxu0 %v1130
  %1657 = vmatmul.bf16.gmra.mxu0 %v668
  %v1658 = vpop.f32.mrf.mxu0
  %v1659 = vadd.f32 %v1560, %v1658
  %v1660 = vpop.f32.mrf.mxu0
  %v1661 = vadd.f32 %v1562, %v1660
  %1662 = vmatmul.bf16.gmra.mxu0 %v675
  %v1663 = vpop.f32.mrf.mxu0
  %v1664 = vadd.f32 %v1565, %v1663
  %v1665 = vpop.f32.mrf.mxu0
  %v1666 = vadd.f32 %v1567, %v1665
  %1667 = vmatmul.bf16.gmra.mxu0 %v682
  %v1668 = vpop.f32.mrf.mxu0
  %v1669 = vadd.f32 %v1570, %v1668
  %v1670 = vpop.f32.mrf.mxu0
  %v1671 = vadd.f32 %v1572, %v1670
  %1672 = vmatmul.bf16.gmra.mxu0 %v689
  %v1673 = vpop.f32.mrf.mxu0
  %v1674 = vadd.f32 %v1575, %v1673
  %v1675 = vpop.f32.mrf.mxu0
  %v1676 = vadd.f32 %v1577, %v1675
  %1677 = vmatmul.bf16.gmra.mxu0 %v696
  %v1678 = vpop.f32.mrf.mxu0
  %v1679 = vadd.f32 %v1580, %v1678
  %v1680 = vpop.f32.mrf.mxu0
  %v1681 = vadd.f32 %v1582, %v1680
  %1682 = vmatmul.bf16.gmra.mxu0 %v703
  %v1683 = vpop.f32.mrf.mxu0
  %v1684 = vadd.f32 %v1585, %v1683
  %v1685 = vpop.f32.mrf.mxu0
  %v1686 = vadd.f32 %v1587, %v1685
  %1687 = vmatmul.bf16.gmra.mxu0 %v710
  %v1688 = vpop.f32.mrf.mxu0
  %v1689 = vadd.f32 %v1590, %v1688
  %v1690 = vpop.f32.mrf.mxu0
  %v1691 = vadd.f32 %v1592, %v1690
  %1692 = vmatmul.bf16.gmra.mxu0 %v717
  %v1693 = vpop.f32.mrf.mxu0
  %v1694 = vadd.f32 %v1595, %v1693
  %v1695 = vpop.f32.mrf.mxu0
  %v1696 = vadd.f32 %v1597, %v1695
  %1697 = vmatmul.bf16.gmra.mxu0 %v724
  %v1698 = vpop.f32.mrf.mxu0
  %v1699 = vadd.f32 %v1600, %v1698
  %v1700 = vpop.f32.mrf.mxu0
  %v1701 = vadd.f32 %v1602, %v1700
  %1702 = vmatmul.bf16.gmra.mxu0 %v731
  %v1703 = vpop.f32.mrf.mxu0
  %v1704 = vadd.f32 %v1605, %v1703
  %v1705 = vpop.f32.mrf.mxu0
  %v1706 = vadd.f32 %v1607, %v1705
  %1707 = vmatmul.bf16.gmra.mxu0 %v738
  %v1708 = vpop.f32.mrf.mxu0
  %v1709 = vadd.f32 %v1610, %v1708
  %v1710 = vpop.f32.mrf.mxu0
  %v1711 = vadd.f32 %v1612, %v1710
  %1712 = vmatmul.bf16.gmra.mxu0 %v745
  %v1713 = vpop.f32.mrf.mxu0
  %v1714 = vadd.f32 %v1615, %v1713
  %v1715 = vpop.f32.mrf.mxu0
  %v1716 = vadd.f32 %v1617, %v1715
  %1717 = vmatmul.bf16.gmra.mxu0 %v752
  %v1718 = vpop.f32.mrf.mxu0
  %v1719 = vadd.f32 %v1620, %v1718
  %v1720 = vpop.f32.mrf.mxu0
  %v1721 = vadd.f32 %v1622, %v1720
  %1722 = vmatmul.bf16.gmra.mxu0 %v759
  %v1723 = vpop.f32.mrf.mxu0
  %v1724 = vadd.f32 %v1625, %v1723
  %v1725 = vpop.f32.mrf.mxu0
  %v1726 = vadd.f32 %v1627, %v1725
  %1727 = vmatmul.bf16.gmra.mxu0 %v766
  %v1728 = vpop.f32.mrf.mxu0
  %v1729 = vadd.f32 %v1630, %v1728
  %v1730 = vpop.f32.mrf.mxu0
  %v1731 = vadd.f32 %v1632, %v1730
  %1732 = vmatmul.bf16.gmra.mxu0 %v773
  %v1733 = vpop.f32.mrf.mxu0
  %v1734 = vadd.f32 %v1635, %v1733
  %v1735 = vpop.f32.mrf.mxu0
  %v1736 = vadd.f32 %v1637, %v1735
  %1737 = vmatmul.bf16.gmra.mxu0 %v780
  %v1738 = vpop.f32.mrf.mxu0
  %v1739 = vadd.f32 %v1640, %v1738
  %v1740 = vpop.f32.mrf.mxu0
  %v1741 = vadd.f32 %v1642, %v1740
  %1742 = vmatmul.bf16.gmra.mxu0 %v787
  %v1743 = vpop.f32.mrf.mxu0
  %v1744 = vadd.f32 %v1645, %v1743
  %v1745 = vpop.f32.mrf.mxu0
  %v1746 = vadd.f32 %v1647, %v1745
  %1747 = vdwg.mxu0
  %1748 = vmatpush.bf16.msra.mxu0 %v1145
  %1749 = vmatpush.bf16.msra.mxu0 %v1144
  %1750 = vmatpush.bf16.msra.mxu0 %v1143
  %1751 = vmatpush.bf16.msra.mxu0 %v1142
  %1752 = vmatpush.bf16.msra.mxu0 %v1141
  %1753 = vmatpush.bf16.msra.mxu0 %v1140
  %1754 = vmatpush.bf16.msra.mxu0 %v1139
  %1755 = vmatpush.bf16.msra.mxu0 %v1138
  %1756 = vmatmul.bf16.gmra.mxu0 %v669
  %v1757 = vpop.f32.mrf.mxu0
  %v1758 = vadd.f32 %v1659, %v1757
  %v1759 = vpop.f32.mrf.mxu0
  %v1760 = vadd.f32 %v1661, %v1759
  %1761 = vmatmul.bf16.gmra.mxu0 %v676
  %v1762 = vpop.f32.mrf.mxu0
  %v1763 = vadd.f32 %v1664, %v1762
  %v1764 = vpop.f32.mrf.mxu0
  %v1765 = vadd.f32 %v1666, %v1764
  %1766 = vmatmul.bf16.gmra.mxu0 %v683
  %v1767 = vpop.f32.mrf.mxu0
  %v1768 = vadd.f32 %v1669, %v1767
  %v1769 = vpop.f32.mrf.mxu0
  %v1770 = vadd.f32 %v1671, %v1769
  %1771 = vmatmul.bf16.gmra.mxu0 %v690
  %v1772 = vpop.f32.mrf.mxu0
  %v1773 = vadd.f32 %v1674, %v1772
  %v1774 = vpop.f32.mrf.mxu0
  %v1775 = vadd.f32 %v1676, %v1774
  %1776 = vmatmul.bf16.gmra.mxu0 %v697
  %v1777 = vpop.f32.mrf.mxu0
  %v1778 = vadd.f32 %v1679, %v1777
  %v1779 = vpop.f32.mrf.mxu0
  %v1780 = vadd.f32 %v1681, %v1779
  %1781 = vmatmul.bf16.gmra.mxu0 %v704
  %v1782 = vpop.f32.mrf.mxu0
  %v1783 = vadd.f32 %v1684, %v1782
  %v1784 = vpop.f32.mrf.mxu0
  %v1785 = vadd.f32 %v1686, %v1784
  %1786 = vmatmul.bf16.gmra.mxu0 %v711
  %v1787 = vpop.f32.mrf.mxu0
  %v1788 = vadd.f32 %v1689, %v1787
  %v1789 = vpop.f32.mrf.mxu0
  %v1790 = vadd.f32 %v1691, %v1789
  %1791 = vmatmul.bf16.gmra.mxu0 %v718
  %v1792 = vpop.f32.mrf.mxu0
  %v1793 = vadd.f32 %v1694, %v1792
  %v1794 = vpop.f32.mrf.mxu0
  %v1795 = vadd.f32 %v1696, %v1794
  %1796 = vmatmul.bf16.gmra.mxu0 %v725
  %v1797 = vpop.f32.mrf.mxu0
  %v1798 = vadd.f32 %v1699, %v1797
  %v1799 = vpop.f32.mrf.mxu0
  %v1800 = vadd.f32 %v1701, %v1799
  %1801 = vmatmul.bf16.gmra.mxu0 %v732
  %v1802 = vpop.f32.mrf.mxu0
  %v1803 = vadd.f32 %v1704, %v1802
  %v1804 = vpop.f32.mrf.mxu0
  %v1805 = vadd.f32 %v1706, %v1804
  %1806 = vmatmul.bf16.gmra.mxu0 %v739
  %v1807 = vpop.f32.mrf.mxu0
  %v1808 = vadd.f32 %v1709, %v1807
  %v1809 = vpop.f32.mrf.mxu0
  %v1810 = vadd.f32 %v1711, %v1809
  %1811 = vmatmul.bf16.gmra.mxu0 %v746
  %v1812 = vpop.f32.mrf.mxu0
  %v1813 = vadd.f32 %v1714, %v1812
  %v1814 = vpop.f32.mrf.mxu0
  %v1815 = vadd.f32 %v1716, %v1814
  %1816 = vmatmul.bf16.gmra.mxu0 %v753
  %v1817 = vpop.f32.mrf.mxu0
  %v1818 = vadd.f32 %v1719, %v1817
  %v1819 = vpop.f32.mrf.mxu0
  %v1820 = vadd.f32 %v1721, %v1819
  %1821 = vmatmul.bf16.gmra.mxu0 %v760
  %v1822 = vpop.f32.mrf.mxu0
  %v1823 = vadd.f32 %v1724, %v1822
  %v1824 = vpop.f32.mrf.mxu0
  %v1825 = vadd.f32 %v1726, %v1824
  %1826 = vmatmul.bf16.gmra.mxu0 %v767
  %v1827 = vpop.f32.mrf.mxu0
  %v1828 = vadd.f32 %v1729, %v1827
  %v1829 = vpop.f32.mrf.mxu0
  %v1830 = vadd.f32 %v1731, %v1829
  %1831 = vmatmul.bf16.gmra.mxu0 %v774
  %v1832 = vpop.f32.mrf.mxu0
  %v1833 = vadd.f32 %v1734, %v1832
  %v1834 = vpop.f32.mrf.mxu0
  %v1835 = vadd.f32 %v1736, %v1834
  %1836 = vmatmul.bf16.gmra.mxu0 %v781
  %v1837 = vpop.f32.mrf.mxu0
  %v1838 = vadd.f32 %v1739, %v1837
  %v1839 = vpop.f32.mrf.mxu0
  %v1840 = vadd.f32 %v1741, %v1839
  %1841 = vmatmul.bf16.gmra.mxu0 %v788
  %v1842 = vpop.f32.mrf.mxu0
  %v1843 = vadd.f32 %v1744, %v1842
  %v1844 = vpop.f32.mrf.mxu0
  %v1845 = vadd.f32 %v1746, %v1844
  %1846 = vdwg.mxu0
  %1847 = vmatpush.bf16.msra.mxu0 0
  %1848 = vmatpush.bf16.msra.mxu0 0
  %1849 = vmatpush.bf16.msra.mxu0 0
  %1850 = vmatpush.bf16.msra.mxu0 0
  %1851 = vmatpush.bf16.msra.mxu0 0
  %1852 = vmatpush.bf16.msra.mxu0 0
  %1853 = vmatpush.bf16.msra.mxu0 %v1147
  %1854 = vmatpush.bf16.msra.mxu0 %v1146
  %1855 = vmatmul.bf16.gmra.mxu0 %v1200
  %v1856 = vpop.f32.mrf.mxu0
  %v1857 = vadd.f32 %v1758, %v1856
  %v1858 = vpop.f32.mrf.mxu0
  %v1859 = vadd.f32 %v1760, %v1858
  %1860 = vmatmul.bf16.gmra.mxu0 %v1203
  %v1861 = vpop.f32.mrf.mxu0
  %v1862 = vadd.f32 %v1763, %v1861
  %v1863 = vpop.f32.mrf.mxu0
  %v1864 = vadd.f32 %v1765, %v1863
  %1865 = vmatmul.bf16.gmra.mxu0 %v1206
  %v1866 = vpop.f32.mrf.mxu0
  %v1867 = vadd.f32 %v1768, %v1866
  %v1868 = vpop.f32.mrf.mxu0
  %v1869 = vadd.f32 %v1770, %v1868
  %1870 = vmatmul.bf16.gmra.mxu0 %v1209
  %v1871 = vpop.f32.mrf.mxu0
  %v1872 = vadd.f32 %v1773, %v1871
  %v1873 = vpop.f32.mrf.mxu0
  %v1874 = vadd.f32 %v1775, %v1873
  %1875 = vmatmul.bf16.gmra.mxu0 %v1212
  %v1876 = vpop.f32.mrf.mxu0
  %v1877 = vadd.f32 %v1778, %v1876
  %v1878 = vpop.f32.mrf.mxu0
  %v1879 = vadd.f32 %v1780, %v1878
  %1880 = vmatmul.bf16.gmra.mxu0 %v1215
  %v1881 = vpop.f32.mrf.mxu0
  %v1882 = vadd.f32 %v1783, %v1881
  %v1883 = vpop.f32.mrf.mxu0
  %v1884 = vadd.f32 %v1785, %v1883
  %1885 = vmatmul.bf16.gmra.mxu0 %v1218
  %v1886 = vpop.f32.mrf.mxu0
  %v1887 = vadd.f32 %v1788, %v1886
  %v1888 = vpop.f32.mrf.mxu0
  %v1889 = vadd.f32 %v1790, %v1888
  %1890 = vmatmul.bf16.gmra.mxu0 %v1221
  %v1891 = vpop.f32.mrf.mxu0
  %v1892 = vadd.f32 %v1793, %v1891
  %v1893 = vpop.f32.mrf.mxu0
  %v1894 = vadd.f32 %v1795, %v1893
  %1895 = vmatmul.bf16.gmra.mxu0 %v1224
  %v1896 = vpop.f32.mrf.mxu0
  %v1897 = vadd.f32 %v1798, %v1896
  %v1898 = vpop.f32.mrf.mxu0
  %v1899 = vadd.f32 %v1800, %v1898
  %1900 = vmatmul.bf16.gmra.mxu0 %v1227
  %v1901 = vpop.f32.mrf.mxu0
  %v1902 = vadd.f32 %v1803, %v1901
  %v1903 = vpop.f32.mrf.mxu0
  %v1904 = vadd.f32 %v1805, %v1903
  %1905 = vmatmul.bf16.gmra.mxu0 %v1230
  %v1906 = vpop.f32.mrf.mxu0
  %v1907 = vadd.f32 %v1808, %v1906
  %v1908 = vpop.f32.mrf.mxu0
  %v1909 = vadd.f32 %v1810, %v1908
  %1910 = vmatmul.bf16.gmra.mxu0 %v1233
  %v1911 = vpop.f32.mrf.mxu0
  %v1912 = vadd.f32 %v1813, %v1911
  %v1913 = vpop.f32.mrf.mxu0
  %v1914 = vadd.f32 %v1815, %v1913
  %1915 = vmatmul.bf16.gmra.mxu0 %v1236
  %v1916 = vpop.f32.mrf.mxu0
  %v1917 = vadd.f32 %v1818, %v1916
  %v1918 = vpop.f32.mrf.mxu0
  %v1919 = vadd.f32 %v1820, %v1918
  %1920 = vmatmul.bf16.gmra.mxu0 %v1239
  %v1921 = vpop.f32.mrf.mxu0
  %v1922 = vadd.f32 %v1823, %v1921
  %v1923 = vpop.f32.mrf.mxu0
  %v1924 = vadd.f32 %v1825, %v1923
  %1925 = vmatmul.bf16.gmra.mxu0 %v1242
  %v1926 = vpop.f32.mrf.mxu0
  %v1927 = vadd.f32 %v1828, %v1926
  %v1928 = vpop.f32.mrf.mxu0
  %v1929 = vadd.f32 %v1830, %v1928
  %1930 = vmatmul.bf16.gmra.mxu0 %v1245
  %v1931 = vpop.f32.mrf.mxu0
  %v1932 = vadd.f32 %v1833, %v1931
  %v1933 = vpop.f32.mrf.mxu0
  %v1934 = vadd.f32 %v1835, %v1933
  %1935 = vmatmul.bf16.gmra.mxu0 %v1248
  %v1936 = vpop.f32.mrf.mxu0
  %v1937 = vadd.f32 %v1838, %v1936
  %v1938 = vpop.f32.mrf.mxu0
  %v1939 = vadd.f32 %v1840, %v1938
  %1940 = vmatmul.bf16.gmra.mxu0 %v1251
  %v1941 = vpop.f32.mrf.mxu0
  %v1942 = vadd.f32 %v1843, %v1941
  %v1943 = vpop.f32.mrf.mxu0
  %v1944 = vadd.f32 %v1845, %v1943
  %1945 = vdwg.mxu0
  %v1946 = vld [vmem:[%s1] sm:$0xff]
  %v1947 = vld [vmem:[%s1 + $0x8] sm:$0xff]
  %v1948 = vld [vmem:[%s1 + $0x10] sm:$0xff]
  %v1949 = vld [vmem:[%s1 + $0x18] sm:$0xf]
  %v1950 = vld [vmem:[%s1 + $0x1c] sm:$0xff]
  %v1951 = vld [vmem:[%s1 + $0x24] sm:$0xff]
  %v1952 = vld [vmem:[%s1 + $0x2c] sm:$0xff]
  %v1953 = vld [vmem:[%s1 + $0x34] sm:$0xf]
  %v1954 = vld [vmem:[%s1 + $0x38] sm:$0xff]
  %v1955 = vld [vmem:[%s1 + $0x40] sm:$0xff]
  %v1956 = vld [vmem:[%s1 + $0x48] sm:$0xff]
  %v1957 = vld [vmem:[%s1 + $0x50] sm:$0xf]
  %v1958 = vld [vmem:[%s1 + $0x54] sm:$0xff]
  %v1959 = vld [vmem:[%s1 + $0x5c] sm:$0xff]
  %v1960 = vld [vmem:[%s1 + $0x64] sm:$0xff]
  %v1961 = vld [vmem:[%s1 + $0x6c] sm:$0xf]
  %v1962 = vld [vmem:[%s1 + $0x70] sm:$0xff]
  %v1963 = vld [vmem:[%s1 + $0x78] sm:$0xff]
  %v1964 = vld [vmem:[%s1 + $0x80] sm:$0xff]
  %v1965 = vld [vmem:[%s1 + $0x88] sm:$0xf]
  %v1966 = vld [vmem:[%s1 + $0x8c] sm:$0xff]
  %v1967 = vld [vmem:[%s1 + $0x94] sm:$0xff]
  %v1968 = vld [vmem:[%s1 + $0x9c] sm:$0xff]
  %v1969 = vld [vmem:[%s1 + $0xa4] sm:$0xf]
  %v1970 = vld [vmem:[%s1 + $0xa8] sm:$0xff]
  %v1971 = vld [vmem:[%s1 + $0xb0] sm:$0xff]
  %v1972 = vld [vmem:[%s1 + $0xb8] sm:$0xff]
  %v1973 = vld [vmem:[%s1 + $0xc0] sm:$0xf]
  %v1974 = vld [vmem:[%s1 + $0xc4] sm:$0xff]
  %v1975 = vld [vmem:[%s1 + $0xcc] sm:$0xff]
  %v1976 = vld [vmem:[%s1 + $0xd4] sm:$0xff]
  %v1977 = vld [vmem:[%s1 + $0xdc] sm:$0xf]
  %v1978 = vld [vmem:[%s1 + $0xe0] sm:$0xff]
  %v1979 = vld [vmem:[%s1 + $0xe8] sm:$0xff]
  %v1980 = vld [vmem:[%s1 + $0xf0] sm:$0xff]
  %v1981 = vld [vmem:[%s1 + $0xf8] sm:$0xf]
  %v1982 = vld [vmem:[%s1 + $0xfc] sm:$0xff]
  %v1983 = vld [vmem:[%s1 + $0x104] sm:$0xff]
  %v1984 = vld [vmem:[%s1 + $0x10c] sm:$0xff]
  %v1985 = vld [vmem:[%s1 + $0x114] sm:$0xf]
  %v1986 = vld [vmem:[%s1 + $0x118] sm:$0xff]
  %v1987 = vld [vmem:[%s1 + $0x120] sm:$0xff]
  %v1988 = vld [vmem:[%s1 + $0x128] sm:$0xff]
  %v1989 = vld [vmem:[%s1 + $0x130] sm:$0xf]
  %v1990 = vld [vmem:[%s1 + $0x134] sm:$0xff]
  %v1991 = vld [vmem:[%s1 + $0x13c] sm:$0xff]
  %v1992 = vld [vmem:[%s1 + $0x144] sm:$0xff]
  %v1993 = vld [vmem:[%s1 + $0x14c] sm:$0xf]
  %v1994 = vld [vmem:[%s1 + $0x150] sm:$0xff]
  %v1995 = vld [vmem:[%s1 + $0x158] sm:$0xff]
  %v1996 = vld [vmem:[%s1 + $0x160] sm:$0xff]
  %v1997 = vld [vmem:[%s1 + $0x168] sm:$0xf]
  %v1998 = vld [vmem:[%s1 + $0x16c] sm:$0xff]
  %v1999 = vld [vmem:[%s1 + $0x174] sm:$0xff]
  %v2000 = vld [vmem:[%s1 + $0x17c] sm:$0xff]
  %v2001 = vld [vmem:[%s1 + $0x184] sm:$0xf]
  %v2002 = vld [vmem:[%s1 + $0x188] sm:$0xff]
  %v2003 = vld [vmem:[%s1 + $0x190] sm:$0xff]
  %v2004 = vld [vmem:[%s1 + $0x198] sm:$0xff]
  %v2005 = vld [vmem:[%s1 + $0x1a0] sm:$0xf]
  %v2006 = vld [vmem:[%s1 + $0x1a4] sm:$0xff]
  %v2007 = vld [vmem:[%s1 + $0x1ac] sm:$0xff]
  %v2008 = vld [vmem:[%s1 + $0x1b4] sm:$0xff]
  %v2009 = vld [vmem:[%s1 + $0x1bc] sm:$0xf]
  %v2010 = vld [vmem:[%s1 + $0x1c0] sm:$0xff]
  %v2011 = vld [vmem:[%s1 + $0x1c8] sm:$0xff]
  %v2012 = vld [vmem:[%s1 + $0x1d0] sm:$0xff]
  %v2013 = vld [vmem:[%s1 + $0x1d8] sm:$0xf]
  %v2014 = vld [vmem:[%s1 + $0x1dc] sm:$0xff]
  %v2015 = vld [vmem:[%s1 + $0x1e4] sm:$0xff]
  %v2016 = vld [vmem:[%s1 + $0x1ec] sm:$0xff]
  %v2017 = vld [vmem:[%s1 + $0x1f4] sm:$0xf]
  %v2018 = vld [vmem:[%s1 + $0x1f8] sm:$0xff]
  %v2019 = vld [vmem:[%s1 + $0x200] sm:$0xff]
  %v2020 = vld [vmem:[%s1 + $0x208] sm:$0xff]
  %v2021 = vld [vmem:[%s1 + $0x210] sm:$0xf]
  %v2022 = vld [vmem:[%s1 + $0x214] sm:$0xff]
  %v2023 = vld [vmem:[%s1 + $0x21c] sm:$0xff]
  %v2024 = vld [vmem:[%s1 + $0x224] sm:$0xff]
  %v2025 = vld [vmem:[%s1 + $0x22c] sm:$0xf]
  %v2026 = vld [vmem:[%s1 + $0x230] sm:$0xff]
  %v2027 = vld [vmem:[%s1 + $0x238] sm:$0xff]
  %v2028 = vld [vmem:[%s1 + $0x240] sm:$0xff]
  %v2029 = vld [vmem:[%s1 + $0x248] sm:$0xf]
  %v2030 = vld [vmem:[%s1 + $0x24c] sm:$0xff]
  %v2031 = vld [vmem:[%s1 + $0x254] sm:$0xff]
  %v2032 = vld [vmem:[%s1 + $0x25c] sm:$0xff]
  %v2033 = vld [vmem:[%s1 + $0x264] sm:$0xf]
  %v2034 = vld [vmem:[%s1 + $0x268] sm:$0xff]
  %v2035 = vld [vmem:[%s1 + $0x270] sm:$0xff]
  %v2036 = vld [vmem:[%s1 + $0x278] sm:$0xff]
  %v2037 = vld [vmem:[%s1 + $0x280] sm:$0xf]
  %v2038 = vld [vmem:[%s1 + $0x284] sm:$0xff]
  %v2039 = vld [vmem:[%s1 + $0x28c] sm:$0xff]
  %v2040 = vld [vmem:[%s1 + $0x294] sm:$0xff]
  %v2041 = vld [vmem:[%s1 + $0x29c] sm:$0xf]
  %v2042 = vld [vmem:[%s1 + $0x2a0] sm:$0xff]
  %v2043 = vld [vmem:[%s1 + $0x2a8] sm:$0xff]
  %v2044 = vld [vmem:[%s1 + $0x2b0] sm:$0xff]
  %v2045 = vld [vmem:[%s1 + $0x2b8] sm:$0xf]
  %v2046 = vld [vmem:[%s1 + $0x2bc] sm:$0xff]
  %v2047 = vld [vmem:[%s1 + $0x2c4] sm:$0xff]
  %v2048 = vld [vmem:[%s1 + $0x2cc] sm:$0xff]
  %v2049 = vld [vmem:[%s1 + $0x2d4] sm:$0xf]
  %v2050 = vld [vmem:[%s1 + $0x2d8] sm:$0xff]
  %v2051 = vld [vmem:[%s1 + $0x2e0] sm:$0xff]
  %v2052 = vld [vmem:[%s1 + $0x2e8] sm:$0xff]
  %v2053 = vld [vmem:[%s1 + $0x2f0] sm:$0xf]
  %v2054 = vld [vmem:[%s1 + $0x2f4] sm:$0xff]
  %v2055 = vld [vmem:[%s1 + $0x2fc] sm:$0xff]
  %v2056 = vld [vmem:[%s1 + $0x304] sm:$0xff]
  %v2057 = vld [vmem:[%s1 + $0x30c] sm:$0xf]
  %v2058 = vld [vmem:[%s1 + $0x310] sm:$0xff]
  %v2059 = vld [vmem:[%s1 + $0x318] sm:$0xff]
  %v2060 = vld [vmem:[%s1 + $0x320] sm:$0xff]
  %v2061 = vld [vmem:[%s1 + $0x328] sm:$0xf]
  %v2062 = vld [vmem:[%s1 + $0x32c] sm:$0xff]
  %v2063 = vld [vmem:[%s1 + $0x334] sm:$0xff]
  %v2064 = vld [vmem:[%s1 + $0x33c] sm:$0xff]
  %v2065 = vld [vmem:[%s1 + $0x344] sm:$0xf]
  %v2066 = vld [vmem:[%s1 + $0x348] sm:$0xff]
  %v2067 = vld [vmem:[%s1 + $0x350] sm:$0xff]
  %v2068 = vld [vmem:[%s1 + $0x358] sm:$0xff]
  %v2069 = vld [vmem:[%s1 + $0x360] sm:$0xf]
  %v2070 = vld [vmem:[%s1 + $0x364] sm:$0xff]
  %v2071 = vld [vmem:[%s1 + $0x36c] sm:$0xff]
  %v2072 = vld [vmem:[%s1 + $0x374] sm:$0xff]
  %v2073 = vld [vmem:[%s1 + $0x37c] sm:$0xf]
  %v2074 = vld [vmem:[%s1 + $0x380] sm:$0xff]
  %v2075 = vld [vmem:[%s1 + $0x388] sm:$0xff]
  %v2076 = vld [vmem:[%s1 + $0x390] sm:$0xff]
  %v2077 = vld [vmem:[%s1 + $0x398] sm:$0xf]
  %v2078 = vld [vmem:[%s1 + $0x39c] sm:$0xff]
  %v2079 = vld [vmem:[%s1 + $0x3a4] sm:$0xff]
  %v2080 = vld [vmem:[%s1 + $0x3ac] sm:$0xff]
  %v2081 = vld [vmem:[%s1 + $0x3b4] sm:$0xf]
  %v2082 = vld [vmem:[%s1 + $0x3b8] sm:$0xff]
  %v2083 = vld [vmem:[%s1 + $0x3c0] sm:$0xff]
  %v2084 = vld [vmem:[%s1 + $0x3c8] sm:$0xff]
  %v2085 = vld [vmem:[%s1 + $0x3d0] sm:$0xf]
  %v2086 = vld [vmem:[%s1 + $0x3d4] sm:$0xff]
  %v2087 = vld [vmem:[%s1 + $0x3dc] sm:$0xff]
  %v2088 = vld [vmem:[%s1 + $0x3e4] sm:$0xff]
  %v2089 = vld [vmem:[%s1 + $0x3ec] sm:$0xf]
  %v2234 = vunpack.c.l.b16 %v1946
  %v2235 = vunpack.c.h.b16 %v1946
  %v2236 = vunpack.c.l.b16 %v1947
  %v2237 = vunpack.c.h.b16 %v1947
  %v2238 = vunpack.c.l.b16 %v1948
  %v2239 = vunpack.c.h.b16 %v1948
  %v2240 = vunpack.c.l.b16 %v1949
  %v2241 = vunpack.c.l.b16 %v1950
  %v2242 = vunpack.c.h.b16 %v1950
  %v2243 = vunpack.c.l.b16 %v1951
  %v2244 = vunpack.c.h.b16 %v1951
  %v2245 = vunpack.c.l.b16 %v1952
  %v2246 = vunpack.c.h.b16 %v1952
  %v2247 = vunpack.c.l.b16 %v1953
  %v2248 = vunpack.c.l.b16 %v1954
  %v2249 = vunpack.c.h.b16 %v1954
  %v2250 = vunpack.c.l.b16 %v1955
  %v2251 = vunpack.c.h.b16 %v1955
  %v2252 = vunpack.c.l.b16 %v1956
  %v2253 = vunpack.c.h.b16 %v1956
  %v2254 = vunpack.c.l.b16 %v1957
  %v2255 = vunpack.c.l.b16 %v1958
  %v2256 = vunpack.c.h.b16 %v1958
  %v2257 = vunpack.c.l.b16 %v1959
  %v2258 = vunpack.c.h.b16 %v1959
  %v2259 = vunpack.c.l.b16 %v1960
  %v2260 = vunpack.c.h.b16 %v1960
  %v2261 = vunpack.c.l.b16 %v1961
  %v2262 = vunpack.c.l.b16 %v1962
  %v2263 = vunpack.c.h.b16 %v1962
  %v2264 = vunpack.c.l.b16 %v1963
  %v2265 = vunpack.c.h.b16 %v1963
  %v2266 = vunpack.c.l.b16 %v1964
  %v2267 = vunpack.c.h.b16 %v1964
  %v2268 = vunpack.c.l.b16 %v1965
  %v2269 = vunpack.c.l.b16 %v1966
  %v2270 = vunpack.c.h.b16 %v1966
  %v2271 = vunpack.c.l.b16 %v1967
  %v2272 = vunpack.c.h.b16 %v1967
  %v2273 = vunpack.c.l.b16 %v1968
  %v2274 = vunpack.c.h.b16 %v1968
  %v2275 = vunpack.c.l.b16 %v1969
  %v2276 = vunpack.c.l.b16 %v1970
  %v2277 = vunpack.c.h.b16 %v1970
  %v2278 = vunpack.c.l.b16 %v1971
  %v2279 = vunpack.c.h.b16 %v1971
  %v2280 = vunpack.c.l.b16 %v1972
  %v2281 = vunpack.c.h.b16 %v1972
  %v2282 = vunpack.c.l.b16 %v1973
  %v2283 = vunpack.c.l.b16 %v1974
  %v2284 = vunpack.c.h.b16 %v1974
  %v2285 = vunpack.c.l.b16 %v1975
  %v2286 = vunpack.c.h.b16 %v1975
  %v2287 = vunpack.c.l.b16 %v1976
  %v2288 = vunpack.c.h.b16 %v1976
  %v2289 = vunpack.c.l.b16 %v1977
  %v2290 = vunpack.c.l.b16 %v1978
  %v2291 = vunpack.c.h.b16 %v1978
  %v2292 = vunpack.c.l.b16 %v1979
  %v2293 = vunpack.c.h.b16 %v1979
  %v2294 = vunpack.c.l.b16 %v1980
  %v2295 = vunpack.c.h.b16 %v1980
  %v2296 = vunpack.c.l.b16 %v1981
  %v2297 = vunpack.c.l.b16 %v1982
  %v2298 = vunpack.c.h.b16 %v1982
  %v2299 = vunpack.c.l.b16 %v1983
  %v2300 = vunpack.c.h.b16 %v1983
  %v2301 = vunpack.c.l.b16 %v1984
  %v2302 = vunpack.c.h.b16 %v1984
  %v2303 = vunpack.c.l.b16 %v1985
  %v2304 = vunpack.c.l.b16 %v1986
  %v2305 = vunpack.c.h.b16 %v1986
  %v2306 = vunpack.c.l.b16 %v1987
  %v2307 = vunpack.c.h.b16 %v1987
  %v2308 = vunpack.c.l.b16 %v1988
  %v2309 = vunpack.c.h.b16 %v1988
  %v2310 = vunpack.c.l.b16 %v1989
  %v2311 = vunpack.c.l.b16 %v1990
  %v2312 = vunpack.c.h.b16 %v1990
  %v2313 = vunpack.c.l.b16 %v1991
  %v2314 = vunpack.c.h.b16 %v1991
  %v2315 = vunpack.c.l.b16 %v1992
  %v2316 = vunpack.c.h.b16 %v1992
  %v2317 = vunpack.c.l.b16 %v1993
  %v2318 = vunpack.c.l.b16 %v1994
  %v2319 = vunpack.c.h.b16 %v1994
  %v2320 = vunpack.c.l.b16 %v1995
  %v2321 = vunpack.c.h.b16 %v1995
  %v2322 = vunpack.c.l.b16 %v1996
  %v2323 = vunpack.c.h.b16 %v1996
  %v2324 = vunpack.c.l.b16 %v1997
  %v2325 = vunpack.c.l.b16 %v1998
  %v2326 = vunpack.c.h.b16 %v1998
  %v2327 = vunpack.c.l.b16 %v1999
  %v2328 = vunpack.c.h.b16 %v1999
  %v2329 = vunpack.c.l.b16 %v2000
  %v2330 = vunpack.c.h.b16 %v2000
  %v2331 = vunpack.c.l.b16 %v2001
  %v2332 = vunpack.c.l.b16 %v2002
  %v2333 = vunpack.c.h.b16 %v2002
  %v2334 = vunpack.c.l.b16 %v2003
  %v2335 = vunpack.c.h.b16 %v2003
  %v2336 = vunpack.c.l.b16 %v2004
  %v2337 = vunpack.c.h.b16 %v2004
  %v2338 = vunpack.c.l.b16 %v2005
  %v2339 = vunpack.c.l.b16 %v2006
  %v2340 = vunpack.c.h.b16 %v2006
  %v2341 = vunpack.c.l.b16 %v2007
  %v2342 = vunpack.c.h.b16 %v2007
  %v2343 = vunpack.c.l.b16 %v2008
  %v2344 = vunpack.c.h.b16 %v2008
  %v2345 = vunpack.c.l.b16 %v2009
  %v2346 = vunpack.c.l.b16 %v2010
  %v2347 = vunpack.c.h.b16 %v2010
  %v2348 = vunpack.c.l.b16 %v2011
  %v2349 = vunpack.c.h.b16 %v2011
  %v2350 = vunpack.c.l.b16 %v2012
  %v2351 = vunpack.c.h.b16 %v2012
  %v2352 = vunpack.c.l.b16 %v2013
  %v2353 = vunpack.c.l.b16 %v2014
  %v2354 = vunpack.c.h.b16 %v2014
  %v2355 = vunpack.c.l.b16 %v2015
  %v2356 = vunpack.c.h.b16 %v2015
  %v2357 = vunpack.c.l.b16 %v2016
  %v2358 = vunpack.c.h.b16 %v2016
  %v2359 = vunpack.c.l.b16 %v2017
  %v2360 = vunpack.c.l.b16 %v2018
  %v2361 = vunpack.c.h.b16 %v2018
  %v2362 = vunpack.c.l.b16 %v2019
  %v2363 = vunpack.c.h.b16 %v2019
  %v2364 = vunpack.c.l.b16 %v2020
  %v2365 = vunpack.c.h.b16 %v2020
  %v2366 = vunpack.c.l.b16 %v2021
  %v2367 = vunpack.c.l.b16 %v2022
  %v2368 = vunpack.c.h.b16 %v2022
  %v2369 = vunpack.c.l.b16 %v2023
  %v2370 = vunpack.c.h.b16 %v2023
  %v2371 = vunpack.c.l.b16 %v2024
  %v2372 = vunpack.c.h.b16 %v2024
  %v2373 = vunpack.c.l.b16 %v2025
  %v2374 = vunpack.c.l.b16 %v2026
  %v2375 = vunpack.c.h.b16 %v2026
  %v2376 = vunpack.c.l.b16 %v2027
  %v2377 = vunpack.c.h.b16 %v2027
  %v2378 = vunpack.c.l.b16 %v2028
  %v2379 = vunpack.c.h.b16 %v2028
  %v2380 = vunpack.c.l.b16 %v2029
  %v2381 = vunpack.c.l.b16 %v2030
  %v2382 = vunpack.c.h.b16 %v2030
  %v2383 = vunpack.c.l.b16 %v2031
  %v2384 = vunpack.c.h.b16 %v2031
  %v2385 = vunpack.c.l.b16 %v2032
  %v2386 = vunpack.c.h.b16 %v2032
  %v2387 = vunpack.c.l.b16 %v2033
  %v2388 = vunpack.c.l.b16 %v2034
  %v2389 = vunpack.c.h.b16 %v2034
  %v2390 = vunpack.c.l.b16 %v2035
  %v2391 = vunpack.c.h.b16 %v2035
  %v2392 = vunpack.c.l.b16 %v2036
  %v2393 = vunpack.c.h.b16 %v2036
  %v2394 = vunpack.c.l.b16 %v2037
  %v2395 = vunpack.c.l.b16 %v2038
  %v2396 = vunpack.c.h.b16 %v2038
  %v2397 = vunpack.c.l.b16 %v2039
  %v2398 = vunpack.c.h.b16 %v2039
  %v2399 = vunpack.c.l.b16 %v2040
  %v2400 = vunpack.c.h.b16 %v2040
  %v2401 = vunpack.c.l.b16 %v2041
  %v2402 = vunpack.c.l.b16 %v2042
  %v2403 = vunpack.c.h.b16 %v2042
  %v2404 = vunpack.c.l.b16 %v2043
  %v2405 = vunpack.c.h.b16 %v2043
  %v2406 = vunpack.c.l.b16 %v2044
  %v2407 = vunpack.c.h.b16 %v2044
  %v2408 = vunpack.c.l.b16 %v2045
  %v2409 = vunpack.c.l.b16 %v2046
  %v2410 = vunpack.c.h.b16 %v2046
  %v2411 = vunpack.c.l.b16 %v2047
  %v2412 = vunpack.c.h.b16 %v2047
  %v2413 = vunpack.c.l.b16 %v2048
  %v2414 = vunpack.c.h.b16 %v2048
  %v2415 = vunpack.c.l.b16 %v2049
  %v2416 = vunpack.c.l.b16 %v2050
  %v2417 = vunpack.c.h.b16 %v2050
  %v2418 = vunpack.c.l.b16 %v2051
  %v2419 = vunpack.c.h.b16 %v2051
  %v2420 = vunpack.c.l.b16 %v2052
  %v2421 = vunpack.c.h.b16 %v2052
  %v2422 = vunpack.c.l.b16 %v2053
  %v2423 = vunpack.c.l.b16 %v2054
  %v2424 = vunpack.c.h.b16 %v2054
  %v2425 = vunpack.c.l.b16 %v2055
  %v2426 = vunpack.c.h.b16 %v2055
  %v2427 = vunpack.c.l.b16 %v2056
  %v2428 = vunpack.c.h.b16 %v2056
  %v2429 = vunpack.c.l.b16 %v2057
  %v2430 = vunpack.c.l.b16 %v2058
  %v2431 = vunpack.c.h.b16 %v2058
  %v2432 = vunpack.c.l.b16 %v2059
  %v2433 = vunpack.c.h.b16 %v2059
  %v2434 = vunpack.c.l.b16 %v2060
  %v2435 = vunpack.c.h.b16 %v2060
  %v2436 = vunpack.c.l.b16 %v2061
  %v2437 = vunpack.c.l.b16 %v2062
  %v2438 = vunpack.c.h.b16 %v2062
  %v2439 = vunpack.c.l.b16 %v2063
  %v2440 = vunpack.c.h.b16 %v2063
  %v2441 = vunpack.c.l.b16 %v2064
  %v2442 = vunpack.c.h.b16 %v2064
  %v2443 = vunpack.c.l.b16 %v2065
  %v2444 = vunpack.c.l.b16 %v2066
  %v2445 = vunpack.c.h.b16 %v2066
  %v2446 = vunpack.c.l.b16 %v2067
  %v2447 = vunpack.c.h.b16 %v2067
  %v2448 = vunpack.c.l.b16 %v2068
  %v2449 = vunpack.c.h.b16 %v2068
  %v2450 = vunpack.c.l.b16 %v2069
  %v2451 = vunpack.c.l.b16 %v2070
  %v2452 = vunpack.c.h.b16 %v2070
  %v2453 = vunpack.c.l.b16 %v2071
  %v2454 = vunpack.c.h.b16 %v2071
  %v2455 = vunpack.c.l.b16 %v2072
  %v2456 = vunpack.c.h.b16 %v2072
  %v2457 = vunpack.c.l.b16 %v2073
  %v2458 = vunpack.c.l.b16 %v2074
  %v2459 = vunpack.c.h.b16 %v2074
  %v2460 = vunpack.c.l.b16 %v2075
  %v2461 = vunpack.c.h.b16 %v2075
  %v2462 = vunpack.c.l.b16 %v2076
  %v2463 = vunpack.c.h.b16 %v2076
  %v2464 = vunpack.c.l.b16 %v2077
  %v2465 = vunpack.c.l.b16 %v2078
  %v2466 = vunpack.c.h.b16 %v2078
  %v2467 = vunpack.c.l.b16 %v2079
  %v2468 = vunpack.c.h.b16 %v2079
  %v2469 = vunpack.c.l.b16 %v2080
  %v2470 = vunpack.c.h.b16 %v2080
  %v2471 = vunpack.c.l.b16 %v2081
  %v2472 = vunpack.c.l.b16 %v2082
  %v2473 = vunpack.c.h.b16 %v2082
  %v2474 = vunpack.c.l.b16 %v2083
  %v2475 = vunpack.c.h.b16 %v2083
  %v2476 = vunpack.c.l.b16 %v2084
  %v2477 = vunpack.c.h.b16 %v2084
  %v2478 = vunpack.c.l.b16 %v2085
  %v2479 = vunpack.c.l.b16 %v2086
  %v2480 = vunpack.c.h.b16 %v2086
  %v2481 = vunpack.c.l.b16 %v2087
  %v2482 = vunpack.c.h.b16 %v2087
  %v2483 = vunpack.c.l.b16 %v2088
  %v2484 = vunpack.c.h.b16 %v2088
  %v2485 = vunpack.c.l.b16 %v2089
  %v2486 = vpack.c.b16 %v2241, %v2234
  %v2487 = vpack.c.b16 %v2242, %v2235
  %v2488 = vpack.c.b16 %v2243, %v2236
  %v2489 = vpack.c.b16 %v2244, %v2237
  %v2490 = vpack.c.b16 %v2245, %v2238
  %v2491 = vpack.c.b16 %v2246, %v2239
  %v2492 = vpack.c.b16 %v2247, %v2240
  %v2493 = vpack.c.b16 %v2255, %v2248
  %v2494 = vpack.c.b16 %v2256, %v2249
  %v2495 = vpack.c.b16 %v2257, %v2250
  %v2496 = vpack.c.b16 %v2258, %v2251
  %v2497 = vpack.c.b16 %v2259, %v2252
  %v2498 = vpack.c.b16 %v2260, %v2253
  %v2499 = vpack.c.b16 %v2261, %v2254
  %v2500 = vpack.c.b16 %v2269, %v2262
  %v2501 = vpack.c.b16 %v2270, %v2263
  %v2502 = vpack.c.b16 %v2271, %v2264
  %v2503 = vpack.c.b16 %v2272, %v2265
  %v2504 = vpack.c.b16 %v2273, %v2266
  %v2505 = vpack.c.b16 %v2274, %v2267
  %v2506 = vpack.c.b16 %v2275, %v2268
  %v2507 = vpack.c.b16 %v2283, %v2276
  %v2508 = vpack.c.b16 %v2284, %v2277
  %v2509 = vpack.c.b16 %v2285, %v2278
  %v2510 = vpack.c.b16 %v2286, %v2279
  %v2511 = vpack.c.b16 %v2287, %v2280
  %v2512 = vpack.c.b16 %v2288, %v2281
  %v2513 = vpack.c.b16 %v2289, %v2282
  %v2514 = vpack.c.b16 %v2297, %v2290
  %v2515 = vpack.c.b16 %v2298, %v2291
  %v2516 = vpack.c.b16 %v2299, %v2292
  %v2517 = vpack.c.b16 %v2300, %v2293
  %v2518 = vpack.c.b16 %v2301, %v2294
  %v2519 = vpack.c.b16 %v2302, %v2295
  %v2520 = vpack.c.b16 %v2303, %v2296
  %v2521 = vpack.c.b16 %v2311, %v2304
  %v2522 = vpack.c.b16 %v2312, %v2305
  %v2523 = vpack.c.b16 %v2313, %v2306
  %v2524 = vpack.c.b16 %v2314, %v2307
  %v2525 = vpack.c.b16 %v2315, %v2308
  %v2526 = vpack.c.b16 %v2316, %v2309
  %v2527 = vpack.c.b16 %v2317, %v2310
  %v2528 = vpack.c.b16 %v2325, %v2318
  %v2529 = vpack.c.b16 %v2326, %v2319
  %v2530 = vpack.c.b16 %v2327, %v2320
  %v2531 = vpack.c.b16 %v2328, %v2321
  %v2532 = vpack.c.b16 %v2329, %v2322
  %v2533 = vpack.c.b16 %v2330, %v2323
  %v2534 = vpack.c.b16 %v2331, %v2324
  %v2535 = vpack.c.b16 %v2339, %v2332
  %v2536 = vpack.c.b16 %v2340, %v2333
  %v2537 = vpack.c.b16 %v2341, %v2334
  %v2538 = vpack.c.b16 %v2342, %v2335
  %v2539 = vpack.c.b16 %v2343, %v2336
  %v2540 = vpack.c.b16 %v2344, %v2337
  %v2541 = vpack.c.b16 %v2345, %v2338
  %v2542 = vpack.c.b16 %v2353, %v2346
  %v2543 = vpack.c.b16 %v2354, %v2347
  %v2544 = vpack.c.b16 %v2355, %v2348
  %v2545 = vpack.c.b16 %v2356, %v2349
  %v2546 = vpack.c.b16 %v2357, %v2350
  %v2547 = vpack.c.b16 %v2358, %v2351
  %v2548 = vpack.c.b16 %v2359, %v2352
  %v2549 = vpack.c.b16 %v2367, %v2360
  %v2550 = vpack.c.b16 %v2368, %v2361
  %v2551 = vpack.c.b16 %v2369, %v2362
  %v2552 = vpack.c.b16 %v2370, %v2363
  %v2553 = vpack.c.b16 %v2371, %v2364
  %v2554 = vpack.c.b16 %v2372, %v2365
  %v2555 = vpack.c.b16 %v2373, %v2366
  %v2556 = vpack.c.b16 %v2381, %v2374
  %v2557 = vpack.c.b16 %v2382, %v2375
  %v2558 = vpack.c.b16 %v2383, %v2376
  %v2559 = vpack.c.b16 %v2384, %v2377
  %v2560 = vpack.c.b16 %v2385, %v2378
  %v2561 = vpack.c.b16 %v2386, %v2379
  %v2562 = vpack.c.b16 %v2387, %v2380
  %v2563 = vpack.c.b16 %v2395, %v2388
  %v2564 = vpack.c.b16 %v2396, %v2389
  %v2565 = vpack.c.b16 %v2397, %v2390
  %v2566 = vpack.c.b16 %v2398, %v2391
  %v2567 = vpack.c.b16 %v2399, %v2392
  %v2568 = vpack.c.b16 %v2400, %v2393
  %v2569 = vpack.c.b16 %v2401, %v2394
  %v2570 = vpack.c.b16 %v2409, %v2402
  %v2571 = vpack.c.b16 %v2410, %v2403
  %v2572 = vpack.c.b16 %v2411, %v2404
  %v2573 = vpack.c.b16 %v2412, %v2405
  %v2574 = vpack.c.b16 %v2413, %v2406
  %v2575 = vpack.c.b16 %v2414, %v2407
  %v2576 = vpack.c.b16 %v2415, %v2408
  %v2577 = vpack.c.b16 %v2423, %v2416
  %v2578 = vpack.c.b16 %v2424, %v2417
  %v2579 = vpack.c.b16 %v2425, %v2418
  %v2580 = vpack.c.b16 %v2426, %v2419
  %v2581 = vpack.c.b16 %v2427, %v2420
  %v2582 = vpack.c.b16 %v2428, %v2421
  %v2583 = vpack.c.b16 %v2429, %v2422
  %v2584 = vpack.c.b16 %v2437, %v2430
  %v2585 = vpack.c.b16 %v2438, %v2431
  %v2586 = vpack.c.b16 %v2439, %v2432
  %v2587 = vpack.c.b16 %v2440, %v2433
  %v2588 = vpack.c.b16 %v2441, %v2434
  %v2589 = vpack.c.b16 %v2442, %v2435
  %v2590 = vpack.c.b16 %v2443, %v2436
  %v2591 = vpack.c.b16 %v2451, %v2444
  %v2592 = vpack.c.b16 %v2452, %v2445
  %v2593 = vpack.c.b16 %v2453, %v2446
  %v2594 = vpack.c.b16 %v2454, %v2447
  %v2595 = vpack.c.b16 %v2455, %v2448
  %v2596 = vpack.c.b16 %v2456, %v2449
  %v2597 = vpack.c.b16 %v2457, %v2450
  %v2598 = vpack.c.b16 %v2465, %v2458
  %v2599 = vpack.c.b16 %v2466, %v2459
  %v2600 = vpack.c.b16 %v2467, %v2460
  %v2601 = vpack.c.b16 %v2468, %v2461
  %v2602 = vpack.c.b16 %v2469, %v2462
  %v2603 = vpack.c.b16 %v2470, %v2463
  %v2604 = vpack.c.b16 %v2471, %v2464
  %v2605 = vpack.c.b16 %v2479, %v2472
  %v2606 = vpack.c.b16 %v2480, %v2473
  %v2607 = vpack.c.b16 %v2481, %v2474
  %v2608 = vpack.c.b16 %v2482, %v2475
  %v2609 = vpack.c.b16 %v2483, %v2476
  %v2610 = vpack.c.b16 %v2484, %v2477
  %v2611 = vpack.c.b16 %v2485, %v2478
  %v2721 = vsel %vm1198, %v2492, 0
  %v2724 = vsel %vm1198, %v2499, 0
  %v2727 = vsel %vm1198, %v2506, 0
  %v2730 = vsel %vm1198, %v2513, 0
  %v2733 = vsel %vm1198, %v2520, 0
  %v2736 = vsel %vm1198, %v2527, 0
  %v2739 = vsel %vm1198, %v2534, 0
  %v2742 = vsel %vm1198, %v2541, 0
  %v2745 = vsel %vm1198, %v2548, 0
  %v2748 = vsel %vm1198, %v2555, 0
  %v2751 = vsel %vm1198, %v2562, 0
  %v2754 = vsel %vm1198, %v2569, 0
  %v2757 = vsel %vm1198, %v2576, 0
  %v2760 = vsel %vm1198, %v2583, 0
  %v2763 = vsel %vm1198, %v2590, 0
  %v2766 = vsel %vm1198, %v2597, 0
  %v2769 = vsel %vm1198, %v2604, 0
  %v2772 = vsel %vm1198, %v2611, 0
  %2774 = vmatpush.bf16.msra.mxu0 %v1105
  %2775 = vmatpush.bf16.msra.mxu0 %v1104
  %2776 = vmatpush.bf16.msra.mxu0 %v1103
  %2777 = vmatpush.bf16.msra.mxu0 %v1102
  %2778 = vmatpush.bf16.msra.mxu0 %v1101
  %2779 = vmatpush.bf16.msra.mxu0 %v1100
  %2780 = vmatpush.bf16.msra.mxu0 %v1099
  %2781 = vmatpush.bf16.msra.mxu0 %v1098
  %2782 = vmatmul.bf16.gmra.mxu0 %v2486
  %v2783 = vpop.f32.mrf.mxu0
  %v2784 = vadd.f32 0.0, %v2783
  %v2785 = vpop.f32.mrf.mxu0
  %v2786 = vadd.f32 0.0, %v2785
  %2787 = vmatmul.bf16.gmra.mxu0 %v2493
  %v2788 = vpop.f32.mrf.mxu0
  %v2789 = vadd.f32 0.0, %v2788
  %v2790 = vpop.f32.mrf.mxu0
  %v2791 = vadd.f32 0.0, %v2790
  %2792 = vmatmul.bf16.gmra.mxu0 %v2500
  %v2793 = vpop.f32.mrf.mxu0
  %v2794 = vadd.f32 0.0, %v2793
  %v2795 = vpop.f32.mrf.mxu0
  %v2796 = vadd.f32 0.0, %v2795
  %2797 = vmatmul.bf16.gmra.mxu0 %v2507
  %v2798 = vpop.f32.mrf.mxu0
  %v2799 = vadd.f32 0.0, %v2798
  %v2800 = vpop.f32.mrf.mxu0
  %v2801 = vadd.f32 0.0, %v2800
  %2802 = vmatmul.bf16.gmra.mxu0 %v2514
  %v2803 = vpop.f32.mrf.mxu0
  %v2804 = vadd.f32 0.0, %v2803
  %v2805 = vpop.f32.mrf.mxu0
  %v2806 = vadd.f32 0.0, %v2805
  %2807 = vmatmul.bf16.gmra.mxu0 %v2521
  %v2808 = vpop.f32.mrf.mxu0
  %v2809 = vadd.f32 0.0, %v2808
  %v2810 = vpop.f32.mrf.mxu0
  %v2811 = vadd.f32 0.0, %v2810
  %2812 = vmatmul.bf16.gmra.mxu0 %v2528
  %v2813 = vpop.f32.mrf.mxu0
  %v2814 = vadd.f32 0.0, %v2813
  %v2815 = vpop.f32.mrf.mxu0
  %v2816 = vadd.f32 0.0, %v2815
  %2817 = vmatmul.bf16.gmra.mxu0 %v2535
  %v2818 = vpop.f32.mrf.mxu0
  %v2819 = vadd.f32 0.0, %v2818
  %v2820 = vpop.f32.mrf.mxu0
  %v2821 = vadd.f32 0.0, %v2820
  %2822 = vmatmul.bf16.gmra.mxu0 %v2542
  %v2823 = vpop.f32.mrf.mxu0
  %v2824 = vadd.f32 0.0, %v2823
  %v2825 = vpop.f32.mrf.mxu0
  %v2826 = vadd.f32 0.0, %v2825
  %2827 = vmatmul.bf16.gmra.mxu0 %v2549
  %v2828 = vpop.f32.mrf.mxu0
  %v2829 = vadd.f32 0.0, %v2828
  %v2830 = vpop.f32.mrf.mxu0
  %v2831 = vadd.f32 0.0, %v2830
  %2832 = vmatmul.bf16.gmra.mxu0 %v2556
  %v2833 = vpop.f32.mrf.mxu0
  %v2834 = vadd.f32 0.0, %v2833
  %v2835 = vpop.f32.mrf.mxu0
  %v2836 = vadd.f32 0.0, %v2835
  %2837 = vmatmul.bf16.gmra.mxu0 %v2563
  %v2838 = vpop.f32.mrf.mxu0
  %v2839 = vadd.f32 0.0, %v2838
  %v2840 = vpop.f32.mrf.mxu0
  %v2841 = vadd.f32 0.0, %v2840
  %2842 = vmatmul.bf16.gmra.mxu0 %v2570
  %v2843 = vpop.f32.mrf.mxu0
  %v2844 = vadd.f32 0.0, %v2843
  %v2845 = vpop.f32.mrf.mxu0
  %v2846 = vadd.f32 0.0, %v2845
  %2847 = vmatmul.bf16.gmra.mxu0 %v2577
  %v2848 = vpop.f32.mrf.mxu0
  %v2849 = vadd.f32 0.0, %v2848
  %v2850 = vpop.f32.mrf.mxu0
  %v2851 = vadd.f32 0.0, %v2850
  %2852 = vmatmul.bf16.gmra.mxu0 %v2584
  %v2853 = vpop.f32.mrf.mxu0
  %v2854 = vadd.f32 0.0, %v2853
  %v2855 = vpop.f32.mrf.mxu0
  %v2856 = vadd.f32 0.0, %v2855
  %2857 = vmatmul.bf16.gmra.mxu0 %v2591
  %v2858 = vpop.f32.mrf.mxu0
  %v2859 = vadd.f32 0.0, %v2858
  %v2860 = vpop.f32.mrf.mxu0
  %v2861 = vadd.f32 0.0, %v2860
  %2862 = vmatmul.bf16.gmra.mxu0 %v2598
  %v2863 = vpop.f32.mrf.mxu0
  %v2864 = vadd.f32 0.0, %v2863
  %v2865 = vpop.f32.mrf.mxu0
  %v2866 = vadd.f32 0.0, %v2865
  %2867 = vmatmul.bf16.gmra.mxu0 %v2605
  %v2868 = vpop.f32.mrf.mxu0
  %v2869 = vadd.f32 0.0, %v2868
  %v2870 = vpop.f32.mrf.mxu0
  %v2871 = vadd.f32 0.0, %v2870
  %2872 = vdwg.mxu0
  %2873 = vmatpush.bf16.msra.mxu0 %v1113
  %2874 = vmatpush.bf16.msra.mxu0 %v1112
  %2875 = vmatpush.bf16.msra.mxu0 %v1111
  %2876 = vmatpush.bf16.msra.mxu0 %v1110
  %2877 = vmatpush.bf16.msra.mxu0 %v1109
  %2878 = vmatpush.bf16.msra.mxu0 %v1108
  %2879 = vmatpush.bf16.msra.mxu0 %v1107
  %2880 = vmatpush.bf16.msra.mxu0 %v1106
  %2881 = vmatmul.bf16.gmra.mxu0 %v2487
  %v2882 = vpop.f32.mrf.mxu0
  %v2883 = vadd.f32 %v2784, %v2882
  %v2884 = vpop.f32.mrf.mxu0
  %v2885 = vadd.f32 %v2786, %v2884
  %2886 = vmatmul.bf16.gmra.mxu0 %v2494
  %v2887 = vpop.f32.mrf.mxu0
  %v2888 = vadd.f32 %v2789, %v2887
  %v2889 = vpop.f32.mrf.mxu0
  %v2890 = vadd.f32 %v2791, %v2889
  %2891 = vmatmul.bf16.gmra.mxu0 %v2501
  %v2892 = vpop.f32.mrf.mxu0
  %v2893 = vadd.f32 %v2794, %v2892
  %v2894 = vpop.f32.mrf.mxu0
  %v2895 = vadd.f32 %v2796, %v2894
  %2896 = vmatmul.bf16.gmra.mxu0 %v2508
  %v2897 = vpop.f32.mrf.mxu0
  %v2898 = vadd.f32 %v2799, %v2897
  %v2899 = vpop.f32.mrf.mxu0
  %v2900 = vadd.f32 %v2801, %v2899
  %2901 = vmatmul.bf16.gmra.mxu0 %v2515
  %v2902 = vpop.f32.mrf.mxu0
  %v2903 = vadd.f32 %v2804, %v2902
  %v2904 = vpop.f32.mrf.mxu0
  %v2905 = vadd.f32 %v2806, %v2904
  %2906 = vmatmul.bf16.gmra.mxu0 %v2522
  %v2907 = vpop.f32.mrf.mxu0
  %v2908 = vadd.f32 %v2809, %v2907
  %v2909 = vpop.f32.mrf.mxu0
  %v2910 = vadd.f32 %v2811, %v2909
  %2911 = vmatmul.bf16.gmra.mxu0 %v2529
  %v2912 = vpop.f32.mrf.mxu0
  %v2913 = vadd.f32 %v2814, %v2912
  %v2914 = vpop.f32.mrf.mxu0
  %v2915 = vadd.f32 %v2816, %v2914
  %2916 = vmatmul.bf16.gmra.mxu0 %v2536
  %v2917 = vpop.f32.mrf.mxu0
  %v2918 = vadd.f32 %v2819, %v2917
  %v2919 = vpop.f32.mrf.mxu0
  %v2920 = vadd.f32 %v2821, %v2919
  %2921 = vmatmul.bf16.gmra.mxu0 %v2543
  %v2922 = vpop.f32.mrf.mxu0
  %v2923 = vadd.f32 %v2824, %v2922
  %v2924 = vpop.f32.mrf.mxu0
  %v2925 = vadd.f32 %v2826, %v2924
  %2926 = vmatmul.bf16.gmra.mxu0 %v2550
  %v2927 = vpop.f32.mrf.mxu0
  %v2928 = vadd.f32 %v2829, %v2927
  %v2929 = vpop.f32.mrf.mxu0
  %v2930 = vadd.f32 %v2831, %v2929
  %2931 = vmatmul.bf16.gmra.mxu0 %v2557
  %v2932 = vpop.f32.mrf.mxu0
  %v2933 = vadd.f32 %v2834, %v2932
  %v2934 = vpop.f32.mrf.mxu0
  %v2935 = vadd.f32 %v2836, %v2934
  %2936 = vmatmul.bf16.gmra.mxu0 %v2564
  %v2937 = vpop.f32.mrf.mxu0
  %v2938 = vadd.f32 %v2839, %v2937
  %v2939 = vpop.f32.mrf.mxu0
  %v2940 = vadd.f32 %v2841, %v2939
  %2941 = vmatmul.bf16.gmra.mxu0 %v2571
  %v2942 = vpop.f32.mrf.mxu0
  %v2943 = vadd.f32 %v2844, %v2942
  %v2944 = vpop.f32.mrf.mxu0
  %v2945 = vadd.f32 %v2846, %v2944
  %2946 = vmatmul.bf16.gmra.mxu0 %v2578
  %v2947 = vpop.f32.mrf.mxu0
  %v2948 = vadd.f32 %v2849, %v2947
  %v2949 = vpop.f32.mrf.mxu0
  %v2950 = vadd.f32 %v2851, %v2949
  %2951 = vmatmul.bf16.gmra.mxu0 %v2585
  %v2952 = vpop.f32.mrf.mxu0
  %v2953 = vadd.f32 %v2854, %v2952
  %v2954 = vpop.f32.mrf.mxu0
  %v2955 = vadd.f32 %v2856, %v2954
  %2956 = vmatmul.bf16.gmra.mxu0 %v2592
  %v2957 = vpop.f32.mrf.mxu0
  %v2958 = vadd.f32 %v2859, %v2957
  %v2959 = vpop.f32.mrf.mxu0
  %v2960 = vadd.f32 %v2861, %v2959
  %2961 = vmatmul.bf16.gmra.mxu0 %v2599
  %v2962 = vpop.f32.mrf.mxu0
  %v2963 = vadd.f32 %v2864, %v2962
  %v2964 = vpop.f32.mrf.mxu0
  %v2965 = vadd.f32 %v2866, %v2964
  %2966 = vmatmul.bf16.gmra.mxu0 %v2606
  %v2967 = vpop.f32.mrf.mxu0
  %v2968 = vadd.f32 %v2869, %v2967
  %v2969 = vpop.f32.mrf.mxu0
  %v2970 = vadd.f32 %v2871, %v2969
  %2971 = vdwg.mxu0
  %2972 = vmatpush.bf16.msra.mxu0 %v1121
  %2973 = vmatpush.bf16.msra.mxu0 %v1120
  %2974 = vmatpush.bf16.msra.mxu0 %v1119
  %2975 = vmatpush.bf16.msra.mxu0 %v1118
  %2976 = vmatpush.bf16.msra.mxu0 %v1117
  %2977 = vmatpush.bf16.msra.mxu0 %v1116
  %2978 = vmatpush.bf16.msra.mxu0 %v1115
  %2979 = vmatpush.bf16.msra.mxu0 %v1114
  %2980 = vmatmul.bf16.gmra.mxu0 %v2488
  %v2981 = vpop.f32.mrf.mxu0
  %v2982 = vadd.f32 %v2883, %v2981
  %v2983 = vpop.f32.mrf.mxu0
  %v2984 = vadd.f32 %v2885, %v2983
  %2985 = vmatmul.bf16.gmra.mxu0 %v2495
  %v2986 = vpop.f32.mrf.mxu0
  %v2987 = vadd.f32 %v2888, %v2986
  %v2988 = vpop.f32.mrf.mxu0
  %v2989 = vadd.f32 %v2890, %v2988
  %2990 = vmatmul.bf16.gmra.mxu0 %v2502
  %v2991 = vpop.f32.mrf.mxu0
  %v2992 = vadd.f32 %v2893, %v2991
  %v2993 = vpop.f32.mrf.mxu0
  %v2994 = vadd.f32 %v2895, %v2993
  %2995 = vmatmul.bf16.gmra.mxu0 %v2509
  %v2996 = vpop.f32.mrf.mxu0
  %v2997 = vadd.f32 %v2898, %v2996
  %v2998 = vpop.f32.mrf.mxu0
  %v2999 = vadd.f32 %v2900, %v2998
  %3000 = vmatmul.bf16.gmra.mxu0 %v2516
  %v3001 = vpop.f32.mrf.mxu0
  %v3002 = vadd.f32 %v2903, %v3001
  %v3003 = vpop.f32.mrf.mxu0
  %v3004 = vadd.f32 %v2905, %v3003
  %3005 = vmatmul.bf16.gmra.mxu0 %v2523
  %v3006 = vpop.f32.mrf.mxu0
  %v3007 = vadd.f32 %v2908, %v3006
  %v3008 = vpop.f32.mrf.mxu0
  %v3009 = vadd.f32 %v2910, %v3008
  %3010 = vmatmul.bf16.gmra.mxu0 %v2530
  %v3011 = vpop.f32.mrf.mxu0
  %v3012 = vadd.f32 %v2913, %v3011
  %v3013 = vpop.f32.mrf.mxu0
  %v3014 = vadd.f32 %v2915, %v3013
  %3015 = vmatmul.bf16.gmra.mxu0 %v2537
  %v3016 = vpop.f32.mrf.mxu0
  %v3017 = vadd.f32 %v2918, %v3016
  %v3018 = vpop.f32.mrf.mxu0
  %v3019 = vadd.f32 %v2920, %v3018
  %3020 = vmatmul.bf16.gmra.mxu0 %v2544
  %v3021 = vpop.f32.mrf.mxu0
  %v3022 = vadd.f32 %v2923, %v3021
  %v3023 = vpop.f32.mrf.mxu0
  %v3024 = vadd.f32 %v2925, %v3023
  %3025 = vmatmul.bf16.gmra.mxu0 %v2551
  %v3026 = vpop.f32.mrf.mxu0
  %v3027 = vadd.f32 %v2928, %v3026
  %v3028 = vpop.f32.mrf.mxu0
  %v3029 = vadd.f32 %v2930, %v3028
  %3030 = vmatmul.bf16.gmra.mxu0 %v2558
  %v3031 = vpop.f32.mrf.mxu0
  %v3032 = vadd.f32 %v2933, %v3031
  %v3033 = vpop.f32.mrf.mxu0
  %v3034 = vadd.f32 %v2935, %v3033
  %3035 = vmatmul.bf16.gmra.mxu0 %v2565
  %v3036 = vpop.f32.mrf.mxu0
  %v3037 = vadd.f32 %v2938, %v3036
  %v3038 = vpop.f32.mrf.mxu0
  %v3039 = vadd.f32 %v2940, %v3038
  %3040 = vmatmul.bf16.gmra.mxu0 %v2572
  %v3041 = vpop.f32.mrf.mxu0
  %v3042 = vadd.f32 %v2943, %v3041
  %v3043 = vpop.f32.mrf.mxu0
  %v3044 = vadd.f32 %v2945, %v3043
  %3045 = vmatmul.bf16.gmra.mxu0 %v2579
  %v3046 = vpop.f32.mrf.mxu0
  %v3047 = vadd.f32 %v2948, %v3046
  %v3048 = vpop.f32.mrf.mxu0
  %v3049 = vadd.f32 %v2950, %v3048
  %3050 = vmatmul.bf16.gmra.mxu0 %v2586
  %v3051 = vpop.f32.mrf.mxu0
  %v3052 = vadd.f32 %v2953, %v3051
  %v3053 = vpop.f32.mrf.mxu0
  %v3054 = vadd.f32 %v2955, %v3053
  %3055 = vmatmul.bf16.gmra.mxu0 %v2593
  %v3056 = vpop.f32.mrf.mxu0
  %v3057 = vadd.f32 %v2958, %v3056
  %v3058 = vpop.f32.mrf.mxu0
  %v3059 = vadd.f32 %v2960, %v3058
  %3060 = vmatmul.bf16.gmra.mxu0 %v2600
  %v3061 = vpop.f32.mrf.mxu0
  %v3062 = vadd.f32 %v2963, %v3061
  %v3063 = vpop.f32.mrf.mxu0
  %v3064 = vadd.f32 %v2965, %v3063
  %3065 = vmatmul.bf16.gmra.mxu0 %v2607
  %v3066 = vpop.f32.mrf.mxu0
  %v3067 = vadd.f32 %v2968, %v3066
  %v3068 = vpop.f32.mrf.mxu0
  %v3069 = vadd.f32 %v2970, %v3068
  %3070 = vdwg.mxu0
  %3071 = vmatpush.bf16.msra.mxu0 %v1129
  %3072 = vmatpush.bf16.msra.mxu0 %v1128
  %3073 = vmatpush.bf16.msra.mxu0 %v1127
  %3074 = vmatpush.bf16.msra.mxu0 %v1126
  %3075 = vmatpush.bf16.msra.mxu0 %v1125
  %3076 = vmatpush.bf16.msra.mxu0 %v1124
  %3077 = vmatpush.bf16.msra.mxu0 %v1123
  %3078 = vmatpush.bf16.msra.mxu0 %v1122
  %3079 = vmatmul.bf16.gmra.mxu0 %v2489
  %v3080 = vpop.f32.mrf.mxu0
  %v3081 = vadd.f32 %v2982, %v3080
  %v3082 = vpop.f32.mrf.mxu0
  %v3083 = vadd.f32 %v2984, %v3082
  %3084 = vmatmul.bf16.gmra.mxu0 %v2496
  %v3085 = vpop.f32.mrf.mxu0
  %v3086 = vadd.f32 %v2987, %v3085
  %v3087 = vpop.f32.mrf.mxu0
  %v3088 = vadd.f32 %v2989, %v3087
  %3089 = vmatmul.bf16.gmra.mxu0 %v2503
  %v3090 = vpop.f32.mrf.mxu0
  %v3091 = vadd.f32 %v2992, %v3090
  %v3092 = vpop.f32.mrf.mxu0
  %v3093 = vadd.f32 %v2994, %v3092
  %3094 = vmatmul.bf16.gmra.mxu0 %v2510
  %v3095 = vpop.f32.mrf.mxu0
  %v3096 = vadd.f32 %v2997, %v3095
  %v3097 = vpop.f32.mrf.mxu0
  %v3098 = vadd.f32 %v2999, %v3097
  %3099 = vmatmul.bf16.gmra.mxu0 %v2517
  %v3100 = vpop.f32.mrf.mxu0
  %v3101 = vadd.f32 %v3002, %v3100
  %v3102 = vpop.f32.mrf.mxu0
  %v3103 = vadd.f32 %v3004, %v3102
  %3104 = vmatmul.bf16.gmra.mxu0 %v2524
  %v3105 = vpop.f32.mrf.mxu0
  %v3106 = vadd.f32 %v3007, %v3105
  %v3107 = vpop.f32.mrf.mxu0
  %v3108 = vadd.f32 %v3009, %v3107
  %3109 = vmatmul.bf16.gmra.mxu0 %v2531
  %v3110 = vpop.f32.mrf.mxu0
  %v3111 = vadd.f32 %v3012, %v3110
  %v3112 = vpop.f32.mrf.mxu0
  %v3113 = vadd.f32 %v3014, %v3112
  %3114 = vmatmul.bf16.gmra.mxu0 %v2538
  %v3115 = vpop.f32.mrf.mxu0
  %v3116 = vadd.f32 %v3017, %v3115
  %v3117 = vpop.f32.mrf.mxu0
  %v3118 = vadd.f32 %v3019, %v3117
  %3119 = vmatmul.bf16.gmra.mxu0 %v2545
  %v3120 = vpop.f32.mrf.mxu0
  %v3121 = vadd.f32 %v3022, %v3120
  %v3122 = vpop.f32.mrf.mxu0
  %v3123 = vadd.f32 %v3024, %v3122
  %3124 = vmatmul.bf16.gmra.mxu0 %v2552
  %v3125 = vpop.f32.mrf.mxu0
  %v3126 = vadd.f32 %v3027, %v3125
  %v3127 = vpop.f32.mrf.mxu0
  %v3128 = vadd.f32 %v3029, %v3127
  %3129 = vmatmul.bf16.gmra.mxu0 %v2559
  %v3130 = vpop.f32.mrf.mxu0
  %v3131 = vadd.f32 %v3032, %v3130
  %v3132 = vpop.f32.mrf.mxu0
  %v3133 = vadd.f32 %v3034, %v3132
  %3134 = vmatmul.bf16.gmra.mxu0 %v2566
  %v3135 = vpop.f32.mrf.mxu0
  %v3136 = vadd.f32 %v3037, %v3135
  %v3137 = vpop.f32.mrf.mxu0
  %v3138 = vadd.f32 %v3039, %v3137
  %3139 = vmatmul.bf16.gmra.mxu0 %v2573
  %v3140 = vpop.f32.mrf.mxu0
  %v3141 = vadd.f32 %v3042, %v3140
  %v3142 = vpop.f32.mrf.mxu0
  %v3143 = vadd.f32 %v3044, %v3142
  %3144 = vmatmul.bf16.gmra.mxu0 %v2580
  %v3145 = vpop.f32.mrf.mxu0
  %v3146 = vadd.f32 %v3047, %v3145
  %v3147 = vpop.f32.mrf.mxu0
  %v3148 = vadd.f32 %v3049, %v3147
  %3149 = vmatmul.bf16.gmra.mxu0 %v2587
  %v3150 = vpop.f32.mrf.mxu0
  %v3151 = vadd.f32 %v3052, %v3150
  %v3152 = vpop.f32.mrf.mxu0
  %v3153 = vadd.f32 %v3054, %v3152
  %3154 = vmatmul.bf16.gmra.mxu0 %v2594
  %v3155 = vpop.f32.mrf.mxu0
  %v3156 = vadd.f32 %v3057, %v3155
  %v3157 = vpop.f32.mrf.mxu0
  %v3158 = vadd.f32 %v3059, %v3157
  %3159 = vmatmul.bf16.gmra.mxu0 %v2601
  %v3160 = vpop.f32.mrf.mxu0
  %v3161 = vadd.f32 %v3062, %v3160
  %v3162 = vpop.f32.mrf.mxu0
  %v3163 = vadd.f32 %v3064, %v3162
  %3164 = vmatmul.bf16.gmra.mxu0 %v2608
  %v3165 = vpop.f32.mrf.mxu0
  %v3166 = vadd.f32 %v3067, %v3165
  %v3167 = vpop.f32.mrf.mxu0
  %v3168 = vadd.f32 %v3069, %v3167
  %3169 = vdwg.mxu0
  %3170 = vmatpush.bf16.msra.mxu0 %v1137
  %3171 = vmatpush.bf16.msra.mxu0 %v1136
  %3172 = vmatpush.bf16.msra.mxu0 %v1135
  %3173 = vmatpush.bf16.msra.mxu0 %v1134
  %3174 = vmatpush.bf16.msra.mxu0 %v1133
  %3175 = vmatpush.bf16.msra.mxu0 %v1132
  %3176 = vmatpush.bf16.msra.mxu0 %v1131
  %3177 = vmatpush.bf16.msra.mxu0 %v1130
  %3178 = vmatmul.bf16.gmra.mxu0 %v2490
  %v3179 = vpop.f32.mrf.mxu0
  %v3180 = vadd.f32 %v3081, %v3179
  %v3181 = vpop.f32.mrf.mxu0
  %v3182 = vadd.f32 %v3083, %v3181
  %3183 = vmatmul.bf16.gmra.mxu0 %v2497
  %v3184 = vpop.f32.mrf.mxu0
  %v3185 = vadd.f32 %v3086, %v3184
  %v3186 = vpop.f32.mrf.mxu0
  %v3187 = vadd.f32 %v3088, %v3186
  %3188 = vmatmul.bf16.gmra.mxu0 %v2504
  %v3189 = vpop.f32.mrf.mxu0
  %v3190 = vadd.f32 %v3091, %v3189
  %v3191 = vpop.f32.mrf.mxu0
  %v3192 = vadd.f32 %v3093, %v3191
  %3193 = vmatmul.bf16.gmra.mxu0 %v2511
  %v3194 = vpop.f32.mrf.mxu0
  %v3195 = vadd.f32 %v3096, %v3194
  %v3196 = vpop.f32.mrf.mxu0
  %v3197 = vadd.f32 %v3098, %v3196
  %3198 = vmatmul.bf16.gmra.mxu0 %v2518
  %v3199 = vpop.f32.mrf.mxu0
  %v3200 = vadd.f32 %v3101, %v3199
  %v3201 = vpop.f32.mrf.mxu0
  %v3202 = vadd.f32 %v3103, %v3201
  %3203 = vmatmul.bf16.gmra.mxu0 %v2525
  %v3204 = vpop.f32.mrf.mxu0
  %v3205 = vadd.f32 %v3106, %v3204
  %v3206 = vpop.f32.mrf.mxu0
  %v3207 = vadd.f32 %v3108, %v3206
  %3208 = vmatmul.bf16.gmra.mxu0 %v2532
  %v3209 = vpop.f32.mrf.mxu0
  %v3210 = vadd.f32 %v3111, %v3209
  %v3211 = vpop.f32.mrf.mxu0
  %v3212 = vadd.f32 %v3113, %v3211
  %3213 = vmatmul.bf16.gmra.mxu0 %v2539
  %v3214 = vpop.f32.mrf.mxu0
  %v3215 = vadd.f32 %v3116, %v3214
  %v3216 = vpop.f32.mrf.mxu0
  %v3217 = vadd.f32 %v3118, %v3216
  %3218 = vmatmul.bf16.gmra.mxu0 %v2546
  %v3219 = vpop.f32.mrf.mxu0
  %v3220 = vadd.f32 %v3121, %v3219
  %v3221 = vpop.f32.mrf.mxu0
  %v3222 = vadd.f32 %v3123, %v3221
  %3223 = vmatmul.bf16.gmra.mxu0 %v2553
  %v3224 = vpop.f32.mrf.mxu0
  %v3225 = vadd.f32 %v3126, %v3224
  %v3226 = vpop.f32.mrf.mxu0
  %v3227 = vadd.f32 %v3128, %v3226
  %3228 = vmatmul.bf16.gmra.mxu0 %v2560
  %v3229 = vpop.f32.mrf.mxu0
  %v3230 = vadd.f32 %v3131, %v3229
  %v3231 = vpop.f32.mrf.mxu0
  %v3232 = vadd.f32 %v3133, %v3231
  %3233 = vmatmul.bf16.gmra.mxu0 %v2567
  %v3234 = vpop.f32.mrf.mxu0
  %v3235 = vadd.f32 %v3136, %v3234
  %v3236 = vpop.f32.mrf.mxu0
  %v3237 = vadd.f32 %v3138, %v3236
  %3238 = vmatmul.bf16.gmra.mxu0 %v2574
  %v3239 = vpop.f32.mrf.mxu0
  %v3240 = vadd.f32 %v3141, %v3239
  %v3241 = vpop.f32.mrf.mxu0
  %v3242 = vadd.f32 %v3143, %v3241
  %3243 = vmatmul.bf16.gmra.mxu0 %v2581
  %v3244 = vpop.f32.mrf.mxu0
  %v3245 = vadd.f32 %v3146, %v3244
  %v3246 = vpop.f32.mrf.mxu0
  %v3247 = vadd.f32 %v3148, %v3246
  %3248 = vmatmul.bf16.gmra.mxu0 %v2588
  %v3249 = vpop.f32.mrf.mxu0
  %v3250 = vadd.f32 %v3151, %v3249
  %v3251 = vpop.f32.mrf.mxu0
  %v3252 = vadd.f32 %v3153, %v3251
  %3253 = vmatmul.bf16.gmra.mxu0 %v2595
  %v3254 = vpop.f32.mrf.mxu0
  %v3255 = vadd.f32 %v3156, %v3254
  %v3256 = vpop.f32.mrf.mxu0
  %v3257 = vadd.f32 %v3158, %v3256
  %3258 = vmatmul.bf16.gmra.mxu0 %v2602
  %v3259 = vpop.f32.mrf.mxu0
  %v3260 = vadd.f32 %v3161, %v3259
  %v3261 = vpop.f32.mrf.mxu0
  %v3262 = vadd.f32 %v3163, %v3261
  %3263 = vmatmul.bf16.gmra.mxu0 %v2609
  %v3264 = vpop.f32.mrf.mxu0
  %v3265 = vadd.f32 %v3166, %v3264
  %v3266 = vpop.f32.mrf.mxu0
  %v3267 = vadd.f32 %v3168, %v3266
  %3268 = vdwg.mxu0
  %3269 = vmatpush.bf16.msra.mxu0 %v1145
  %3270 = vmatpush.bf16.msra.mxu0 %v1144
  %3271 = vmatpush.bf16.msra.mxu0 %v1143
  %3272 = vmatpush.bf16.msra.mxu0 %v1142
  %3273 = vmatpush.bf16.msra.mxu0 %v1141
  %3274 = vmatpush.bf16.msra.mxu0 %v1140
  %3275 = vmatpush.bf16.msra.mxu0 %v1139
  %3276 = vmatpush.bf16.msra.mxu0 %v1138
  %3277 = vmatmul.bf16.gmra.mxu0 %v2491
  %v3278 = vpop.f32.mrf.mxu0
  %v3279 = vadd.f32 %v3180, %v3278
  %v3280 = vpop.f32.mrf.mxu0
  %v3281 = vadd.f32 %v3182, %v3280
  %3282 = vmatmul.bf16.gmra.mxu0 %v2498
  %v3283 = vpop.f32.mrf.mxu0
  %v3284 = vadd.f32 %v3185, %v3283
  %v3285 = vpop.f32.mrf.mxu0
  %v3286 = vadd.f32 %v3187, %v3285
  %3287 = vmatmul.bf16.gmra.mxu0 %v2505
  %v3288 = vpop.f32.mrf.mxu0
  %v3289 = vadd.f32 %v3190, %v3288
  %v3290 = vpop.f32.mrf.mxu0
  %v3291 = vadd.f32 %v3192, %v3290
  %3292 = vmatmul.bf16.gmra.mxu0 %v2512
  %v3293 = vpop.f32.mrf.mxu0
  %v3294 = vadd.f32 %v3195, %v3293
  %v3295 = vpop.f32.mrf.mxu0
  %v3296 = vadd.f32 %v3197, %v3295
  %3297 = vmatmul.bf16.gmra.mxu0 %v2519
  %v3298 = vpop.f32.mrf.mxu0
  %v3299 = vadd.f32 %v3200, %v3298
  %v3300 = vpop.f32.mrf.mxu0
  %v3301 = vadd.f32 %v3202, %v3300
  %3302 = vmatmul.bf16.gmra.mxu0 %v2526
  %v3303 = vpop.f32.mrf.mxu0
  %v3304 = vadd.f32 %v3205, %v3303
  %v3305 = vpop.f32.mrf.mxu0
  %v3306 = vadd.f32 %v3207, %v3305
  %3307 = vmatmul.bf16.gmra.mxu0 %v2533
  %v3308 = vpop.f32.mrf.mxu0
  %v3309 = vadd.f32 %v3210, %v3308
  %v3310 = vpop.f32.mrf.mxu0
  %v3311 = vadd.f32 %v3212, %v3310
  %3312 = vmatmul.bf16.gmra.mxu0 %v2540
  %v3313 = vpop.f32.mrf.mxu0
  %v3314 = vadd.f32 %v3215, %v3313
  %v3315 = vpop.f32.mrf.mxu0
  %v3316 = vadd.f32 %v3217, %v3315
  %3317 = vmatmul.bf16.gmra.mxu0 %v2547
  %v3318 = vpop.f32.mrf.mxu0
  %v3319 = vadd.f32 %v3220, %v3318
  %v3320 = vpop.f32.mrf.mxu0
  %v3321 = vadd.f32 %v3222, %v3320
  %3322 = vmatmul.bf16.gmra.mxu0 %v2554
  %v3323 = vpop.f32.mrf.mxu0
  %v3324 = vadd.f32 %v3225, %v3323
  %v3325 = vpop.f32.mrf.mxu0
  %v3326 = vadd.f32 %v3227, %v3325
  %3327 = vmatmul.bf16.gmra.mxu0 %v2561
  %v3328 = vpop.f32.mrf.mxu0
  %v3329 = vadd.f32 %v3230, %v3328
  %v3330 = vpop.f32.mrf.mxu0
  %v3331 = vadd.f32 %v3232, %v3330
  %3332 = vmatmul.bf16.gmra.mxu0 %v2568
  %v3333 = vpop.f32.mrf.mxu0
  %v3334 = vadd.f32 %v3235, %v3333
  %v3335 = vpop.f32.mrf.mxu0
  %v3336 = vadd.f32 %v3237, %v3335
  %3337 = vmatmul.bf16.gmra.mxu0 %v2575
  %v3338 = vpop.f32.mrf.mxu0
  %v3339 = vadd.f32 %v3240, %v3338
  %v3340 = vpop.f32.mrf.mxu0
  %v3341 = vadd.f32 %v3242, %v3340
  %3342 = vmatmul.bf16.gmra.mxu0 %v2582
  %v3343 = vpop.f32.mrf.mxu0
  %v3344 = vadd.f32 %v3245, %v3343
  %v3345 = vpop.f32.mrf.mxu0
  %v3346 = vadd.f32 %v3247, %v3345
  %3347 = vmatmul.bf16.gmra.mxu0 %v2589
  %v3348 = vpop.f32.mrf.mxu0
  %v3349 = vadd.f32 %v3250, %v3348
  %v3350 = vpop.f32.mrf.mxu0
  %v3351 = vadd.f32 %v3252, %v3350
  %3352 = vmatmul.bf16.gmra.mxu0 %v2596
  %v3353 = vpop.f32.mrf.mxu0
  %v3354 = vadd.f32 %v3255, %v3353
  %v3355 = vpop.f32.mrf.mxu0
  %v3356 = vadd.f32 %v3257, %v3355
  %3357 = vmatmul.bf16.gmra.mxu0 %v2603
  %v3358 = vpop.f32.mrf.mxu0
  %v3359 = vadd.f32 %v3260, %v3358
  %v3360 = vpop.f32.mrf.mxu0
  %v3361 = vadd.f32 %v3262, %v3360
  %3362 = vmatmul.bf16.gmra.mxu0 %v2610
  %v3363 = vpop.f32.mrf.mxu0
  %v3364 = vadd.f32 %v3265, %v3363
  %v3365 = vpop.f32.mrf.mxu0
  %v3366 = vadd.f32 %v3267, %v3365
  %3367 = vdwg.mxu0
  %3368 = vmatpush.bf16.msra.mxu0 0
  %3369 = vmatpush.bf16.msra.mxu0 0
  %3370 = vmatpush.bf16.msra.mxu0 0
  %3371 = vmatpush.bf16.msra.mxu0 0
  %3372 = vmatpush.bf16.msra.mxu0 0
  %3373 = vmatpush.bf16.msra.mxu0 0
  %3374 = vmatpush.bf16.msra.mxu0 %v1147
  %3375 = vmatpush.bf16.msra.mxu0 %v1146
  %3376 = vmatmul.bf16.gmra.mxu0 %v2721
  %v3377 = vpop.f32.mrf.mxu0
  %v3378 = vadd.f32 %v3279, %v3377
  %v3379 = vpop.f32.mrf.mxu0
  %v3380 = vadd.f32 %v3281, %v3379
  %3381 = vmatmul.bf16.gmra.mxu0 %v2724
  %v3382 = vpop.f32.mrf.mxu0
  %v3383 = vadd.f32 %v3284, %v3382
  %v3384 = vpop.f32.mrf.mxu0
  %v3385 = vadd.f32 %v3286, %v3384
  %3386 = vmatmul.bf16.gmra.mxu0 %v2727
  %v3387 = vpop.f32.mrf.mxu0
  %v3388 = vadd.f32 %v3289, %v3387
  %v3389 = vpop.f32.mrf.mxu0
  %v3390 = vadd.f32 %v3291, %v3389
  %3391 = vmatmul.bf16.gmra.mxu0 %v2730
  %v3392 = vpop.f32.mrf.mxu0
  %v3393 = vadd.f32 %v3294, %v3392
  %v3394 = vpop.f32.mrf.mxu0
  %v3395 = vadd.f32 %v3296, %v3394
  %3396 = vmatmul.bf16.gmra.mxu0 %v2733
  %v3397 = vpop.f32.mrf.mxu0
  %v3398 = vadd.f32 %v3299, %v3397
  %v3399 = vpop.f32.mrf.mxu0
  %v3400 = vadd.f32 %v3301, %v3399
  %3401 = vmatmul.bf16.gmra.mxu0 %v2736
  %v3402 = vpop.f32.mrf.mxu0
  %v3403 = vadd.f32 %v3304, %v3402
  %v3404 = vpop.f32.mrf.mxu0
  %v3405 = vadd.f32 %v3306, %v3404
  %3406 = vmatmul.bf16.gmra.mxu0 %v2739
  %v3407 = vpop.f32.mrf.mxu0
  %v3408 = vadd.f32 %v3309, %v3407
  %v3409 = vpop.f32.mrf.mxu0
  %v3410 = vadd.f32 %v3311, %v3409
  %3411 = vmatmul.bf16.gmra.mxu0 %v2742
  %v3412 = vpop.f32.mrf.mxu0
  %v3413 = vadd.f32 %v3314, %v3412
  %v3414 = vpop.f32.mrf.mxu0
  %v3415 = vadd.f32 %v3316, %v3414
  %3416 = vmatmul.bf16.gmra.mxu0 %v2745
  %v3417 = vpop.f32.mrf.mxu0
  %v3418 = vadd.f32 %v3319, %v3417
  %v3419 = vpop.f32.mrf.mxu0
  %v3420 = vadd.f32 %v3321, %v3419
  %3421 = vmatmul.bf16.gmra.mxu0 %v2748
  %v3422 = vpop.f32.mrf.mxu0
  %v3423 = vadd.f32 %v3324, %v3422
  %v3424 = vpop.f32.mrf.mxu0
  %v3425 = vadd.f32 %v3326, %v3424
  %3426 = vmatmul.bf16.gmra.mxu0 %v2751
  %v3427 = vpop.f32.mrf.mxu0
  %v3428 = vadd.f32 %v3329, %v3427
  %v3429 = vpop.f32.mrf.mxu0
  %v3430 = vadd.f32 %v3331, %v3429
  %3431 = vmatmul.bf16.gmra.mxu0 %v2754
  %v3432 = vpop.f32.mrf.mxu0
  %v3433 = vadd.f32 %v3334, %v3432
  %v3434 = vpop.f32.mrf.mxu0
  %v3435 = vadd.f32 %v3336, %v3434
  %3436 = vmatmul.bf16.gmra.mxu0 %v2757
  %v3437 = vpop.f32.mrf.mxu0
  %v3438 = vadd.f32 %v3339, %v3437
  %v3439 = vpop.f32.mrf.mxu0
  %v3440 = vadd.f32 %v3341, %v3439
  %3441 = vmatmul.bf16.gmra.mxu0 %v2760
  %v3442 = vpop.f32.mrf.mxu0
  %v3443 = vadd.f32 %v3344, %v3442
  %v3444 = vpop.f32.mrf.mxu0
  %v3445 = vadd.f32 %v3346, %v3444
  %3446 = vmatmul.bf16.gmra.mxu0 %v2763
  %v3447 = vpop.f32.mrf.mxu0
  %v3448 = vadd.f32 %v3349, %v3447
  %v3449 = vpop.f32.mrf.mxu0
  %v3450 = vadd.f32 %v3351, %v3449
  %3451 = vmatmul.bf16.gmra.mxu0 %v2766
  %v3452 = vpop.f32.mrf.mxu0
  %v3453 = vadd.f32 %v3354, %v3452
  %v3454 = vpop.f32.mrf.mxu0
  %v3455 = vadd.f32 %v3356, %v3454
  %3456 = vmatmul.bf16.gmra.mxu0 %v2769
  %v3457 = vpop.f32.mrf.mxu0
  %v3458 = vadd.f32 %v3359, %v3457
  %v3459 = vpop.f32.mrf.mxu0
  %v3460 = vadd.f32 %v3361, %v3459
  %3461 = vmatmul.bf16.gmra.mxu0 %v2772
  %v3462 = vpop.f32.mrf.mxu0
  %v3463 = vadd.f32 %v3364, %v3462
  %v3464 = vpop.f32.mrf.mxu0
  %v3465 = vadd.f32 %v3366, %v3464
  %3466 = vdwg.mxu0
  %v3467 = vld [vmem:[%s2] sm:$0xff]
  %v3468 = vld [vmem:[%s2 + $0x8] sm:$0xff]
  %v3469 = vld [vmem:[%s2 + $0x10] sm:$0xff]
  %v3470 = vld [vmem:[%s2 + $0x18] sm:$0xf]
  %v3471 = vld [vmem:[%s2 + $0x1c] sm:$0xff]
  %v3472 = vld [vmem:[%s2 + $0x24] sm:$0xff]
  %v3473 = vld [vmem:[%s2 + $0x2c] sm:$0xff]
  %v3474 = vld [vmem:[%s2 + $0x34] sm:$0xf]
  %v3475 = vld [vmem:[%s2 + $0x38] sm:$0xff]
  %v3476 = vld [vmem:[%s2 + $0x40] sm:$0xff]
  %v3477 = vld [vmem:[%s2 + $0x48] sm:$0xff]
  %v3478 = vld [vmem:[%s2 + $0x50] sm:$0xf]
  %v3479 = vld [vmem:[%s2 + $0x54] sm:$0xff]
  %v3480 = vld [vmem:[%s2 + $0x5c] sm:$0xff]
  %v3481 = vld [vmem:[%s2 + $0x64] sm:$0xff]
  %v3482 = vld [vmem:[%s2 + $0x6c] sm:$0xf]
  %v3483 = vld [vmem:[%s2 + $0x70] sm:$0xff]
  %v3484 = vld [vmem:[%s2 + $0x78] sm:$0xff]
  %v3485 = vld [vmem:[%s2 + $0x80] sm:$0xff]
  %v3486 = vld [vmem:[%s2 + $0x88] sm:$0xf]
  %v3487 = vld [vmem:[%s2 + $0x8c] sm:$0xff]
  %v3488 = vld [vmem:[%s2 + $0x94] sm:$0xff]
  %v3489 = vld [vmem:[%s2 + $0x9c] sm:$0xff]
  %v3490 = vld [vmem:[%s2 + $0xa4] sm:$0xf]
  %v3491 = vld [vmem:[%s2 + $0xa8] sm:$0xff]
  %v3492 = vld [vmem:[%s2 + $0xb0] sm:$0xff]
  %v3493 = vld [vmem:[%s2 + $0xb8] sm:$0xff]
  %v3494 = vld [vmem:[%s2 + $0xc0] sm:$0xf]
  %v3495 = vld [vmem:[%s2 + $0xc4] sm:$0xff]
  %v3496 = vld [vmem:[%s2 + $0xcc] sm:$0xff]
  %v3497 = vld [vmem:[%s2 + $0xd4] sm:$0xff]
  %v3498 = vld [vmem:[%s2 + $0xdc] sm:$0xf]
  %v3499 = vld [vmem:[%s2 + $0xe0] sm:$0xff]
  %v3500 = vld [vmem:[%s2 + $0xe8] sm:$0xff]
  %v3501 = vld [vmem:[%s2 + $0xf0] sm:$0xff]
  %v3502 = vld [vmem:[%s2 + $0xf8] sm:$0xf]
  %v3503 = vld [vmem:[%s2 + $0xfc] sm:$0xff]
  %v3504 = vld [vmem:[%s2 + $0x104] sm:$0xff]
  %v3505 = vld [vmem:[%s2 + $0x10c] sm:$0xff]
  %v3506 = vld [vmem:[%s2 + $0x114] sm:$0xf]
  %v3507 = vld [vmem:[%s2 + $0x118] sm:$0xff]
  %v3508 = vld [vmem:[%s2 + $0x120] sm:$0xff]
  %v3509 = vld [vmem:[%s2 + $0x128] sm:$0xff]
  %v3510 = vld [vmem:[%s2 + $0x130] sm:$0xf]
  %v3511 = vld [vmem:[%s2 + $0x134] sm:$0xff]
  %v3512 = vld [vmem:[%s2 + $0x13c] sm:$0xff]
  %v3513 = vld [vmem:[%s2 + $0x144] sm:$0xff]
  %v3514 = vld [vmem:[%s2 + $0x14c] sm:$0xf]
  %v3515 = vld [vmem:[%s2 + $0x150] sm:$0xff]
  %v3516 = vld [vmem:[%s2 + $0x158] sm:$0xff]
  %v3517 = vld [vmem:[%s2 + $0x160] sm:$0xff]
  %v3518 = vld [vmem:[%s2 + $0x168] sm:$0xf]
  %v3519 = vld [vmem:[%s2 + $0x16c] sm:$0xff]
  %v3520 = vld [vmem:[%s2 + $0x174] sm:$0xff]
  %v3521 = vld [vmem:[%s2 + $0x17c] sm:$0xff]
  %v3522 = vld [vmem:[%s2 + $0x184] sm:$0xf]
  %v3523 = vld [vmem:[%s2 + $0x188] sm:$0xff]
  %v3524 = vld [vmem:[%s2 + $0x190] sm:$0xff]
  %v3525 = vld [vmem:[%s2 + $0x198] sm:$0xff]
  %v3526 = vld [vmem:[%s2 + $0x1a0] sm:$0xf]
  %v3527 = vld [vmem:[%s2 + $0x1a4] sm:$0xff]
  %v3528 = vld [vmem:[%s2 + $0x1ac] sm:$0xff]
  %v3529 = vld [vmem:[%s2 + $0x1b4] sm:$0xff]
  %v3530 = vld [vmem:[%s2 + $0x1bc] sm:$0xf]
  %v3531 = vld [vmem:[%s2 + $0x1c0] sm:$0xff]
  %v3532 = vld [vmem:[%s2 + $0x1c8] sm:$0xff]
  %v3533 = vld [vmem:[%s2 + $0x1d0] sm:$0xff]
  %v3534 = vld [vmem:[%s2 + $0x1d8] sm:$0xf]
  %v3535 = vld [vmem:[%s2 + $0x1dc] sm:$0xff]
  %v3536 = vld [vmem:[%s2 + $0x1e4] sm:$0xff]
  %v3537 = vld [vmem:[%s2 + $0x1ec] sm:$0xff]
  %v3538 = vld [vmem:[%s2 + $0x1f4] sm:$0xf]
  %v3539 = vld [vmem:[%s2 + $0x1f8] sm:$0xff]
  %v3540 = vld [vmem:[%s2 + $0x200] sm:$0xff]
  %v3541 = vld [vmem:[%s2 + $0x208] sm:$0xff]
  %v3542 = vld [vmem:[%s2 + $0x210] sm:$0xf]
  %v3543 = vld [vmem:[%s2 + $0x214] sm:$0xff]
  %v3544 = vld [vmem:[%s2 + $0x21c] sm:$0xff]
  %v3545 = vld [vmem:[%s2 + $0x224] sm:$0xff]
  %v3546 = vld [vmem:[%s2 + $0x22c] sm:$0xf]
  %v3547 = vld [vmem:[%s2 + $0x230] sm:$0xff]
  %v3548 = vld [vmem:[%s2 + $0x238] sm:$0xff]
  %v3549 = vld [vmem:[%s2 + $0x240] sm:$0xff]
  %v3550 = vld [vmem:[%s2 + $0x248] sm:$0xf]
  %v3551 = vld [vmem:[%s2 + $0x24c] sm:$0xff]
  %v3552 = vld [vmem:[%s2 + $0x254] sm:$0xff]
  %v3553 = vld [vmem:[%s2 + $0x25c] sm:$0xff]
  %v3554 = vld [vmem:[%s2 + $0x264] sm:$0xf]
  %v3555 = vld [vmem:[%s2 + $0x268] sm:$0xff]
  %v3556 = vld [vmem:[%s2 + $0x270] sm:$0xff]
  %v3557 = vld [vmem:[%s2 + $0x278] sm:$0xff]
  %v3558 = vld [vmem:[%s2 + $0x280] sm:$0xf]
  %v3559 = vld [vmem:[%s2 + $0x284] sm:$0xff]
  %v3560 = vld [vmem:[%s2 + $0x28c] sm:$0xff]
  %v3561 = vld [vmem:[%s2 + $0x294] sm:$0xff]
  %v3562 = vld [vmem:[%s2 + $0x29c] sm:$0xf]
  %v3563 = vld [vmem:[%s2 + $0x2a0] sm:$0xff]
  %v3564 = vld [vmem:[%s2 + $0x2a8] sm:$0xff]
  %v3565 = vld [vmem:[%s2 + $0x2b0] sm:$0xff]
  %v3566 = vld [vmem:[%s2 + $0x2b8] sm:$0xf]
  %v3567 = vld [vmem:[%s2 + $0x2bc] sm:$0xff]
  %v3568 = vld [vmem:[%s2 + $0x2c4] sm:$0xff]
  %v3569 = vld [vmem:[%s2 + $0x2cc] sm:$0xff]
  %v3570 = vld [vmem:[%s2 + $0x2d4] sm:$0xf]
  %v3571 = vld [vmem:[%s2 + $0x2d8] sm:$0xff]
  %v3572 = vld [vmem:[%s2 + $0x2e0] sm:$0xff]
  %v3573 = vld [vmem:[%s2 + $0x2e8] sm:$0xff]
  %v3574 = vld [vmem:[%s2 + $0x2f0] sm:$0xf]
  %v3575 = vld [vmem:[%s2 + $0x2f4] sm:$0xff]
  %v3576 = vld [vmem:[%s2 + $0x2fc] sm:$0xff]
  %v3577 = vld [vmem:[%s2 + $0x304] sm:$0xff]
  %v3578 = vld [vmem:[%s2 + $0x30c] sm:$0xf]
  %v3579 = vld [vmem:[%s2 + $0x310] sm:$0xff]
  %v3580 = vld [vmem:[%s2 + $0x318] sm:$0xff]
  %v3581 = vld [vmem:[%s2 + $0x320] sm:$0xff]
  %v3582 = vld [vmem:[%s2 + $0x328] sm:$0xf]
  %v3583 = vld [vmem:[%s2 + $0x32c] sm:$0xff]
  %v3584 = vld [vmem:[%s2 + $0x334] sm:$0xff]
  %v3585 = vld [vmem:[%s2 + $0x33c] sm:$0xff]
  %v3586 = vld [vmem:[%s2 + $0x344] sm:$0xf]
  %v3587 = vld [vmem:[%s2 + $0x348] sm:$0xff]
  %v3588 = vld [vmem:[%s2 + $0x350] sm:$0xff]
  %v3589 = vld [vmem:[%s2 + $0x358] sm:$0xff]
  %v3590 = vld [vmem:[%s2 + $0x360] sm:$0xf]
  %v3591 = vld [vmem:[%s2 + $0x364] sm:$0xff]
  %v3592 = vld [vmem:[%s2 + $0x36c] sm:$0xff]
  %v3593 = vld [vmem:[%s2 + $0x374] sm:$0xff]
  %v3594 = vld [vmem:[%s2 + $0x37c] sm:$0xf]
  %v3595 = vld [vmem:[%s2 + $0x380] sm:$0xff]
  %v3596 = vld [vmem:[%s2 + $0x388] sm:$0xff]
  %v3597 = vld [vmem:[%s2 + $0x390] sm:$0xff]
  %v3598 = vld [vmem:[%s2 + $0x398] sm:$0xf]
  %v3599 = vld [vmem:[%s2 + $0x39c] sm:$0xff]
  %v3600 = vld [vmem:[%s2 + $0x3a4] sm:$0xff]
  %v3601 = vld [vmem:[%s2 + $0x3ac] sm:$0xff]
  %v3602 = vld [vmem:[%s2 + $0x3b4] sm:$0xf]
  %v3603 = vld [vmem:[%s2 + $0x3b8] sm:$0xff]
  %v3604 = vld [vmem:[%s2 + $0x3c0] sm:$0xff]
  %v3605 = vld [vmem:[%s2 + $0x3c8] sm:$0xff]
  %v3606 = vld [vmem:[%s2 + $0x3d0] sm:$0xf]
  %v3607 = vld [vmem:[%s2 + $0x3d4] sm:$0xff]
  %v3608 = vld [vmem:[%s2 + $0x3dc] sm:$0xff]
  %v3609 = vld [vmem:[%s2 + $0x3e4] sm:$0xff]
  %v3610 = vld [vmem:[%s2 + $0x3ec] sm:$0xf]
  %v3755 = vunpack.c.l.b16 %v3467
  %v3756 = vunpack.c.h.b16 %v3467
  %v3757 = vunpack.c.l.b16 %v3468
  %v3758 = vunpack.c.h.b16 %v3468
  %v3759 = vunpack.c.l.b16 %v3469
  %v3760 = vunpack.c.h.b16 %v3469
  %v3761 = vunpack.c.l.b16 %v3470
  %v3762 = vunpack.c.l.b16 %v3471
  %v3763 = vunpack.c.h.b16 %v3471
  %v3764 = vunpack.c.l.b16 %v3472
  %v3765 = vunpack.c.h.b16 %v3472
  %v3766 = vunpack.c.l.b16 %v3473
  %v3767 = vunpack.c.h.b16 %v3473
  %v3768 = vunpack.c.l.b16 %v3474
  %v3769 = vunpack.c.l.b16 %v3475
  %v3770 = vunpack.c.h.b16 %v3475
  %v3771 = vunpack.c.l.b16 %v3476
  %v3772 = vunpack.c.h.b16 %v3476
  %v3773 = vunpack.c.l.b16 %v3477
  %v3774 = vunpack.c.h.b16 %v3477
  %v3775 = vunpack.c.l.b16 %v3478
  %v3776 = vunpack.c.l.b16 %v3479
  %v3777 = vunpack.c.h.b16 %v3479
  %v3778 = vunpack.c.l.b16 %v3480
  %v3779 = vunpack.c.h.b16 %v3480
  %v3780 = vunpack.c.l.b16 %v3481
  %v3781 = vunpack.c.h.b16 %v3481
  %v3782 = vunpack.c.l.b16 %v3482
  %v3783 = vunpack.c.l.b16 %v3483
  %v3784 = vunpack.c.h.b16 %v3483
  %v3785 = vunpack.c.l.b16 %v3484
  %v3786 = vunpack.c.h.b16 %v3484
  %v3787 = vunpack.c.l.b16 %v3485
  %v3788 = vunpack.c.h.b16 %v3485
  %v3789 = vunpack.c.l.b16 %v3486
  %v3790 = vunpack.c.l.b16 %v3487
  %v3791 = vunpack.c.h.b16 %v3487
  %v3792 = vunpack.c.l.b16 %v3488
  %v3793 = vunpack.c.h.b16 %v3488
  %v3794 = vunpack.c.l.b16 %v3489
  %v3795 = vunpack.c.h.b16 %v3489
  %v3796 = vunpack.c.l.b16 %v3490
  %v3797 = vunpack.c.l.b16 %v3491
  %v3798 = vunpack.c.h.b16 %v3491
  %v3799 = vunpack.c.l.b16 %v3492
  %v3800 = vunpack.c.h.b16 %v3492
  %v3801 = vunpack.c.l.b16 %v3493
  %v3802 = vunpack.c.h.b16 %v3493
  %v3803 = vunpack.c.l.b16 %v3494
  %v3804 = vunpack.c.l.b16 %v3495
  %v3805 = vunpack.c.h.b16 %v3495
  %v3806 = vunpack.c.l.b16 %v3496
  %v3807 = vunpack.c.h.b16 %v3496
  %v3808 = vunpack.c.l.b16 %v3497
  %v3809 = vunpack.c.h.b16 %v3497
  %v3810 = vunpack.c.l.b16 %v3498
  %v3811 = vunpack.c.l.b16 %v3499
  %v3812 = vunpack.c.h.b16 %v3499
  %v3813 = vunpack.c.l.b16 %v3500
  %v3814 = vunpack.c.h.b16 %v3500
  %v3815 = vunpack.c.l.b16 %v3501
  %v3816 = vunpack.c.h.b16 %v3501
  %v3817 = vunpack.c.l.b16 %v3502
  %v3818 = vunpack.c.l.b16 %v3503
  %v3819 = vunpack.c.h.b16 %v3503
  %v3820 = vunpack.c.l.b16 %v3504
  %v3821 = vunpack.c.h.b16 %v3504
  %v3822 = vunpack.c.l.b16 %v3505
  %v3823 = vunpack.c.h.b16 %v3505
  %v3824 = vunpack.c.l.b16 %v3506
  %v3825 = vunpack.c.l.b16 %v3507
  %v3826 = vunpack.c.h.b16 %v3507
  %v3827 = vunpack.c.l.b16 %v3508
  %v3828 = vunpack.c.h.b16 %v3508
  %v3829 = vunpack.c.l.b16 %v3509
  %v3830 = vunpack.c.h.b16 %v3509
  %v3831 = vunpack.c.l.b16 %v3510
  %v3832 = vunpack.c.l.b16 %v3511
  %v3833 = vunpack.c.h.b16 %v3511
  %v3834 = vunpack.c.l.b16 %v3512
  %v3835 = vunpack.c.h.b16 %v3512
  %v3836 = vunpack.c.l.b16 %v3513
  %v3837 = vunpack.c.h.b16 %v3513
  %v3838 = vunpack.c.l.b16 %v3514
  %v3839 = vunpack.c.l.b16 %v3515
  %v3840 = vunpack.c.h.b16 %v3515
  %v3841 = vunpack.c.l.b16 %v3516
  %v3842 = vunpack.c.h.b16 %v3516
  %v3843 = vunpack.c.l.b16 %v3517
  %v3844 = vunpack.c.h.b16 %v3517
  %v3845 = vunpack.c.l.b16 %v3518
  %v3846 = vunpack.c.l.b16 %v3519
  %v3847 = vunpack.c.h.b16 %v3519
  %v3848 = vunpack.c.l.b16 %v3520
  %v3849 = vunpack.c.h.b16 %v3520
  %v3850 = vunpack.c.l.b16 %v3521
  %v3851 = vunpack.c.h.b16 %v3521
  %v3852 = vunpack.c.l.b16 %v3522
  %v3853 = vunpack.c.l.b16 %v3523
  %v3854 = vunpack.c.h.b16 %v3523
  %v3855 = vunpack.c.l.b16 %v3524
  %v3856 = vunpack.c.h.b16 %v3524
  %v3857 = vunpack.c.l.b16 %v3525
  %v3858 = vunpack.c.h.b16 %v3525
  %v3859 = vunpack.c.l.b16 %v3526
  %v3860 = vunpack.c.l.b16 %v3527
  %v3861 = vunpack.c.h.b16 %v3527
  %v3862 = vunpack.c.l.b16 %v3528
  %v3863 = vunpack.c.h.b16 %v3528
  %v3864 = vunpack.c.l.b16 %v3529
  %v3865 = vunpack.c.h.b16 %v3529
  %v3866 = vunpack.c.l.b16 %v3530
  %v3867 = vunpack.c.l.b16 %v3531
  %v3868 = vunpack.c.h.b16 %v3531
  %v3869 = vunpack.c.l.b16 %v3532
  %v3870 = vunpack.c.h.b16 %v3532
  %v3871 = vunpack.c.l.b16 %v3533
  %v3872 = vunpack.c.h.b16 %v3533
  %v3873 = vunpack.c.l.b16 %v3534
  %v3874 = vunpack.c.l.b16 %v3535
  %v3875 = vunpack.c.h.b16 %v3535
  %v3876 = vunpack.c.l.b16 %v3536
  %v3877 = vunpack.c.h.b16 %v3536
  %v3878 = vunpack.c.l.b16 %v3537
  %v3879 = vunpack.c.h.b16 %v3537
  %v3880 = vunpack.c.l.b16 %v3538
  %v3881 = vunpack.c.l.b16 %v3539
  %v3882 = vunpack.c.h.b16 %v3539
  %v3883 = vunpack.c.l.b16 %v3540
  %v3884 = vunpack.c.h.b16 %v3540
  %v3885 = vunpack.c.l.b16 %v3541
  %v3886 = vunpack.c.h.b16 %v3541
  %v3887 = vunpack.c.l.b16 %v3542
  %v3888 = vunpack.c.l.b16 %v3543
  %v3889 = vunpack.c.h.b16 %v3543
  %v3890 = vunpack.c.l.b16 %v3544
  %v3891 = vunpack.c.h.b16 %v3544
  %v3892 = vunpack.c.l.b16 %v3545
  %v3893 = vunpack.c.h.b16 %v3545
  %v3894 = vunpack.c.l.b16 %v3546
  %v3895 = vunpack.c.l.b16 %v3547
  %v3896 = vunpack.c.h.b16 %v3547
  %v3897 = vunpack.c.l.b16 %v3548
  %v3898 = vunpack.c.h.b16 %v3548
  %v3899 = vunpack.c.l.b16 %v3549
  %v3900 = vunpack.c.h.b16 %v3549
  %v3901 = vunpack.c.l.b16 %v3550
  %v3902 = vunpack.c.l.b16 %v3551
  %v3903 = vunpack.c.h.b16 %v3551
  %v3904 = vunpack.c.l.b16 %v3552
  %v3905 = vunpack.c.h.b16 %v3552
  %v3906 = vunpack.c.l.b16 %v3553
  %v3907 = vunpack.c.h.b16 %v3553
  %v3908 = vunpack.c.l.b16 %v3554
  %v3909 = vunpack.c.l.b16 %v3555
  %v3910 = vunpack.c.h.b16 %v3555
  %v3911 = vunpack.c.l.b16 %v3556
  %v3912 = vunpack.c.h.b16 %v3556
  %v3913 = vunpack.c.l.b16 %v3557
  %v3914 = vunpack.c.h.b16 %v3557
  %v3915 = vunpack.c.l.b16 %v3558
  %v3916 = vunpack.c.l.b16 %v3559
  %v3917 = vunpack.c.h.b16 %v3559
  %v3918 = vunpack.c.l.b16 %v3560
  %v3919 = vunpack.c.h.b16 %v3560
  %v3920 = vunpack.c.l.b16 %v3561
  %v3921 = vunpack.c.h.b16 %v3561
  %v3922 = vunpack.c.l.b16 %v3562
  %v3923 = vunpack.c.l.b16 %v3563
  %v3924 = vunpack.c.h.b16 %v3563
  %v3925 = vunpack.c.l.b16 %v3564
  %v3926 = vunpack.c.h.b16 %v3564
  %v3927 = vunpack.c.l.b16 %v3565
  %v3928 = vunpack.c.h.b16 %v3565
  %v3929 = vunpack.c.l.b16 %v3566
  %v3930 = vunpack.c.l.b16 %v3567
  %v3931 = vunpack.c.h.b16 %v3567
  %v3932 = vunpack.c.l.b16 %v3568
  %v3933 = vunpack.c.h.b16 %v3568
  %v3934 = vunpack.c.l.b16 %v3569
  %v3935 = vunpack.c.h.b16 %v3569
  %v3936 = vunpack.c.l.b16 %v3570
  %v3937 = vunpack.c.l.b16 %v3571
  %v3938 = vunpack.c.h.b16 %v3571
  %v3939 = vunpack.c.l.b16 %v3572
  %v3940 = vunpack.c.h.b16 %v3572
  %v3941 = vunpack.c.l.b16 %v3573
  %v3942 = vunpack.c.h.b16 %v3573
  %v3943 = vunpack.c.l.b16 %v3574
  %v3944 = vunpack.c.l.b16 %v3575
  %v3945 = vunpack.c.h.b16 %v3575
  %v3946 = vunpack.c.l.b16 %v3576
  %v3947 = vunpack.c.h.b16 %v3576
  %v3948 = vunpack.c.l.b16 %v3577
  %v3949 = vunpack.c.h.b16 %v3577
  %v3950 = vunpack.c.l.b16 %v3578
  %v3951 = vunpack.c.l.b16 %v3579
  %v3952 = vunpack.c.h.b16 %v3579
  %v3953 = vunpack.c.l.b16 %v3580
  %v3954 = vunpack.c.h.b16 %v3580
  %v3955 = vunpack.c.l.b16 %v3581
  %v3956 = vunpack.c.h.b16 %v3581
  %v3957 = vunpack.c.l.b16 %v3582
  %v3958 = vunpack.c.l.b16 %v3583
  %v3959 = vunpack.c.h.b16 %v3583
  %v3960 = vunpack.c.l.b16 %v3584
  %v3961 = vunpack.c.h.b16 %v3584
  %v3962 = vunpack.c.l.b16 %v3585
  %v3963 = vunpack.c.h.b16 %v3585
  %v3964 = vunpack.c.l.b16 %v3586
  %v3965 = vunpack.c.l.b16 %v3587
  %v3966 = vunpack.c.h.b16 %v3587
  %v3967 = vunpack.c.l.b16 %v3588
  %v3968 = vunpack.c.h.b16 %v3588
  %v3969 = vunpack.c.l.b16 %v3589
  %v3970 = vunpack.c.h.b16 %v3589
  %v3971 = vunpack.c.l.b16 %v3590
  %v3972 = vunpack.c.l.b16 %v3591
  %v3973 = vunpack.c.h.b16 %v3591
  %v3974 = vunpack.c.l.b16 %v3592
  %v3975 = vunpack.c.h.b16 %v3592
  %v3976 = vunpack.c.l.b16 %v3593
  %v3977 = vunpack.c.h.b16 %v3593
  %v3978 = vunpack.c.l.b16 %v3594
  %v3979 = vunpack.c.l.b16 %v3595
  %v3980 = vunpack.c.h.b16 %v3595
  %v3981 = vunpack.c.l.b16 %v3596
  %v3982 = vunpack.c.h.b16 %v3596
  %v3983 = vunpack.c.l.b16 %v3597
  %v3984 = vunpack.c.h.b16 %v3597
  %v3985 = vunpack.c.l.b16 %v3598
  %v3986 = vunpack.c.l.b16 %v3599
  %v3987 = vunpack.c.h.b16 %v3599
  %v3988 = vunpack.c.l.b16 %v3600
  %v3989 = vunpack.c.h.b16 %v3600
  %v3990 = vunpack.c.l.b16 %v3601
  %v3991 = vunpack.c.h.b16 %v3601
  %v3992 = vunpack.c.l.b16 %v3602
  %v3993 = vunpack.c.l.b16 %v3603
  %v3994 = vunpack.c.h.b16 %v3603
  %v3995 = vunpack.c.l.b16 %v3604
  %v3996 = vunpack.c.h.b16 %v3604
  %v3997 = vunpack.c.l.b16 %v3605
  %v3998 = vunpack.c.h.b16 %v3605
  %v3999 = vunpack.c.l.b16 %v3606
  %v4000 = vunpack.c.l.b16 %v3607
  %v4001 = vunpack.c.h.b16 %v3607
  %v4002 = vunpack.c.l.b16 %v3608
  %v4003 = vunpack.c.h.b16 %v3608
  %v4004 = vunpack.c.l.b16 %v3609
  %v4005 = vunpack.c.h.b16 %v3609
  %v4006 = vunpack.c.l.b16 %v3610
  %v4007 = vpack.c.b16 %v3762, %v3755
  %v4008 = vpack.c.b16 %v3763, %v3756
  %v4009 = vpack.c.b16 %v3764, %v3757
  %v4010 = vpack.c.b16 %v3765, %v3758
  %v4011 = vpack.c.b16 %v3766, %v3759
  %v4012 = vpack.c.b16 %v3767, %v3760
  %v4013 = vpack.c.b16 %v3768, %v3761
  %v4014 = vpack.c.b16 %v3776, %v3769
  %v4015 = vpack.c.b16 %v3777, %v3770
  %v4016 = vpack.c.b16 %v3778, %v3771
  %v4017 = vpack.c.b16 %v3779, %v3772
  %v4018 = vpack.c.b16 %v3780, %v3773
  %v4019 = vpack.c.b16 %v3781, %v3774
  %v4020 = vpack.c.b16 %v3782, %v3775
  %v4021 = vpack.c.b16 %v3790, %v3783
  %v4022 = vpack.c.b16 %v3791, %v3784
  %v4023 = vpack.c.b16 %v3792, %v3785
  %v4024 = vpack.c.b16 %v3793, %v3786
  %v4025 = vpack.c.b16 %v3794, %v3787
  %v4026 = vpack.c.b16 %v3795, %v3788
  %v4027 = vpack.c.b16 %v3796, %v3789
  %v4028 = vpack.c.b16 %v3804, %v3797
  %v4029 = vpack.c.b16 %v3805, %v3798
  %v4030 = vpack.c.b16 %v3806, %v3799
  %v4031 = vpack.c.b16 %v3807, %v3800
  %v4032 = vpack.c.b16 %v3808, %v3801
  %v4033 = vpack.c.b16 %v3809, %v3802
  %v4034 = vpack.c.b16 %v3810, %v3803
  %v4035 = vpack.c.b16 %v3818, %v3811
  %v4036 = vpack.c.b16 %v3819, %v3812
  %v4037 = vpack.c.b16 %v3820, %v3813
  %v4038 = vpack.c.b16 %v3821, %v3814
  %v4039 = vpack.c.b16 %v3822, %v3815
  %v4040 = vpack.c.b16 %v3823, %v3816
  %v4041 = vpack.c.b16 %v3824, %v3817
  %v4042 = vpack.c.b16 %v3832, %v3825
  %v4043 = vpack.c.b16 %v3833, %v3826
  %v4044 = vpack.c.b16 %v3834, %v3827
  %v4045 = vpack.c.b16 %v3835, %v3828
  %v4046 = vpack.c.b16 %v3836, %v3829
  %v4047 = vpack.c.b16 %v3837, %v3830
  %v4048 = vpack.c.b16 %v3838, %v3831
  %v4049 = vpack.c.b16 %v3846, %v3839
  %v4050 = vpack.c.b16 %v3847, %v3840
  %v4051 = vpack.c.b16 %v3848, %v3841
  %v4052 = vpack.c.b16 %v3849, %v3842
  %v4053 = vpack.c.b16 %v3850, %v3843
  %v4054 = vpack.c.b16 %v3851, %v3844
  %v4055 = vpack.c.b16 %v3852, %v3845
  %v4056 = vpack.c.b16 %v3860, %v3853
  %v4057 = vpack.c.b16 %v3861, %v3854
  %v4058 = vpack.c.b16 %v3862, %v3855
  %v4059 = vpack.c.b16 %v3863, %v3856
  %v4060 = vpack.c.b16 %v3864, %v3857
  %v4061 = vpack.c.b16 %v3865, %v3858
  %v4062 = vpack.c.b16 %v3866, %v3859
  %v4063 = vpack.c.b16 %v3874, %v3867
  %v4064 = vpack.c.b16 %v3875, %v3868
  %v4065 = vpack.c.b16 %v3876, %v3869
  %v4066 = vpack.c.b16 %v3877, %v3870
  %v4067 = vpack.c.b16 %v3878, %v3871
  %v4068 = vpack.c.b16 %v3879, %v3872
  %v4069 = vpack.c.b16 %v3880, %v3873
  %v4070 = vpack.c.b16 %v3888, %v3881
  %v4071 = vpack.c.b16 %v3889, %v3882
  %v4072 = vpack.c.b16 %v3890, %v3883
  %v4073 = vpack.c.b16 %v3891, %v3884
  %v4074 = vpack.c.b16 %v3892, %v3885
  %v4075 = vpack.c.b16 %v3893, %v3886
  %v4076 = vpack.c.b16 %v3894, %v3887
  %v4077 = vpack.c.b16 %v3902, %v3895
  %v4078 = vpack.c.b16 %v3903, %v3896
  %v4079 = vpack.c.b16 %v3904, %v3897
  %v4080 = vpack.c.b16 %v3905, %v3898
  %v4081 = vpack.c.b16 %v3906, %v3899
  %v4082 = vpack.c.b16 %v3907, %v3900
  %v4083 = vpack.c.b16 %v3908, %v3901
  %v4084 = vpack.c.b16 %v3916, %v3909
  %v4085 = vpack.c.b16 %v3917, %v3910
  %v4086 = vpack.c.b16 %v3918, %v3911
  %v4087 = vpack.c.b16 %v3919, %v3912
  %v4088 = vpack.c.b16 %v3920, %v3913
  %v4089 = vpack.c.b16 %v3921, %v3914
  %v4090 = vpack.c.b16 %v3922, %v3915
  %v4091 = vpack.c.b16 %v3930, %v3923
  %v4092 = vpack.c.b16 %v3931, %v3924
  %v4093 = vpack.c.b16 %v3932, %v3925
  %v4094 = vpack.c.b16 %v3933, %v3926
  %v4095 = vpack.c.b16 %v3934, %v3927
  %v4096 = vpack.c.b16 %v3935, %v3928
  %v4097 = vpack.c.b16 %v3936, %v3929
  %v4098 = vpack.c.b16 %v3944, %v3937
  %v4099 = vpack.c.b16 %v3945, %v3938
  %v4100 = vpack.c.b16 %v3946, %v3939
  %v4101 = vpack.c.b16 %v3947, %v3940
  %v4102 = vpack.c.b16 %v3948, %v3941
  %v4103 = vpack.c.b16 %v3949, %v3942
  %v4104 = vpack.c.b16 %v3950, %v3943
  %v4105 = vpack.c.b16 %v3958, %v3951
  %v4106 = vpack.c.b16 %v3959, %v3952
  %v4107 = vpack.c.b16 %v3960, %v3953
  %v4108 = vpack.c.b16 %v3961, %v3954
  %v4109 = vpack.c.b16 %v3962, %v3955
  %v4110 = vpack.c.b16 %v3963, %v3956
  %v4111 = vpack.c.b16 %v3964, %v3957
  %v4112 = vpack.c.b16 %v3972, %v3965
  %v4113 = vpack.c.b16 %v3973, %v3966
  %v4114 = vpack.c.b16 %v3974, %v3967
  %v4115 = vpack.c.b16 %v3975, %v3968
  %v4116 = vpack.c.b16 %v3976, %v3969
  %v4117 = vpack.c.b16 %v3977, %v3970
  %v4118 = vpack.c.b16 %v3978, %v3971
  %v4119 = vpack.c.b16 %v3986, %v3979
  %v4120 = vpack.c.b16 %v3987, %v3980
  %v4121 = vpack.c.b16 %v3988, %v3981
  %v4122 = vpack.c.b16 %v3989, %v3982
  %v4123 = vpack.c.b16 %v3990, %v3983
  %v4124 = vpack.c.b16 %v3991, %v3984
  %v4125 = vpack.c.b16 %v3992, %v3985
  %v4126 = vpack.c.b16 %v4000, %v3993
  %v4127 = vpack.c.b16 %v4001, %v3994
  %v4128 = vpack.c.b16 %v4002, %v3995
  %v4129 = vpack.c.b16 %v4003, %v3996
  %v4130 = vpack.c.b16 %v4004, %v3997
  %v4131 = vpack.c.b16 %v4005, %v3998
  %v4132 = vpack.c.b16 %v4006, %v3999
  %v4242 = vsel %vm1198, %v4013, 0
  %v4245 = vsel %vm1198, %v4020, 0
  %v4248 = vsel %vm1198, %v4027, 0
  %v4251 = vsel %vm1198, %v4034, 0
  %v4254 = vsel %vm1198, %v4041, 0
  %v4257 = vsel %vm1198, %v4048, 0
  %v4260 = vsel %vm1198, %v4055, 0
  %v4263 = vsel %vm1198, %v4062, 0
  %v4266 = vsel %vm1198, %v4069, 0
  %v4269 = vsel %vm1198, %v4076, 0
  %v4272 = vsel %vm1198, %v4083, 0
  %v4275 = vsel %vm1198, %v4090, 0
  %v4278 = vsel %vm1198, %v4097, 0
  %v4281 = vsel %vm1198, %v4104, 0
  %v4284 = vsel %vm1198, %v4111, 0
  %v4287 = vsel %vm1198, %v4118, 0
  %v4290 = vsel %vm1198, %v4125, 0
  %v4293 = vsel %vm1198, %v4132, 0
  %4295 = vmatpush.bf16.msra.mxu0 %v1105
  %4296 = vmatpush.bf16.msra.mxu0 %v1104
  %4297 = vmatpush.bf16.msra.mxu0 %v1103
  %4298 = vmatpush.bf16.msra.mxu0 %v1102
  %4299 = vmatpush.bf16.msra.mxu0 %v1101
  %4300 = vmatpush.bf16.msra.mxu0 %v1100
  %4301 = vmatpush.bf16.msra.mxu0 %v1099
  %4302 = vmatpush.bf16.msra.mxu0 %v1098
  %4303 = vmatmul.bf16.gmra.mxu0 %v4007
  %v4304 = vpop.f32.mrf.mxu0
  %v4305 = vadd.f32 0.0, %v4304
  %v4306 = vpop.f32.mrf.mxu0
  %v4307 = vadd.f32 0.0, %v4306
  %4308 = vmatmul.bf16.gmra.mxu0 %v4014
  %v4309 = vpop.f32.mrf.mxu0
  %v4310 = vadd.f32 0.0, %v4309
  %v4311 = vpop.f32.mrf.mxu0
  %v4312 = vadd.f32 0.0, %v4311
  %4313 = vmatmul.bf16.gmra.mxu0 %v4021
  %v4314 = vpop.f32.mrf.mxu0
  %v4315 = vadd.f32 0.0, %v4314
  %v4316 = vpop.f32.mrf.mxu0
  %v4317 = vadd.f32 0.0, %v4316
  %4318 = vmatmul.bf16.gmra.mxu0 %v4028
  %v4319 = vpop.f32.mrf.mxu0
  %v4320 = vadd.f32 0.0, %v4319
  %v4321 = vpop.f32.mrf.mxu0
  %v4322 = vadd.f32 0.0, %v4321
  %4323 = vmatmul.bf16.gmra.mxu0 %v4035
  %v4324 = vpop.f32.mrf.mxu0
  %v4325 = vadd.f32 0.0, %v4324
  %v4326 = vpop.f32.mrf.mxu0
  %v4327 = vadd.f32 0.0, %v4326
  %4328 = vmatmul.bf16.gmra.mxu0 %v4042
  %v4329 = vpop.f32.mrf.mxu0
  %v4330 = vadd.f32 0.0, %v4329
  %v4331 = vpop.f32.mrf.mxu0
  %v4332 = vadd.f32 0.0, %v4331
  %4333 = vmatmul.bf16.gmra.mxu0 %v4049
  %v4334 = vpop.f32.mrf.mxu0
  %v4335 = vadd.f32 0.0, %v4334
  %v4336 = vpop.f32.mrf.mxu0
  %v4337 = vadd.f32 0.0, %v4336
  %4338 = vmatmul.bf16.gmra.mxu0 %v4056
  %v4339 = vpop.f32.mrf.mxu0
  %v4340 = vadd.f32 0.0, %v4339
  %v4341 = vpop.f32.mrf.mxu0
  %v4342 = vadd.f32 0.0, %v4341
  %4343 = vmatmul.bf16.gmra.mxu0 %v4063
  %v4344 = vpop.f32.mrf.mxu0
  %v4345 = vadd.f32 0.0, %v4344
  %v4346 = vpop.f32.mrf.mxu0
  %v4347 = vadd.f32 0.0, %v4346
  %4348 = vmatmul.bf16.gmra.mxu0 %v4070
  %v4349 = vpop.f32.mrf.mxu0
  %v4350 = vadd.f32 0.0, %v4349
  %v4351 = vpop.f32.mrf.mxu0
  %v4352 = vadd.f32 0.0, %v4351
  %4353 = vmatmul.bf16.gmra.mxu0 %v4077
  %v4354 = vpop.f32.mrf.mxu0
  %v4355 = vadd.f32 0.0, %v4354
  %v4356 = vpop.f32.mrf.mxu0
  %v4357 = vadd.f32 0.0, %v4356
  %4358 = vmatmul.bf16.gmra.mxu0 %v4084
  %v4359 = vpop.f32.mrf.mxu0
  %v4360 = vadd.f32 0.0, %v4359
  %v4361 = vpop.f32.mrf.mxu0
  %v4362 = vadd.f32 0.0, %v4361
  %4363 = vmatmul.bf16.gmra.mxu0 %v4091
  %v4364 = vpop.f32.mrf.mxu0
  %v4365 = vadd.f32 0.0, %v4364
  %v4366 = vpop.f32.mrf.mxu0
  %v4367 = vadd.f32 0.0, %v4366
  %4368 = vmatmul.bf16.gmra.mxu0 %v4098
  %v4369 = vpop.f32.mrf.mxu0
  %v4370 = vadd.f32 0.0, %v4369
  %v4371 = vpop.f32.mrf.mxu0
  %v4372 = vadd.f32 0.0, %v4371
  %4373 = vmatmul.bf16.gmra.mxu0 %v4105
  %v4374 = vpop.f32.mrf.mxu0
  %v4375 = vadd.f32 0.0, %v4374
  %v4376 = vpop.f32.mrf.mxu0
  %v4377 = vadd.f32 0.0, %v4376
  %4378 = vmatmul.bf16.gmra.mxu0 %v4112
  %v4379 = vpop.f32.mrf.mxu0
  %v4380 = vadd.f32 0.0, %v4379
  %v4381 = vpop.f32.mrf.mxu0
  %v4382 = vadd.f32 0.0, %v4381
  %4383 = vmatmul.bf16.gmra.mxu0 %v4119
  %v4384 = vpop.f32.mrf.mxu0
  %v4385 = vadd.f32 0.0, %v4384
  %v4386 = vpop.f32.mrf.mxu0
  %v4387 = vadd.f32 0.0, %v4386
  %4388 = vmatmul.bf16.gmra.mxu0 %v4126
  %v4389 = vpop.f32.mrf.mxu0
  %v4390 = vadd.f32 0.0, %v4389
  %v4391 = vpop.f32.mrf.mxu0
  %v4392 = vadd.f32 0.0, %v4391
  %4393 = vdwg.mxu0
  %4394 = vmatpush.bf16.msra.mxu0 %v1113
  %4395 = vmatpush.bf16.msra.mxu0 %v1112
  %4396 = vmatpush.bf16.msra.mxu0 %v1111
  %4397 = vmatpush.bf16.msra.mxu0 %v1110
  %4398 = vmatpush.bf16.msra.mxu0 %v1109
  %4399 = vmatpush.bf16.msra.mxu0 %v1108
  %4400 = vmatpush.bf16.msra.mxu0 %v1107
  %4401 = vmatpush.bf16.msra.mxu0 %v1106
  %4402 = vmatmul.bf16.gmra.mxu0 %v4008
  %v4403 = vpop.f32.mrf.mxu0
  %v4404 = vadd.f32 %v4305, %v4403
  %v4405 = vpop.f32.mrf.mxu0
  %v4406 = vadd.f32 %v4307, %v4405
  %4407 = vmatmul.bf16.gmra.mxu0 %v4015
  %v4408 = vpop.f32.mrf.mxu0
  %v4409 = vadd.f32 %v4310, %v4408
  %v4410 = vpop.f32.mrf.mxu0
  %v4411 = vadd.f32 %v4312, %v4410
  %4412 = vmatmul.bf16.gmra.mxu0 %v4022
  %v4413 = vpop.f32.mrf.mxu0
  %v4414 = vadd.f32 %v4315, %v4413
  %v4415 = vpop.f32.mrf.mxu0
  %v4416 = vadd.f32 %v4317, %v4415
  %4417 = vmatmul.bf16.gmra.mxu0 %v4029
  %v4418 = vpop.f32.mrf.mxu0
  %v4419 = vadd.f32 %v4320, %v4418
  %v4420 = vpop.f32.mrf.mxu0
  %v4421 = vadd.f32 %v4322, %v4420
  %4422 = vmatmul.bf16.gmra.mxu0 %v4036
  %v4423 = vpop.f32.mrf.mxu0
  %v4424 = vadd.f32 %v4325, %v4423
  %v4425 = vpop.f32.mrf.mxu0
  %v4426 = vadd.f32 %v4327, %v4425
  %4427 = vmatmul.bf16.gmra.mxu0 %v4043
  %v4428 = vpop.f32.mrf.mxu0
  %v4429 = vadd.f32 %v4330, %v4428
  %v4430 = vpop.f32.mrf.mxu0
  %v4431 = vadd.f32 %v4332, %v4430
  %4432 = vmatmul.bf16.gmra.mxu0 %v4050
  %v4433 = vpop.f32.mrf.mxu0
  %v4434 = vadd.f32 %v4335, %v4433
  %v4435 = vpop.f32.mrf.mxu0
  %v4436 = vadd.f32 %v4337, %v4435
  %4437 = vmatmul.bf16.gmra.mxu0 %v4057
  %v4438 = vpop.f32.mrf.mxu0
  %v4439 = vadd.f32 %v4340, %v4438
  %v4440 = vpop.f32.mrf.mxu0
  %v4441 = vadd.f32 %v4342, %v4440
  %4442 = vmatmul.bf16.gmra.mxu0 %v4064
  %v4443 = vpop.f32.mrf.mxu0
  %v4444 = vadd.f32 %v4345, %v4443
  %v4445 = vpop.f32.mrf.mxu0
  %v4446 = vadd.f32 %v4347, %v4445
  %4447 = vmatmul.bf16.gmra.mxu0 %v4071
  %v4448 = vpop.f32.mrf.mxu0
  %v4449 = vadd.f32 %v4350, %v4448
  %v4450 = vpop.f32.mrf.mxu0
  %v4451 = vadd.f32 %v4352, %v4450
  %4452 = vmatmul.bf16.gmra.mxu0 %v4078
  %v4453 = vpop.f32.mrf.mxu0
  %v4454 = vadd.f32 %v4355, %v4453
  %v4455 = vpop.f32.mrf.mxu0
  %v4456 = vadd.f32 %v4357, %v4455
  %4457 = vmatmul.bf16.gmra.mxu0 %v4085
  %v4458 = vpop.f32.mrf.mxu0
  %v4459 = vadd.f32 %v4360, %v4458
  %v4460 = vpop.f32.mrf.mxu0
  %v4461 = vadd.f32 %v4362, %v4460
  %4462 = vmatmul.bf16.gmra.mxu0 %v4092
  %v4463 = vpop.f32.mrf.mxu0
  %v4464 = vadd.f32 %v4365, %v4463
  %v4465 = vpop.f32.mrf.mxu0
  %v4466 = vadd.f32 %v4367, %v4465
  %4467 = vmatmul.bf16.gmra.mxu0 %v4099
  %v4468 = vpop.f32.mrf.mxu0
  %v4469 = vadd.f32 %v4370, %v4468
  %v4470 = vpop.f32.mrf.mxu0
  %v4471 = vadd.f32 %v4372, %v4470
  %4472 = vmatmul.bf16.gmra.mxu0 %v4106
  %v4473 = vpop.f32.mrf.mxu0
  %v4474 = vadd.f32 %v4375, %v4473
  %v4475 = vpop.f32.mrf.mxu0
  %v4476 = vadd.f32 %v4377, %v4475
  %4477 = vmatmul.bf16.gmra.mxu0 %v4113
  %v4478 = vpop.f32.mrf.mxu0
  %v4479 = vadd.f32 %v4380, %v4478
  %v4480 = vpop.f32.mrf.mxu0
  %v4481 = vadd.f32 %v4382, %v4480
  %4482 = vmatmul.bf16.gmra.mxu0 %v4120
  %v4483 = vpop.f32.mrf.mxu0
  %v4484 = vadd.f32 %v4385, %v4483
  %v4485 = vpop.f32.mrf.mxu0
  %v4486 = vadd.f32 %v4387, %v4485
  %4487 = vmatmul.bf16.gmra.mxu0 %v4127
  %v4488 = vpop.f32.mrf.mxu0
  %v4489 = vadd.f32 %v4390, %v4488
  %v4490 = vpop.f32.mrf.mxu0
  %v4491 = vadd.f32 %v4392, %v4490
  %4492 = vdwg.mxu0
  %4493 = vmatpush.bf16.msra.mxu0 %v1121
  %4494 = vmatpush.bf16.msra.mxu0 %v1120
  %4495 = vmatpush.bf16.msra.mxu0 %v1119
  %4496 = vmatpush.bf16.msra.mxu0 %v1118
  %4497 = vmatpush.bf16.msra.mxu0 %v1117
  %4498 = vmatpush.bf16.msra.mxu0 %v1116
  %4499 = vmatpush.bf16.msra.mxu0 %v1115
  %4500 = vmatpush.bf16.msra.mxu0 %v1114
  %4501 = vmatmul.bf16.gmra.mxu0 %v4009
  %v4502 = vpop.f32.mrf.mxu0
  %v4503 = vadd.f32 %v4404, %v4502
  %v4504 = vpop.f32.mrf.mxu0
  %v4505 = vadd.f32 %v4406, %v4504
  %4506 = vmatmul.bf16.gmra.mxu0 %v4016
  %v4507 = vpop.f32.mrf.mxu0
  %v4508 = vadd.f32 %v4409, %v4507
  %v4509 = vpop.f32.mrf.mxu0
  %v4510 = vadd.f32 %v4411, %v4509
  %4511 = vmatmul.bf16.gmra.mxu0 %v4023
  %v4512 = vpop.f32.mrf.mxu0
  %v4513 = vadd.f32 %v4414, %v4512
  %v4514 = vpop.f32.mrf.mxu0
  %v4515 = vadd.f32 %v4416, %v4514
  %4516 = vmatmul.bf16.gmra.mxu0 %v4030
  %v4517 = vpop.f32.mrf.mxu0
  %v4518 = vadd.f32 %v4419, %v4517
  %v4519 = vpop.f32.mrf.mxu0
  %v4520 = vadd.f32 %v4421, %v4519
  %4521 = vmatmul.bf16.gmra.mxu0 %v4037
  %v4522 = vpop.f32.mrf.mxu0
  %v4523 = vadd.f32 %v4424, %v4522
  %v4524 = vpop.f32.mrf.mxu0
  %v4525 = vadd.f32 %v4426, %v4524
  %4526 = vmatmul.bf16.gmra.mxu0 %v4044
  %v4527 = vpop.f32.mrf.mxu0
  %v4528 = vadd.f32 %v4429, %v4527
  %v4529 = vpop.f32.mrf.mxu0
  %v4530 = vadd.f32 %v4431, %v4529
  %4531 = vmatmul.bf16.gmra.mxu0 %v4051
  %v4532 = vpop.f32.mrf.mxu0
  %v4533 = vadd.f32 %v4434, %v4532
  %v4534 = vpop.f32.mrf.mxu0
  %v4535 = vadd.f32 %v4436, %v4534
  %4536 = vmatmul.bf16.gmra.mxu0 %v4058
  %v4537 = vpop.f32.mrf.mxu0
  %v4538 = vadd.f32 %v4439, %v4537
  %v4539 = vpop.f32.mrf.mxu0
  %v4540 = vadd.f32 %v4441, %v4539
  %4541 = vmatmul.bf16.gmra.mxu0 %v4065
  %v4542 = vpop.f32.mrf.mxu0
  %v4543 = vadd.f32 %v4444, %v4542
  %v4544 = vpop.f32.mrf.mxu0
  %v4545 = vadd.f32 %v4446, %v4544
  %4546 = vmatmul.bf16.gmra.mxu0 %v4072
  %v4547 = vpop.f32.mrf.mxu0
  %v4548 = vadd.f32 %v4449, %v4547
  %v4549 = vpop.f32.mrf.mxu0
  %v4550 = vadd.f32 %v4451, %v4549
  %4551 = vmatmul.bf16.gmra.mxu0 %v4079
  %v4552 = vpop.f32.mrf.mxu0
  %v4553 = vadd.f32 %v4454, %v4552
  %v4554 = vpop.f32.mrf.mxu0
  %v4555 = vadd.f32 %v4456, %v4554
  %4556 = vmatmul.bf16.gmra.mxu0 %v4086
  %v4557 = vpop.f32.mrf.mxu0
  %v4558 = vadd.f32 %v4459, %v4557
  %v4559 = vpop.f32.mrf.mxu0
  %v4560 = vadd.f32 %v4461, %v4559
  %4561 = vmatmul.bf16.gmra.mxu0 %v4093
  %v4562 = vpop.f32.mrf.mxu0
  %v4563 = vadd.f32 %v4464, %v4562
  %v4564 = vpop.f32.mrf.mxu0
  %v4565 = vadd.f32 %v4466, %v4564
  %4566 = vmatmul.bf16.gmra.mxu0 %v4100
  %v4567 = vpop.f32.mrf.mxu0
  %v4568 = vadd.f32 %v4469, %v4567
  %v4569 = vpop.f32.mrf.mxu0
  %v4570 = vadd.f32 %v4471, %v4569
  %4571 = vmatmul.bf16.gmra.mxu0 %v4107
  %v4572 = vpop.f32.mrf.mxu0
  %v4573 = vadd.f32 %v4474, %v4572
  %v4574 = vpop.f32.mrf.mxu0
  %v4575 = vadd.f32 %v4476, %v4574
  %4576 = vmatmul.bf16.gmra.mxu0 %v4114
  %v4577 = vpop.f32.mrf.mxu0
  %v4578 = vadd.f32 %v4479, %v4577
  %v4579 = vpop.f32.mrf.mxu0
  %v4580 = vadd.f32 %v4481, %v4579
  %4581 = vmatmul.bf16.gmra.mxu0 %v4121
  %v4582 = vpop.f32.mrf.mxu0
  %v4583 = vadd.f32 %v4484, %v4582
  %v4584 = vpop.f32.mrf.mxu0
  %v4585 = vadd.f32 %v4486, %v4584
  %4586 = vmatmul.bf16.gmra.mxu0 %v4128
  %v4587 = vpop.f32.mrf.mxu0
  %v4588 = vadd.f32 %v4489, %v4587
  %v4589 = vpop.f32.mrf.mxu0
  %v4590 = vadd.f32 %v4491, %v4589
  %4591 = vdwg.mxu0
  %4592 = vmatpush.bf16.msra.mxu0 %v1129
  %4593 = vmatpush.bf16.msra.mxu0 %v1128
  %4594 = vmatpush.bf16.msra.mxu0 %v1127
  %4595 = vmatpush.bf16.msra.mxu0 %v1126
  %4596 = vmatpush.bf16.msra.mxu0 %v1125
  %4597 = vmatpush.bf16.msra.mxu0 %v1124
  %4598 = vmatpush.bf16.msra.mxu0 %v1123
  %4599 = vmatpush.bf16.msra.mxu0 %v1122
  %4600 = vmatmul.bf16.gmra.mxu0 %v4010
  %v4601 = vpop.f32.mrf.mxu0
  %v4602 = vadd.f32 %v4503, %v4601
  %v4603 = vpop.f32.mrf.mxu0
  %v4604 = vadd.f32 %v4505, %v4603
  %4605 = vmatmul.bf16.gmra.mxu0 %v4017
  %v4606 = vpop.f32.mrf.mxu0
  %v4607 = vadd.f32 %v4508, %v4606
  %v4608 = vpop.f32.mrf.mxu0
  %v4609 = vadd.f32 %v4510, %v4608
  %4610 = vmatmul.bf16.gmra.mxu0 %v4024
  %v4611 = vpop.f32.mrf.mxu0
  %v4612 = vadd.f32 %v4513, %v4611
  %v4613 = vpop.f32.mrf.mxu0
  %v4614 = vadd.f32 %v4515, %v4613
  %4615 = vmatmul.bf16.gmra.mxu0 %v4031
  %v4616 = vpop.f32.mrf.mxu0
  %v4617 = vadd.f32 %v4518, %v4616
  %v4618 = vpop.f32.mrf.mxu0
  %v4619 = vadd.f32 %v4520, %v4618
  %4620 = vmatmul.bf16.gmra.mxu0 %v4038
  %v4621 = vpop.f32.mrf.mxu0
  %v4622 = vadd.f32 %v4523, %v4621
  %v4623 = vpop.f32.mrf.mxu0
  %v4624 = vadd.f32 %v4525, %v4623
  %4625 = vmatmul.bf16.gmra.mxu0 %v4045
  %v4626 = vpop.f32.mrf.mxu0
  %v4627 = vadd.f32 %v4528, %v4626
  %v4628 = vpop.f32.mrf.mxu0
  %v4629 = vadd.f32 %v4530, %v4628
  %4630 = vmatmul.bf16.gmra.mxu0 %v4052
  %v4631 = vpop.f32.mrf.mxu0
  %v4632 = vadd.f32 %v4533, %v4631
  %v4633 = vpop.f32.mrf.mxu0
  %v4634 = vadd.f32 %v4535, %v4633
  %4635 = vmatmul.bf16.gmra.mxu0 %v4059
  %v4636 = vpop.f32.mrf.mxu0
  %v4637 = vadd.f32 %v4538, %v4636
  %v4638 = vpop.f32.mrf.mxu0
  %v4639 = vadd.f32 %v4540, %v4638
  %4640 = vmatmul.bf16.gmra.mxu0 %v4066
  %v4641 = vpop.f32.mrf.mxu0
  %v4642 = vadd.f32 %v4543, %v4641
  %v4643 = vpop.f32.mrf.mxu0
  %v4644 = vadd.f32 %v4545, %v4643
  %4645 = vmatmul.bf16.gmra.mxu0 %v4073
  %v4646 = vpop.f32.mrf.mxu0
  %v4647 = vadd.f32 %v4548, %v4646
  %v4648 = vpop.f32.mrf.mxu0
  %v4649 = vadd.f32 %v4550, %v4648
  %4650 = vmatmul.bf16.gmra.mxu0 %v4080
  %v4651 = vpop.f32.mrf.mxu0
  %v4652 = vadd.f32 %v4553, %v4651
  %v4653 = vpop.f32.mrf.mxu0
  %v4654 = vadd.f32 %v4555, %v4653
  %4655 = vmatmul.bf16.gmra.mxu0 %v4087
  %v4656 = vpop.f32.mrf.mxu0
  %v4657 = vadd.f32 %v4558, %v4656
  %v4658 = vpop.f32.mrf.mxu0
  %v4659 = vadd.f32 %v4560, %v4658
  %4660 = vmatmul.bf16.gmra.mxu0 %v4094
  %v4661 = vpop.f32.mrf.mxu0
  %v4662 = vadd.f32 %v4563, %v4661
  %v4663 = vpop.f32.mrf.mxu0
  %v4664 = vadd.f32 %v4565, %v4663
  %4665 = vmatmul.bf16.gmra.mxu0 %v4101
  %v4666 = vpop.f32.mrf.mxu0
  %v4667 = vadd.f32 %v4568, %v4666
  %v4668 = vpop.f32.mrf.mxu0
  %v4669 = vadd.f32 %v4570, %v4668
  %4670 = vmatmul.bf16.gmra.mxu0 %v4108
  %v4671 = vpop.f32.mrf.mxu0
  %v4672 = vadd.f32 %v4573, %v4671
  %v4673 = vpop.f32.mrf.mxu0
  %v4674 = vadd.f32 %v4575, %v4673
  %4675 = vmatmul.bf16.gmra.mxu0 %v4115
  %v4676 = vpop.f32.mrf.mxu0
  %v4677 = vadd.f32 %v4578, %v4676
  %v4678 = vpop.f32.mrf.mxu0
  %v4679 = vadd.f32 %v4580, %v4678
  %4680 = vmatmul.bf16.gmra.mxu0 %v4122
  %v4681 = vpop.f32.mrf.mxu0
  %v4682 = vadd.f32 %v4583, %v4681
  %v4683 = vpop.f32.mrf.mxu0
  %v4684 = vadd.f32 %v4585, %v4683
  %4685 = vmatmul.bf16.gmra.mxu0 %v4129
  %v4686 = vpop.f32.mrf.mxu0
  %v4687 = vadd.f32 %v4588, %v4686
  %v4688 = vpop.f32.mrf.mxu0
  %v4689 = vadd.f32 %v4590, %v4688
  %4690 = vdwg.mxu0
  %4691 = vmatpush.bf16.msra.mxu0 %v1137
  %4692 = vmatpush.bf16.msra.mxu0 %v1136
  %4693 = vmatpush.bf16.msra.mxu0 %v1135
  %4694 = vmatpush.bf16.msra.mxu0 %v1134
  %4695 = vmatpush.bf16.msra.mxu0 %v1133
  %4696 = vmatpush.bf16.msra.mxu0 %v1132
  %4697 = vmatpush.bf16.msra.mxu0 %v1131
  %4698 = vmatpush.bf16.msra.mxu0 %v1130
  %4699 = vmatmul.bf16.gmra.mxu0 %v4011
  %v4700 = vpop.f32.mrf.mxu0
  %v4701 = vadd.f32 %v4602, %v4700
  %v4702 = vpop.f32.mrf.mxu0
  %v4703 = vadd.f32 %v4604, %v4702
  %4704 = vmatmul.bf16.gmra.mxu0 %v4018
  %v4705 = vpop.f32.mrf.mxu0
  %v4706 = vadd.f32 %v4607, %v4705
  %v4707 = vpop.f32.mrf.mxu0
  %v4708 = vadd.f32 %v4609, %v4707
  %4709 = vmatmul.bf16.gmra.mxu0 %v4025
  %v4710 = vpop.f32.mrf.mxu0
  %v4711 = vadd.f32 %v4612, %v4710
  %v4712 = vpop.f32.mrf.mxu0
  %v4713 = vadd.f32 %v4614, %v4712
  %4714 = vmatmul.bf16.gmra.mxu0 %v4032
  %v4715 = vpop.f32.mrf.mxu0
  %v4716 = vadd.f32 %v4617, %v4715
  %v4717 = vpop.f32.mrf.mxu0
  %v4718 = vadd.f32 %v4619, %v4717
  %4719 = vmatmul.bf16.gmra.mxu0 %v4039
  %v4720 = vpop.f32.mrf.mxu0
  %v4721 = vadd.f32 %v4622, %v4720
  %v4722 = vpop.f32.mrf.mxu0
  %v4723 = vadd.f32 %v4624, %v4722
  %4724 = vmatmul.bf16.gmra.mxu0 %v4046
  %v4725 = vpop.f32.mrf.mxu0
  %v4726 = vadd.f32 %v4627, %v4725
  %v4727 = vpop.f32.mrf.mxu0
  %v4728 = vadd.f32 %v4629, %v4727
  %4729 = vmatmul.bf16.gmra.mxu0 %v4053
  %v4730 = vpop.f32.mrf.mxu0
  %v4731 = vadd.f32 %v4632, %v4730
  %v4732 = vpop.f32.mrf.mxu0
  %v4733 = vadd.f32 %v4634, %v4732
  %4734 = vmatmul.bf16.gmra.mxu0 %v4060
  %v4735 = vpop.f32.mrf.mxu0
  %v4736 = vadd.f32 %v4637, %v4735
  %v4737 = vpop.f32.mrf.mxu0
  %v4738 = vadd.f32 %v4639, %v4737
  %4739 = vmatmul.bf16.gmra.mxu0 %v4067
  %v4740 = vpop.f32.mrf.mxu0
  %v4741 = vadd.f32 %v4642, %v4740
  %v4742 = vpop.f32.mrf.mxu0
  %v4743 = vadd.f32 %v4644, %v4742
  %4744 = vmatmul.bf16.gmra.mxu0 %v4074
  %v4745 = vpop.f32.mrf.mxu0
  %v4746 = vadd.f32 %v4647, %v4745
  %v4747 = vpop.f32.mrf.mxu0
  %v4748 = vadd.f32 %v4649, %v4747
  %4749 = vmatmul.bf16.gmra.mxu0 %v4081
  %v4750 = vpop.f32.mrf.mxu0
  %v4751 = vadd.f32 %v4652, %v4750
  %v4752 = vpop.f32.mrf.mxu0
  %v4753 = vadd.f32 %v4654, %v4752
  %4754 = vmatmul.bf16.gmra.mxu0 %v4088
  %v4755 = vpop.f32.mrf.mxu0
  %v4756 = vadd.f32 %v4657, %v4755
  %v4757 = vpop.f32.mrf.mxu0
  %v4758 = vadd.f32 %v4659, %v4757
  %4759 = vmatmul.bf16.gmra.mxu0 %v4095
  %v4760 = vpop.f32.mrf.mxu0
  %v4761 = vadd.f32 %v4662, %v4760
  %v4762 = vpop.f32.mrf.mxu0
  %v4763 = vadd.f32 %v4664, %v4762
  %4764 = vmatmul.bf16.gmra.mxu0 %v4102
  %v4765 = vpop.f32.mrf.mxu0
  %v4766 = vadd.f32 %v4667, %v4765
  %v4767 = vpop.f32.mrf.mxu0
  %v4768 = vadd.f32 %v4669, %v4767
  %4769 = vmatmul.bf16.gmra.mxu0 %v4109
  %v4770 = vpop.f32.mrf.mxu0
  %v4771 = vadd.f32 %v4672, %v4770
  %v4772 = vpop.f32.mrf.mxu0
  %v4773 = vadd.f32 %v4674, %v4772
  %4774 = vmatmul.bf16.gmra.mxu0 %v4116
  %v4775 = vpop.f32.mrf.mxu0
  %v4776 = vadd.f32 %v4677, %v4775
  %v4777 = vpop.f32.mrf.mxu0
  %v4778 = vadd.f32 %v4679, %v4777
  %4779 = vmatmul.bf16.gmra.mxu0 %v4123
  %v4780 = vpop.f32.mrf.mxu0
  %v4781 = vadd.f32 %v4682, %v4780
  %v4782 = vpop.f32.mrf.mxu0
  %v4783 = vadd.f32 %v4684, %v4782
  %4784 = vmatmul.bf16.gmra.mxu0 %v4130
  %v4785 = vpop.f32.mrf.mxu0
  %v4786 = vadd.f32 %v4687, %v4785
  %v4787 = vpop.f32.mrf.mxu0
  %v4788 = vadd.f32 %v4689, %v4787
  %4789 = vdwg.mxu0
  %4790 = vmatpush.bf16.msra.mxu0 %v1145
  %4791 = vmatpush.bf16.msra.mxu0 %v1144
  %4792 = vmatpush.bf16.msra.mxu0 %v1143
  %4793 = vmatpush.bf16.msra.mxu0 %v1142
  %4794 = vmatpush.bf16.msra.mxu0 %v1141
  %4795 = vmatpush.bf16.msra.mxu0 %v1140
  %4796 = vmatpush.bf16.msra.mxu0 %v1139
  %4797 = vmatpush.bf16.msra.mxu0 %v1138
  %4798 = vmatmul.bf16.gmra.mxu0 %v4012
  %v4799 = vpop.f32.mrf.mxu0
  %v4800 = vadd.f32 %v4701, %v4799
  %v4801 = vpop.f32.mrf.mxu0
  %v4802 = vadd.f32 %v4703, %v4801
  %4803 = vmatmul.bf16.gmra.mxu0 %v4019
  %v4804 = vpop.f32.mrf.mxu0
  %v4805 = vadd.f32 %v4706, %v4804
  %v4806 = vpop.f32.mrf.mxu0
  %v4807 = vadd.f32 %v4708, %v4806
  %4808 = vmatmul.bf16.gmra.mxu0 %v4026
  %v4809 = vpop.f32.mrf.mxu0
  %v4810 = vadd.f32 %v4711, %v4809
  %v4811 = vpop.f32.mrf.mxu0
  %v4812 = vadd.f32 %v4713, %v4811
  %4813 = vmatmul.bf16.gmra.mxu0 %v4033
  %v4814 = vpop.f32.mrf.mxu0
  %v4815 = vadd.f32 %v4716, %v4814
  %v4816 = vpop.f32.mrf.mxu0
  %v4817 = vadd.f32 %v4718, %v4816
  %4818 = vmatmul.bf16.gmra.mxu0 %v4040
  %v4819 = vpop.f32.mrf.mxu0
  %v4820 = vadd.f32 %v4721, %v4819
  %v4821 = vpop.f32.mrf.mxu0
  %v4822 = vadd.f32 %v4723, %v4821
  %4823 = vmatmul.bf16.gmra.mxu0 %v4047
  %v4824 = vpop.f32.mrf.mxu0
  %v4825 = vadd.f32 %v4726, %v4824
  %v4826 = vpop.f32.mrf.mxu0
  %v4827 = vadd.f32 %v4728, %v4826
  %4828 = vmatmul.bf16.gmra.mxu0 %v4054
  %v4829 = vpop.f32.mrf.mxu0
  %v4830 = vadd.f32 %v4731, %v4829
  %v4831 = vpop.f32.mrf.mxu0
  %v4832 = vadd.f32 %v4733, %v4831
  %4833 = vmatmul.bf16.gmra.mxu0 %v4061
  %v4834 = vpop.f32.mrf.mxu0
  %v4835 = vadd.f32 %v4736, %v4834
  %v4836 = vpop.f32.mrf.mxu0
  %v4837 = vadd.f32 %v4738, %v4836
  %4838 = vmatmul.bf16.gmra.mxu0 %v4068
  %v4839 = vpop.f32.mrf.mxu0
  %v4840 = vadd.f32 %v4741, %v4839
  %v4841 = vpop.f32.mrf.mxu0
  %v4842 = vadd.f32 %v4743, %v4841
  %4843 = vmatmul.bf16.gmra.mxu0 %v4075
  %v4844 = vpop.f32.mrf.mxu0
  %v4845 = vadd.f32 %v4746, %v4844
  %v4846 = vpop.f32.mrf.mxu0
  %v4847 = vadd.f32 %v4748, %v4846
  %4848 = vmatmul.bf16.gmra.mxu0 %v4082
  %v4849 = vpop.f32.mrf.mxu0
  %v4850 = vadd.f32 %v4751, %v4849
  %v4851 = vpop.f32.mrf.mxu0
  %v4852 = vadd.f32 %v4753, %v4851
  %4853 = vmatmul.bf16.gmra.mxu0 %v4089
  %v4854 = vpop.f32.mrf.mxu0
  %v4855 = vadd.f32 %v4756, %v4854
  %v4856 = vpop.f32.mrf.mxu0
  %v4857 = vadd.f32 %v4758, %v4856
  %4858 = vmatmul.bf16.gmra.mxu0 %v4096
  %v4859 = vpop.f32.mrf.mxu0
  %v4860 = vadd.f32 %v4761, %v4859
  %v4861 = vpop.f32.mrf.mxu0
  %v4862 = vadd.f32 %v4763, %v4861
  %4863 = vmatmul.bf16.gmra.mxu0 %v4103
  %v4864 = vpop.f32.mrf.mxu0
  %v4865 = vadd.f32 %v4766, %v4864
  %v4866 = vpop.f32.mrf.mxu0
  %v4867 = vadd.f32 %v4768, %v4866
  %4868 = vmatmul.bf16.gmra.mxu0 %v4110
  %v4869 = vpop.f32.mrf.mxu0
  %v4870 = vadd.f32 %v4771, %v4869
  %v4871 = vpop.f32.mrf.mxu0
  %v4872 = vadd.f32 %v4773, %v4871
  %4873 = vmatmul.bf16.gmra.mxu0 %v4117
  %v4874 = vpop.f32.mrf.mxu0
  %v4875 = vadd.f32 %v4776, %v4874
  %v4876 = vpop.f32.mrf.mxu0
  %v4877 = vadd.f32 %v4778, %v4876
  %4878 = vmatmul.bf16.gmra.mxu0 %v4124
  %v4879 = vpop.f32.mrf.mxu0
  %v4880 = vadd.f32 %v4781, %v4879
  %v4881 = vpop.f32.mrf.mxu0
  %v4882 = vadd.f32 %v4783, %v4881
  %4883 = vmatmul.bf16.gmra.mxu0 %v4131
  %v4884 = vpop.f32.mrf.mxu0
  %v4885 = vadd.f32 %v4786, %v4884
  %v4886 = vpop.f32.mrf.mxu0
  %v4887 = vadd.f32 %v4788, %v4886
  %4888 = vdwg.mxu0
  %4889 = vmatpush.bf16.msra.mxu0 0
  %4890 = vmatpush.bf16.msra.mxu0 0
  %4891 = vmatpush.bf16.msra.mxu0 0
  %4892 = vmatpush.bf16.msra.mxu0 0
  %4893 = vmatpush.bf16.msra.mxu0 0
  %4894 = vmatpush.bf16.msra.mxu0 0
  %4895 = vmatpush.bf16.msra.mxu0 %v1147
  %4896 = vmatpush.bf16.msra.mxu0 %v1146
  %4897 = vmatmul.bf16.gmra.mxu0 %v4242
  %v4898 = vpop.f32.mrf.mxu0
  %v4899 = vadd.f32 %v4800, %v4898
  %v4900 = vpop.f32.mrf.mxu0
  %v4901 = vadd.f32 %v4802, %v4900
  %4902 = vmatmul.bf16.gmra.mxu0 %v4245
  %v4903 = vpop.f32.mrf.mxu0
  %v4904 = vadd.f32 %v4805, %v4903
  %v4905 = vpop.f32.mrf.mxu0
  %v4906 = vadd.f32 %v4807, %v4905
  %4907 = vmatmul.bf16.gmra.mxu0 %v4248
  %v4908 = vpop.f32.mrf.mxu0
  %v4909 = vadd.f32 %v4810, %v4908
  %v4910 = vpop.f32.mrf.mxu0
  %v4911 = vadd.f32 %v4812, %v4910
  %4912 = vmatmul.bf16.gmra.mxu0 %v4251
  %v4913 = vpop.f32.mrf.mxu0
  %v4914 = vadd.f32 %v4815, %v4913
  %v4915 = vpop.f32.mrf.mxu0
  %v4916 = vadd.f32 %v4817, %v4915
  %4917 = vmatmul.bf16.gmra.mxu0 %v4254
  %v4918 = vpop.f32.mrf.mxu0
  %v4919 = vadd.f32 %v4820, %v4918
  %v4920 = vpop.f32.mrf.mxu0
  %v4921 = vadd.f32 %v4822, %v4920
  %4922 = vmatmul.bf16.gmra.mxu0 %v4257
  %v4923 = vpop.f32.mrf.mxu0
  %v4924 = vadd.f32 %v4825, %v4923
  %v4925 = vpop.f32.mrf.mxu0
  %v4926 = vadd.f32 %v4827, %v4925
  %4927 = vmatmul.bf16.gmra.mxu0 %v4260
  %v4928 = vpop.f32.mrf.mxu0
  %v4929 = vadd.f32 %v4830, %v4928
  %v4930 = vpop.f32.mrf.mxu0
  %v4931 = vadd.f32 %v4832, %v4930
  %4932 = vmatmul.bf16.gmra.mxu0 %v4263
  %v4933 = vpop.f32.mrf.mxu0
  %v4934 = vadd.f32 %v4835, %v4933
  %v4935 = vpop.f32.mrf.mxu0
  %v4936 = vadd.f32 %v4837, %v4935
  %4937 = vmatmul.bf16.gmra.mxu0 %v4266
  %v4938 = vpop.f32.mrf.mxu0
  %v4939 = vadd.f32 %v4840, %v4938
  %v4940 = vpop.f32.mrf.mxu0
  %v4941 = vadd.f32 %v4842, %v4940
  %4942 = vmatmul.bf16.gmra.mxu0 %v4269
  %v4943 = vpop.f32.mrf.mxu0
  %v4944 = vadd.f32 %v4845, %v4943
  %v4945 = vpop.f32.mrf.mxu0
  %v4946 = vadd.f32 %v4847, %v4945
  %4947 = vmatmul.bf16.gmra.mxu0 %v4272
  %v4948 = vpop.f32.mrf.mxu0
  %v4949 = vadd.f32 %v4850, %v4948
  %v4950 = vpop.f32.mrf.mxu0
  %v4951 = vadd.f32 %v4852, %v4950
  %4952 = vmatmul.bf16.gmra.mxu0 %v4275
  %v4953 = vpop.f32.mrf.mxu0
  %v4954 = vadd.f32 %v4855, %v4953
  %v4955 = vpop.f32.mrf.mxu0
  %v4956 = vadd.f32 %v4857, %v4955
  %4957 = vmatmul.bf16.gmra.mxu0 %v4278
  %v4958 = vpop.f32.mrf.mxu0
  %v4959 = vadd.f32 %v4860, %v4958
  %v4960 = vpop.f32.mrf.mxu0
  %v4961 = vadd.f32 %v4862, %v4960
  %4962 = vmatmul.bf16.gmra.mxu0 %v4281
  %v4963 = vpop.f32.mrf.mxu0
  %v4964 = vadd.f32 %v4865, %v4963
  %v4965 = vpop.f32.mrf.mxu0
  %v4966 = vadd.f32 %v4867, %v4965
  %4967 = vmatmul.bf16.gmra.mxu0 %v4284
  %v4968 = vpop.f32.mrf.mxu0
  %v4969 = vadd.f32 %v4870, %v4968
  %v4970 = vpop.f32.mrf.mxu0
  %v4971 = vadd.f32 %v4872, %v4970
  %4972 = vmatmul.bf16.gmra.mxu0 %v4287
  %v4973 = vpop.f32.mrf.mxu0
  %v4974 = vadd.f32 %v4875, %v4973
  %v4975 = vpop.f32.mrf.mxu0
  %v4976 = vadd.f32 %v4877, %v4975
  %4977 = vmatmul.bf16.gmra.mxu0 %v4290
  %v4978 = vpop.f32.mrf.mxu0
  %v4979 = vadd.f32 %v4880, %v4978
  %v4980 = vpop.f32.mrf.mxu0
  %v4981 = vadd.f32 %v4882, %v4980
  %4982 = vmatmul.bf16.gmra.mxu0 %v4293
  %v4983 = vpop.f32.mrf.mxu0
  %v4984 = vadd.f32 %v4885, %v4983
  %v4985 = vpop.f32.mrf.mxu0
  %v4986 = vadd.f32 %v4887, %v4985
  %4987 = vdwg.mxu0
  %v4988 = vld [vmem:[%s3] sm:$0xff]
  %v4989 = vld [vmem:[%s3 + $0x8] sm:$0xff]
  %v4990 = vld [vmem:[%s3 + $0x10] sm:$0xff]
  %v4991 = vld [vmem:[%s3 + $0x18] sm:$0xf]
  %v4992 = vld [vmem:[%s3 + $0x1c] sm:$0xff]
  %v4993 = vld [vmem:[%s3 + $0x24] sm:$0xff]
  %v4994 = vld [vmem:[%s3 + $0x2c] sm:$0xff]
  %v4995 = vld [vmem:[%s3 + $0x34] sm:$0xf]
  %v4996 = vld [vmem:[%s3 + $0x38] sm:$0xff]
  %v4997 = vld [vmem:[%s3 + $0x40] sm:$0xff]
  %v4998 = vld [vmem:[%s3 + $0x48] sm:$0xff]
  %v4999 = vld [vmem:[%s3 + $0x50] sm:$0xf]
  %v5000 = vld [vmem:[%s3 + $0x54] sm:$0xff]
  %v5001 = vld [vmem:[%s3 + $0x5c] sm:$0xff]
  %v5002 = vld [vmem:[%s3 + $0x64] sm:$0xff]
  %v5003 = vld [vmem:[%s3 + $0x6c] sm:$0xf]
  %v5004 = vld [vmem:[%s3 + $0x70] sm:$0xff]
  %v5005 = vld [vmem:[%s3 + $0x78] sm:$0xff]
  %v5006 = vld [vmem:[%s3 + $0x80] sm:$0xff]
  %v5007 = vld [vmem:[%s3 + $0x88] sm:$0xf]
  %v5008 = vld [vmem:[%s3 + $0x8c] sm:$0xff]
  %v5009 = vld [vmem:[%s3 + $0x94] sm:$0xff]
  %v5010 = vld [vmem:[%s3 + $0x9c] sm:$0xff]
  %v5011 = vld [vmem:[%s3 + $0xa4] sm:$0xf]
  %v5012 = vld [vmem:[%s3 + $0xa8] sm:$0xff]
  %v5013 = vld [vmem:[%s3 + $0xb0] sm:$0xff]
  %v5014 = vld [vmem:[%s3 + $0xb8] sm:$0xff]
  %v5015 = vld [vmem:[%s3 + $0xc0] sm:$0xf]
  %v5016 = vld [vmem:[%s3 + $0xc4] sm:$0xff]
  %v5017 = vld [vmem:[%s3 + $0xcc] sm:$0xff]
  %v5018 = vld [vmem:[%s3 + $0xd4] sm:$0xff]
  %v5019 = vld [vmem:[%s3 + $0xdc] sm:$0xf]
  %v5020 = vld [vmem:[%s3 + $0xe0] sm:$0xff]
  %v5021 = vld [vmem:[%s3 + $0xe8] sm:$0xff]
  %v5022 = vld [vmem:[%s3 + $0xf0] sm:$0xff]
  %v5023 = vld [vmem:[%s3 + $0xf8] sm:$0xf]
  %v5024 = vld [vmem:[%s3 + $0xfc] sm:$0xff]
  %v5025 = vld [vmem:[%s3 + $0x104] sm:$0xff]
  %v5026 = vld [vmem:[%s3 + $0x10c] sm:$0xff]
  %v5027 = vld [vmem:[%s3 + $0x114] sm:$0xf]
  %v5028 = vld [vmem:[%s3 + $0x118] sm:$0xff]
  %v5029 = vld [vmem:[%s3 + $0x120] sm:$0xff]
  %v5030 = vld [vmem:[%s3 + $0x128] sm:$0xff]
  %v5031 = vld [vmem:[%s3 + $0x130] sm:$0xf]
  %v5032 = vld [vmem:[%s3 + $0x134] sm:$0xff]
  %v5033 = vld [vmem:[%s3 + $0x13c] sm:$0xff]
  %v5034 = vld [vmem:[%s3 + $0x144] sm:$0xff]
  %v5035 = vld [vmem:[%s3 + $0x14c] sm:$0xf]
  %v5036 = vld [vmem:[%s3 + $0x150] sm:$0xff]
  %v5037 = vld [vmem:[%s3 + $0x158] sm:$0xff]
  %v5038 = vld [vmem:[%s3 + $0x160] sm:$0xff]
  %v5039 = vld [vmem:[%s3 + $0x168] sm:$0xf]
  %v5040 = vld [vmem:[%s3 + $0x16c] sm:$0xff]
  %v5041 = vld [vmem:[%s3 + $0x174] sm:$0xff]
  %v5042 = vld [vmem:[%s3 + $0x17c] sm:$0xff]
  %v5043 = vld [vmem:[%s3 + $0x184] sm:$0xf]
  %v5044 = vld [vmem:[%s3 + $0x188] sm:$0xff]
  %v5045 = vld [vmem:[%s3 + $0x190] sm:$0xff]
  %v5046 = vld [vmem:[%s3 + $0x198] sm:$0xff]
  %v5047 = vld [vmem:[%s3 + $0x1a0] sm:$0xf]
  %v5048 = vld [vmem:[%s3 + $0x1a4] sm:$0xff]
  %v5049 = vld [vmem:[%s3 + $0x1ac] sm:$0xff]
  %v5050 = vld [vmem:[%s3 + $0x1b4] sm:$0xff]
  %v5051 = vld [vmem:[%s3 + $0x1bc] sm:$0xf]
  %v5052 = vld [vmem:[%s3 + $0x1c0] sm:$0xff]
  %v5053 = vld [vmem:[%s3 + $0x1c8] sm:$0xff]
  %v5054 = vld [vmem:[%s3 + $0x1d0] sm:$0xff]
  %v5055 = vld [vmem:[%s3 + $0x1d8] sm:$0xf]
  %v5056 = vld [vmem:[%s3 + $0x1dc] sm:$0xff]
  %v5057 = vld [vmem:[%s3 + $0x1e4] sm:$0xff]
  %v5058 = vld [vmem:[%s3 + $0x1ec] sm:$0xff]
  %v5059 = vld [vmem:[%s3 + $0x1f4] sm:$0xf]
  %v5060 = vld [vmem:[%s3 + $0x1f8] sm:$0xff]
  %v5061 = vld [vmem:[%s3 + $0x200] sm:$0xff]
  %v5062 = vld [vmem:[%s3 + $0x208] sm:$0xff]
  %v5063 = vld [vmem:[%s3 + $0x210] sm:$0xf]
  %v5064 = vld [vmem:[%s3 + $0x214] sm:$0xff]
  %v5065 = vld [vmem:[%s3 + $0x21c] sm:$0xff]
  %v5066 = vld [vmem:[%s3 + $0x224] sm:$0xff]
  %v5067 = vld [vmem:[%s3 + $0x22c] sm:$0xf]
  %v5068 = vld [vmem:[%s3 + $0x230] sm:$0xff]
  %v5069 = vld [vmem:[%s3 + $0x238] sm:$0xff]
  %v5070 = vld [vmem:[%s3 + $0x240] sm:$0xff]
  %v5071 = vld [vmem:[%s3 + $0x248] sm:$0xf]
  %v5072 = vld [vmem:[%s3 + $0x24c] sm:$0xff]
  %v5073 = vld [vmem:[%s3 + $0x254] sm:$0xff]
  %v5074 = vld [vmem:[%s3 + $0x25c] sm:$0xff]
  %v5075 = vld [vmem:[%s3 + $0x264] sm:$0xf]
  %v5076 = vld [vmem:[%s3 + $0x268] sm:$0xff]
  %v5077 = vld [vmem:[%s3 + $0x270] sm:$0xff]
  %v5078 = vld [vmem:[%s3 + $0x278] sm:$0xff]
  %v5079 = vld [vmem:[%s3 + $0x280] sm:$0xf]
  %v5080 = vld [vmem:[%s3 + $0x284] sm:$0xff]
  %v5081 = vld [vmem:[%s3 + $0x28c] sm:$0xff]
  %v5082 = vld [vmem:[%s3 + $0x294] sm:$0xff]
  %v5083 = vld [vmem:[%s3 + $0x29c] sm:$0xf]
  %v5084 = vld [vmem:[%s3 + $0x2a0] sm:$0xff]
  %v5085 = vld [vmem:[%s3 + $0x2a8] sm:$0xff]
  %v5086 = vld [vmem:[%s3 + $0x2b0] sm:$0xff]
  %v5087 = vld [vmem:[%s3 + $0x2b8] sm:$0xf]
  %v5088 = vld [vmem:[%s3 + $0x2bc] sm:$0xff]
  %v5089 = vld [vmem:[%s3 + $0x2c4] sm:$0xff]
  %v5090 = vld [vmem:[%s3 + $0x2cc] sm:$0xff]
  %v5091 = vld [vmem:[%s3 + $0x2d4] sm:$0xf]
  %v5092 = vld [vmem:[%s3 + $0x2d8] sm:$0xff]
  %v5093 = vld [vmem:[%s3 + $0x2e0] sm:$0xff]
  %v5094 = vld [vmem:[%s3 + $0x2e8] sm:$0xff]
  %v5095 = vld [vmem:[%s3 + $0x2f0] sm:$0xf]
  %v5096 = vld [vmem:[%s3 + $0x2f4] sm:$0xff]
  %v5097 = vld [vmem:[%s3 + $0x2fc] sm:$0xff]
  %v5098 = vld [vmem:[%s3 + $0x304] sm:$0xff]
  %v5099 = vld [vmem:[%s3 + $0x30c] sm:$0xf]
  %v5100 = vld [vmem:[%s3 + $0x310] sm:$0xff]
  %v5101 = vld [vmem:[%s3 + $0x318] sm:$0xff]
  %v5102 = vld [vmem:[%s3 + $0x320] sm:$0xff]
  %v5103 = vld [vmem:[%s3 + $0x328] sm:$0xf]
  %v5104 = vld [vmem:[%s3 + $0x32c] sm:$0xff]
  %v5105 = vld [vmem:[%s3 + $0x334] sm:$0xff]
  %v5106 = vld [vmem:[%s3 + $0x33c] sm:$0xff]
  %v5107 = vld [vmem:[%s3 + $0x344] sm:$0xf]
  %v5108 = vld [vmem:[%s3 + $0x348] sm:$0xff]
  %v5109 = vld [vmem:[%s3 + $0x350] sm:$0xff]
  %v5110 = vld [vmem:[%s3 + $0x358] sm:$0xff]
  %v5111 = vld [vmem:[%s3 + $0x360] sm:$0xf]
  %v5112 = vld [vmem:[%s3 + $0x364] sm:$0xff]
  %v5113 = vld [vmem:[%s3 + $0x36c] sm:$0xff]
  %v5114 = vld [vmem:[%s3 + $0x374] sm:$0xff]
  %v5115 = vld [vmem:[%s3 + $0x37c] sm:$0xf]
  %v5116 = vld [vmem:[%s3 + $0x380] sm:$0xff]
  %v5117 = vld [vmem:[%s3 + $0x388] sm:$0xff]
  %v5118 = vld [vmem:[%s3 + $0x390] sm:$0xff]
  %v5119 = vld [vmem:[%s3 + $0x398] sm:$0xf]
  %v5120 = vld [vmem:[%s3 + $0x39c] sm:$0xff]
  %v5121 = vld [vmem:[%s3 + $0x3a4] sm:$0xff]
  %v5122 = vld [vmem:[%s3 + $0x3ac] sm:$0xff]
  %v5123 = vld [vmem:[%s3 + $0x3b4] sm:$0xf]
  %v5124 = vld [vmem:[%s3 + $0x3b8] sm:$0xff]
  %v5125 = vld [vmem:[%s3 + $0x3c0] sm:$0xff]
  %v5126 = vld [vmem:[%s3 + $0x3c8] sm:$0xff]
  %v5127 = vld [vmem:[%s3 + $0x3d0] sm:$0xf]
  %v5128 = vld [vmem:[%s3 + $0x3d4] sm:$0xff]
  %v5129 = vld [vmem:[%s3 + $0x3dc] sm:$0xff]
  %v5130 = vld [vmem:[%s3 + $0x3e4] sm:$0xff]
  %v5131 = vld [vmem:[%s3 + $0x3ec] sm:$0xf]
  %v5276 = vunpack.c.l.b16 %v4988
  %v5277 = vunpack.c.h.b16 %v4988
  %v5278 = vunpack.c.l.b16 %v4989
  %v5279 = vunpack.c.h.b16 %v4989
  %v5280 = vunpack.c.l.b16 %v4990
  %v5281 = vunpack.c.h.b16 %v4990
  %v5282 = vunpack.c.l.b16 %v4991
  %v5283 = vunpack.c.l.b16 %v4992
  %v5284 = vunpack.c.h.b16 %v4992
  %v5285 = vunpack.c.l.b16 %v4993
  %v5286 = vunpack.c.h.b16 %v4993
  %v5287 = vunpack.c.l.b16 %v4994
  %v5288 = vunpack.c.h.b16 %v4994
  %v5289 = vunpack.c.l.b16 %v4995
  %v5290 = vunpack.c.l.b16 %v4996
  %v5291 = vunpack.c.h.b16 %v4996
  %v5292 = vunpack.c.l.b16 %v4997
  %v5293 = vunpack.c.h.b16 %v4997
  %v5294 = vunpack.c.l.b16 %v4998
  %v5295 = vunpack.c.h.b16 %v4998
  %v5296 = vunpack.c.l.b16 %v4999
  %v5297 = vunpack.c.l.b16 %v5000
  %v5298 = vunpack.c.h.b16 %v5000
  %v5299 = vunpack.c.l.b16 %v5001
  %v5300 = vunpack.c.h.b16 %v5001
  %v5301 = vunpack.c.l.b16 %v5002
  %v5302 = vunpack.c.h.b16 %v5002
  %v5303 = vunpack.c.l.b16 %v5003
  %v5304 = vunpack.c.l.b16 %v5004
  %v5305 = vunpack.c.h.b16 %v5004
  %v5306 = vunpack.c.l.b16 %v5005
  %v5307 = vunpack.c.h.b16 %v5005
  %v5308 = vunpack.c.l.b16 %v5006
  %v5309 = vunpack.c.h.b16 %v5006
  %v5310 = vunpack.c.l.b16 %v5007
  %v5311 = vunpack.c.l.b16 %v5008
  %v5312 = vunpack.c.h.b16 %v5008
  %v5313 = vunpack.c.l.b16 %v5009
  %v5314 = vunpack.c.h.b16 %v5009
  %v5315 = vunpack.c.l.b16 %v5010
  %v5316 = vunpack.c.h.b16 %v5010
  %v5317 = vunpack.c.l.b16 %v5011
  %v5318 = vunpack.c.l.b16 %v5012
  %v5319 = vunpack.c.h.b16 %v5012
  %v5320 = vunpack.c.l.b16 %v5013
  %v5321 = vunpack.c.h.b16 %v5013
  %v5322 = vunpack.c.l.b16 %v5014
  %v5323 = vunpack.c.h.b16 %v5014
  %v5324 = vunpack.c.l.b16 %v5015
  %v5325 = vunpack.c.l.b16 %v5016
  %v5326 = vunpack.c.h.b16 %v5016
  %v5327 = vunpack.c.l.b16 %v5017
  %v5328 = vunpack.c.h.b16 %v5017
  %v5329 = vunpack.c.l.b16 %v5018
  %v5330 = vunpack.c.h.b16 %v5018
  %v5331 = vunpack.c.l.b16 %v5019
  %v5332 = vunpack.c.l.b16 %v5020
  %v5333 = vunpack.c.h.b16 %v5020
  %v5334 = vunpack.c.l.b16 %v5021
  %v5335 = vunpack.c.h.b16 %v5021
  %v5336 = vunpack.c.l.b16 %v5022
  %v5337 = vunpack.c.h.b16 %v5022
  %v5338 = vunpack.c.l.b16 %v5023
  %v5339 = vunpack.c.l.b16 %v5024
  %v5340 = vunpack.c.h.b16 %v5024
  %v5341 = vunpack.c.l.b16 %v5025
  %v5342 = vunpack.c.h.b16 %v5025
  %v5343 = vunpack.c.l.b16 %v5026
  %v5344 = vunpack.c.h.b16 %v5026
  %v5345 = vunpack.c.l.b16 %v5027
  %v5346 = vunpack.c.l.b16 %v5028
  %v5347 = vunpack.c.h.b16 %v5028
  %v5348 = vunpack.c.l.b16 %v5029
  %v5349 = vunpack.c.h.b16 %v5029
  %v5350 = vunpack.c.l.b16 %v5030
  %v5351 = vunpack.c.h.b16 %v5030
  %v5352 = vunpack.c.l.b16 %v5031
  %v5353 = vunpack.c.l.b16 %v5032
  %v5354 = vunpack.c.h.b16 %v5032
  %v5355 = vunpack.c.l.b16 %v5033
  %v5356 = vunpack.c.h.b16 %v5033
  %v5357 = vunpack.c.l.b16 %v5034
  %v5358 = vunpack.c.h.b16 %v5034
  %v5359 = vunpack.c.l.b16 %v5035
  %v5360 = vunpack.c.l.b16 %v5036
  %v5361 = vunpack.c.h.b16 %v5036
  %v5362 = vunpack.c.l.b16 %v5037
  %v5363 = vunpack.c.h.b16 %v5037
  %v5364 = vunpack.c.l.b16 %v5038
  %v5365 = vunpack.c.h.b16 %v5038
  %v5366 = vunpack.c.l.b16 %v5039
  %v5367 = vunpack.c.l.b16 %v5040
  %v5368 = vunpack.c.h.b16 %v5040
  %v5369 = vunpack.c.l.b16 %v5041
  %v5370 = vunpack.c.h.b16 %v5041
  %v5371 = vunpack.c.l.b16 %v5042
  %v5372 = vunpack.c.h.b16 %v5042
  %v5373 = vunpack.c.l.b16 %v5043
  %v5374 = vunpack.c.l.b16 %v5044
  %v5375 = vunpack.c.h.b16 %v5044
  %v5376 = vunpack.c.l.b16 %v5045
  %v5377 = vunpack.c.h.b16 %v5045
  %v5378 = vunpack.c.l.b16 %v5046
  %v5379 = vunpack.c.h.b16 %v5046
  %v5380 = vunpack.c.l.b16 %v5047
  %v5381 = vunpack.c.l.b16 %v5048
  %v5382 = vunpack.c.h.b16 %v5048
  %v5383 = vunpack.c.l.b16 %v5049
  %v5384 = vunpack.c.h.b16 %v5049
  %v5385 = vunpack.c.l.b16 %v5050
  %v5386 = vunpack.c.h.b16 %v5050
  %v5387 = vunpack.c.l.b16 %v5051
  %v5388 = vunpack.c.l.b16 %v5052
  %v5389 = vunpack.c.h.b16 %v5052
  %v5390 = vunpack.c.l.b16 %v5053
  %v5391 = vunpack.c.h.b16 %v5053
  %v5392 = vunpack.c.l.b16 %v5054
  %v5393 = vunpack.c.h.b16 %v5054
  %v5394 = vunpack.c.l.b16 %v5055
  %v5395 = vunpack.c.l.b16 %v5056
  %v5396 = vunpack.c.h.b16 %v5056
  %v5397 = vunpack.c.l.b16 %v5057
  %v5398 = vunpack.c.h.b16 %v5057
  %v5399 = vunpack.c.l.b16 %v5058
  %v5400 = vunpack.c.h.b16 %v5058
  %v5401 = vunpack.c.l.b16 %v5059
  %v5402 = vunpack.c.l.b16 %v5060
  %v5403 = vunpack.c.h.b16 %v5060
  %v5404 = vunpack.c.l.b16 %v5061
  %v5405 = vunpack.c.h.b16 %v5061
  %v5406 = vunpack.c.l.b16 %v5062
  %v5407 = vunpack.c.h.b16 %v5062
  %v5408 = vunpack.c.l.b16 %v5063
  %v5409 = vunpack.c.l.b16 %v5064
  %v5410 = vunpack.c.h.b16 %v5064
  %v5411 = vunpack.c.l.b16 %v5065
  %v5412 = vunpack.c.h.b16 %v5065
  %v5413 = vunpack.c.l.b16 %v5066
  %v5414 = vunpack.c.h.b16 %v5066
  %v5415 = vunpack.c.l.b16 %v5067
  %v5416 = vunpack.c.l.b16 %v5068
  %v5417 = vunpack.c.h.b16 %v5068
  %v5418 = vunpack.c.l.b16 %v5069
  %v5419 = vunpack.c.h.b16 %v5069
  %v5420 = vunpack.c.l.b16 %v5070
  %v5421 = vunpack.c.h.b16 %v5070
  %v5422 = vunpack.c.l.b16 %v5071
  %v5423 = vunpack.c.l.b16 %v5072
  %v5424 = vunpack.c.h.b16 %v5072
  %v5425 = vunpack.c.l.b16 %v5073
  %v5426 = vunpack.c.h.b16 %v5073
  %v5427 = vunpack.c.l.b16 %v5074
  %v5428 = vunpack.c.h.b16 %v5074
  %v5429 = vunpack.c.l.b16 %v5075
  %v5430 = vunpack.c.l.b16 %v5076
  %v5431 = vunpack.c.h.b16 %v5076
  %v5432 = vunpack.c.l.b16 %v5077
  %v5433 = vunpack.c.h.b16 %v5077
  %v5434 = vunpack.c.l.b16 %v5078
  %v5435 = vunpack.c.h.b16 %v5078
  %v5436 = vunpack.c.l.b16 %v5079
  %v5437 = vunpack.c.l.b16 %v5080
  %v5438 = vunpack.c.h.b16 %v5080
  %v5439 = vunpack.c.l.b16 %v5081
  %v5440 = vunpack.c.h.b16 %v5081
  %v5441 = vunpack.c.l.b16 %v5082
  %v5442 = vunpack.c.h.b16 %v5082
  %v5443 = vunpack.c.l.b16 %v5083
  %v5444 = vunpack.c.l.b16 %v5084
  %v5445 = vunpack.c.h.b16 %v5084
  %v5446 = vunpack.c.l.b16 %v5085
  %v5447 = vunpack.c.h.b16 %v5085
  %v5448 = vunpack.c.l.b16 %v5086
  %v5449 = vunpack.c.h.b16 %v5086
  %v5450 = vunpack.c.l.b16 %v5087
  %v5451 = vunpack.c.l.b16 %v5088
  %v5452 = vunpack.c.h.b16 %v5088
  %v5453 = vunpack.c.l.b16 %v5089
  %v5454 = vunpack.c.h.b16 %v5089
  %v5455 = vunpack.c.l.b16 %v5090
  %v5456 = vunpack.c.h.b16 %v5090
  %v5457 = vunpack.c.l.b16 %v5091
  %v5458 = vunpack.c.l.b16 %v5092
  %v5459 = vunpack.c.h.b16 %v5092
  %v5460 = vunpack.c.l.b16 %v5093
  %v5461 = vunpack.c.h.b16 %v5093
  %v5462 = vunpack.c.l.b16 %v5094
  %v5463 = vunpack.c.h.b16 %v5094
  %v5464 = vunpack.c.l.b16 %v5095
  %v5465 = vunpack.c.l.b16 %v5096
  %v5466 = vunpack.c.h.b16 %v5096
  %v5467 = vunpack.c.l.b16 %v5097
  %v5468 = vunpack.c.h.b16 %v5097
  %v5469 = vunpack.c.l.b16 %v5098
  %v5470 = vunpack.c.h.b16 %v5098
  %v5471 = vunpack.c.l.b16 %v5099
  %v5472 = vunpack.c.l.b16 %v5100
  %v5473 = vunpack.c.h.b16 %v5100
  %v5474 = vunpack.c.l.b16 %v5101
  %v5475 = vunpack.c.h.b16 %v5101
  %v5476 = vunpack.c.l.b16 %v5102
  %v5477 = vunpack.c.h.b16 %v5102
  %v5478 = vunpack.c.l.b16 %v5103
  %v5479 = vunpack.c.l.b16 %v5104
  %v5480 = vunpack.c.h.b16 %v5104
  %v5481 = vunpack.c.l.b16 %v5105
  %v5482 = vunpack.c.h.b16 %v5105
  %v5483 = vunpack.c.l.b16 %v5106
  %v5484 = vunpack.c.h.b16 %v5106
  %v5485 = vunpack.c.l.b16 %v5107
  %v5486 = vunpack.c.l.b16 %v5108
  %v5487 = vunpack.c.h.b16 %v5108
  %v5488 = vunpack.c.l.b16 %v5109
  %v5489 = vunpack.c.h.b16 %v5109
  %v5490 = vunpack.c.l.b16 %v5110
  %v5491 = vunpack.c.h.b16 %v5110
  %v5492 = vunpack.c.l.b16 %v5111
  %v5493 = vunpack.c.l.b16 %v5112
  %v5494 = vunpack.c.h.b16 %v5112
  %v5495 = vunpack.c.l.b16 %v5113
  %v5496 = vunpack.c.h.b16 %v5113
  %v5497 = vunpack.c.l.b16 %v5114
  %v5498 = vunpack.c.h.b16 %v5114
  %v5499 = vunpack.c.l.b16 %v5115
  %v5500 = vunpack.c.l.b16 %v5116
  %v5501 = vunpack.c.h.b16 %v5116
  %v5502 = vunpack.c.l.b16 %v5117
  %v5503 = vunpack.c.h.b16 %v5117
  %v5504 = vunpack.c.l.b16 %v5118
  %v5505 = vunpack.c.h.b16 %v5118
  %v5506 = vunpack.c.l.b16 %v5119
  %v5507 = vunpack.c.l.b16 %v5120
  %v5508 = vunpack.c.h.b16 %v5120
  %v5509 = vunpack.c.l.b16 %v5121
  %v5510 = vunpack.c.h.b16 %v5121
  %v5511 = vunpack.c.l.b16 %v5122
  %v5512 = vunpack.c.h.b16 %v5122
  %v5513 = vunpack.c.l.b16 %v5123
  %v5514 = vunpack.c.l.b16 %v5124
  %v5515 = vunpack.c.h.b16 %v5124
  %v5516 = vunpack.c.l.b16 %v5125
  %v5517 = vunpack.c.h.b16 %v5125
  %v5518 = vunpack.c.l.b16 %v5126
  %v5519 = vunpack.c.h.b16 %v5126
  %v5520 = vunpack.c.l.b16 %v5127
  %v5521 = vunpack.c.l.b16 %v5128
  %v5522 = vunpack.c.h.b16 %v5128
  %v5523 = vunpack.c.l.b16 %v5129
  %v5524 = vunpack.c.h.b16 %v5129
  %v5525 = vunpack.c.l.b16 %v5130
  %v5526 = vunpack.c.h.b16 %v5130
  %v5527 = vunpack.c.l.b16 %v5131
  %v5528 = vpack.c.b16 %v5283, %v5276
  %v5529 = vpack.c.b16 %v5284, %v5277
  %v5530 = vpack.c.b16 %v5285, %v5278
  %v5531 = vpack.c.b16 %v5286, %v5279
  %v5532 = vpack.c.b16 %v5287, %v5280
  %v5533 = vpack.c.b16 %v5288, %v5281
  %v5534 = vpack.c.b16 %v5289, %v5282
  %v5535 = vpack.c.b16 %v5297, %v5290
  %v5536 = vpack.c.b16 %v5298, %v5291
  %v5537 = vpack.c.b16 %v5299, %v5292
  %v5538 = vpack.c.b16 %v5300, %v5293
  %v5539 = vpack.c.b16 %v5301, %v5294
  %v5540 = vpack.c.b16 %v5302, %v5295
  %v5541 = vpack.c.b16 %v5303, %v5296
  %v5542 = vpack.c.b16 %v5311, %v5304
  %v5543 = vpack.c.b16 %v5312, %v5305
  %v5544 = vpack.c.b16 %v5313, %v5306
  %v5545 = vpack.c.b16 %v5314, %v5307
  %v5546 = vpack.c.b16 %v5315, %v5308
  %v5547 = vpack.c.b16 %v5316, %v5309
  %v5548 = vpack.c.b16 %v5317, %v5310
  %v5549 = vpack.c.b16 %v5325, %v5318
  %v5550 = vpack.c.b16 %v5326, %v5319
  %v5551 = vpack.c.b16 %v5327, %v5320
  %v5552 = vpack.c.b16 %v5328, %v5321
  %v5553 = vpack.c.b16 %v5329, %v5322
  %v5554 = vpack.c.b16 %v5330, %v5323
  %v5555 = vpack.c.b16 %v5331, %v5324
  %v5556 = vpack.c.b16 %v5339, %v5332
  %v5557 = vpack.c.b16 %v5340, %v5333
  %v5558 = vpack.c.b16 %v5341, %v5334
  %v5559 = vpack.c.b16 %v5342, %v5335
  %v5560 = vpack.c.b16 %v5343, %v5336
  %v5561 = vpack.c.b16 %v5344, %v5337
  %v5562 = vpack.c.b16 %v5345, %v5338
  %v5563 = vpack.c.b16 %v5353, %v5346
  %v5564 = vpack.c.b16 %v5354, %v5347
  %v5565 = vpack.c.b16 %v5355, %v5348
  %v5566 = vpack.c.b16 %v5356, %v5349
  %v5567 = vpack.c.b16 %v5357, %v5350
  %v5568 = vpack.c.b16 %v5358, %v5351
  %v5569 = vpack.c.b16 %v5359, %v5352
  %v5570 = vpack.c.b16 %v5367, %v5360
  %v5571 = vpack.c.b16 %v5368, %v5361
  %v5572 = vpack.c.b16 %v5369, %v5362
  %v5573 = vpack.c.b16 %v5370, %v5363
  %v5574 = vpack.c.b16 %v5371, %v5364
  %v5575 = vpack.c.b16 %v5372, %v5365
  %v5576 = vpack.c.b16 %v5373, %v5366
  %v5577 = vpack.c.b16 %v5381, %v5374
  %v5578 = vpack.c.b16 %v5382, %v5375
  %v5579 = vpack.c.b16 %v5383, %v5376
  %v5580 = vpack.c.b16 %v5384, %v5377
  %v5581 = vpack.c.b16 %v5385, %v5378
  %v5582 = vpack.c.b16 %v5386, %v5379
  %v5583 = vpack.c.b16 %v5387, %v5380
  %v5584 = vpack.c.b16 %v5395, %v5388
  %v5585 = vpack.c.b16 %v5396, %v5389
  %v5586 = vpack.c.b16 %v5397, %v5390
  %v5587 = vpack.c.b16 %v5398, %v5391
  %v5588 = vpack.c.b16 %v5399, %v5392
  %v5589 = vpack.c.b16 %v5400, %v5393
  %v5590 = vpack.c.b16 %v5401, %v5394
  %v5591 = vpack.c.b16 %v5409, %v5402
  %v5592 = vpack.c.b16 %v5410, %v5403
  %v5593 = vpack.c.b16 %v5411, %v5404
  %v5594 = vpack.c.b16 %v5412, %v5405
  %v5595 = vpack.c.b16 %v5413, %v5406
  %v5596 = vpack.c.b16 %v5414, %v5407
  %v5597 = vpack.c.b16 %v5415, %v5408
  %v5598 = vpack.c.b16 %v5423, %v5416
  %v5599 = vpack.c.b16 %v5424, %v5417
  %v5600 = vpack.c.b16 %v5425, %v5418
  %v5601 = vpack.c.b16 %v5426, %v5419
  %v5602 = vpack.c.b16 %v5427, %v5420
  %v5603 = vpack.c.b16 %v5428, %v5421
  %v5604 = vpack.c.b16 %v5429, %v5422
  %v5605 = vpack.c.b16 %v5437, %v5430
  %v5606 = vpack.c.b16 %v5438, %v5431
  %v5607 = vpack.c.b16 %v5439, %v5432
  %v5608 = vpack.c.b16 %v5440, %v5433
  %v5609 = vpack.c.b16 %v5441, %v5434
  %v5610 = vpack.c.b16 %v5442, %v5435
  %v5611 = vpack.c.b16 %v5443, %v5436
  %v5612 = vpack.c.b16 %v5451, %v5444
  %v5613 = vpack.c.b16 %v5452, %v5445
  %v5614 = vpack.c.b16 %v5453, %v5446
  %v5615 = vpack.c.b16 %v5454, %v5447
  %v5616 = vpack.c.b16 %v5455, %v5448
  %v5617 = vpack.c.b16 %v5456, %v5449
  %v5618 = vpack.c.b16 %v5457, %v5450
  %v5619 = vpack.c.b16 %v5465, %v5458
  %v5620 = vpack.c.b16 %v5466, %v5459
  %v5621 = vpack.c.b16 %v5467, %v5460
  %v5622 = vpack.c.b16 %v5468, %v5461
  %v5623 = vpack.c.b16 %v5469, %v5462
  %v5624 = vpack.c.b16 %v5470, %v5463
  %v5625 = vpack.c.b16 %v5471, %v5464
  %v5626 = vpack.c.b16 %v5479, %v5472
  %v5627 = vpack.c.b16 %v5480, %v5473
  %v5628 = vpack.c.b16 %v5481, %v5474
  %v5629 = vpack.c.b16 %v5482, %v5475
  %v5630 = vpack.c.b16 %v5483, %v5476
  %v5631 = vpack.c.b16 %v5484, %v5477
  %v5632 = vpack.c.b16 %v5485, %v5478
  %v5633 = vpack.c.b16 %v5493, %v5486
  %v5634 = vpack.c.b16 %v5494, %v5487
  %v5635 = vpack.c.b16 %v5495, %v5488
  %v5636 = vpack.c.b16 %v5496, %v5489
  %v5637 = vpack.c.b16 %v5497, %v5490
  %v5638 = vpack.c.b16 %v5498, %v5491
  %v5639 = vpack.c.b16 %v5499, %v5492
  %v5640 = vpack.c.b16 %v5507, %v5500
  %v5641 = vpack.c.b16 %v5508, %v5501
  %v5642 = vpack.c.b16 %v5509, %v5502
  %v5643 = vpack.c.b16 %v5510, %v5503
  %v5644 = vpack.c.b16 %v5511, %v5504
  %v5645 = vpack.c.b16 %v5512, %v5505
  %v5646 = vpack.c.b16 %v5513, %v5506
  %v5647 = vpack.c.b16 %v5521, %v5514
  %v5648 = vpack.c.b16 %v5522, %v5515
  %v5649 = vpack.c.b16 %v5523, %v5516
  %v5650 = vpack.c.b16 %v5524, %v5517
  %v5651 = vpack.c.b16 %v5525, %v5518
  %v5652 = vpack.c.b16 %v5526, %v5519
  %v5653 = vpack.c.b16 %v5527, %v5520
  %v5763 = vsel %vm1198, %v5534, 0
  %v5766 = vsel %vm1198, %v5541, 0
  %v5769 = vsel %vm1198, %v5548, 0
  %v5772 = vsel %vm1198, %v5555, 0
  %v5775 = vsel %vm1198, %v5562, 0
  %v5778 = vsel %vm1198, %v5569, 0
  %v5781 = vsel %vm1198, %v5576, 0
  %v5784 = vsel %vm1198, %v5583, 0
  %v5787 = vsel %vm1198, %v5590, 0
  %v5790 = vsel %vm1198, %v5597, 0
  %v5793 = vsel %vm1198, %v5604, 0
  %v5796 = vsel %vm1198, %v5611, 0
  %v5799 = vsel %vm1198, %v5618, 0
  %v5802 = vsel %vm1198, %v5625, 0
  %v5805 = vsel %vm1198, %v5632, 0
  %v5808 = vsel %vm1198, %v5639, 0
  %v5811 = vsel %vm1198, %v5646, 0
  %v5814 = vsel %vm1198, %v5653, 0
  %5816 = vmatpush.bf16.msra.mxu0 %v1105
  %5817 = vmatpush.bf16.msra.mxu0 %v1104
  %5818 = vmatpush.bf16.msra.mxu0 %v1103
  %5819 = vmatpush.bf16.msra.mxu0 %v1102
  %5820 = vmatpush.bf16.msra.mxu0 %v1101
  %5821 = vmatpush.bf16.msra.mxu0 %v1100
  %5822 = vmatpush.bf16.msra.mxu0 %v1099
  %5823 = vmatpush.bf16.msra.mxu0 %v1098
  %5824 = vmatmul.bf16.gmra.mxu0 %v5528
  %v5825 = vpop.f32.mrf.mxu0
  %v5826 = vadd.f32 0.0, %v5825
  %v5827 = vpop.f32.mrf.mxu0
  %v5828 = vadd.f32 0.0, %v5827
  %5829 = vmatmul.bf16.gmra.mxu0 %v5535
  %v5830 = vpop.f32.mrf.mxu0
  %v5831 = vadd.f32 0.0, %v5830
  %v5832 = vpop.f32.mrf.mxu0
  %v5833 = vadd.f32 0.0, %v5832
  %5834 = vmatmul.bf16.gmra.mxu0 %v5542
  %v5835 = vpop.f32.mrf.mxu0
  %v5836 = vadd.f32 0.0, %v5835
  %v5837 = vpop.f32.mrf.mxu0
  %v5838 = vadd.f32 0.0, %v5837
  %5839 = vmatmul.bf16.gmra.mxu0 %v5549
  %v5840 = vpop.f32.mrf.mxu0
  %v5841 = vadd.f32 0.0, %v5840
  %v5842 = vpop.f32.mrf.mxu0
  %v5843 = vadd.f32 0.0, %v5842
  %5844 = vmatmul.bf16.gmra.mxu0 %v5556
  %v5845 = vpop.f32.mrf.mxu0
  %v5846 = vadd.f32 0.0, %v5845
  %v5847 = vpop.f32.mrf.mxu0
  %v5848 = vadd.f32 0.0, %v5847
  %5849 = vmatmul.bf16.gmra.mxu0 %v5563
  %v5850 = vpop.f32.mrf.mxu0
  %v5851 = vadd.f32 0.0, %v5850
  %v5852 = vpop.f32.mrf.mxu0
  %v5853 = vadd.f32 0.0, %v5852
  %5854 = vmatmul.bf16.gmra.mxu0 %v5570
  %v5855 = vpop.f32.mrf.mxu0
  %v5856 = vadd.f32 0.0, %v5855
  %v5857 = vpop.f32.mrf.mxu0
  %v5858 = vadd.f32 0.0, %v5857
  %5859 = vmatmul.bf16.gmra.mxu0 %v5577
  %v5860 = vpop.f32.mrf.mxu0
  %v5861 = vadd.f32 0.0, %v5860
  %v5862 = vpop.f32.mrf.mxu0
  %v5863 = vadd.f32 0.0, %v5862
  %5864 = vmatmul.bf16.gmra.mxu0 %v5584
  %v5865 = vpop.f32.mrf.mxu0
  %v5866 = vadd.f32 0.0, %v5865
  %v5867 = vpop.f32.mrf.mxu0
  %v5868 = vadd.f32 0.0, %v5867
  %5869 = vmatmul.bf16.gmra.mxu0 %v5591
  %v5870 = vpop.f32.mrf.mxu0
  %v5871 = vadd.f32 0.0, %v5870
  %v5872 = vpop.f32.mrf.mxu0
  %v5873 = vadd.f32 0.0, %v5872
  %5874 = vmatmul.bf16.gmra.mxu0 %v5598
  %v5875 = vpop.f32.mrf.mxu0
  %v5876 = vadd.f32 0.0, %v5875
  %v5877 = vpop.f32.mrf.mxu0
  %v5878 = vadd.f32 0.0, %v5877
  %5879 = vmatmul.bf16.gmra.mxu0 %v5605
  %v5880 = vpop.f32.mrf.mxu0
  %v5881 = vadd.f32 0.0, %v5880
  %v5882 = vpop.f32.mrf.mxu0
  %v5883 = vadd.f32 0.0, %v5882
  %5884 = vmatmul.bf16.gmra.mxu0 %v5612
  %v5885 = vpop.f32.mrf.mxu0
  %v5886 = vadd.f32 0.0, %v5885
  %v5887 = vpop.f32.mrf.mxu0
  %v5888 = vadd.f32 0.0, %v5887
  %5889 = vmatmul.bf16.gmra.mxu0 %v5619
  %v5890 = vpop.f32.mrf.mxu0
  %v5891 = vadd.f32 0.0, %v5890
  %v5892 = vpop.f32.mrf.mxu0
  %v5893 = vadd.f32 0.0, %v5892
  %5894 = vmatmul.bf16.gmra.mxu0 %v5626
  %v5895 = vpop.f32.mrf.mxu0
  %v5896 = vadd.f32 0.0, %v5895
  %v5897 = vpop.f32.mrf.mxu0
  %v5898 = vadd.f32 0.0, %v5897
  %5899 = vmatmul.bf16.gmra.mxu0 %v5633
  %v5900 = vpop.f32.mrf.mxu0
  %v5901 = vadd.f32 0.0, %v5900
  %v5902 = vpop.f32.mrf.mxu0
  %v5903 = vadd.f32 0.0, %v5902
  %5904 = vmatmul.bf16.gmra.mxu0 %v5640
  %v5905 = vpop.f32.mrf.mxu0
  %v5906 = vadd.f32 0.0, %v5905
  %v5907 = vpop.f32.mrf.mxu0
  %v5908 = vadd.f32 0.0, %v5907
  %5909 = vmatmul.bf16.gmra.mxu0 %v5647
  %v5910 = vpop.f32.mrf.mxu0
  %v5911 = vadd.f32 0.0, %v5910
  %v5912 = vpop.f32.mrf.mxu0
  %v5913 = vadd.f32 0.0, %v5912
  %5914 = vdwg.mxu0
  %5915 = vmatpush.bf16.msra.mxu0 %v1113
  %5916 = vmatpush.bf16.msra.mxu0 %v1112
  %5917 = vmatpush.bf16.msra.mxu0 %v1111
  %5918 = vmatpush.bf16.msra.mxu0 %v1110
  %5919 = vmatpush.bf16.msra.mxu0 %v1109
  %5920 = vmatpush.bf16.msra.mxu0 %v1108
  %5921 = vmatpush.bf16.msra.mxu0 %v1107
  %5922 = vmatpush.bf16.msra.mxu0 %v1106
  %5923 = vmatmul.bf16.gmra.mxu0 %v5529
  %v5924 = vpop.f32.mrf.mxu0
  %v5925 = vadd.f32 %v5826, %v5924
  %v5926 = vpop.f32.mrf.mxu0
  %v5927 = vadd.f32 %v5828, %v5926
  %5928 = vmatmul.bf16.gmra.mxu0 %v5536
  %v5929 = vpop.f32.mrf.mxu0
  %v5930 = vadd.f32 %v5831, %v5929
  %v5931 = vpop.f32.mrf.mxu0
  %v5932 = vadd.f32 %v5833, %v5931
  %5933 = vmatmul.bf16.gmra.mxu0 %v5543
  %v5934 = vpop.f32.mrf.mxu0
  %v5935 = vadd.f32 %v5836, %v5934
  %v5936 = vpop.f32.mrf.mxu0
  %v5937 = vadd.f32 %v5838, %v5936
  %5938 = vmatmul.bf16.gmra.mxu0 %v5550
  %v5939 = vpop.f32.mrf.mxu0
  %v5940 = vadd.f32 %v5841, %v5939
  %v5941 = vpop.f32.mrf.mxu0
  %v5942 = vadd.f32 %v5843, %v5941
  %5943 = vmatmul.bf16.gmra.mxu0 %v5557
  %v5944 = vpop.f32.mrf.mxu0
  %v5945 = vadd.f32 %v5846, %v5944
  %v5946 = vpop.f32.mrf.mxu0
  %v5947 = vadd.f32 %v5848, %v5946
  %5948 = vmatmul.bf16.gmra.mxu0 %v5564
  %v5949 = vpop.f32.mrf.mxu0
  %v5950 = vadd.f32 %v5851, %v5949
  %v5951 = vpop.f32.mrf.mxu0
  %v5952 = vadd.f32 %v5853, %v5951
  %5953 = vmatmul.bf16.gmra.mxu0 %v5571
  %v5954 = vpop.f32.mrf.mxu0
  %v5955 = vadd.f32 %v5856, %v5954
  %v5956 = vpop.f32.mrf.mxu0
  %v5957 = vadd.f32 %v5858, %v5956
  %5958 = vmatmul.bf16.gmra.mxu0 %v5578
  %v5959 = vpop.f32.mrf.mxu0
  %v5960 = vadd.f32 %v5861, %v5959
  %v5961 = vpop.f32.mrf.mxu0
  %v5962 = vadd.f32 %v5863, %v5961
  %5963 = vmatmul.bf16.gmra.mxu0 %v5585
  %v5964 = vpop.f32.mrf.mxu0
  %v5965 = vadd.f32 %v5866, %v5964
  %v5966 = vpop.f32.mrf.mxu0
  %v5967 = vadd.f32 %v5868, %v5966
  %5968 = vmatmul.bf16.gmra.mxu0 %v5592
  %v5969 = vpop.f32.mrf.mxu0
  %v5970 = vadd.f32 %v5871, %v5969
  %v5971 = vpop.f32.mrf.mxu0
  %v5972 = vadd.f32 %v5873, %v5971
  %5973 = vmatmul.bf16.gmra.mxu0 %v5599
  %v5974 = vpop.f32.mrf.mxu0
  %v5975 = vadd.f32 %v5876, %v5974
  %v5976 = vpop.f32.mrf.mxu0
  %v5977 = vadd.f32 %v5878, %v5976
  %5978 = vmatmul.bf16.gmra.mxu0 %v5606
  %v5979 = vpop.f32.mrf.mxu0
  %v5980 = vadd.f32 %v5881, %v5979
  %v5981 = vpop.f32.mrf.mxu0
  %v5982 = vadd.f32 %v5883, %v5981
  %5983 = vmatmul.bf16.gmra.mxu0 %v5613
  %v5984 = vpop.f32.mrf.mxu0
  %v5985 = vadd.f32 %v5886, %v5984
  %v5986 = vpop.f32.mrf.mxu0
  %v5987 = vadd.f32 %v5888, %v5986
  %5988 = vmatmul.bf16.gmra.mxu0 %v5620
  %v5989 = vpop.f32.mrf.mxu0
  %v5990 = vadd.f32 %v5891, %v5989
  %v5991 = vpop.f32.mrf.mxu0
  %v5992 = vadd.f32 %v5893, %v5991
  %5993 = vmatmul.bf16.gmra.mxu0 %v5627
  %v5994 = vpop.f32.mrf.mxu0
  %v5995 = vadd.f32 %v5896, %v5994
  %v5996 = vpop.f32.mrf.mxu0
  %v5997 = vadd.f32 %v5898, %v5996
  %5998 = vmatmul.bf16.gmra.mxu0 %v5634
  %v5999 = vpop.f32.mrf.mxu0
  %v6000 = vadd.f32 %v5901, %v5999
  %v6001 = vpop.f32.mrf.mxu0
  %v6002 = vadd.f32 %v5903, %v6001
  %6003 = vmatmul.bf16.gmra.mxu0 %v5641
  %v6004 = vpop.f32.mrf.mxu0
  %v6005 = vadd.f32 %v5906, %v6004
  %v6006 = vpop.f32.mrf.mxu0
  %v6007 = vadd.f32 %v5908, %v6006
  %6008 = vmatmul.bf16.gmra.mxu0 %v5648
  %v6009 = vpop.f32.mrf.mxu0
  %v6010 = vadd.f32 %v5911, %v6009
  %v6011 = vpop.f32.mrf.mxu0
  %v6012 = vadd.f32 %v5913, %v6011
  %6013 = vdwg.mxu0
  %6014 = vmatpush.bf16.msra.mxu0 %v1121
  %6015 = vmatpush.bf16.msra.mxu0 %v1120
  %6016 = vmatpush.bf16.msra.mxu0 %v1119
  %6017 = vmatpush.bf16.msra.mxu0 %v1118
  %6018 = vmatpush.bf16.msra.mxu0 %v1117
  %6019 = vmatpush.bf16.msra.mxu0 %v1116
  %6020 = vmatpush.bf16.msra.mxu0 %v1115
  %6021 = vmatpush.bf16.msra.mxu0 %v1114
  %6022 = vmatmul.bf16.gmra.mxu0 %v5530
  %v6023 = vpop.f32.mrf.mxu0
  %v6024 = vadd.f32 %v5925, %v6023
  %v6025 = vpop.f32.mrf.mxu0
  %v6026 = vadd.f32 %v5927, %v6025
  %6027 = vmatmul.bf16.gmra.mxu0 %v5537
  %v6028 = vpop.f32.mrf.mxu0
  %v6029 = vadd.f32 %v5930, %v6028
  %v6030 = vpop.f32.mrf.mxu0
  %v6031 = vadd.f32 %v5932, %v6030
  %6032 = vmatmul.bf16.gmra.mxu0 %v5544
  %v6033 = vpop.f32.mrf.mxu0
  %v6034 = vadd.f32 %v5935, %v6033
  %v6035 = vpop.f32.mrf.mxu0
  %v6036 = vadd.f32 %v5937, %v6035
  %6037 = vmatmul.bf16.gmra.mxu0 %v5551
  %v6038 = vpop.f32.mrf.mxu0
  %v6039 = vadd.f32 %v5940, %v6038
  %v6040 = vpop.f32.mrf.mxu0
  %v6041 = vadd.f32 %v5942, %v6040
  %6042 = vmatmul.bf16.gmra.mxu0 %v5558
  %v6043 = vpop.f32.mrf.mxu0
  %v6044 = vadd.f32 %v5945, %v6043
  %v6045 = vpop.f32.mrf.mxu0
  %v6046 = vadd.f32 %v5947, %v6045
  %6047 = vmatmul.bf16.gmra.mxu0 %v5565
  %v6048 = vpop.f32.mrf.mxu0
  %v6049 = vadd.f32 %v5950, %v6048
  %v6050 = vpop.f32.mrf.mxu0
  %v6051 = vadd.f32 %v5952, %v6050
  %6052 = vmatmul.bf16.gmra.mxu0 %v5572
  %v6053 = vpop.f32.mrf.mxu0
  %v6054 = vadd.f32 %v5955, %v6053
  %v6055 = vpop.f32.mrf.mxu0
  %v6056 = vadd.f32 %v5957, %v6055
  %6057 = vmatmul.bf16.gmra.mxu0 %v5579
  %v6058 = vpop.f32.mrf.mxu0
  %v6059 = vadd.f32 %v5960, %v6058
  %v6060 = vpop.f32.mrf.mxu0
  %v6061 = vadd.f32 %v5962, %v6060
  %6062 = vmatmul.bf16.gmra.mxu0 %v5586
  %v6063 = vpop.f32.mrf.mxu0
  %v6064 = vadd.f32 %v5965, %v6063
  %v6065 = vpop.f32.mrf.mxu0
  %v6066 = vadd.f32 %v5967, %v6065
  %6067 = vmatmul.bf16.gmra.mxu0 %v5593
  %v6068 = vpop.f32.mrf.mxu0
  %v6069 = vadd.f32 %v5970, %v6068
  %v6070 = vpop.f32.mrf.mxu0
  %v6071 = vadd.f32 %v5972, %v6070
  %6072 = vmatmul.bf16.gmra.mxu0 %v5600
  %v6073 = vpop.f32.mrf.mxu0
  %v6074 = vadd.f32 %v5975, %v6073
  %v6075 = vpop.f32.mrf.mxu0
  %v6076 = vadd.f32 %v5977, %v6075
  %6077 = vmatmul.bf16.gmra.mxu0 %v5607
  %v6078 = vpop.f32.mrf.mxu0
  %v6079 = vadd.f32 %v5980, %v6078
  %v6080 = vpop.f32.mrf.mxu0
  %v6081 = vadd.f32 %v5982, %v6080
  %6082 = vmatmul.bf16.gmra.mxu0 %v5614
  %v6083 = vpop.f32.mrf.mxu0
  %v6084 = vadd.f32 %v5985, %v6083
  %v6085 = vpop.f32.mrf.mxu0
  %v6086 = vadd.f32 %v5987, %v6085
  %6087 = vmatmul.bf16.gmra.mxu0 %v5621
  %v6088 = vpop.f32.mrf.mxu0
  %v6089 = vadd.f32 %v5990, %v6088
  %v6090 = vpop.f32.mrf.mxu0
  %v6091 = vadd.f32 %v5992, %v6090
  %6092 = vmatmul.bf16.gmra.mxu0 %v5628
  %v6093 = vpop.f32.mrf.mxu0
  %v6094 = vadd.f32 %v5995, %v6093
  %v6095 = vpop.f32.mrf.mxu0
  %v6096 = vadd.f32 %v5997, %v6095
  %6097 = vmatmul.bf16.gmra.mxu0 %v5635
  %v6098 = vpop.f32.mrf.mxu0
  %v6099 = vadd.f32 %v6000, %v6098
  %v6100 = vpop.f32.mrf.mxu0
  %v6101 = vadd.f32 %v6002, %v6100
  %6102 = vmatmul.bf16.gmra.mxu0 %v5642
  %v6103 = vpop.f32.mrf.mxu0
  %v6104 = vadd.f32 %v6005, %v6103
  %v6105 = vpop.f32.mrf.mxu0
  %v6106 = vadd.f32 %v6007, %v6105
  %6107 = vmatmul.bf16.gmra.mxu0 %v5649
  %v6108 = vpop.f32.mrf.mxu0
  %v6109 = vadd.f32 %v6010, %v6108
  %v6110 = vpop.f32.mrf.mxu0
  %v6111 = vadd.f32 %v6012, %v6110
  %6112 = vdwg.mxu0
  %6113 = vmatpush.bf16.msra.mxu0 %v1129
  %6114 = vmatpush.bf16.msra.mxu0 %v1128
  %6115 = vmatpush.bf16.msra.mxu0 %v1127
  %6116 = vmatpush.bf16.msra.mxu0 %v1126
  %6117 = vmatpush.bf16.msra.mxu0 %v1125
  %6118 = vmatpush.bf16.msra.mxu0 %v1124
  %6119 = vmatpush.bf16.msra.mxu0 %v1123
  %6120 = vmatpush.bf16.msra.mxu0 %v1122
  %6121 = vmatmul.bf16.gmra.mxu0 %v5531
  %v6122 = vpop.f32.mrf.mxu0
  %v6123 = vadd.f32 %v6024, %v6122
  %v6124 = vpop.f32.mrf.mxu0
  %v6125 = vadd.f32 %v6026, %v6124
  %6126 = vmatmul.bf16.gmra.mxu0 %v5538
  %v6127 = vpop.f32.mrf.mxu0
  %v6128 = vadd.f32 %v6029, %v6127
  %v6129 = vpop.f32.mrf.mxu0
  %v6130 = vadd.f32 %v6031, %v6129
  %6131 = vmatmul.bf16.gmra.mxu0 %v5545
  %v6132 = vpop.f32.mrf.mxu0
  %v6133 = vadd.f32 %v6034, %v6132
  %v6134 = vpop.f32.mrf.mxu0
  %v6135 = vadd.f32 %v6036, %v6134
  %6136 = vmatmul.bf16.gmra.mxu0 %v5552
  %v6137 = vpop.f32.mrf.mxu0
  %v6138 = vadd.f32 %v6039, %v6137
  %v6139 = vpop.f32.mrf.mxu0
  %v6140 = vadd.f32 %v6041, %v6139
  %6141 = vmatmul.bf16.gmra.mxu0 %v5559
  %v6142 = vpop.f32.mrf.mxu0
  %v6143 = vadd.f32 %v6044, %v6142
  %v6144 = vpop.f32.mrf.mxu0
  %v6145 = vadd.f32 %v6046, %v6144
  %6146 = vmatmul.bf16.gmra.mxu0 %v5566
  %v6147 = vpop.f32.mrf.mxu0
  %v6148 = vadd.f32 %v6049, %v6147
  %v6149 = vpop.f32.mrf.mxu0
  %v6150 = vadd.f32 %v6051, %v6149
  %6151 = vmatmul.bf16.gmra.mxu0 %v5573
  %v6152 = vpop.f32.mrf.mxu0
  %v6153 = vadd.f32 %v6054, %v6152
  %v6154 = vpop.f32.mrf.mxu0
  %v6155 = vadd.f32 %v6056, %v6154
  %6156 = vmatmul.bf16.gmra.mxu0 %v5580
  %v6157 = vpop.f32.mrf.mxu0
  %v6158 = vadd.f32 %v6059, %v6157
  %v6159 = vpop.f32.mrf.mxu0
  %v6160 = vadd.f32 %v6061, %v6159
  %6161 = vmatmul.bf16.gmra.mxu0 %v5587
  %v6162 = vpop.f32.mrf.mxu0
  %v6163 = vadd.f32 %v6064, %v6162
  %v6164 = vpop.f32.mrf.mxu0
  %v6165 = vadd.f32 %v6066, %v6164
  %6166 = vmatmul.bf16.gmra.mxu0 %v5594
  %v6167 = vpop.f32.mrf.mxu0
  %v6168 = vadd.f32 %v6069, %v6167
  %v6169 = vpop.f32.mrf.mxu0
  %v6170 = vadd.f32 %v6071, %v6169
  %6171 = vmatmul.bf16.gmra.mxu0 %v5601
  %v6172 = vpop.f32.mrf.mxu0
  %v6173 = vadd.f32 %v6074, %v6172
  %v6174 = vpop.f32.mrf.mxu0
  %v6175 = vadd.f32 %v6076, %v6174
  %6176 = vmatmul.bf16.gmra.mxu0 %v5608
  %v6177 = vpop.f32.mrf.mxu0
  %v6178 = vadd.f32 %v6079, %v6177
  %v6179 = vpop.f32.mrf.mxu0
  %v6180 = vadd.f32 %v6081, %v6179
  %6181 = vmatmul.bf16.gmra.mxu0 %v5615
  %v6182 = vpop.f32.mrf.mxu0
  %v6183 = vadd.f32 %v6084, %v6182
  %v6184 = vpop.f32.mrf.mxu0
  %v6185 = vadd.f32 %v6086, %v6184
  %6186 = vmatmul.bf16.gmra.mxu0 %v5622
  %v6187 = vpop.f32.mrf.mxu0
  %v6188 = vadd.f32 %v6089, %v6187
  %v6189 = vpop.f32.mrf.mxu0
  %v6190 = vadd.f32 %v6091, %v6189
  %6191 = vmatmul.bf16.gmra.mxu0 %v5629
  %v6192 = vpop.f32.mrf.mxu0
  %v6193 = vadd.f32 %v6094, %v6192
  %v6194 = vpop.f32.mrf.mxu0
  %v6195 = vadd.f32 %v6096, %v6194
  %6196 = vmatmul.bf16.gmra.mxu0 %v5636
  %v6197 = vpop.f32.mrf.mxu0
  %v6198 = vadd.f32 %v6099, %v6197
  %v6199 = vpop.f32.mrf.mxu0
  %v6200 = vadd.f32 %v6101, %v6199
  %6201 = vmatmul.bf16.gmra.mxu0 %v5643
  %v6202 = vpop.f32.mrf.mxu0
  %v6203 = vadd.f32 %v6104, %v6202
  %v6204 = vpop.f32.mrf.mxu0
  %v6205 = vadd.f32 %v6106, %v6204
  %6206 = vmatmul.bf16.gmra.mxu0 %v5650
  %v6207 = vpop.f32.mrf.mxu0
  %v6208 = vadd.f32 %v6109, %v6207
  %v6209 = vpop.f32.mrf.mxu0
  %v6210 = vadd.f32 %v6111, %v6209
  %6211 = vdwg.mxu0
  %6212 = vmatpush.bf16.msra.mxu0 %v1137
  %6213 = vmatpush.bf16.msra.mxu0 %v1136
  %6214 = vmatpush.bf16.msra.mxu0 %v1135
  %6215 = vmatpush.bf16.msra.mxu0 %v1134
  %6216 = vmatpush.bf16.msra.mxu0 %v1133
  %6217 = vmatpush.bf16.msra.mxu0 %v1132
  %6218 = vmatpush.bf16.msra.mxu0 %v1131
  %6219 = vmatpush.bf16.msra.mxu0 %v1130
  %6220 = vmatmul.bf16.gmra.mxu0 %v5532
  %v6221 = vpop.f32.mrf.mxu0
  %v6222 = vadd.f32 %v6123, %v6221
  %v6223 = vpop.f32.mrf.mxu0
  %v6224 = vadd.f32 %v6125, %v6223
  %6225 = vmatmul.bf16.gmra.mxu0 %v5539
  %v6226 = vpop.f32.mrf.mxu0
  %v6227 = vadd.f32 %v6128, %v6226
  %v6228 = vpop.f32.mrf.mxu0
  %v6229 = vadd.f32 %v6130, %v6228
  %6230 = vmatmul.bf16.gmra.mxu0 %v5546
  %v6231 = vpop.f32.mrf.mxu0
  %v6232 = vadd.f32 %v6133, %v6231
  %v6233 = vpop.f32.mrf.mxu0
  %v6234 = vadd.f32 %v6135, %v6233
  %6235 = vmatmul.bf16.gmra.mxu0 %v5553
  %v6236 = vpop.f32.mrf.mxu0
  %v6237 = vadd.f32 %v6138, %v6236
  %v6238 = vpop.f32.mrf.mxu0
  %v6239 = vadd.f32 %v6140, %v6238
  %6240 = vmatmul.bf16.gmra.mxu0 %v5560
  %v6241 = vpop.f32.mrf.mxu0
  %v6242 = vadd.f32 %v6143, %v6241
  %v6243 = vpop.f32.mrf.mxu0
  %v6244 = vadd.f32 %v6145, %v6243
  %6245 = vmatmul.bf16.gmra.mxu0 %v5567
  %v6246 = vpop.f32.mrf.mxu0
  %v6247 = vadd.f32 %v6148, %v6246
  %v6248 = vpop.f32.mrf.mxu0
  %v6249 = vadd.f32 %v6150, %v6248
  %6250 = vmatmul.bf16.gmra.mxu0 %v5574
  %v6251 = vpop.f32.mrf.mxu0
  %v6252 = vadd.f32 %v6153, %v6251
  %v6253 = vpop.f32.mrf.mxu0
  %v6254 = vadd.f32 %v6155, %v6253
  %6255 = vmatmul.bf16.gmra.mxu0 %v5581
  %v6256 = vpop.f32.mrf.mxu0
  %v6257 = vadd.f32 %v6158, %v6256
  %v6258 = vpop.f32.mrf.mxu0
  %v6259 = vadd.f32 %v6160, %v6258
  %6260 = vmatmul.bf16.gmra.mxu0 %v5588
  %v6261 = vpop.f32.mrf.mxu0
  %v6262 = vadd.f32 %v6163, %v6261
  %v6263 = vpop.f32.mrf.mxu0
  %v6264 = vadd.f32 %v6165, %v6263
  %6265 = vmatmul.bf16.gmra.mxu0 %v5595
  %v6266 = vpop.f32.mrf.mxu0
  %v6267 = vadd.f32 %v6168, %v6266
  %v6268 = vpop.f32.mrf.mxu0
  %v6269 = vadd.f32 %v6170, %v6268
  %6270 = vmatmul.bf16.gmra.mxu0 %v5602
  %v6271 = vpop.f32.mrf.mxu0
  %v6272 = vadd.f32 %v6173, %v6271
  %v6273 = vpop.f32.mrf.mxu0
  %v6274 = vadd.f32 %v6175, %v6273
  %6275 = vmatmul.bf16.gmra.mxu0 %v5609
  %v6276 = vpop.f32.mrf.mxu0
  %v6277 = vadd.f32 %v6178, %v6276
  %v6278 = vpop.f32.mrf.mxu0
  %v6279 = vadd.f32 %v6180, %v6278
  %6280 = vmatmul.bf16.gmra.mxu0 %v5616
  %v6281 = vpop.f32.mrf.mxu0
  %v6282 = vadd.f32 %v6183, %v6281
  %v6283 = vpop.f32.mrf.mxu0
  %v6284 = vadd.f32 %v6185, %v6283
  %6285 = vmatmul.bf16.gmra.mxu0 %v5623
  %v6286 = vpop.f32.mrf.mxu0
  %v6287 = vadd.f32 %v6188, %v6286
  %v6288 = vpop.f32.mrf.mxu0
  %v6289 = vadd.f32 %v6190, %v6288
  %6290 = vmatmul.bf16.gmra.mxu0 %v5630
  %v6291 = vpop.f32.mrf.mxu0
  %v6292 = vadd.f32 %v6193, %v6291
  %v6293 = vpop.f32.mrf.mxu0
  %v6294 = vadd.f32 %v6195, %v6293
  %6295 = vmatmul.bf16.gmra.mxu0 %v5637
  %v6296 = vpop.f32.mrf.mxu0
  %v6297 = vadd.f32 %v6198, %v6296
  %v6298 = vpop.f32.mrf.mxu0
  %v6299 = vadd.f32 %v6200, %v6298
  %6300 = vmatmul.bf16.gmra.mxu0 %v5644
  %v6301 = vpop.f32.mrf.mxu0
  %v6302 = vadd.f32 %v6203, %v6301
  %v6303 = vpop.f32.mrf.mxu0
  %v6304 = vadd.f32 %v6205, %v6303
  %6305 = vmatmul.bf16.gmra.mxu0 %v5651
  %v6306 = vpop.f32.mrf.mxu0
  %v6307 = vadd.f32 %v6208, %v6306
  %v6308 = vpop.f32.mrf.mxu0
  %v6309 = vadd.f32 %v6210, %v6308
  %6310 = vdwg.mxu0
  %6311 = vmatpush.bf16.msra.mxu0 %v1145
  %6312 = vmatpush.bf16.msra.mxu0 %v1144
  %6313 = vmatpush.bf16.msra.mxu0 %v1143
  %6314 = vmatpush.bf16.msra.mxu0 %v1142
  %6315 = vmatpush.bf16.msra.mxu0 %v1141
  %6316 = vmatpush.bf16.msra.mxu0 %v1140
  %6317 = vmatpush.bf16.msra.mxu0 %v1139
  %6318 = vmatpush.bf16.msra.mxu0 %v1138
  %6319 = vmatmul.bf16.gmra.mxu0 %v5533
  %v6320 = vpop.f32.mrf.mxu0
  %v6321 = vadd.f32 %v6222, %v6320
  %v6322 = vpop.f32.mrf.mxu0
  %v6323 = vadd.f32 %v6224, %v6322
  %6324 = vmatmul.bf16.gmra.mxu0 %v5540
  %v6325 = vpop.f32.mrf.mxu0
  %v6326 = vadd.f32 %v6227, %v6325
  %v6327 = vpop.f32.mrf.mxu0
  %v6328 = vadd.f32 %v6229, %v6327
  %6329 = vmatmul.bf16.gmra.mxu0 %v5547
  %v6330 = vpop.f32.mrf.mxu0
  %v6331 = vadd.f32 %v6232, %v6330
  %v6332 = vpop.f32.mrf.mxu0
  %v6333 = vadd.f32 %v6234, %v6332
  %6334 = vmatmul.bf16.gmra.mxu0 %v5554
  %v6335 = vpop.f32.mrf.mxu0
  %v6336 = vadd.f32 %v6237, %v6335
  %v6337 = vpop.f32.mrf.mxu0
  %v6338 = vadd.f32 %v6239, %v6337
  %6339 = vmatmul.bf16.gmra.mxu0 %v5561
  %v6340 = vpop.f32.mrf.mxu0
  %v6341 = vadd.f32 %v6242, %v6340
  %v6342 = vpop.f32.mrf.mxu0
  %v6343 = vadd.f32 %v6244, %v6342
  %6344 = vmatmul.bf16.gmra.mxu0 %v5568
  %v6345 = vpop.f32.mrf.mxu0
  %v6346 = vadd.f32 %v6247, %v6345
  %v6347 = vpop.f32.mrf.mxu0
  %v6348 = vadd.f32 %v6249, %v6347
  %6349 = vmatmul.bf16.gmra.mxu0 %v5575
  %v6350 = vpop.f32.mrf.mxu0
  %v6351 = vadd.f32 %v6252, %v6350
  %v6352 = vpop.f32.mrf.mxu0
  %v6353 = vadd.f32 %v6254, %v6352
  %6354 = vmatmul.bf16.gmra.mxu0 %v5582
  %v6355 = vpop.f32.mrf.mxu0
  %v6356 = vadd.f32 %v6257, %v6355
  %v6357 = vpop.f32.mrf.mxu0
  %v6358 = vadd.f32 %v6259, %v6357
  %6359 = vmatmul.bf16.gmra.mxu0 %v5589
  %v6360 = vpop.f32.mrf.mxu0
  %v6361 = vadd.f32 %v6262, %v6360
  %v6362 = vpop.f32.mrf.mxu0
  %v6363 = vadd.f32 %v6264, %v6362
  %6364 = vmatmul.bf16.gmra.mxu0 %v5596
  %v6365 = vpop.f32.mrf.mxu0
  %v6366 = vadd.f32 %v6267, %v6365
  %v6367 = vpop.f32.mrf.mxu0
  %v6368 = vadd.f32 %v6269, %v6367
  %6369 = vmatmul.bf16.gmra.mxu0 %v5603
  %v6370 = vpop.f32.mrf.mxu0
  %v6371 = vadd.f32 %v6272, %v6370
  %v6372 = vpop.f32.mrf.mxu0
  %v6373 = vadd.f32 %v6274, %v6372
  %6374 = vmatmul.bf16.gmra.mxu0 %v5610
  %v6375 = vpop.f32.mrf.mxu0
  %v6376 = vadd.f32 %v6277, %v6375
  %v6377 = vpop.f32.mrf.mxu0
  %v6378 = vadd.f32 %v6279, %v6377
  %6379 = vmatmul.bf16.gmra.mxu0 %v5617
  %v6380 = vpop.f32.mrf.mxu0
  %v6381 = vadd.f32 %v6282, %v6380
  %v6382 = vpop.f32.mrf.mxu0
  %v6383 = vadd.f32 %v6284, %v6382
  %6384 = vmatmul.bf16.gmra.mxu0 %v5624
  %v6385 = vpop.f32.mrf.mxu0
  %v6386 = vadd.f32 %v6287, %v6385
  %v6387 = vpop.f32.mrf.mxu0
  %v6388 = vadd.f32 %v6289, %v6387
  %6389 = vmatmul.bf16.gmra.mxu0 %v5631
  %v6390 = vpop.f32.mrf.mxu0
  %v6391 = vadd.f32 %v6292, %v6390
  %v6392 = vpop.f32.mrf.mxu0
  %v6393 = vadd.f32 %v6294, %v6392
  %6394 = vmatmul.bf16.gmra.mxu0 %v5638
  %v6395 = vpop.f32.mrf.mxu0
  %v6396 = vadd.f32 %v6297, %v6395
  %v6397 = vpop.f32.mrf.mxu0
  %v6398 = vadd.f32 %v6299, %v6397
  %6399 = vmatmul.bf16.gmra.mxu0 %v5645
  %v6400 = vpop.f32.mrf.mxu0
  %v6401 = vadd.f32 %v6302, %v6400
  %v6402 = vpop.f32.mrf.mxu0
  %v6403 = vadd.f32 %v6304, %v6402
  %6404 = vmatmul.bf16.gmra.mxu0 %v5652
  %v6405 = vpop.f32.mrf.mxu0
  %v6406 = vadd.f32 %v6307, %v6405
  %v6407 = vpop.f32.mrf.mxu0
  %v6408 = vadd.f32 %v6309, %v6407
  %6409 = vdwg.mxu0
  %6410 = vmatpush.bf16.msra.mxu0 0
  %6411 = vmatpush.bf16.msra.mxu0 0
  %6412 = vmatpush.bf16.msra.mxu0 0
  %6413 = vmatpush.bf16.msra.mxu0 0
  %6414 = vmatpush.bf16.msra.mxu0 0
  %6415 = vmatpush.bf16.msra.mxu0 0
  %6416 = vmatpush.bf16.msra.mxu0 %v1147
  %6417 = vmatpush.bf16.msra.mxu0 %v1146
  %6418 = vmatmul.bf16.gmra.mxu0 %v5763
  %v6419 = vpop.f32.mrf.mxu0
  %v6420 = vadd.f32 %v6321, %v6419
  %v6421 = vpop.f32.mrf.mxu0
  %v6422 = vadd.f32 %v6323, %v6421
  %6423 = vmatmul.bf16.gmra.mxu0 %v5766
  %v6424 = vpop.f32.mrf.mxu0
  %v6425 = vadd.f32 %v6326, %v6424
  %v6426 = vpop.f32.mrf.mxu0
  %v6427 = vadd.f32 %v6328, %v6426
  %6428 = vmatmul.bf16.gmra.mxu0 %v5769
  %v6429 = vpop.f32.mrf.mxu0
  %v6430 = vadd.f32 %v6331, %v6429
  %v6431 = vpop.f32.mrf.mxu0
  %v6432 = vadd.f32 %v6333, %v6431
  %6433 = vmatmul.bf16.gmra.mxu0 %v5772
  %v6434 = vpop.f32.mrf.mxu0
  %v6435 = vadd.f32 %v6336, %v6434
  %v6436 = vpop.f32.mrf.mxu0
  %v6437 = vadd.f32 %v6338, %v6436
  %6438 = vmatmul.bf16.gmra.mxu0 %v5775
  %v6439 = vpop.f32.mrf.mxu0
  %v6440 = vadd.f32 %v6341, %v6439
  %v6441 = vpop.f32.mrf.mxu0
  %v6442 = vadd.f32 %v6343, %v6441
  %6443 = vmatmul.bf16.gmra.mxu0 %v5778
  %v6444 = vpop.f32.mrf.mxu0
  %v6445 = vadd.f32 %v6346, %v6444
  %v6446 = vpop.f32.mrf.mxu0
  %v6447 = vadd.f32 %v6348, %v6446
  %6448 = vmatmul.bf16.gmra.mxu0 %v5781
  %v6449 = vpop.f32.mrf.mxu0
  %v6450 = vadd.f32 %v6351, %v6449
  %v6451 = vpop.f32.mrf.mxu0
  %v6452 = vadd.f32 %v6353, %v6451
  %6453 = vmatmul.bf16.gmra.mxu0 %v5784
  %v6454 = vpop.f32.mrf.mxu0
  %v6455 = vadd.f32 %v6356, %v6454
  %v6456 = vpop.f32.mrf.mxu0
  %v6457 = vadd.f32 %v6358, %v6456
  %6458 = vmatmul.bf16.gmra.mxu0 %v5787
  %v6459 = vpop.f32.mrf.mxu0
  %v6460 = vadd.f32 %v6361, %v6459
  %v6461 = vpop.f32.mrf.mxu0
  %v6462 = vadd.f32 %v6363, %v6461
  %6463 = vmatmul.bf16.gmra.mxu0 %v5790
  %v6464 = vpop.f32.mrf.mxu0
  %v6465 = vadd.f32 %v6366, %v6464
  %v6466 = vpop.f32.mrf.mxu0
  %v6467 = vadd.f32 %v6368, %v6466
  %6468 = vmatmul.bf16.gmra.mxu0 %v5793
  %v6469 = vpop.f32.mrf.mxu0
  %v6470 = vadd.f32 %v6371, %v6469
  %v6471 = vpop.f32.mrf.mxu0
  %v6472 = vadd.f32 %v6373, %v6471
  %6473 = vmatmul.bf16.gmra.mxu0 %v5796
  %v6474 = vpop.f32.mrf.mxu0
  %v6475 = vadd.f32 %v6376, %v6474
  %v6476 = vpop.f32.mrf.mxu0
  %v6477 = vadd.f32 %v6378, %v6476
  %6478 = vmatmul.bf16.gmra.mxu0 %v5799
  %v6479 = vpop.f32.mrf.mxu0
  %v6480 = vadd.f32 %v6381, %v6479
  %v6481 = vpop.f32.mrf.mxu0
  %v6482 = vadd.f32 %v6383, %v6481
  %6483 = vmatmul.bf16.gmra.mxu0 %v5802
  %v6484 = vpop.f32.mrf.mxu0
  %v6485 = vadd.f32 %v6386, %v6484
  %v6486 = vpop.f32.mrf.mxu0
  %v6487 = vadd.f32 %v6388, %v6486
  %6488 = vmatmul.bf16.gmra.mxu0 %v5805
  %v6489 = vpop.f32.mrf.mxu0
  %v6490 = vadd.f32 %v6391, %v6489
  %v6491 = vpop.f32.mrf.mxu0
  %v6492 = vadd.f32 %v6393, %v6491
  %6493 = vmatmul.bf16.gmra.mxu0 %v5808
  %v6494 = vpop.f32.mrf.mxu0
  %v6495 = vadd.f32 %v6396, %v6494
  %v6496 = vpop.f32.mrf.mxu0
  %v6497 = vadd.f32 %v6398, %v6496
  %6498 = vmatmul.bf16.gmra.mxu0 %v5811
  %v6499 = vpop.f32.mrf.mxu0
  %v6500 = vadd.f32 %v6401, %v6499
  %v6501 = vpop.f32.mrf.mxu0
  %v6502 = vadd.f32 %v6403, %v6501
  %6503 = vmatmul.bf16.gmra.mxu0 %v5814
  %v6504 = vpop.f32.mrf.mxu0
  %v6505 = vadd.f32 %v6406, %v6504
  %v6506 = vpop.f32.mrf.mxu0
  %v6507 = vadd.f32 %v6408, %v6506
  %6508 = vdwg.mxu0
  %v6509 = vmax.f32 %v1857, %v3378
  %v6510 = vmax.f32 %v1859, %v3380
  %v6511 = vmax.f32 %v1862, %v3383
  %v6512 = vmax.f32 %v1864, %v3385
  %v6513 = vmax.f32 %v1867, %v3388
  %v6514 = vmax.f32 %v1869, %v3390
  %v6515 = vmax.f32 %v1872, %v3393
  %v6516 = vmax.f32 %v1874, %v3395
  %v6517 = vmax.f32 %v1877, %v3398
  %v6518 = vmax.f32 %v1879, %v3400
  %v6519 = vmax.f32 %v1882, %v3403
  %v6520 = vmax.f32 %v1884, %v3405
  %v6521 = vmax.f32 %v1887, %v3408
  %v6522 = vmax.f32 %v1889, %v3410
  %v6523 = vmax.f32 %v1892, %v3413
  %v6524 = vmax.f32 %v1894, %v3415
  %v6525 = vmax.f32 %v1897, %v3418
  %v6526 = vmax.f32 %v1899, %v3420
  %v6527 = vmax.f32 %v1902, %v3423
  %v6528 = vmax.f32 %v1904, %v3425
  %v6529 = vmax.f32 %v1907, %v3428
  %v6530 = vmax.f32 %v1909, %v3430
  %v6531 = vmax.f32 %v1912, %v3433
  %v6532 = vmax.f32 %v1914, %v3435
  %v6533 = vmax.f32 %v1917, %v3438
  %v6534 = vmax.f32 %v1919, %v3440
  %v6535 = vmax.f32 %v1922, %v3443
  %v6536 = vmax.f32 %v1924, %v3445
  %v6537 = vmax.f32 %v1927, %v3448
  %v6538 = vmax.f32 %v1929, %v3450
  %v6539 = vmax.f32 %v1932, %v3453
  %v6540 = vmax.f32 %v1934, %v3455
  %v6541 = vmax.f32 %v1937, %v3458
  %v6542 = vmax.f32 %v1939, %v3460
  %v6543 = vmax.f32 %v1942, %v3463
  %v6544 = vmax.f32 %v1944, %v3465
  %v6545 = vmax.f32 %v4899, %v6420
  %v6546 = vmax.f32 %v4901, %v6422
  %v6547 = vmax.f32 %v4904, %v6425
  %v6548 = vmax.f32 %v4906, %v6427
  %v6549 = vmax.f32 %v4909, %v6430
  %v6550 = vmax.f32 %v4911, %v6432
  %v6551 = vmax.f32 %v4914, %v6435
  %v6552 = vmax.f32 %v4916, %v6437
  %v6553 = vmax.f32 %v4919, %v6440
  %v6554 = vmax.f32 %v4921, %v6442
  %v6555 = vmax.f32 %v4924, %v6445
  %v6556 = vmax.f32 %v4926, %v6447
  %v6557 = vmax.f32 %v4929, %v6450
  %v6558 = vmax.f32 %v4931, %v6452
  %v6559 = vmax.f32 %v4934, %v6455
  %v6560 = vmax.f32 %v4936, %v6457
  %v6561 = vmax.f32 %v4939, %v6460
  %v6562 = vmax.f32 %v4941, %v6462
  %v6563 = vmax.f32 %v4944, %v6465
  %v6564 = vmax.f32 %v4946, %v6467
  %v6565 = vmax.f32 %v4949, %v6470
  %v6566 = vmax.f32 %v4951, %v6472
  %v6567 = vmax.f32 %v4954, %v6475
  %v6568 = vmax.f32 %v4956, %v6477
  %v6569 = vmax.f32 %v4959, %v6480
  %v6570 = vmax.f32 %v4961, %v6482
  %v6571 = vmax.f32 %v4964, %v6485
  %v6572 = vmax.f32 %v4966, %v6487
  %v6573 = vmax.f32 %v4969, %v6490
  %v6574 = vmax.f32 %v4971, %v6492
  %v6575 = vmax.f32 %v4974, %v6495
  %v6576 = vmax.f32 %v4976, %v6497
  %v6577 = vmax.f32 %v4979, %v6500
  %v6578 = vmax.f32 %v4981, %v6502
  %v6579 = vmax.f32 %v4984, %v6505
  %v6580 = vmax.f32 %v4986, %v6507
  %v6581 = vmax.f32 %v6509, %v6545
  %v6582 = vmax.f32 %v6510, %v6546
  %v6583 = vmax.f32 %v6511, %v6547
  %v6584 = vmax.f32 %v6512, %v6548
  %v6585 = vmax.f32 %v6513, %v6549
  %v6586 = vmax.f32 %v6514, %v6550
  %v6587 = vmax.f32 %v6515, %v6551
  %v6588 = vmax.f32 %v6516, %v6552
  %v6589 = vmax.f32 %v6517, %v6553
  %v6590 = vmax.f32 %v6518, %v6554
  %v6591 = vmax.f32 %v6519, %v6555
  %v6592 = vmax.f32 %v6520, %v6556
  %v6593 = vmax.f32 %v6521, %v6557
  %v6594 = vmax.f32 %v6522, %v6558
  %v6595 = vmax.f32 %v6523, %v6559
  %v6596 = vmax.f32 %v6524, %v6560
  %v6597 = vmax.f32 %v6525, %v6561
  %v6598 = vmax.f32 %v6526, %v6562
  %v6599 = vmax.f32 %v6527, %v6563
  %v6600 = vmax.f32 %v6528, %v6564
  %v6601 = vmax.f32 %v6529, %v6565
  %v6602 = vmax.f32 %v6530, %v6566
  %v6603 = vmax.f32 %v6531, %v6567
  %v6604 = vmax.f32 %v6532, %v6568
  %v6605 = vmax.f32 %v6533, %v6569
  %v6606 = vmax.f32 %v6534, %v6570
  %v6607 = vmax.f32 %v6535, %v6571
  %v6608 = vmax.f32 %v6536, %v6572
  %v6609 = vmax.f32 %v6537, %v6573
  %v6610 = vmax.f32 %v6538, %v6574
  %v6611 = vmax.f32 %v6539, %v6575
  %v6612 = vmax.f32 %v6540, %v6576
  %v6613 = vmax.f32 %v6541, %v6577
  %v6614 = vmax.f32 %v6542, %v6578
  %v6615 = vmax.f32 %v6543, %v6579
  %v6616 = vmax.f32 %v6544, %v6580
  %v6617 = vld [vmem:[%s5] sm:$0x1]
  %v6619 = vperm.slane %v6617, 0
  %v6621 = vadd.f32 %v6581, %v6619
  %v6622 = vadd.f32 %v6582, %v6619
  %v6623 = vadd.f32 %v6583, %v6619
  %v6624 = vadd.f32 %v6584, %v6619
  %v6625 = vadd.f32 %v6585, %v6619
  %v6626 = vadd.f32 %v6586, %v6619
  %v6627 = vadd.f32 %v6587, %v6619
  %v6628 = vadd.f32 %v6588, %v6619
  %v6629 = vadd.f32 %v6589, %v6619
  %v6630 = vadd.f32 %v6590, %v6619
  %v6631 = vadd.f32 %v6591, %v6619
  %v6632 = vadd.f32 %v6592, %v6619
  %v6633 = vadd.f32 %v6593, %v6619
  %v6634 = vadd.f32 %v6594, %v6619
  %v6635 = vadd.f32 %v6595, %v6619
  %v6636 = vadd.f32 %v6596, %v6619
  %v6637 = vadd.f32 %v6597, %v6619
  %v6638 = vadd.f32 %v6598, %v6619
  %v6639 = vadd.f32 %v6599, %v6619
  %v6640 = vadd.f32 %v6600, %v6619
  %v6641 = vadd.f32 %v6601, %v6619
  %v6642 = vadd.f32 %v6602, %v6619
  %v6643 = vadd.f32 %v6603, %v6619
  %v6644 = vadd.f32 %v6604, %v6619
  %v6645 = vadd.f32 %v6605, %v6619
  %v6646 = vadd.f32 %v6606, %v6619
  %v6647 = vadd.f32 %v6607, %v6619
  %v6648 = vadd.f32 %v6608, %v6619
  %v6649 = vadd.f32 %v6609, %v6619
  %v6650 = vadd.f32 %v6610, %v6619
  %v6651 = vadd.f32 %v6611, %v6619
  %v6652 = vadd.f32 %v6612, %v6619
  %v6653 = vadd.f32 %v6613, %v6619
  %v6654 = vadd.f32 %v6614, %v6619
  %v6655 = vadd.f32 %v6615, %v6619
  %v6656 = vadd.f32 %v6616, %v6619
  %6657 = vst.msk [vmem:[%s6] sm:$0xff] %vm1198, %v6621
  %6658 = vst.msk [vmem:[%s6 + $0x8] sm:$0xff] %vm1198, %v6622
  %6659 = vst.msk [vmem:[%s6 + $0x10] sm:$0xff] %vm1198, %v6623
  %6660 = vst.msk [vmem:[%s6 + $0x18] sm:$0xff] %vm1198, %v6624
  %6661 = vst.msk [vmem:[%s6 + $0x20] sm:$0xff] %vm1198, %v6625
  %6662 = vst.msk [vmem:[%s6 + $0x28] sm:$0xff] %vm1198, %v6626
  %6663 = vst.msk [vmem:[%s6 + $0x30] sm:$0xff] %vm1198, %v6627
  %6664 = vst.msk [vmem:[%s6 + $0x38] sm:$0xff] %vm1198, %v6628
  %6665 = vst.msk [vmem:[%s6 + $0x40] sm:$0xff] %vm1198, %v6629
  %6666 = vst.msk [vmem:[%s6 + $0x48] sm:$0xff] %vm1198, %v6630
  %6667 = vst.msk [vmem:[%s6 + $0x50] sm:$0xff] %vm1198, %v6631
  %6668 = vst.msk [vmem:[%s6 + $0x58] sm:$0xff] %vm1198, %v6632
  %6669 = vst.msk [vmem:[%s6 + $0x60] sm:$0xff] %vm1198, %v6633
  %6670 = vst.msk [vmem:[%s6 + $0x68] sm:$0xff] %vm1198, %v6634
  %6671 = vst.msk [vmem:[%s6 + $0x70] sm:$0xff] %vm1198, %v6635
  %6672 = vst.msk [vmem:[%s6 + $0x78] sm:$0xff] %vm1198, %v6636
  %6673 = vst.msk [vmem:[%s6 + $0x80] sm:$0xff] %vm1198, %v6637
  %6674 = vst.msk [vmem:[%s6 + $0x88] sm:$0xff] %vm1198, %v6638
  %6675 = vst.msk [vmem:[%s6 + $0x90] sm:$0xff] %vm1198, %v6639
  %6676 = vst.msk [vmem:[%s6 + $0x98] sm:$0xff] %vm1198, %v6640
  %6677 = vst.msk [vmem:[%s6 + $0xa0] sm:$0xff] %vm1198, %v6641
  %6678 = vst.msk [vmem:[%s6 + $0xa8] sm:$0xff] %vm1198, %v6642
  %6679 = vst.msk [vmem:[%s6 + $0xb0] sm:$0xff] %vm1198, %v6643
  %6680 = vst.msk [vmem:[%s6 + $0xb8] sm:$0xff] %vm1198, %v6644
  %6681 = vst.msk [vmem:[%s6 + $0xc0] sm:$0xff] %vm1198, %v6645
  %6682 = vst.msk [vmem:[%s6 + $0xc8] sm:$0xff] %vm1198, %v6646
  %6683 = vst.msk [vmem:[%s6 + $0xd0] sm:$0xff] %vm1198, %v6647
  %6684 = vst.msk [vmem:[%s6 + $0xd8] sm:$0xff] %vm1198, %v6648
  %6685 = vst.msk [vmem:[%s6 + $0xe0] sm:$0xff] %vm1198, %v6649
  %6686 = vst.msk [vmem:[%s6 + $0xe8] sm:$0xff] %vm1198, %v6650
  %6687 = vst.msk [vmem:[%s6 + $0xf0] sm:$0xff] %vm1198, %v6651
  %6688 = vst.msk [vmem:[%s6 + $0xf8] sm:$0xff] %vm1198, %v6652
  %6689 = vst.msk [vmem:[%s6 + $0x100] sm:$0xff] %vm1198, %v6653
  %6690 = vst.msk [vmem:[%s6 + $0x108] sm:$0xff] %vm1198, %v6654
  %6691 = vst.msk [vmem:[%s6 + $0x110] sm:$0xff] %vm1198, %v6655
  %6692 = vst.msk [vmem:[%s6 + $0x118] sm:$0xff] %vm1198, %v6656
  // Predicated region
  $region26: #{pathfinder_forward.6} parent=0 // pred_check
    _
  $region27: #{pathfinder_forward.6} parent=0 // pred_check_branch
    %6694 = sbr.rel (0) target = $region29
  $region28: #{pathfinder_forward.6} parent=0 // pred_region
    _
  $region29: #{pathfinder_forward.6} parent=0 // pred_fallthru
    _
  // Predicated region
  $region30: #{pathfinder_forward.6} parent=0 // pred_check
    _
  $region31: #{pathfinder_forward.6} parent=0 // pred_check_branch
    %6696 = sbr.rel (0) target = $region33
  $region32: #{pathfinder_forward.6} parent=0 // pred_region
    _
  $region33: #{pathfinder_forward.6} parent=0 // pred_fallthru
    _

// kernel: pathfinder_forward.8
$region0: #{pathfinder_forward.8}
  #allocation0 [shape = 'u32[]', space=smem, size = 0x4, offset = 0x4, fixed_abs, tag = 'smem constant byte address 0x4 - core index']
  #allocation1 [shape = 'u32[72,128]{1,0:T(1,128)}', space=vmem, size = 0x9000, scoped, tag = 'internal scratch']
  %s0 = inlined_call_operand.vmem [shape: bf16[8,1600], index: 0, kind: input, shape index: {}]
  %s1 = inlined_call_operand.vmem [shape: bf16[8,1600], index: 1, kind: input, shape index: {}]
  %s2 = inlined_call_operand.vmem [shape: bf16[8,1600], index: 2, kind: input, shape index: {}]
  %s3 = inlined_call_operand.vmem [shape: bf16[8,1600], index: 3, kind: input, shape index: {}]
  %s4 = inlined_call_operand.vmem [shape: bf16[1600,64], index: 4, kind: input, shape index: {}]
  %s5 = inlined_call_operand.vmem [shape: f32[1,64], index: 5, kind: input, shape index: {}]
  %s6 = inlined_call_operand.vmem [shape: f32[8,64], index: 6, kind: output, shape index: {}]
  %s7 = sld [smem:[#allocation0]]
  $region34: #{pathfinder_forward.8} parent=0
    _
  %s9 = ssub.s32 1, %s7
  %s10 = scalar_select 0, %s9, %s7
  // Predicated region
  $region2: #{pathfinder_forward.8} parent=0 // pred_check
    _
  $region3: #{pathfinder_forward.8} parent=0 // pred_check_branch
    %12 = sbr.rel (0) target = $region5
  $region4: #{pathfinder_forward.8} parent=0 // pred_region
    _
  $region5: #{pathfinder_forward.8} parent=0 // pred_fallthru
    _
  // Predicated region
  $region6: #{pathfinder_forward.8} parent=0 // pred_check
    _
  $region7: #{pathfinder_forward.8} parent=0 // pred_check_branch
    %14 = sbr.rel (0) target = $region9
  $region8: #{pathfinder_forward.8} parent=0 // pred_region
    _
  $region9: #{pathfinder_forward.8} parent=0 // pred_fallthru
    _
  // Predicated region
  $region10: #{pathfinder_forward.8} parent=0 // pred_check
    _
  $region11: #{pathfinder_forward.8} parent=0 // pred_check_branch
    %16 = sbr.rel (0) target = $region13
  $region12: #{pathfinder_forward.8} parent=0 // pred_region
    _
  $region13: #{pathfinder_forward.8} parent=0 // pred_fallthru
    _
  // Predicated region
  $region14: #{pathfinder_forward.8} parent=0 // pred_check
    _
  $region15: #{pathfinder_forward.8} parent=0 // pred_check_branch
    %18 = sbr.rel (0) target = $region17
  $region16: #{pathfinder_forward.8} parent=0 // pred_region
    _
  $region17: #{pathfinder_forward.8} parent=0 // pred_fallthru
    _
  // Predicated region
  $region18: #{pathfinder_forward.8} parent=0 // pred_check
    _
  $region19: #{pathfinder_forward.8} parent=0 // pred_check_branch
    %20 = sbr.rel (0) target = $region21
  $region20: #{pathfinder_forward.8} parent=0 // pred_region
    _
  $region21: #{pathfinder_forward.8} parent=0 // pred_fallthru
    _
  // Predicated region
  $region22: #{pathfinder_forward.8} parent=0 // pred_check
    _
  $region23: #{pathfinder_forward.8} parent=0 // pred_check_branch
    %22 = sbr.rel (0) target = $region25
  $region24: #{pathfinder_forward.8} parent=0 // pred_region
    _
  $region25: #{pathfinder_forward.8} parent=0 // pred_fallthru
    _
  %v24 = vld [vmem:[%s4] sm:$0xf]
  %v25 = vld [vmem:[%s4 + $0x4] sm:$0xf]
  %v26 = vld [vmem:[%s4 + $0x8] sm:$0xf]
  %v27 = vld [vmem:[%s4 + $0xc] sm:$0xf]
  %v28 = vld [vmem:[%s4 + $0x10] sm:$0xf]
  %v29 = vld [vmem:[%s4 + $0x14] sm:$0xf]
  %v30 = vld [vmem:[%s4 + $0x18] sm:$0xf]
  %v31 = vld [vmem:[%s4 + $0x1c] sm:$0xf]
  %v32 = vld [vmem:[%s4 + $0x20] sm:$0xf]
  %v33 = vld [vmem:[%s4 + $0x24] sm:$0xf]
  %v34 = vld [vmem:[%s4 + $0x28] sm:$0xf]
  %v35 = vld [vmem:[%s4 + $0x2c] sm:$0xf]
  %v36 = vld [vmem:[%s4 + $0x30] sm:$0xf]
  %v37 = vld [vmem:[%s4 + $0x34] sm:$0xf]
  %v38 = vld [vmem:[%s4 + $0x38] sm:$0xf]
  %v39 = vld [vmem:[%s4 + $0x3c] sm:$0xf]
  %v40 = vld [vmem:[%s4 + $0x40] sm:$0xf]
  %v41 = vld [vmem:[%s4 + $0x44] sm:$0xf]
  %v42 = vld [vmem:[%s4 + $0x48] sm:$0xf]
  %v43 = vld [vmem:[%s4 + $0x4c] sm:$0xf]
  %v44 = vld [vmem:[%s4 + $0x50] sm:$0xf]
  %v45 = vld [vmem:[%s4 + $0x54] sm:$0xf]
  %v46 = vld [vmem:[%s4 + $0x58] sm:$0xf]
  %v47 = vld [vmem:[%s4 + $0x5c] sm:$0xf]
  %v48 = vld [vmem:[%s4 + $0x60] sm:$0xf]
  %v49 = vld [vmem:[%s4 + $0x64] sm:$0xf]
  %v50 = vld [vmem:[%s4 + $0x68] sm:$0xf]
  %v51 = vld [vmem:[%s4 + $0x6c] sm:$0xf]
  %v52 = vld [vmem:[%s4 + $0x70] sm:$0xf]
  %v53 = vld [vmem:[%s4 + $0x74] sm:$0xf]
  %v54 = vld [vmem:[%s4 + $0x78] sm:$0xf]
  %v55 = vld [vmem:[%s4 + $0x7c] sm:$0xf]
  %v56 = vld [vmem:[%s4 + $0x80] sm:$0xf]
  %v57 = vld [vmem:[%s4 + $0x84] sm:$0xf]
  %v58 = vld [vmem:[%s4 + $0x88] sm:$0xf]
  %v59 = vld [vmem:[%s4 + $0x8c] sm:$0xf]
  %v60 = vld [vmem:[%s4 + $0x90] sm:$0xf]
  %v61 = vld [vmem:[%s4 + $0x94] sm:$0xf]
  %v62 = vld [vmem:[%s4 + $0x98] sm:$0xf]
  %v63 = vld [vmem:[%s4 + $0x9c] sm:$0xf]
  %v64 = vld [vmem:[%s4 + $0xa0] sm:$0xf]
  %v65 = vld [vmem:[%s4 + $0xa4] sm:$0xf]
  %v66 = vld [vmem:[%s4 + $0xa8] sm:$0xf]
  %v67 = vld [vmem:[%s4 + $0xac] sm:$0xf]
  %v68 = vld [vmem:[%s4 + $0xb0] sm:$0xf]
  %v69 = vld [vmem:[%s4 + $0xb4] sm:$0xf]
  %v70 = vld [vmem:[%s4 + $0xb8] sm:$0xf]
  %v71 = vld [vmem:[%s4 + $0xbc] sm:$0xf]
  %v72 = vld [vmem:[%s4 + $0xc0] sm:$0xf]
  %v73 = vld [vmem:[%s4 + $0xc4] sm:$0xf]
  %v74 = vld [vmem:[%s4 + $0xc8] sm:$0xf]
  %v75 = vld [vmem:[%s4 + $0xcc] sm:$0xf]
  %v76 = vld [vmem:[%s4 + $0xd0] sm:$0xf]
  %v77 = vld [vmem:[%s4 + $0xd4] sm:$0xf]
  %v78 = vld [vmem:[%s4 + $0xd8] sm:$0xf]
  %v79 = vld [vmem:[%s4 + $0xdc] sm:$0xf]
  %v80 = vld [vmem:[%s4 + $0xe0] sm:$0xf]
  %v81 = vld [vmem:[%s4 + $0xe4] sm:$0xf]
  %v82 = vld [vmem:[%s4 + $0xe8] sm:$0xf]
  %v83 = vld [vmem:[%s4 + $0xec] sm:$0xf]
  %v84 = vld [vmem:[%s4 + $0xf0] sm:$0xf]
  %v85 = vld [vmem:[%s4 + $0xf4] sm:$0xf]
  %v86 = vld [vmem:[%s4 + $0xf8] sm:$0xf]
  %v87 = vld [vmem:[%s4 + $0xfc] sm:$0xf]
  %v88 = vld [vmem:[%s4 + $0x100] sm:$0xf]
  %v89 = vld [vmem:[%s4 + $0x104] sm:$0xf]
  %v90 = vld [vmem:[%s4 + $0x108] sm:$0xf]
  %v91 = vld [vmem:[%s4 + $0x10c] sm:$0xf]
  %v92 = vld [vmem:[%s4 + $0x110] sm:$0xf]
  %v93 = vld [vmem:[%s4 + $0x114] sm:$0xf]
  %v94 = vld [vmem:[%s4 + $0x118] sm:$0xf]
  %v95 = vld [vmem:[%s4 + $0x11c] sm:$0xf]
  %v96 = vld [vmem:[%s4 + $0x120] sm:$0xf]
  %v97 = vld [vmem:[%s4 + $0x124] sm:$0xf]
  %v98 = vld [vmem:[%s4 + $0x128] sm:$0xf]
  %v99 = vld [vmem:[%s4 + $0x12c] sm:$0xf]
  %v100 = vld [vmem:[%s4 + $0x130] sm:$0xf]
  %v101 = vld [vmem:[%s4 + $0x134] sm:$0xf]
  %v102 = vld [vmem:[%s4 + $0x138] sm:$0xf]
  %v103 = vld [vmem:[%s4 + $0x13c] sm:$0xf]
  %v104 = vld [vmem:[%s4 + $0x140] sm:$0xf]
  %v105 = vld [vmem:[%s4 + $0x144] sm:$0xf]
  %v106 = vld [vmem:[%s4 + $0x148] sm:$0xf]
  %v107 = vld [vmem:[%s4 + $0x14c] sm:$0xf]
  %v108 = vld [vmem:[%s4 + $0x150] sm:$0xf]
  %v109 = vld [vmem:[%s4 + $0x154] sm:$0xf]
  %v110 = vld [vmem:[%s4 + $0x158] sm:$0xf]
  %v111 = vld [vmem:[%s4 + $0x15c] sm:$0xf]
  %v112 = vld [vmem:[%s4 + $0x160] sm:$0xf]
  %v113 = vld [vmem:[%s4 + $0x164] sm:$0xf]
  %v114 = vld [vmem:[%s4 + $0x168] sm:$0xf]
  %v115 = vld [vmem:[%s4 + $0x16c] sm:$0xf]
  %v116 = vld [vmem:[%s4 + $0x170] sm:$0xf]
  %v117 = vld [vmem:[%s4 + $0x174] sm:$0xf]
  %v118 = vld [vmem:[%s4 + $0x178] sm:$0xf]
  %v119 = vld [vmem:[%s4 + $0x17c] sm:$0xf]
  %v120 = vld [vmem:[%s4 + $0x180] sm:$0xf]
  %v121 = vld [vmem:[%s4 + $0x184] sm:$0xf]
  %v122 = vld [vmem:[%s4 + $0x188] sm:$0xf]
  %v123 = vld [vmem:[%s4 + $0x18c] sm:$0xf]
  %v124 = vld [vmem:[%s4 + $0x190] sm:$0xf]
  %v125 = vld [vmem:[%s4 + $0x194] sm:$0xf]
  %v126 = vld [vmem:[%s4 + $0x198] sm:$0xf]
  %v127 = vld [vmem:[%s4 + $0x19c] sm:$0xf]
  %v128 = vld [vmem:[%s4 + $0x1a0] sm:$0xf]
  %v129 = vld [vmem:[%s4 + $0x1a4] sm:$0xf]
  %v130 = vld [vmem:[%s4 + $0x1a8] sm:$0xf]
  %v131 = vld [vmem:[%s4 + $0x1ac] sm:$0xf]
  %v132 = vld [vmem:[%s4 + $0x1b0] sm:$0xf]
  %v133 = vld [vmem:[%s4 + $0x1b4] sm:$0xf]
  %v134 = vld [vmem:[%s4 + $0x1b8] sm:$0xf]
  %v135 = vld [vmem:[%s4 + $0x1bc] sm:$0xf]
  %v136 = vld [vmem:[%s4 + $0x1c0] sm:$0xf]
  %v137 = vld [vmem:[%s4 + $0x1c4] sm:$0xf]
  %v138 = vld [vmem:[%s4 + $0x1c8] sm:$0xf]
  %v139 = vld [vmem:[%s4 + $0x1cc] sm:$0xf]
  %v140 = vld [vmem:[%s4 + $0x1d0] sm:$0xf]
  %v141 = vld [vmem:[%s4 + $0x1d4] sm:$0xf]
  %v142 = vld [vmem:[%s4 + $0x1d8] sm:$0xf]
  %v143 = vld [vmem:[%s4 + $0x1dc] sm:$0xf]
  %v144 = vld [vmem:[%s4 + $0x1e0] sm:$0xf]
  %v145 = vld [vmem:[%s4 + $0x1e4] sm:$0xf]
  %v146 = vld [vmem:[%s4 + $0x1e8] sm:$0xf]
  %v147 = vld [vmem:[%s4 + $0x1ec] sm:$0xf]
  %v148 = vld [vmem:[%s4 + $0x1f0] sm:$0xf]
  %v149 = vld [vmem:[%s4 + $0x1f4] sm:$0xf]
  %v150 = vld [vmem:[%s4 + $0x1f8] sm:$0xf]
  %v151 = vld [vmem:[%s4 + $0x1fc] sm:$0xf]
  %v152 = vld [vmem:[%s4 + $0x200] sm:$0xf]
  %v153 = vld [vmem:[%s4 + $0x204] sm:$0xf]
  %v154 = vld [vmem:[%s4 + $0x208] sm:$0xf]
  %v155 = vld [vmem:[%s4 + $0x20c] sm:$0xf]
  %v156 = vld [vmem:[%s4 + $0x210] sm:$0xf]
  %v157 = vld [vmem:[%s4 + $0x214] sm:$0xf]
  %v158 = vld [vmem:[%s4 + $0x218] sm:$0xf]
  %v159 = vld [vmem:[%s4 + $0x21c] sm:$0xf]
  %v160 = vld [vmem:[%s4 + $0x220] sm:$0xf]
  %v161 = vld [vmem:[%s4 + $0x224] sm:$0xf]
  %v162 = vld [vmem:[%s4 + $0x228] sm:$0xf]
  %v163 = vld [vmem:[%s4 + $0x22c] sm:$0xf]
  %v164 = vld [vmem:[%s4 + $0x230] sm:$0xf]
  %v165 = vld [vmem:[%s4 + $0x234] sm:$0xf]
  %v166 = vld [vmem:[%s4 + $0x238] sm:$0xf]
  %v167 = vld [vmem:[%s4 + $0x23c] sm:$0xf]
  %v168 = vld [vmem:[%s4 + $0x240] sm:$0xf]
  %v169 = vld [vmem:[%s4 + $0x244] sm:$0xf]
  %v170 = vld [vmem:[%s4 + $0x248] sm:$0xf]
  %v171 = vld [vmem:[%s4 + $0x24c] sm:$0xf]
  %v172 = vld [vmem:[%s4 + $0x250] sm:$0xf]
  %v173 = vld [vmem:[%s4 + $0x254] sm:$0xf]
  %v174 = vld [vmem:[%s4 + $0x258] sm:$0xf]
  %v175 = vld [vmem:[%s4 + $0x25c] sm:$0xf]
  %v176 = vld [vmem:[%s4 + $0x260] sm:$0xf]
  %v177 = vld [vmem:[%s4 + $0x264] sm:$0xf]
  %v178 = vld [vmem:[%s4 + $0x268] sm:$0xf]
  %v179 = vld [vmem:[%s4 + $0x26c] sm:$0xf]
  %v180 = vld [vmem:[%s4 + $0x270] sm:$0xf]
  %v181 = vld [vmem:[%s4 + $0x274] sm:$0xf]
  %v182 = vld [vmem:[%s4 + $0x278] sm:$0xf]
  %v183 = vld [vmem:[%s4 + $0x27c] sm:$0xf]
  %v184 = vld [vmem:[%s4 + $0x280] sm:$0xf]
  %v185 = vld [vmem:[%s4 + $0x284] sm:$0xf]
  %v186 = vld [vmem:[%s4 + $0x288] sm:$0xf]
  %v187 = vld [vmem:[%s4 + $0x28c] sm:$0xf]
  %v188 = vld [vmem:[%s4 + $0x290] sm:$0xf]
  %v189 = vld [vmem:[%s4 + $0x294] sm:$0xf]
  %v190 = vld [vmem:[%s4 + $0x298] sm:$0xf]
  %v191 = vld [vmem:[%s4 + $0x29c] sm:$0xf]
  %v192 = vld [vmem:[%s4 + $0x2a0] sm:$0xf]
  %v193 = vld [vmem:[%s4 + $0x2a4] sm:$0xf]
  %v194 = vld [vmem:[%s4 + $0x2a8] sm:$0xf]
  %v195 = vld [vmem:[%s4 + $0x2ac] sm:$0xf]
  %v196 = vld [vmem:[%s4 + $0x2b0] sm:$0xf]
  %v197 = vld [vmem:[%s4 + $0x2b4] sm:$0xf]
  %v198 = vld [vmem:[%s4 + $0x2b8] sm:$0xf]
  %v199 = vld [vmem:[%s4 + $0x2bc] sm:$0xf]
  %v200 = vld [vmem:[%s4 + $0x2c0] sm:$0xf]
  %v201 = vld [vmem:[%s4 + $0x2c4] sm:$0xf]
  %v202 = vld [vmem:[%s4 + $0x2c8] sm:$0xf]
  %v203 = vld [vmem:[%s4 + $0x2cc] sm:$0xf]
  %v204 = vld [vmem:[%s4 + $0x2d0] sm:$0xf]
  %v205 = vld [vmem:[%s4 + $0x2d4] sm:$0xf]
  %v206 = vld [vmem:[%s4 + $0x2d8] sm:$0xf]
  %v207 = vld [vmem:[%s4 + $0x2dc] sm:$0xf]
  %v208 = vld [vmem:[%s4 + $0x2e0] sm:$0xf]
  %v209 = vld [vmem:[%s4 + $0x2e4] sm:$0xf]
  %v210 = vld [vmem:[%s4 + $0x2e8] sm:$0xf]
  %v211 = vld [vmem:[%s4 + $0x2ec] sm:$0xf]
  %v212 = vld [vmem:[%s4 + $0x2f0] sm:$0xf]
  %v213 = vld [vmem:[%s4 + $0x2f4] sm:$0xf]
  %v214 = vld [vmem:[%s4 + $0x2f8] sm:$0xf]
  %v215 = vld [vmem:[%s4 + $0x2fc] sm:$0xf]
  %v216 = vld [vmem:[%s4 + $0x300] sm:$0xf]
  %v217 = vld [vmem:[%s4 + $0x304] sm:$0xf]
  %v218 = vld [vmem:[%s4 + $0x308] sm:$0xf]
  %v219 = vld [vmem:[%s4 + $0x30c] sm:$0xf]
  %v220 = vld [vmem:[%s4 + $0x310] sm:$0xf]
  %v221 = vld [vmem:[%s4 + $0x314] sm:$0xf]
  %v222 = vld [vmem:[%s4 + $0x318] sm:$0xf]
  %v223 = vld [vmem:[%s4 + $0x31c] sm:$0xf]
  %v224 = vld [vmem:[%s0] sm:$0xff]
  %v225 = vld [vmem:[%s0 + $0x8] sm:$0xff]
  %v226 = vld [vmem:[%s0 + $0x10] sm:$0xff]
  %v227 = vld [vmem:[%s0 + $0x18] sm:$0xff]
  %v228 = vld [vmem:[%s0 + $0x20] sm:$0xff]
  %v229 = vld [vmem:[%s0 + $0x28] sm:$0xff]
  %v230 = vld [vmem:[%s0 + $0x30] sm:$0xf]
  %v238 = vunpack.c.l.b16 %v224
  %v239 = vunpack.c.h.b16 %v224
  %v240 = vunpack.c.l.b16 %v225
  %v241 = vunpack.c.h.b16 %v225
  %v242 = vunpack.c.l.b16 %v226
  %v243 = vunpack.c.h.b16 %v226
  %v244 = vunpack.c.l.b16 %v227
  %v245 = vunpack.c.h.b16 %v227
  %v246 = vunpack.c.l.b16 %v228
  %v247 = vunpack.c.h.b16 %v228
  %v248 = vunpack.c.l.b16 %v229
  %v249 = vunpack.c.h.b16 %v229
  %v250 = vunpack.c.l.b16 %v230
  %v251 = vpack.c.b16 %v238, %v238
  %v252 = vpack.c.b16 %v239, %v239
  %v253 = vpack.c.b16 %v240, %v240
  %v254 = vpack.c.b16 %v241, %v241
  %v255 = vpack.c.b16 %v242, %v242
  %v256 = vpack.c.b16 %v243, %v243
  %v257 = vpack.c.b16 %v244, %v244
  %v258 = vpack.c.b16 %v245, %v245
  %v259 = vpack.c.b16 %v246, %v246
  %v260 = vpack.c.b16 %v247, %v247
  %v261 = vpack.c.b16 %v248, %v248
  %v262 = vpack.c.b16 %v249, %v249
  %v263 = vpack.c.b16 %v250, %v250
  %v476 = vunpack.c.l.b16 %v24
  %v477 = vunpack.c.l.b16 %v25
  %v478 = vunpack.c.l.b16 %v26
  %v479 = vunpack.c.l.b16 %v27
  %v480 = vunpack.c.l.b16 %v28
  %v481 = vunpack.c.l.b16 %v29
  %v482 = vunpack.c.l.b16 %v30
  %v483 = vunpack.c.l.b16 %v31
  %v484 = vunpack.c.l.b16 %v32
  %v485 = vunpack.c.l.b16 %v33
  %v486 = vunpack.c.l.b16 %v34
  %v487 = vunpack.c.l.b16 %v35
  %v488 = vunpack.c.l.b16 %v36
  %v489 = vunpack.c.l.b16 %v37
  %v490 = vunpack.c.l.b16 %v38
  %v491 = vunpack.c.l.b16 %v39
  %v492 = vunpack.c.l.b16 %v40
  %v493 = vunpack.c.l.b16 %v41
  %v494 = vunpack.c.l.b16 %v42
  %v495 = vunpack.c.l.b16 %v43
  %v496 = vunpack.c.l.b16 %v44
  %v497 = vunpack.c.l.b16 %v45
  %v498 = vunpack.c.l.b16 %v46
  %v499 = vunpack.c.l.b16 %v47
  %v500 = vunpack.c.l.b16 %v48
  %v501 = vunpack.c.l.b16 %v49
  %v502 = vunpack.c.l.b16 %v50
  %v503 = vunpack.c.l.b16 %v51
  %v504 = vunpack.c.l.b16 %v52
  %v505 = vunpack.c.l.b16 %v53
  %v506 = vunpack.c.l.b16 %v54
  %v507 = vunpack.c.l.b16 %v55
  %v508 = vunpack.c.l.b16 %v56
  %v509 = vunpack.c.l.b16 %v57
  %v510 = vunpack.c.l.b16 %v58
  %v511 = vunpack.c.l.b16 %v59
  %v512 = vunpack.c.l.b16 %v60
  %v513 = vunpack.c.l.b16 %v61
  %v514 = vunpack.c.l.b16 %v62
  %v515 = vunpack.c.l.b16 %v63
  %v516 = vunpack.c.l.b16 %v64
  %v517 = vunpack.c.l.b16 %v65
  %v518 = vunpack.c.l.b16 %v66
  %v519 = vunpack.c.l.b16 %v67
  %v520 = vunpack.c.l.b16 %v68
  %v521 = vunpack.c.l.b16 %v69
  %v522 = vunpack.c.l.b16 %v70
  %v523 = vunpack.c.l.b16 %v71
  %v524 = vunpack.c.l.b16 %v72
  %v525 = vunpack.c.l.b16 %v73
  %v526 = vunpack.c.l.b16 %v74
  %v527 = vunpack.c.l.b16 %v75
  %v528 = vunpack.c.l.b16 %v76
  %v529 = vunpack.c.l.b16 %v77
  %v530 = vunpack.c.l.b16 %v78
  %v531 = vunpack.c.l.b16 %v79
  %v532 = vunpack.c.l.b16 %v80
  %v533 = vunpack.c.l.b16 %v81
  %v534 = vunpack.c.l.b16 %v82
  %v535 = vunpack.c.l.b16 %v83
  %v536 = vunpack.c.l.b16 %v84
  %v537 = vunpack.c.l.b16 %v85
  %v538 = vunpack.c.l.b16 %v86
  %v539 = vunpack.c.l.b16 %v87
  %v540 = vunpack.c.l.b16 %v88
  %v541 = vunpack.c.l.b16 %v89
  %v542 = vunpack.c.l.b16 %v90
  %v543 = vunpack.c.l.b16 %v91
  %v544 = vunpack.c.l.b16 %v92
  %v545 = vunpack.c.l.b16 %v93
  %v546 = vunpack.c.l.b16 %v94
  %v547 = vunpack.c.l.b16 %v95
  %v548 = vunpack.c.l.b16 %v96
  %v549 = vunpack.c.l.b16 %v97
  %v550 = vunpack.c.l.b16 %v98
  %v551 = vunpack.c.l.b16 %v99
  %v552 = vunpack.c.l.b16 %v100
  %v553 = vunpack.c.l.b16 %v101
  %v554 = vunpack.c.l.b16 %v102
  %v555 = vunpack.c.l.b16 %v103
  %v556 = vunpack.c.l.b16 %v104
  %v557 = vunpack.c.l.b16 %v105
  %v558 = vunpack.c.l.b16 %v106
  %v559 = vunpack.c.l.b16 %v107
  %v560 = vunpack.c.l.b16 %v108
  %v561 = vunpack.c.l.b16 %v109
  %v562 = vunpack.c.l.b16 %v110
  %v563 = vunpack.c.l.b16 %v111
  %v564 = vunpack.c.l.b16 %v112
  %v565 = vunpack.c.l.b16 %v113
  %v566 = vunpack.c.l.b16 %v114
  %v567 = vunpack.c.l.b16 %v115
  %v568 = vunpack.c.l.b16 %v116
  %v569 = vunpack.c.l.b16 %v117
  %v570 = vunpack.c.l.b16 %v118
  %v571 = vunpack.c.l.b16 %v119
  %v572 = vunpack.c.l.b16 %v120
  %v573 = vunpack.c.l.b16 %v121
  %v574 = vunpack.c.l.b16 %v122
  %v575 = vunpack.c.l.b16 %v123
  %v576 = vunpack.c.l.b16 %v124
  %v577 = vunpack.c.l.b16 %v125
  %v578 = vunpack.c.l.b16 %v126
  %v579 = vunpack.c.l.b16 %v127
  %v580 = vunpack.c.l.b16 %v128
  %v581 = vunpack.c.l.b16 %v129
  %v582 = vunpack.c.l.b16 %v130
  %v583 = vunpack.c.l.b16 %v131
  %v584 = vunpack.c.l.b16 %v132
  %v585 = vunpack.c.l.b16 %v133
  %v586 = vunpack.c.l.b16 %v134
  %v587 = vunpack.c.l.b16 %v135
  %v588 = vunpack.c.l.b16 %v136
  %v589 = vunpack.c.l.b16 %v137
  %v590 = vunpack.c.l.b16 %v138
  %v591 = vunpack.c.l.b16 %v139
  %v592 = vunpack.c.l.b16 %v140
  %v593 = vunpack.c.l.b16 %v141
  %v594 = vunpack.c.l.b16 %v142
  %v595 = vunpack.c.l.b16 %v143
  %v596 = vunpack.c.l.b16 %v144
  %v597 = vunpack.c.l.b16 %v145
  %v598 = vunpack.c.l.b16 %v146
  %v599 = vunpack.c.l.b16 %v147
  %v600 = vunpack.c.l.b16 %v148
  %v601 = vunpack.c.l.b16 %v149
  %v602 = vunpack.c.l.b16 %v150
  %v603 = vunpack.c.l.b16 %v151
  %v604 = vunpack.c.l.b16 %v152
  %v605 = vunpack.c.l.b16 %v153
  %v606 = vunpack.c.l.b16 %v154
  %v607 = vunpack.c.l.b16 %v155
  %v608 = vunpack.c.l.b16 %v156
  %v609 = vunpack.c.l.b16 %v157
  %v610 = vunpack.c.l.b16 %v158
  %v611 = vunpack.c.l.b16 %v159
  %v612 = vunpack.c.l.b16 %v160
  %v613 = vunpack.c.l.b16 %v161
  %v614 = vunpack.c.l.b16 %v162
  %v615 = vunpack.c.l.b16 %v163
  %v616 = vunpack.c.l.b16 %v164
  %v617 = vunpack.c.l.b16 %v165
  %v618 = vunpack.c.l.b16 %v166
  %v619 = vunpack.c.l.b16 %v167
  %v620 = vunpack.c.l.b16 %v168
  %v621 = vunpack.c.l.b16 %v169
  %v622 = vunpack.c.l.b16 %v170
  %v623 = vunpack.c.l.b16 %v171
  %v624 = vunpack.c.l.b16 %v172
  %v625 = vunpack.c.l.b16 %v173
  %v626 = vunpack.c.l.b16 %v174
  %v627 = vunpack.c.l.b16 %v175
  %v628 = vunpack.c.l.b16 %v176
  %v629 = vunpack.c.l.b16 %v177
  %v630 = vunpack.c.l.b16 %v178
  %v631 = vunpack.c.l.b16 %v179
  %v632 = vunpack.c.l.b16 %v180
  %v633 = vunpack.c.l.b16 %v181
  %v634 = vunpack.c.l.b16 %v182
  %v635 = vunpack.c.l.b16 %v183
  %v636 = vunpack.c.l.b16 %v184
  %v637 = vunpack.c.l.b16 %v185
  %v638 = vunpack.c.l.b16 %v186
  %v639 = vunpack.c.l.b16 %v187
  %v640 = vunpack.c.l.b16 %v188
  %v641 = vunpack.c.l.b16 %v189
  %v642 = vunpack.c.l.b16 %v190
  %v643 = vunpack.c.l.b16 %v191
  %v644 = vunpack.c.l.b16 %v192
  %v645 = vunpack.c.l.b16 %v193
  %v646 = vunpack.c.l.b16 %v194
  %v647 = vunpack.c.l.b16 %v195
  %v648 = vunpack.c.l.b16 %v196
  %v649 = vunpack.c.l.b16 %v197
  %v650 = vunpack.c.l.b16 %v198
  %v651 = vunpack.c.l.b16 %v199
  %v652 = vunpack.c.l.b16 %v200
  %v653 = vunpack.c.l.b16 %v201
  %v654 = vunpack.c.l.b16 %v202
  %v655 = vunpack.c.l.b16 %v203
  %v656 = vunpack.c.l.b16 %v204
  %v657 = vunpack.c.l.b16 %v205
  %v658 = vunpack.c.l.b16 %v206
  %v659 = vunpack.c.l.b16 %v207
  %v660 = vunpack.c.l.b16 %v208
  %v661 = vunpack.c.l.b16 %v209
  %v662 = vunpack.c.l.b16 %v210
  %v663 = vunpack.c.l.b16 %v211
  %v664 = vunpack.c.l.b16 %v212
  %v665 = vunpack.c.l.b16 %v213
  %v666 = vunpack.c.l.b16 %v214
  %v667 = vunpack.c.l.b16 %v215
  %v668 = vunpack.c.l.b16 %v216
  %v669 = vunpack.c.l.b16 %v217
  %v670 = vunpack.c.l.b16 %v218
  %v671 = vunpack.c.l.b16 %v219
  %v672 = vunpack.c.l.b16 %v220
  %v673 = vunpack.c.l.b16 %v221
  %v674 = vunpack.c.l.b16 %v222
  %v675 = vunpack.c.l.b16 %v223
  %v676 = vpack.c.b16 %v477, %v476
  %v677 = vpack.c.b16 %v479, %v478
  %v678 = vpack.c.b16 %v481, %v480
  %v679 = vpack.c.b16 %v483, %v482
  %v680 = vpack.c.b16 %v485, %v484
  %v681 = vpack.c.b16 %v487, %v486
  %v682 = vpack.c.b16 %v489, %v488
  %v683 = vpack.c.b16 %v491, %v490
  %v684 = vpack.c.b16 %v493, %v492
  %v685 = vpack.c.b16 %v495, %v494
  %v686 = vpack.c.b16 %v497, %v496
  %v687 = vpack.c.b16 %v499, %v498
  %v688 = vpack.c.b16 %v501, %v500
  %v689 = vpack.c.b16 %v503, %v502
  %v690 = vpack.c.b16 %v505, %v504
  %v691 = vpack.c.b16 %v507, %v506
  %v692 = vpack.c.b16 %v509, %v508
  %v693 = vpack.c.b16 %v511, %v510
  %v694 = vpack.c.b16 %v513, %v512
  %v695 = vpack.c.b16 %v515, %v514
  %v696 = vpack.c.b16 %v517, %v516
  %v697 = vpack.c.b16 %v519, %v518
  %v698 = vpack.c.b16 %v521, %v520
  %v699 = vpack.c.b16 %v523, %v522
  %v700 = vpack.c.b16 %v525, %v524
  %v701 = vpack.c.b16 %v527, %v526
  %v702 = vpack.c.b16 %v529, %v528
  %v703 = vpack.c.b16 %v531, %v530
  %v704 = vpack.c.b16 %v533, %v532
  %v705 = vpack.c.b16 %v535, %v534
  %v706 = vpack.c.b16 %v537, %v536
  %v707 = vpack.c.b16 %v539, %v538
  %v708 = vpack.c.b16 %v541, %v540
  %v709 = vpack.c.b16 %v543, %v542
  %v710 = vpack.c.b16 %v545, %v544
  %v711 = vpack.c.b16 %v547, %v546
  %v712 = vpack.c.b16 %v549, %v548
  %v713 = vpack.c.b16 %v551, %v550
  %v714 = vpack.c.b16 %v553, %v552
  %v715 = vpack.c.b16 %v555, %v554
  %v716 = vpack.c.b16 %v557, %v556
  %v717 = vpack.c.b16 %v559, %v558
  %v718 = vpack.c.b16 %v561, %v560
  %v719 = vpack.c.b16 %v563, %v562
  %v720 = vpack.c.b16 %v565, %v564
  %v721 = vpack.c.b16 %v567, %v566
  %v722 = vpack.c.b16 %v569, %v568
  %v723 = vpack.c.b16 %v571, %v570
  %v724 = vpack.c.b16 %v573, %v572
  %v725 = vpack.c.b16 %v575, %v574
  %v726 = vpack.c.b16 %v577, %v576
  %v727 = vpack.c.b16 %v579, %v578
  %v728 = vpack.c.b16 %v581, %v580
  %v729 = vpack.c.b16 %v583, %v582
  %v730 = vpack.c.b16 %v585, %v584
  %v731 = vpack.c.b16 %v587, %v586
  %v732 = vpack.c.b16 %v589, %v588
  %v733 = vpack.c.b16 %v591, %v590
  %v734 = vpack.c.b16 %v593, %v592
  %v735 = vpack.c.b16 %v595, %v594
  %v736 = vpack.c.b16 %v597, %v596
  %v737 = vpack.c.b16 %v599, %v598
  %v738 = vpack.c.b16 %v601, %v600
  %v739 = vpack.c.b16 %v603, %v602
  %v740 = vpack.c.b16 %v605, %v604
  %v741 = vpack.c.b16 %v607, %v606
  %v742 = vpack.c.b16 %v609, %v608
  %v743 = vpack.c.b16 %v611, %v610
  %v744 = vpack.c.b16 %v613, %v612
  %v745 = vpack.c.b16 %v615, %v614
  %v746 = vpack.c.b16 %v617, %v616
  %v747 = vpack.c.b16 %v619, %v618
  %v748 = vpack.c.b16 %v621, %v620
  %v749 = vpack.c.b16 %v623, %v622
  %v750 = vpack.c.b16 %v625, %v624
  %v751 = vpack.c.b16 %v627, %v626
  %v752 = vpack.c.b16 %v629, %v628
  %v753 = vpack.c.b16 %v631, %v630
  %v754 = vpack.c.b16 %v633, %v632
  %v755 = vpack.c.b16 %v635, %v634
  %v756 = vpack.c.b16 %v637, %v636
  %v757 = vpack.c.b16 %v639, %v638
  %v758 = vpack.c.b16 %v641, %v640
  %v759 = vpack.c.b16 %v643, %v642
  %v760 = vpack.c.b16 %v645, %v644
  %v761 = vpack.c.b16 %v647, %v646
  %v762 = vpack.c.b16 %v649, %v648
  %v763 = vpack.c.b16 %v651, %v650
  %v764 = vpack.c.b16 %v653, %v652
  %v765 = vpack.c.b16 %v655, %v654
  %v766 = vpack.c.b16 %v657, %v656
  %v767 = vpack.c.b16 %v659, %v658
  %v768 = vpack.c.b16 %v661, %v660
  %v769 = vpack.c.b16 %v663, %v662
  %v770 = vpack.c.b16 %v665, %v664
  %v771 = vpack.c.b16 %v667, %v666
  %v772 = vpack.c.b16 %v669, %v668
  %v773 = vpack.c.b16 %v671, %v670
  %v774 = vpack.c.b16 %v673, %v672
  %v775 = vpack.c.b16 %v675, %v674
  %vm876 = vcmask 523264
  %v878 = vsel %vm876, %v263, 0
  %880 = vmatpush.bf16.msra.mxu0 %v683
  %881 = vmatpush.bf16.msra.mxu0 %v682
  %882 = vmatpush.bf16.msra.mxu0 %v681
  %883 = vmatpush.bf16.msra.mxu0 %v680
  %884 = vmatpush.bf16.msra.mxu0 %v679
  %885 = vmatpush.bf16.msra.mxu0 %v678
  %886 = vmatpush.bf16.msra.mxu0 %v677
  %887 = vmatpush.bf16.msra.mxu0 %v676
  %888 = vmatmul.bf16.gmra.mxu0 %v251
  %v889 = vpop.f32.mrf.mxu0
  %v890 = vadd.f32 0.0, %v889
  %v891 = vpop.f32.mrf.mxu0
  %892 = vdwg.mxu0
  %893 = vmatpush.bf16.msra.mxu0 %v691
  %894 = vmatpush.bf16.msra.mxu0 %v690
  %895 = vmatpush.bf16.msra.mxu0 %v689
  %896 = vmatpush.bf16.msra.mxu0 %v688
  %897 = vmatpush.bf16.msra.mxu0 %v687
  %898 = vmatpush.bf16.msra.mxu0 %v686
  %899 = vmatpush.bf16.msra.mxu0 %v685
  %900 = vmatpush.bf16.msra.mxu0 %v684
  %901 = vmatmul.bf16.gmra.mxu0 %v252
  %v902 = vpop.f32.mrf.mxu0
  %v903 = vadd.f32 %v890, %v902
  %v904 = vpop.f32.mrf.mxu0
  %905 = vdwg.mxu0
  %906 = vmatpush.bf16.msra.mxu0 %v699
  %907 = vmatpush.bf16.msra.mxu0 %v698
  %908 = vmatpush.bf16.msra.mxu0 %v697
  %909 = vmatpush.bf16.msra.mxu0 %v696
  %910 = vmatpush.bf16.msra.mxu0 %v695
  %911 = vmatpush.bf16.msra.mxu0 %v694
  %912 = vmatpush.bf16.msra.mxu0 %v693
  %913 = vmatpush.bf16.msra.mxu0 %v692
  %914 = vmatmul.bf16.gmra.mxu0 %v253
  %v915 = vpop.f32.mrf.mxu0
  %v916 = vadd.f32 %v903, %v915
  %v917 = vpop.f32.mrf.mxu0
  %918 = vdwg.mxu0
  %919 = vmatpush.bf16.msra.mxu0 %v707
  %920 = vmatpush.bf16.msra.mxu0 %v706
  %921 = vmatpush.bf16.msra.mxu0 %v705
  %922 = vmatpush.bf16.msra.mxu0 %v704
  %923 = vmatpush.bf16.msra.mxu0 %v703
  %924 = vmatpush.bf16.msra.mxu0 %v702
  %925 = vmatpush.bf16.msra.mxu0 %v701
  %926 = vmatpush.bf16.msra.mxu0 %v700
  %927 = vmatmul.bf16.gmra.mxu0 %v254
  %v928 = vpop.f32.mrf.mxu0
  %v929 = vadd.f32 %v916, %v928
  %v930 = vpop.f32.mrf.mxu0
  %931 = vdwg.mxu0
  %932 = vmatpush.bf16.msra.mxu0 %v715
  %933 = vmatpush.bf16.msra.mxu0 %v714
  %934 = vmatpush.bf16.msra.mxu0 %v713
  %935 = vmatpush.bf16.msra.mxu0 %v712
  %936 = vmatpush.bf16.msra.mxu0 %v711
  %937 = vmatpush.bf16.msra.mxu0 %v710
  %938 = vmatpush.bf16.msra.mxu0 %v709
  %939 = vmatpush.bf16.msra.mxu0 %v708
  %940 = vmatmul.bf16.gmra.mxu0 %v255
  %v941 = vpop.f32.mrf.mxu0
  %v942 = vadd.f32 %v929, %v941
  %v943 = vpop.f32.mrf.mxu0
  %944 = vdwg.mxu0
  %945 = vmatpush.bf16.msra.mxu0 %v723
  %946 = vmatpush.bf16.msra.mxu0 %v722
  %947 = vmatpush.bf16.msra.mxu0 %v721
  %948 = vmatpush.bf16.msra.mxu0 %v720
  %949 = vmatpush.bf16.msra.mxu0 %v719
  %950 = vmatpush.bf16.msra.mxu0 %v718
  %951 = vmatpush.bf16.msra.mxu0 %v717
  %952 = vmatpush.bf16.msra.mxu0 %v716
  %953 = vmatmul.bf16.gmra.mxu0 %v256
  %v954 = vpop.f32.mrf.mxu0
  %v955 = vadd.f32 %v942, %v954
  %v956 = vpop.f32.mrf.mxu0
  %957 = vdwg.mxu0
  %958 = vmatpush.bf16.msra.mxu0 %v731
  %959 = vmatpush.bf16.msra.mxu0 %v730
  %960 = vmatpush.bf16.msra.mxu0 %v729
  %961 = vmatpush.bf16.msra.mxu0 %v728
  %962 = vmatpush.bf16.msra.mxu0 %v727
  %963 = vmatpush.bf16.msra.mxu0 %v726
  %964 = vmatpush.bf16.msra.mxu0 %v725
  %965 = vmatpush.bf16.msra.mxu0 %v724
  %966 = vmatmul.bf16.gmra.mxu0 %v257
  %v967 = vpop.f32.mrf.mxu0
  %v968 = vadd.f32 %v955, %v967
  %v969 = vpop.f32.mrf.mxu0
  %970 = vdwg.mxu0
  %971 = vmatpush.bf16.msra.mxu0 %v739
  %972 = vmatpush.bf16.msra.mxu0 %v738
  %973 = vmatpush.bf16.msra.mxu0 %v737
  %974 = vmatpush.bf16.msra.mxu0 %v736
  %975 = vmatpush.bf16.msra.mxu0 %v735
  %976 = vmatpush.bf16.msra.mxu0 %v734
  %977 = vmatpush.bf16.msra.mxu0 %v733
  %978 = vmatpush.bf16.msra.mxu0 %v732
  %979 = vmatmul.bf16.gmra.mxu0 %v258
  %v980 = vpop.f32.mrf.mxu0
  %v981 = vadd.f32 %v968, %v980
  %v982 = vpop.f32.mrf.mxu0
  %983 = vdwg.mxu0
  %984 = vmatpush.bf16.msra.mxu0 %v747
  %985 = vmatpush.bf16.msra.mxu0 %v746
  %986 = vmatpush.bf16.msra.mxu0 %v745
  %987 = vmatpush.bf16.msra.mxu0 %v744
  %988 = vmatpush.bf16.msra.mxu0 %v743
  %989 = vmatpush.bf16.msra.mxu0 %v742
  %990 = vmatpush.bf16.msra.mxu0 %v741
  %991 = vmatpush.bf16.msra.mxu0 %v740
  %992 = vmatmul.bf16.gmra.mxu0 %v259
  %v993 = vpop.f32.mrf.mxu0
  %v994 = vadd.f32 %v981, %v993
  %v995 = vpop.f32.mrf.mxu0
  %996 = vdwg.mxu0
  %997 = vmatpush.bf16.msra.mxu0 %v755
  %998 = vmatpush.bf16.msra.mxu0 %v754
  %999 = vmatpush.bf16.msra.mxu0 %v753
  %1000 = vmatpush.bf16.msra.mxu0 %v752
  %1001 = vmatpush.bf16.msra.mxu0 %v751
  %1002 = vmatpush.bf16.msra.mxu0 %v750
  %1003 = vmatpush.bf16.msra.mxu0 %v749
  %1004 = vmatpush.bf16.msra.mxu0 %v748
  %1005 = vmatmul.bf16.gmra.mxu0 %v260
  %v1006 = vpop.f32.mrf.mxu0
  %v1007 = vadd.f32 %v994, %v1006
  %v1008 = vpop.f32.mrf.mxu0
  %1009 = vdwg.mxu0
  %1010 = vmatpush.bf16.msra.mxu0 %v763
  %1011 = vmatpush.bf16.msra.mxu0 %v762
  %1012 = vmatpush.bf16.msra.mxu0 %v761
  %1013 = vmatpush.bf16.msra.mxu0 %v760
  %1014 = vmatpush.bf16.msra.mxu0 %v759
  %1015 = vmatpush.bf16.msra.mxu0 %v758
  %1016 = vmatpush.bf16.msra.mxu0 %v757
  %1017 = vmatpush.bf16.msra.mxu0 %v756
  %1018 = vmatmul.bf16.gmra.mxu0 %v261
  %v1019 = vpop.f32.mrf.mxu0
  %v1020 = vadd.f32 %v1007, %v1019
  %v1021 = vpop.f32.mrf.mxu0
  %1022 = vdwg.mxu0
  %1023 = vmatpush.bf16.msra.mxu0 %v771
  %1024 = vmatpush.bf16.msra.mxu0 %v770
  %1025 = vmatpush.bf16.msra.mxu0 %v769
  %1026 = vmatpush.bf16.msra.mxu0 %v768
  %1027 = vmatpush.bf16.msra.mxu0 %v767
  %1028 = vmatpush.bf16.msra.mxu0 %v766
  %1029 = vmatpush.bf16.msra.mxu0 %v765
  %1030 = vmatpush.bf16.msra.mxu0 %v764
  %1031 = vmatmul.bf16.gmra.mxu0 %v262
  %v1032 = vpop.f32.mrf.mxu0
  %v1033 = vadd.f32 %v1020, %v1032
  %v1034 = vpop.f32.mrf.mxu0
  %1035 = vdwg.mxu0
  %1036 = vmatpush.bf16.msra.mxu0 0
  %1037 = vmatpush.bf16.msra.mxu0 0
  %1038 = vmatpush.bf16.msra.mxu0 0
  %1039 = vmatpush.bf16.msra.mxu0 0
  %1040 = vmatpush.bf16.msra.mxu0 %v775
  %1041 = vmatpush.bf16.msra.mxu0 %v774
  %1042 = vmatpush.bf16.msra.mxu0 %v773
  %1043 = vmatpush.bf16.msra.mxu0 %v772
  %1044 = vmatmul.bf16.gmra.mxu0 %v878
  %v1045 = vpop.f32.mrf.mxu0
  %v1046 = vadd.f32 %v1033, %v1045
  %v1047 = vpop.f32.mrf.mxu0
  %1048 = vdwg.mxu0
  %v1049 = vld [vmem:[%s1] sm:$0xff]
  %v1050 = vld [vmem:[%s1 + $0x8] sm:$0xff]
  %v1051 = vld [vmem:[%s1 + $0x10] sm:$0xff]
  %v1052 = vld [vmem:[%s1 + $0x18] sm:$0xff]
  %v1053 = vld [vmem:[%s1 + $0x20] sm:$0xff]
  %v1054 = vld [vmem:[%s1 + $0x28] sm:$0xff]
  %v1055 = vld [vmem:[%s1 + $0x30] sm:$0xf]
  %v1063 = vunpack.c.l.b16 %v1049
  %v1064 = vunpack.c.h.b16 %v1049
  %v1065 = vunpack.c.l.b16 %v1050
  %v1066 = vunpack.c.h.b16 %v1050
  %v1067 = vunpack.c.l.b16 %v1051
  %v1068 = vunpack.c.h.b16 %v1051
  %v1069 = vunpack.c.l.b16 %v1052
  %v1070 = vunpack.c.h.b16 %v1052
  %v1071 = vunpack.c.l.b16 %v1053
  %v1072 = vunpack.c.h.b16 %v1053
  %v1073 = vunpack.c.l.b16 %v1054
  %v1074 = vunpack.c.h.b16 %v1054
  %v1075 = vunpack.c.l.b16 %v1055
  %v1076 = vpack.c.b16 %v1063, %v1063
  %v1077 = vpack.c.b16 %v1064, %v1064
  %v1078 = vpack.c.b16 %v1065, %v1065
  %v1079 = vpack.c.b16 %v1066, %v1066
  %v1080 = vpack.c.b16 %v1067, %v1067
  %v1081 = vpack.c.b16 %v1068, %v1068
  %v1082 = vpack.c.b16 %v1069, %v1069
  %v1083 = vpack.c.b16 %v1070, %v1070
  %v1084 = vpack.c.b16 %v1071, %v1071
  %v1085 = vpack.c.b16 %v1072, %v1072
  %v1086 = vpack.c.b16 %v1073, %v1073
  %v1087 = vpack.c.b16 %v1074, %v1074
  %v1088 = vpack.c.b16 %v1075, %v1075
  %v1102 = vsel %vm876, %v1088, 0
  %1104 = vmatpush.bf16.msra.mxu0 %v683
  %1105 = vmatpush.bf16.msra.mxu0 %v682
  %1106 = vmatpush.bf16.msra.mxu0 %v681
  %1107 = vmatpush.bf16.msra.mxu0 %v680
  %1108 = vmatpush.bf16.msra.mxu0 %v679
  %1109 = vmatpush.bf16.msra.mxu0 %v678
  %1110 = vmatpush.bf16.msra.mxu0 %v677
  %1111 = vmatpush.bf16.msra.mxu0 %v676
  %1112 = vmatmul.bf16.gmra.mxu0 %v1076
  %v1113 = vpop.f32.mrf.mxu0
  %v1114 = vadd.f32 0.0, %v1113
  %v1115 = vpop.f32.mrf.mxu0
  %1116 = vdwg.mxu0
  %1117 = vmatpush.bf16.msra.mxu0 %v691
  %1118 = vmatpush.bf16.msra.mxu0 %v690
  %1119 = vmatpush.bf16.msra.mxu0 %v689
  %1120 = vmatpush.bf16.msra.mxu0 %v688
  %1121 = vmatpush.bf16.msra.mxu0 %v687
  %1122 = vmatpush.bf16.msra.mxu0 %v686
  %1123 = vmatpush.bf16.msra.mxu0 %v685
  %1124 = vmatpush.bf16.msra.mxu0 %v684
  %1125 = vmatmul.bf16.gmra.mxu0 %v1077
  %v1126 = vpop.f32.mrf.mxu0
  %v1127 = vadd.f32 %v1114, %v1126
  %v1128 = vpop.f32.mrf.mxu0
  %1129 = vdwg.mxu0
  %1130 = vmatpush.bf16.msra.mxu0 %v699
  %1131 = vmatpush.bf16.msra.mxu0 %v698
  %1132 = vmatpush.bf16.msra.mxu0 %v697
  %1133 = vmatpush.bf16.msra.mxu0 %v696
  %1134 = vmatpush.bf16.msra.mxu0 %v695
  %1135 = vmatpush.bf16.msra.mxu0 %v694
  %1136 = vmatpush.bf16.msra.mxu0 %v693
  %1137 = vmatpush.bf16.msra.mxu0 %v692
  %1138 = vmatmul.bf16.gmra.mxu0 %v1078
  %v1139 = vpop.f32.mrf.mxu0
  %v1140 = vadd.f32 %v1127, %v1139
  %v1141 = vpop.f32.mrf.mxu0
  %1142 = vdwg.mxu0
  %1143 = vmatpush.bf16.msra.mxu0 %v707
  %1144 = vmatpush.bf16.msra.mxu0 %v706
  %1145 = vmatpush.bf16.msra.mxu0 %v705
  %1146 = vmatpush.bf16.msra.mxu0 %v704
  %1147 = vmatpush.bf16.msra.mxu0 %v703
  %1148 = vmatpush.bf16.msra.mxu0 %v702
  %1149 = vmatpush.bf16.msra.mxu0 %v701
  %1150 = vmatpush.bf16.msra.mxu0 %v700
  %1151 = vmatmul.bf16.gmra.mxu0 %v1079
  %v1152 = vpop.f32.mrf.mxu0
  %v1153 = vadd.f32 %v1140, %v1152
  %v1154 = vpop.f32.mrf.mxu0
  %1155 = vdwg.mxu0
  %1156 = vmatpush.bf16.msra.mxu0 %v715
  %1157 = vmatpush.bf16.msra.mxu0 %v714
  %1158 = vmatpush.bf16.msra.mxu0 %v713
  %1159 = vmatpush.bf16.msra.mxu0 %v712
  %1160 = vmatpush.bf16.msra.mxu0 %v711
  %1161 = vmatpush.bf16.msra.mxu0 %v710
  %1162 = vmatpush.bf16.msra.mxu0 %v709
  %1163 = vmatpush.bf16.msra.mxu0 %v708
  %1164 = vmatmul.bf16.gmra.mxu0 %v1080
  %v1165 = vpop.f32.mrf.mxu0
  %v1166 = vadd.f32 %v1153, %v1165
  %v1167 = vpop.f32.mrf.mxu0
  %1168 = vdwg.mxu0
  %1169 = vmatpush.bf16.msra.mxu0 %v723
  %1170 = vmatpush.bf16.msra.mxu0 %v722
  %1171 = vmatpush.bf16.msra.mxu0 %v721
  %1172 = vmatpush.bf16.msra.mxu0 %v720
  %1173 = vmatpush.bf16.msra.mxu0 %v719
  %1174 = vmatpush.bf16.msra.mxu0 %v718
  %1175 = vmatpush.bf16.msra.mxu0 %v717
  %1176 = vmatpush.bf16.msra.mxu0 %v716
  %1177 = vmatmul.bf16.gmra.mxu0 %v1081
  %v1178 = vpop.f32.mrf.mxu0
  %v1179 = vadd.f32 %v1166, %v1178
  %v1180 = vpop.f32.mrf.mxu0
  %1181 = vdwg.mxu0
  %1182 = vmatpush.bf16.msra.mxu0 %v731
  %1183 = vmatpush.bf16.msra.mxu0 %v730
  %1184 = vmatpush.bf16.msra.mxu0 %v729
  %1185 = vmatpush.bf16.msra.mxu0 %v728
  %1186 = vmatpush.bf16.msra.mxu0 %v727
  %1187 = vmatpush.bf16.msra.mxu0 %v726
  %1188 = vmatpush.bf16.msra.mxu0 %v725
  %1189 = vmatpush.bf16.msra.mxu0 %v724
  %1190 = vmatmul.bf16.gmra.mxu0 %v1082
  %v1191 = vpop.f32.mrf.mxu0
  %v1192 = vadd.f32 %v1179, %v1191
  %v1193 = vpop.f32.mrf.mxu0
  %1194 = vdwg.mxu0
  %1195 = vmatpush.bf16.msra.mxu0 %v739
  %1196 = vmatpush.bf16.msra.mxu0 %v738
  %1197 = vmatpush.bf16.msra.mxu0 %v737
  %1198 = vmatpush.bf16.msra.mxu0 %v736
  %1199 = vmatpush.bf16.msra.mxu0 %v735
  %1200 = vmatpush.bf16.msra.mxu0 %v734
  %1201 = vmatpush.bf16.msra.mxu0 %v733
  %1202 = vmatpush.bf16.msra.mxu0 %v732
  %1203 = vmatmul.bf16.gmra.mxu0 %v1083
  %v1204 = vpop.f32.mrf.mxu0
  %v1205 = vadd.f32 %v1192, %v1204
  %v1206 = vpop.f32.mrf.mxu0
  %1207 = vdwg.mxu0
  %1208 = vmatpush.bf16.msra.mxu0 %v747
  %1209 = vmatpush.bf16.msra.mxu0 %v746
  %1210 = vmatpush.bf16.msra.mxu0 %v745
  %1211 = vmatpush.bf16.msra.mxu0 %v744
  %1212 = vmatpush.bf16.msra.mxu0 %v743
  %1213 = vmatpush.bf16.msra.mxu0 %v742
  %1214 = vmatpush.bf16.msra.mxu0 %v741
  %1215 = vmatpush.bf16.msra.mxu0 %v740
  %1216 = vmatmul.bf16.gmra.mxu0 %v1084
  %v1217 = vpop.f32.mrf.mxu0
  %v1218 = vadd.f32 %v1205, %v1217
  %v1219 = vpop.f32.mrf.mxu0
  %1220 = vdwg.mxu0
  %1221 = vmatpush.bf16.msra.mxu0 %v755
  %1222 = vmatpush.bf16.msra.mxu0 %v754
  %1223 = vmatpush.bf16.msra.mxu0 %v753
  %1224 = vmatpush.bf16.msra.mxu0 %v752
  %1225 = vmatpush.bf16.msra.mxu0 %v751
  %1226 = vmatpush.bf16.msra.mxu0 %v750
  %1227 = vmatpush.bf16.msra.mxu0 %v749
  %1228 = vmatpush.bf16.msra.mxu0 %v748
  %1229 = vmatmul.bf16.gmra.mxu0 %v1085
  %v1230 = vpop.f32.mrf.mxu0
  %v1231 = vadd.f32 %v1218, %v1230
  %v1232 = vpop.f32.mrf.mxu0
  %1233 = vdwg.mxu0
  %1234 = vmatpush.bf16.msra.mxu0 %v763
  %1235 = vmatpush.bf16.msra.mxu0 %v762
  %1236 = vmatpush.bf16.msra.mxu0 %v761
  %1237 = vmatpush.bf16.msra.mxu0 %v760
  %1238 = vmatpush.bf16.msra.mxu0 %v759
  %1239 = vmatpush.bf16.msra.mxu0 %v758
  %1240 = vmatpush.bf16.msra.mxu0 %v757
  %1241 = vmatpush.bf16.msra.mxu0 %v756
  %1242 = vmatmul.bf16.gmra.mxu0 %v1086
  %v1243 = vpop.f32.mrf.mxu0
  %v1244 = vadd.f32 %v1231, %v1243
  %v1245 = vpop.f32.mrf.mxu0
  %1246 = vdwg.mxu0
  %1247 = vmatpush.bf16.msra.mxu0 %v771
  %1248 = vmatpush.bf16.msra.mxu0 %v770
  %1249 = vmatpush.bf16.msra.mxu0 %v769
  %1250 = vmatpush.bf16.msra.mxu0 %v768
  %1251 = vmatpush.bf16.msra.mxu0 %v767
  %1252 = vmatpush.bf16.msra.mxu0 %v766
  %1253 = vmatpush.bf16.msra.mxu0 %v765
  %1254 = vmatpush.bf16.msra.mxu0 %v764
  %1255 = vmatmul.bf16.gmra.mxu0 %v1087
  %v1256 = vpop.f32.mrf.mxu0
  %v1257 = vadd.f32 %v1244, %v1256
  %v1258 = vpop.f32.mrf.mxu0
  %1259 = vdwg.mxu0
  %1260 = vmatpush.bf16.msra.mxu0 0
  %1261 = vmatpush.bf16.msra.mxu0 0
  %1262 = vmatpush.bf16.msra.mxu0 0
  %1263 = vmatpush.bf16.msra.mxu0 0
  %1264 = vmatpush.bf16.msra.mxu0 %v775
  %1265 = vmatpush.bf16.msra.mxu0 %v774
  %1266 = vmatpush.bf16.msra.mxu0 %v773
  %1267 = vmatpush.bf16.msra.mxu0 %v772
  %1268 = vmatmul.bf16.gmra.mxu0 %v1102
  %v1269 = vpop.f32.mrf.mxu0
  %v1270 = vadd.f32 %v1257, %v1269
  %v1271 = vpop.f32.mrf.mxu0
  %1272 = vdwg.mxu0
  %v1273 = vld [vmem:[%s2] sm:$0xff]
  %v1274 = vld [vmem:[%s2 + $0x8] sm:$0xff]
  %v1275 = vld [vmem:[%s2 + $0x10] sm:$0xff]
  %v1276 = vld [vmem:[%s2 + $0x18] sm:$0xff]
  %v1277 = vld [vmem:[%s2 + $0x20] sm:$0xff]
  %v1278 = vld [vmem:[%s2 + $0x28] sm:$0xff]
  %v1279 = vld [vmem:[%s2 + $0x30] sm:$0xf]
  %v1287 = vunpack.c.l.b16 %v1273
  %v1288 = vunpack.c.h.b16 %v1273
  %v1289 = vunpack.c.l.b16 %v1274
  %v1290 = vunpack.c.h.b16 %v1274
  %v1291 = vunpack.c.l.b16 %v1275
  %v1292 = vunpack.c.h.b16 %v1275
  %v1293 = vunpack.c.l.b16 %v1276
  %v1294 = vunpack.c.h.b16 %v1276
  %v1295 = vunpack.c.l.b16 %v1277
  %v1296 = vunpack.c.h.b16 %v1277
  %v1297 = vunpack.c.l.b16 %v1278
  %v1298 = vunpack.c.h.b16 %v1278
  %v1299 = vunpack.c.l.b16 %v1279
  %v1300 = vpack.c.b16 %v1287, %v1287
  %v1301 = vpack.c.b16 %v1288, %v1288
  %v1302 = vpack.c.b16 %v1289, %v1289
  %v1303 = vpack.c.b16 %v1290, %v1290
  %v1304 = vpack.c.b16 %v1291, %v1291
  %v1305 = vpack.c.b16 %v1292, %v1292
  %v1306 = vpack.c.b16 %v1293, %v1293
  %v1307 = vpack.c.b16 %v1294, %v1294
  %v1308 = vpack.c.b16 %v1295, %v1295
  %v1309 = vpack.c.b16 %v1296, %v1296
  %v1310 = vpack.c.b16 %v1297, %v1297
  %v1311 = vpack.c.b16 %v1298, %v1298
  %v1312 = vpack.c.b16 %v1299, %v1299
  %v1326 = vsel %vm876, %v1312, 0
  %1328 = vmatpush.bf16.msra.mxu0 %v683
  %1329 = vmatpush.bf16.msra.mxu0 %v682
  %1330 = vmatpush.bf16.msra.mxu0 %v681
  %1331 = vmatpush.bf16.msra.mxu0 %v680
  %1332 = vmatpush.bf16.msra.mxu0 %v679
  %1333 = vmatpush.bf16.msra.mxu0 %v678
  %1334 = vmatpush.bf16.msra.mxu0 %v677
  %1335 = vmatpush.bf16.msra.mxu0 %v676
  %1336 = vmatmul.bf16.gmra.mxu0 %v1300
  %v1337 = vpop.f32.mrf.mxu0
  %v1338 = vadd.f32 0.0, %v1337
  %v1339 = vpop.f32.mrf.mxu0
  %1340 = vdwg.mxu0
  %1341 = vmatpush.bf16.msra.mxu0 %v691
  %1342 = vmatpush.bf16.msra.mxu0 %v690
  %1343 = vmatpush.bf16.msra.mxu0 %v689
  %1344 = vmatpush.bf16.msra.mxu0 %v688
  %1345 = vmatpush.bf16.msra.mxu0 %v687
  %1346 = vmatpush.bf16.msra.mxu0 %v686
  %1347 = vmatpush.bf16.msra.mxu0 %v685
  %1348 = vmatpush.bf16.msra.mxu0 %v684
  %1349 = vmatmul.bf16.gmra.mxu0 %v1301
  %v1350 = vpop.f32.mrf.mxu0
  %v1351 = vadd.f32 %v1338, %v1350
  %v1352 = vpop.f32.mrf.mxu0
  %1353 = vdwg.mxu0
  %1354 = vmatpush.bf16.msra.mxu0 %v699
  %1355 = vmatpush.bf16.msra.mxu0 %v698
  %1356 = vmatpush.bf16.msra.mxu0 %v697
  %1357 = vmatpush.bf16.msra.mxu0 %v696
  %1358 = vmatpush.bf16.msra.mxu0 %v695
  %1359 = vmatpush.bf16.msra.mxu0 %v694
  %1360 = vmatpush.bf16.msra.mxu0 %v693
  %1361 = vmatpush.bf16.msra.mxu0 %v692
  %1362 = vmatmul.bf16.gmra.mxu0 %v1302
  %v1363 = vpop.f32.mrf.mxu0
  %v1364 = vadd.f32 %v1351, %v1363
  %v1365 = vpop.f32.mrf.mxu0
  %1366 = vdwg.mxu0
  %1367 = vmatpush.bf16.msra.mxu0 %v707
  %1368 = vmatpush.bf16.msra.mxu0 %v706
  %1369 = vmatpush.bf16.msra.mxu0 %v705
  %1370 = vmatpush.bf16.msra.mxu0 %v704
  %1371 = vmatpush.bf16.msra.mxu0 %v703
  %1372 = vmatpush.bf16.msra.mxu0 %v702
  %1373 = vmatpush.bf16.msra.mxu0 %v701
  %1374 = vmatpush.bf16.msra.mxu0 %v700
  %1375 = vmatmul.bf16.gmra.mxu0 %v1303
  %v1376 = vpop.f32.mrf.mxu0
  %v1377 = vadd.f32 %v1364, %v1376
  %v1378 = vpop.f32.mrf.mxu0
  %1379 = vdwg.mxu0
  %1380 = vmatpush.bf16.msra.mxu0 %v715
  %1381 = vmatpush.bf16.msra.mxu0 %v714
  %1382 = vmatpush.bf16.msra.mxu0 %v713
  %1383 = vmatpush.bf16.msra.mxu0 %v712
  %1384 = vmatpush.bf16.msra.mxu0 %v711
  %1385 = vmatpush.bf16.msra.mxu0 %v710
  %1386 = vmatpush.bf16.msra.mxu0 %v709
  %1387 = vmatpush.bf16.msra.mxu0 %v708
  %1388 = vmatmul.bf16.gmra.mxu0 %v1304
  %v1389 = vpop.f32.mrf.mxu0
  %v1390 = vadd.f32 %v1377, %v1389
  %v1391 = vpop.f32.mrf.mxu0
  %1392 = vdwg.mxu0
  %1393 = vmatpush.bf16.msra.mxu0 %v723
  %1394 = vmatpush.bf16.msra.mxu0 %v722
  %1395 = vmatpush.bf16.msra.mxu0 %v721
  %1396 = vmatpush.bf16.msra.mxu0 %v720
  %1397 = vmatpush.bf16.msra.mxu0 %v719
  %1398 = vmatpush.bf16.msra.mxu0 %v718
  %1399 = vmatpush.bf16.msra.mxu0 %v717
  %1400 = vmatpush.bf16.msra.mxu0 %v716
  %1401 = vmatmul.bf16.gmra.mxu0 %v1305
  %v1402 = vpop.f32.mrf.mxu0
  %v1403 = vadd.f32 %v1390, %v1402
  %v1404 = vpop.f32.mrf.mxu0
  %1405 = vdwg.mxu0
  %1406 = vmatpush.bf16.msra.mxu0 %v731
  %1407 = vmatpush.bf16.msra.mxu0 %v730
  %1408 = vmatpush.bf16.msra.mxu0 %v729
  %1409 = vmatpush.bf16.msra.mxu0 %v728
  %1410 = vmatpush.bf16.msra.mxu0 %v727
  %1411 = vmatpush.bf16.msra.mxu0 %v726
  %1412 = vmatpush.bf16.msra.mxu0 %v725
  %1413 = vmatpush.bf16.msra.mxu0 %v724
  %1414 = vmatmul.bf16.gmra.mxu0 %v1306
  %v1415 = vpop.f32.mrf.mxu0
  %v1416 = vadd.f32 %v1403, %v1415
  %v1417 = vpop.f32.mrf.mxu0
  %1418 = vdwg.mxu0
  %1419 = vmatpush.bf16.msra.mxu0 %v739
  %1420 = vmatpush.bf16.msra.mxu0 %v738
  %1421 = vmatpush.bf16.msra.mxu0 %v737
  %1422 = vmatpush.bf16.msra.mxu0 %v736
  %1423 = vmatpush.bf16.msra.mxu0 %v735
  %1424 = vmatpush.bf16.msra.mxu0 %v734
  %1425 = vmatpush.bf16.msra.mxu0 %v733
  %1426 = vmatpush.bf16.msra.mxu0 %v732
  %1427 = vmatmul.bf16.gmra.mxu0 %v1307
  %v1428 = vpop.f32.mrf.mxu0
  %v1429 = vadd.f32 %v1416, %v1428
  %v1430 = vpop.f32.mrf.mxu0
  %1431 = vdwg.mxu0
  %1432 = vmatpush.bf16.msra.mxu0 %v747
  %1433 = vmatpush.bf16.msra.mxu0 %v746
  %1434 = vmatpush.bf16.msra.mxu0 %v745
  %1435 = vmatpush.bf16.msra.mxu0 %v744
  %1436 = vmatpush.bf16.msra.mxu0 %v743
  %1437 = vmatpush.bf16.msra.mxu0 %v742
  %1438 = vmatpush.bf16.msra.mxu0 %v741
  %1439 = vmatpush.bf16.msra.mxu0 %v740
  %1440 = vmatmul.bf16.gmra.mxu0 %v1308
  %v1441 = vpop.f32.mrf.mxu0
  %v1442 = vadd.f32 %v1429, %v1441
  %v1443 = vpop.f32.mrf.mxu0
  %1444 = vdwg.mxu0
  %1445 = vmatpush.bf16.msra.mxu0 %v755
  %1446 = vmatpush.bf16.msra.mxu0 %v754
  %1447 = vmatpush.bf16.msra.mxu0 %v753
  %1448 = vmatpush.bf16.msra.mxu0 %v752
  %1449 = vmatpush.bf16.msra.mxu0 %v751
  %1450 = vmatpush.bf16.msra.mxu0 %v750
  %1451 = vmatpush.bf16.msra.mxu0 %v749
  %1452 = vmatpush.bf16.msra.mxu0 %v748
  %1453 = vmatmul.bf16.gmra.mxu0 %v1309
  %v1454 = vpop.f32.mrf.mxu0
  %v1455 = vadd.f32 %v1442, %v1454
  %v1456 = vpop.f32.mrf.mxu0
  %1457 = vdwg.mxu0
  %1458 = vmatpush.bf16.msra.mxu0 %v763
  %1459 = vmatpush.bf16.msra.mxu0 %v762
  %1460 = vmatpush.bf16.msra.mxu0 %v761
  %1461 = vmatpush.bf16.msra.mxu0 %v760
  %1462 = vmatpush.bf16.msra.mxu0 %v759
  %1463 = vmatpush.bf16.msra.mxu0 %v758
  %1464 = vmatpush.bf16.msra.mxu0 %v757
  %1465 = vmatpush.bf16.msra.mxu0 %v756
  %1466 = vmatmul.bf16.gmra.mxu0 %v1310
  %v1467 = vpop.f32.mrf.mxu0
  %v1468 = vadd.f32 %v1455, %v1467
  %v1469 = vpop.f32.mrf.mxu0
  %1470 = vdwg.mxu0
  %1471 = vmatpush.bf16.msra.mxu0 %v771
  %1472 = vmatpush.bf16.msra.mxu0 %v770
  %1473 = vmatpush.bf16.msra.mxu0 %v769
  %1474 = vmatpush.bf16.msra.mxu0 %v768
  %1475 = vmatpush.bf16.msra.mxu0 %v767
  %1476 = vmatpush.bf16.msra.mxu0 %v766
  %1477 = vmatpush.bf16.msra.mxu0 %v765
  %1478 = vmatpush.bf16.msra.mxu0 %v764
  %1479 = vmatmul.bf16.gmra.mxu0 %v1311
  %v1480 = vpop.f32.mrf.mxu0
  %v1481 = vadd.f32 %v1468, %v1480
  %v1482 = vpop.f32.mrf.mxu0
  %1483 = vdwg.mxu0
  %1484 = vmatpush.bf16.msra.mxu0 0
  %1485 = vmatpush.bf16.msra.mxu0 0
  %1486 = vmatpush.bf16.msra.mxu0 0
  %1487 = vmatpush.bf16.msra.mxu0 0
  %1488 = vmatpush.bf16.msra.mxu0 %v775
  %1489 = vmatpush.bf16.msra.mxu0 %v774
  %1490 = vmatpush.bf16.msra.mxu0 %v773
  %1491 = vmatpush.bf16.msra.mxu0 %v772
  %1492 = vmatmul.bf16.gmra.mxu0 %v1326
  %v1493 = vpop.f32.mrf.mxu0
  %v1494 = vadd.f32 %v1481, %v1493
  %v1495 = vpop.f32.mrf.mxu0
  %1496 = vdwg.mxu0
  %v1497 = vld [vmem:[%s3] sm:$0xff]
  %v1498 = vld [vmem:[%s3 + $0x8] sm:$0xff]
  %v1499 = vld [vmem:[%s3 + $0x10] sm:$0xff]
  %v1500 = vld [vmem:[%s3 + $0x18] sm:$0xff]
  %v1501 = vld [vmem:[%s3 + $0x20] sm:$0xff]
  %v1502 = vld [vmem:[%s3 + $0x28] sm:$0xff]
  %v1503 = vld [vmem:[%s3 + $0x30] sm:$0xf]
  %v1511 = vunpack.c.l.b16 %v1497
  %v1512 = vunpack.c.h.b16 %v1497
  %v1513 = vunpack.c.l.b16 %v1498
  %v1514 = vunpack.c.h.b16 %v1498
  %v1515 = vunpack.c.l.b16 %v1499
  %v1516 = vunpack.c.h.b16 %v1499
  %v1517 = vunpack.c.l.b16 %v1500
  %v1518 = vunpack.c.h.b16 %v1500
  %v1519 = vunpack.c.l.b16 %v1501
  %v1520 = vunpack.c.h.b16 %v1501
  %v1521 = vunpack.c.l.b16 %v1502
  %v1522 = vunpack.c.h.b16 %v1502
  %v1523 = vunpack.c.l.b16 %v1503
  %v1524 = vpack.c.b16 %v1511, %v1511
  %v1525 = vpack.c.b16 %v1512, %v1512
  %v1526 = vpack.c.b16 %v1513, %v1513
  %v1527 = vpack.c.b16 %v1514, %v1514
  %v1528 = vpack.c.b16 %v1515, %v1515
  %v1529 = vpack.c.b16 %v1516, %v1516
  %v1530 = vpack.c.b16 %v1517, %v1517
  %v1531 = vpack.c.b16 %v1518, %v1518
  %v1532 = vpack.c.b16 %v1519, %v1519
  %v1533 = vpack.c.b16 %v1520, %v1520
  %v1534 = vpack.c.b16 %v1521, %v1521
  %v1535 = vpack.c.b16 %v1522, %v1522
  %v1536 = vpack.c.b16 %v1523, %v1523
  %v1550 = vsel %vm876, %v1536, 0
  %1552 = vmatpush.bf16.msra.mxu0 %v683
  %1553 = vmatpush.bf16.msra.mxu0 %v682
  %1554 = vmatpush.bf16.msra.mxu0 %v681
  %1555 = vmatpush.bf16.msra.mxu0 %v680
  %1556 = vmatpush.bf16.msra.mxu0 %v679
  %1557 = vmatpush.bf16.msra.mxu0 %v678
  %1558 = vmatpush.bf16.msra.mxu0 %v677
  %1559 = vmatpush.bf16.msra.mxu0 %v676
  %1560 = vmatmul.bf16.gmra.mxu0 %v1524
  %v1561 = vpop.f32.mrf.mxu0
  %v1562 = vadd.f32 0.0, %v1561
  %v1563 = vpop.f32.mrf.mxu0
  %1564 = vdwg.mxu0
  %1565 = vmatpush.bf16.msra.mxu0 %v691
  %1566 = vmatpush.bf16.msra.mxu0 %v690
  %1567 = vmatpush.bf16.msra.mxu0 %v689
  %1568 = vmatpush.bf16.msra.mxu0 %v688
  %1569 = vmatpush.bf16.msra.mxu0 %v687
  %1570 = vmatpush.bf16.msra.mxu0 %v686
  %1571 = vmatpush.bf16.msra.mxu0 %v685
  %1572 = vmatpush.bf16.msra.mxu0 %v684
  %1573 = vmatmul.bf16.gmra.mxu0 %v1525
  %v1574 = vpop.f32.mrf.mxu0
  %v1575 = vadd.f32 %v1562, %v1574
  %v1576 = vpop.f32.mrf.mxu0
  %1577 = vdwg.mxu0
  %1578 = vmatpush.bf16.msra.mxu0 %v699
  %1579 = vmatpush.bf16.msra.mxu0 %v698
  %1580 = vmatpush.bf16.msra.mxu0 %v697
  %1581 = vmatpush.bf16.msra.mxu0 %v696
  %1582 = vmatpush.bf16.msra.mxu0 %v695
  %1583 = vmatpush.bf16.msra.mxu0 %v694
  %1584 = vmatpush.bf16.msra.mxu0 %v693
  %1585 = vmatpush.bf16.msra.mxu0 %v692
  %1586 = vmatmul.bf16.gmra.mxu0 %v1526
  %v1587 = vpop.f32.mrf.mxu0
  %v1588 = vadd.f32 %v1575, %v1587
  %v1589 = vpop.f32.mrf.mxu0
  %1590 = vdwg.mxu0
  %1591 = vmatpush.bf16.msra.mxu0 %v707
  %1592 = vmatpush.bf16.msra.mxu0 %v706
  %1593 = vmatpush.bf16.msra.mxu0 %v705
  %1594 = vmatpush.bf16.msra.mxu0 %v704
  %1595 = vmatpush.bf16.msra.mxu0 %v703
  %1596 = vmatpush.bf16.msra.mxu0 %v702
  %1597 = vmatpush.bf16.msra.mxu0 %v701
  %1598 = vmatpush.bf16.msra.mxu0 %v700
  %1599 = vmatmul.bf16.gmra.mxu0 %v1527
  %v1600 = vpop.f32.mrf.mxu0
  %v1601 = vadd.f32 %v1588, %v1600
  %v1602 = vpop.f32.mrf.mxu0
  %1603 = vdwg.mxu0
  %1604 = vmatpush.bf16.msra.mxu0 %v715
  %1605 = vmatpush.bf16.msra.mxu0 %v714
  %1606 = vmatpush.bf16.msra.mxu0 %v713
  %1607 = vmatpush.bf16.msra.mxu0 %v712
  %1608 = vmatpush.bf16.msra.mxu0 %v711
  %1609 = vmatpush.bf16.msra.mxu0 %v710
  %1610 = vmatpush.bf16.msra.mxu0 %v709
  %1611 = vmatpush.bf16.msra.mxu0 %v708
  %1612 = vmatmul.bf16.gmra.mxu0 %v1528
  %v1613 = vpop.f32.mrf.mxu0
  %v1614 = vadd.f32 %v1601, %v1613
  %v1615 = vpop.f32.mrf.mxu0
  %1616 = vdwg.mxu0
  %1617 = vmatpush.bf16.msra.mxu0 %v723
  %1618 = vmatpush.bf16.msra.mxu0 %v722
  %1619 = vmatpush.bf16.msra.mxu0 %v721
  %1620 = vmatpush.bf16.msra.mxu0 %v720
  %1621 = vmatpush.bf16.msra.mxu0 %v719
  %1622 = vmatpush.bf16.msra.mxu0 %v718
  %1623 = vmatpush.bf16.msra.mxu0 %v717
  %1624 = vmatpush.bf16.msra.mxu0 %v716
  %1625 = vmatmul.bf16.gmra.mxu0 %v1529
  %v1626 = vpop.f32.mrf.mxu0
  %v1627 = vadd.f32 %v1614, %v1626
  %v1628 = vpop.f32.mrf.mxu0
  %1629 = vdwg.mxu0
  %1630 = vmatpush.bf16.msra.mxu0 %v731
  %1631 = vmatpush.bf16.msra.mxu0 %v730
  %1632 = vmatpush.bf16.msra.mxu0 %v729
  %1633 = vmatpush.bf16.msra.mxu0 %v728
  %1634 = vmatpush.bf16.msra.mxu0 %v727
  %1635 = vmatpush.bf16.msra.mxu0 %v726
  %1636 = vmatpush.bf16.msra.mxu0 %v725
  %1637 = vmatpush.bf16.msra.mxu0 %v724
  %1638 = vmatmul.bf16.gmra.mxu0 %v1530
  %v1639 = vpop.f32.mrf.mxu0
  %v1640 = vadd.f32 %v1627, %v1639
  %v1641 = vpop.f32.mrf.mxu0
  %1642 = vdwg.mxu0
  %1643 = vmatpush.bf16.msra.mxu0 %v739
  %1644 = vmatpush.bf16.msra.mxu0 %v738
  %1645 = vmatpush.bf16.msra.mxu0 %v737
  %1646 = vmatpush.bf16.msra.mxu0 %v736
  %1647 = vmatpush.bf16.msra.mxu0 %v735
  %1648 = vmatpush.bf16.msra.mxu0 %v734
  %1649 = vmatpush.bf16.msra.mxu0 %v733
  %1650 = vmatpush.bf16.msra.mxu0 %v732
  %1651 = vmatmul.bf16.gmra.mxu0 %v1531
  %v1652 = vpop.f32.mrf.mxu0
  %v1653 = vadd.f32 %v1640, %v1652
  %v1654 = vpop.f32.mrf.mxu0
  %1655 = vdwg.mxu0
  %1656 = vmatpush.bf16.msra.mxu0 %v747
  %1657 = vmatpush.bf16.msra.mxu0 %v746
  %1658 = vmatpush.bf16.msra.mxu0 %v745
  %1659 = vmatpush.bf16.msra.mxu0 %v744
  %1660 = vmatpush.bf16.msra.mxu0 %v743
  %1661 = vmatpush.bf16.msra.mxu0 %v742
  %1662 = vmatpush.bf16.msra.mxu0 %v741
  %1663 = vmatpush.bf16.msra.mxu0 %v740
  %1664 = vmatmul.bf16.gmra.mxu0 %v1532
  %v1665 = vpop.f32.mrf.mxu0
  %v1666 = vadd.f32 %v1653, %v1665
  %v1667 = vpop.f32.mrf.mxu0
  %1668 = vdwg.mxu0
  %1669 = vmatpush.bf16.msra.mxu0 %v755
  %1670 = vmatpush.bf16.msra.mxu0 %v754
  %1671 = vmatpush.bf16.msra.mxu0 %v753
  %1672 = vmatpush.bf16.msra.mxu0 %v752
  %1673 = vmatpush.bf16.msra.mxu0 %v751
  %1674 = vmatpush.bf16.msra.mxu0 %v750
  %1675 = vmatpush.bf16.msra.mxu0 %v749
  %1676 = vmatpush.bf16.msra.mxu0 %v748
  %1677 = vmatmul.bf16.gmra.mxu0 %v1533
  %v1678 = vpop.f32.mrf.mxu0
  %v1679 = vadd.f32 %v1666, %v1678
  %v1680 = vpop.f32.mrf.mxu0
  %1681 = vdwg.mxu0
  %1682 = vmatpush.bf16.msra.mxu0 %v763
  %1683 = vmatpush.bf16.msra.mxu0 %v762
  %1684 = vmatpush.bf16.msra.mxu0 %v761
  %1685 = vmatpush.bf16.msra.mxu0 %v760
  %1686 = vmatpush.bf16.msra.mxu0 %v759
  %1687 = vmatpush.bf16.msra.mxu0 %v758
  %1688 = vmatpush.bf16.msra.mxu0 %v757
  %1689 = vmatpush.bf16.msra.mxu0 %v756
  %1690 = vmatmul.bf16.gmra.mxu0 %v1534
  %v1691 = vpop.f32.mrf.mxu0
  %v1692 = vadd.f32 %v1679, %v1691
  %v1693 = vpop.f32.mrf.mxu0
  %1694 = vdwg.mxu0
  %1695 = vmatpush.bf16.msra.mxu0 %v771
  %1696 = vmatpush.bf16.msra.mxu0 %v770
  %1697 = vmatpush.bf16.msra.mxu0 %v769
  %1698 = vmatpush.bf16.msra.mxu0 %v768
  %1699 = vmatpush.bf16.msra.mxu0 %v767
  %1700 = vmatpush.bf16.msra.mxu0 %v766
  %1701 = vmatpush.bf16.msra.mxu0 %v765
  %1702 = vmatpush.bf16.msra.mxu0 %v764
  %1703 = vmatmul.bf16.gmra.mxu0 %v1535
  %v1704 = vpop.f32.mrf.mxu0
  %v1705 = vadd.f32 %v1692, %v1704
  %v1706 = vpop.f32.mrf.mxu0
  %1707 = vdwg.mxu0
  %1708 = vmatpush.bf16.msra.mxu0 0
  %1709 = vmatpush.bf16.msra.mxu0 0
  %1710 = vmatpush.bf16.msra.mxu0 0
  %1711 = vmatpush.bf16.msra.mxu0 0
  %1712 = vmatpush.bf16.msra.mxu0 %v775
  %1713 = vmatpush.bf16.msra.mxu0 %v774
  %1714 = vmatpush.bf16.msra.mxu0 %v773
  %1715 = vmatpush.bf16.msra.mxu0 %v772
  %1716 = vmatmul.bf16.gmra.mxu0 %v1550
  %v1717 = vpop.f32.mrf.mxu0
  %v1718 = vadd.f32 %v1705, %v1717
  %v1719 = vpop.f32.mrf.mxu0
  %1720 = vdwg.mxu0
  %v1721 = vmax.f32 %v1046, %v1270
  %v1722 = vmax.f32 %v1494, %v1718
  %v1723 = vmax.f32 %v1721, %v1722
  %v1724 = vld [vmem:[%s5] sm:$0x1]
  %v1726 = vperm.slane %v1724, 0
  %v1728 = vadd.f32 %v1723, %v1726
  %1729 = vst.msk [vmem:[%s6] sm:$0xff] %vm876, %v1728
  // Predicated region
  $region26: #{pathfinder_forward.8} parent=0 // pred_check
    _
  $region27: #{pathfinder_forward.8} parent=0 // pred_check_branch
    %1731 = sbr.rel (0) target = $region29
  $region28: #{pathfinder_forward.8} parent=0 // pred_region
    _
  $region29: #{pathfinder_forward.8} parent=0 // pred_fallthru
    _
  // Predicated region
  $region30: #{pathfinder_forward.8} parent=0 // pred_check
    _
  $region31: #{pathfinder_forward.8} parent=0 // pred_check_branch
    %1733 = sbr.rel (0) target = $region33
  $region32: #{pathfinder_forward.8} parent=0 // pred_region
    _
  $region33: #{pathfinder_forward.8} parent=0 // pred_fallthru
    _

// kernel: pathfinder_forward.9
$region0: #{pathfinder_forward.9}
  #allocation0 [shape = 'u32[]', space=smem, size = 0x4, offset = 0x4, fixed_abs, tag = 'smem constant byte address 0x4 - core index']
  #allocation1 [shape = 'u32[72,128]{1,0:T(1,128)}', space=vmem, size = 0x9000, scoped, tag = 'internal scratch']
  #allocation2 [shape = 'f32[1,1]{1,0:T(1,128)S(1)}', space=vmem, size = 0x200, scoped, tag = 'scoped memory for pathfinder_forward.9']
  %s0 = inlined_call_operand.vmem [shape: bf16[2,256], index: 0, kind: input, shape index: {}]
  %s1 = inlined_call_operand.vmem [shape: bf16[256,512], index: 1, kind: input, shape index: {}]
  %s2 = inlined_call_operand.vmem [shape: f32[1,512], index: 2, kind: input, shape index: {}]
  %s3 = inlined_call_operand.vmem [shape: bf16[512,156], index: 3, kind: input, shape index: {}]
  %s4 = inlined_call_operand.vmem [shape: f32[1,156], index: 4, kind: input, shape index: {}]
  %s5 = inlined_call_operand.vmem [shape: f32[1,156], index: 5, kind: input, shape index: {}]
  %s6 = inlined_call_operand.<no memory space> [shape: f32[1,1], index: 6, kind: input, shape index: {}]
  %s7 = inlined_call_operand.vmem [shape: f32[2,1], index: 7, kind: output, shape index: {}]
  %s8 = sld [smem:[#allocation0]]
  $region38: #{pathfinder_forward.9} parent=0
    _
  %s10 = ssub.s32 1, %s8
  %s11 = scalar_select 0, %s10, %s8
  %v12 = vstv %s6
  %13 = vst [vmem:[#allocation2] sm:$0x1] %v12
  // Predicated region
  $region2: #{pathfinder_forward.9} parent=0 // pred_check
    _
  $region3: #{pathfinder_forward.9} parent=0 // pred_check_branch
    %15 = sbr.rel (0) target = $region5
  $region4: #{pathfinder_forward.9} parent=0 // pred_region
    _
  $region5: #{pathfinder_forward.9} parent=0 // pred_fallthru
    _
  // Predicated region
  $region6: #{pathfinder_forward.9} parent=0 // pred_check
    _
  $region7: #{pathfinder_forward.9} parent=0 // pred_check_branch
    %17 = sbr.rel (0) target = $region9
  $region8: #{pathfinder_forward.9} parent=0 // pred_region
    _
  $region9: #{pathfinder_forward.9} parent=0 // pred_fallthru
    _
  // Predicated region
  $region10: #{pathfinder_forward.9} parent=0 // pred_check
    _
  $region11: #{pathfinder_forward.9} parent=0 // pred_check_branch
    %19 = sbr.rel (0) target = $region13
  $region12: #{pathfinder_forward.9} parent=0 // pred_region
    _
  $region13: #{pathfinder_forward.9} parent=0 // pred_fallthru
    _
  // Predicated region
  $region14: #{pathfinder_forward.9} parent=0 // pred_check
    _
  $region15: #{pathfinder_forward.9} parent=0 // pred_check_branch
    %21 = sbr.rel (0) target = $region17
  $region16: #{pathfinder_forward.9} parent=0 // pred_region
    _
  $region17: #{pathfinder_forward.9} parent=0 // pred_fallthru
    _
  // Predicated region
  $region18: #{pathfinder_forward.9} parent=0 // pred_check
    _
  $region19: #{pathfinder_forward.9} parent=0 // pred_check_branch
    %23 = sbr.rel (0) target = $region21
  $region20: #{pathfinder_forward.9} parent=0 // pred_region
    _
  $region21: #{pathfinder_forward.9} parent=0 // pred_fallthru
    _
  // Predicated region
  $region22: #{pathfinder_forward.9} parent=0 // pred_check
    _
  $region23: #{pathfinder_forward.9} parent=0 // pred_check_branch
    %25 = sbr.rel (0) target = $region25
  $region24: #{pathfinder_forward.9} parent=0 // pred_region
    _
  $region25: #{pathfinder_forward.9} parent=0 // pred_fallthru
    _
  // Predicated region
  $region26: #{pathfinder_forward.9} parent=0 // pred_check
    _
  $region27: #{pathfinder_forward.9} parent=0 // pred_check_branch
    %27 = sbr.rel (0) target = $region29
  $region28: #{pathfinder_forward.9} parent=0 // pred_region
    _
  $region29: #{pathfinder_forward.9} parent=0 // pred_fallthru
    _
  %v28 = vld [vmem:[%s0] sm:$0x3]
  %v29 = vld [vmem:[%s1] sm:$0xff]
  %v30 = vld [vmem:[%s1 + $0x8] sm:$0xff]
  %v31 = vld [vmem:[%s1 + $0x10] sm:$0xff]
  %v32 = vld [vmem:[%s1 + $0x18] sm:$0xff]
  %v33 = vld [vmem:[%s1 + $0x20] sm:$0xff]
  %v34 = vld [vmem:[%s1 + $0x28] sm:$0xff]
  %v35 = vld [vmem:[%s1 + $0x30] sm:$0xff]
  %v36 = vld [vmem:[%s1 + $0x38] sm:$0xff]
  %v37 = vld [vmem:[%s1 + $0x40] sm:$0xff]
  %v38 = vld [vmem:[%s1 + $0x48] sm:$0xff]
  %v39 = vld [vmem:[%s1 + $0x50] sm:$0xff]
  %v40 = vld [vmem:[%s1 + $0x58] sm:$0xff]
  %v41 = vld [vmem:[%s1 + $0x60] sm:$0xff]
  %v42 = vld [vmem:[%s1 + $0x68] sm:$0xff]
  %v43 = vld [vmem:[%s1 + $0x70] sm:$0xff]
  %v44 = vld [vmem:[%s1 + $0x78] sm:$0xff]
  %v45 = vld [vmem:[%s1 + $0x80] sm:$0xff]
  %v46 = vld [vmem:[%s1 + $0x88] sm:$0xff]
  %v47 = vld [vmem:[%s1 + $0x90] sm:$0xff]
  %v48 = vld [vmem:[%s1 + $0x98] sm:$0xff]
  %v49 = vld [vmem:[%s1 + $0xa0] sm:$0xff]
  %v50 = vld [vmem:[%s1 + $0xa8] sm:$0xff]
  %v51 = vld [vmem:[%s1 + $0xb0] sm:$0xff]
  %v52 = vld [vmem:[%s1 + $0xb8] sm:$0xff]
  %v53 = vld [vmem:[%s1 + $0xc0] sm:$0xff]
  %v54 = vld [vmem:[%s1 + $0xc8] sm:$0xff]
  %v55 = vld [vmem:[%s1 + $0xd0] sm:$0xff]
  %v56 = vld [vmem:[%s1 + $0xd8] sm:$0xff]
  %v57 = vld [vmem:[%s1 + $0xe0] sm:$0xff]
  %v58 = vld [vmem:[%s1 + $0xe8] sm:$0xff]
  %v59 = vld [vmem:[%s1 + $0xf0] sm:$0xff]
  %v60 = vld [vmem:[%s1 + $0xf8] sm:$0xff]
  %v61 = vld [vmem:[%s1 + $0x100] sm:$0xff]
  %v62 = vld [vmem:[%s1 + $0x108] sm:$0xff]
  %v63 = vld [vmem:[%s1 + $0x110] sm:$0xff]
  %v64 = vld [vmem:[%s1 + $0x118] sm:$0xff]
  %v65 = vld [vmem:[%s1 + $0x120] sm:$0xff]
  %v66 = vld [vmem:[%s1 + $0x128] sm:$0xff]
  %v67 = vld [vmem:[%s1 + $0x130] sm:$0xff]
  %v68 = vld [vmem:[%s1 + $0x138] sm:$0xff]
  %v69 = vld [vmem:[%s1 + $0x140] sm:$0xff]
  %v70 = vld [vmem:[%s1 + $0x148] sm:$0xff]
  %v71 = vld [vmem:[%s1 + $0x150] sm:$0xff]
  %v72 = vld [vmem:[%s1 + $0x158] sm:$0xff]
  %v73 = vld [vmem:[%s1 + $0x160] sm:$0xff]
  %v74 = vld [vmem:[%s1 + $0x168] sm:$0xff]
  %v75 = vld [vmem:[%s1 + $0x170] sm:$0xff]
  %v76 = vld [vmem:[%s1 + $0x178] sm:$0xff]
  %v77 = vld [vmem:[%s1 + $0x180] sm:$0xff]
  %v78 = vld [vmem:[%s1 + $0x188] sm:$0xff]
  %v79 = vld [vmem:[%s1 + $0x190] sm:$0xff]
  %v80 = vld [vmem:[%s1 + $0x198] sm:$0xff]
  %v81 = vld [vmem:[%s1 + $0x1a0] sm:$0xff]
  %v82 = vld [vmem:[%s1 + $0x1a8] sm:$0xff]
  %v83 = vld [vmem:[%s1 + $0x1b0] sm:$0xff]
  %v84 = vld [vmem:[%s1 + $0x1b8] sm:$0xff]
  %v85 = vld [vmem:[%s1 + $0x1c0] sm:$0xff]
  %v86 = vld [vmem:[%s1 + $0x1c8] sm:$0xff]
  %v87 = vld [vmem:[%s1 + $0x1d0] sm:$0xff]
  %v88 = vld [vmem:[%s1 + $0x1d8] sm:$0xff]
  %v89 = vld [vmem:[%s1 + $0x1e0] sm:$0xff]
  %v90 = vld [vmem:[%s1 + $0x1e8] sm:$0xff]
  %v91 = vld [vmem:[%s1 + $0x1f0] sm:$0xff]
  %v92 = vld [vmem:[%s1 + $0x1f8] sm:$0xff]
  %v93 = vld [vmem:[%s2] sm:$0xf]
  %v95 = vperm.slane %v93, 0
  %v96 = vperm.slane %v93, 1
  %v97 = vperm.slane %v93, 2
  %v98 = vperm.slane %v93, 3
  %104 = vst [vmem:[#allocation1] ss:$9 sm:$0xff] %v28
  %v105 = vld [vmem:[#allocation1] sm:$0xff]
  %v106 = vld [vmem:[#allocation1 + $0x9] sm:$0xff]
  %v173 = vunpack.c.l.b16 %v29
  %v174 = vunpack.c.h.b16 %v29
  %v175 = vunpack.c.l.b16 %v30
  %v176 = vunpack.c.h.b16 %v30
  %v177 = vunpack.c.l.b16 %v31
  %v178 = vunpack.c.h.b16 %v31
  %v179 = vunpack.c.l.b16 %v32
  %v180 = vunpack.c.h.b16 %v32
  %v181 = vunpack.c.l.b16 %v33
  %v182 = vunpack.c.h.b16 %v33
  %v183 = vunpack.c.l.b16 %v34
  %v184 = vunpack.c.h.b16 %v34
  %v185 = vunpack.c.l.b16 %v35
  %v186 = vunpack.c.h.b16 %v35
  %v187 = vunpack.c.l.b16 %v36
  %v188 = vunpack.c.h.b16 %v36
  %v189 = vunpack.c.l.b16 %v37
  %v190 = vunpack.c.h.b16 %v37
  %v191 = vunpack.c.l.b16 %v38
  %v192 = vunpack.c.h.b16 %v38
  %v193 = vunpack.c.l.b16 %v39
  %v194 = vunpack.c.h.b16 %v39
  %v195 = vunpack.c.l.b16 %v40
  %v196 = vunpack.c.h.b16 %v40
  %v197 = vunpack.c.l.b16 %v41
  %v198 = vunpack.c.h.b16 %v41
  %v199 = vunpack.c.l.b16 %v42
  %v200 = vunpack.c.h.b16 %v42
  %v201 = vunpack.c.l.b16 %v43
  %v202 = vunpack.c.h.b16 %v43
  %v203 = vunpack.c.l.b16 %v44
  %v204 = vunpack.c.h.b16 %v44
  %v205 = vunpack.c.l.b16 %v45
  %v206 = vunpack.c.h.b16 %v45
  %v207 = vunpack.c.l.b16 %v46
  %v208 = vunpack.c.h.b16 %v46
  %v209 = vunpack.c.l.b16 %v47
  %v210 = vunpack.c.h.b16 %v47
  %v211 = vunpack.c.l.b16 %v48
  %v212 = vunpack.c.h.b16 %v48
  %v213 = vunpack.c.l.b16 %v49
  %v214 = vunpack.c.h.b16 %v49
  %v215 = vunpack.c.l.b16 %v50
  %v216 = vunpack.c.h.b16 %v50
  %v217 = vunpack.c.l.b16 %v51
  %v218 = vunpack.c.h.b16 %v51
  %v219 = vunpack.c.l.b16 %v52
  %v220 = vunpack.c.h.b16 %v52
  %v221 = vunpack.c.l.b16 %v53
  %v222 = vunpack.c.h.b16 %v53
  %v223 = vunpack.c.l.b16 %v54
  %v224 = vunpack.c.h.b16 %v54
  %v225 = vunpack.c.l.b16 %v55
  %v226 = vunpack.c.h.b16 %v55
  %v227 = vunpack.c.l.b16 %v56
  %v228 = vunpack.c.h.b16 %v56
  %v229 = vunpack.c.l.b16 %v57
  %v230 = vunpack.c.h.b16 %v57
  %v231 = vunpack.c.l.b16 %v58
  %v232 = vunpack.c.h.b16 %v58
  %v233 = vunpack.c.l.b16 %v59
  %v234 = vunpack.c.h.b16 %v59
  %v235 = vunpack.c.l.b16 %v60
  %v236 = vunpack.c.h.b16 %v60
  %v237 = vunpack.c.l.b16 %v61
  %v238 = vunpack.c.h.b16 %v61
  %v239 = vunpack.c.l.b16 %v62
  %v240 = vunpack.c.h.b16 %v62
  %v241 = vunpack.c.l.b16 %v63
  %v242 = vunpack.c.h.b16 %v63
  %v243 = vunpack.c.l.b16 %v64
  %v244 = vunpack.c.h.b16 %v64
  %v245 = vunpack.c.l.b16 %v65
  %v246 = vunpack.c.h.b16 %v65
  %v247 = vunpack.c.l.b16 %v66
  %v248 = vunpack.c.h.b16 %v66
  %v249 = vunpack.c.l.b16 %v67
  %v250 = vunpack.c.h.b16 %v67
  %v251 = vunpack.c.l.b16 %v68
  %v252 = vunpack.c.h.b16 %v68
  %v253 = vunpack.c.l.b16 %v69
  %v254 = vunpack.c.h.b16 %v69
  %v255 = vunpack.c.l.b16 %v70
  %v256 = vunpack.c.h.b16 %v70
  %v257 = vunpack.c.l.b16 %v71
  %v258 = vunpack.c.h.b16 %v71
  %v259 = vunpack.c.l.b16 %v72
  %v260 = vunpack.c.h.b16 %v72
  %v261 = vunpack.c.l.b16 %v73
  %v262 = vunpack.c.h.b16 %v73
  %v263 = vunpack.c.l.b16 %v74
  %v264 = vunpack.c.h.b16 %v74
  %v265 = vunpack.c.l.b16 %v75
  %v266 = vunpack.c.h.b16 %v75
  %v267 = vunpack.c.l.b16 %v76
  %v268 = vunpack.c.h.b16 %v76
  %v269 = vunpack.c.l.b16 %v77
  %v270 = vunpack.c.h.b16 %v77
  %v271 = vunpack.c.l.b16 %v78
  %v272 = vunpack.c.h.b16 %v78
  %v273 = vunpack.c.l.b16 %v79
  %v274 = vunpack.c.h.b16 %v79
  %v275 = vunpack.c.l.b16 %v80
  %v276 = vunpack.c.h.b16 %v80
  %v277 = vunpack.c.l.b16 %v81
  %v278 = vunpack.c.h.b16 %v81
  %v279 = vunpack.c.l.b16 %v82
  %v280 = vunpack.c.h.b16 %v82
  %v281 = vunpack.c.l.b16 %v83
  %v282 = vunpack.c.h.b16 %v83
  %v283 = vunpack.c.l.b16 %v84
  %v284 = vunpack.c.h.b16 %v84
  %v285 = vunpack.c.l.b16 %v85
  %v286 = vunpack.c.h.b16 %v85
  %v287 = vunpack.c.l.b16 %v86
  %v288 = vunpack.c.h.b16 %v86
  %v289 = vunpack.c.l.b16 %v87
  %v290 = vunpack.c.h.b16 %v87
  %v291 = vunpack.c.l.b16 %v88
  %v292 = vunpack.c.h.b16 %v88
  %v293 = vunpack.c.l.b16 %v89
  %v294 = vunpack.c.h.b16 %v89
  %v295 = vunpack.c.l.b16 %v90
  %v296 = vunpack.c.h.b16 %v90
  %v297 = vunpack.c.l.b16 %v91
  %v298 = vunpack.c.h.b16 %v91
  %v299 = vunpack.c.l.b16 %v92
  %v300 = vunpack.c.h.b16 %v92
  %v301 = vpack.c.b16 %v177, %v173
  %v302 = vpack.c.b16 %v178, %v174
  %v303 = vpack.c.b16 %v179, %v175
  %v304 = vpack.c.b16 %v180, %v176
  %v305 = vpack.c.b16 %v185, %v181
  %v306 = vpack.c.b16 %v186, %v182
  %v307 = vpack.c.b16 %v187, %v183
  %v308 = vpack.c.b16 %v188, %v184
  %v309 = vpack.c.b16 %v193, %v189
  %v310 = vpack.c.b16 %v194, %v190
  %v311 = vpack.c.b16 %v195, %v191
  %v312 = vpack.c.b16 %v196, %v192
  %v313 = vpack.c.b16 %v201, %v197
  %v314 = vpack.c.b16 %v202, %v198
  %v315 = vpack.c.b16 %v203, %v199
  %v316 = vpack.c.b16 %v204, %v200
  %v317 = vpack.c.b16 %v209, %v205
  %v318 = vpack.c.b16 %v210, %v206
  %v319 = vpack.c.b16 %v211, %v207
  %v320 = vpack.c.b16 %v212, %v208
  %v321 = vpack.c.b16 %v217, %v213
  %v322 = vpack.c.b16 %v218, %v214
  %v323 = vpack.c.b16 %v219, %v215
  %v324 = vpack.c.b16 %v220, %v216
  %v325 = vpack.c.b16 %v225, %v221
  %v326 = vpack.c.b16 %v226, %v222
  %v327 = vpack.c.b16 %v227, %v223
  %v328 = vpack.c.b16 %v228, %v224
  %v329 = vpack.c.b16 %v233, %v229
  %v330 = vpack.c.b16 %v234, %v230
  %v331 = vpack.c.b16 %v235, %v231
  %v332 = vpack.c.b16 %v236, %v232
  %v333 = vpack.c.b16 %v241, %v237
  %v334 = vpack.c.b16 %v242, %v238
  %v335 = vpack.c.b16 %v243, %v239
  %v336 = vpack.c.b16 %v244, %v240
  %v337 = vpack.c.b16 %v249, %v245
  %v338 = vpack.c.b16 %v250, %v246
  %v339 = vpack.c.b16 %v251, %v247
  %v340 = vpack.c.b16 %v252, %v248
  %v341 = vpack.c.b16 %v257, %v253
  %v342 = vpack.c.b16 %v258, %v254
  %v343 = vpack.c.b16 %v259, %v255
  %v344 = vpack.c.b16 %v260, %v256
  %v345 = vpack.c.b16 %v265, %v261
  %v346 = vpack.c.b16 %v266, %v262
  %v347 = vpack.c.b16 %v267, %v263
  %v348 = vpack.c.b16 %v268, %v264
  %v349 = vpack.c.b16 %v273, %v269
  %v350 = vpack.c.b16 %v274, %v270
  %v351 = vpack.c.b16 %v275, %v271
  %v352 = vpack.c.b16 %v276, %v272
  %v353 = vpack.c.b16 %v281, %v277
  %v354 = vpack.c.b16 %v282, %v278
  %v355 = vpack.c.b16 %v283, %v279
  %v356 = vpack.c.b16 %v284, %v280
  %v357 = vpack.c.b16 %v289, %v285
  %v358 = vpack.c.b16 %v290, %v286
  %v359 = vpack.c.b16 %v291, %v287
  %v360 = vpack.c.b16 %v292, %v288
  %v361 = vpack.c.b16 %v297, %v293
  %v362 = vpack.c.b16 %v298, %v294
  %v363 = vpack.c.b16 %v299, %v295
  %v364 = vpack.c.b16 %v300, %v296
  %429 = vmatpush.bf16.msra.mxu0 %v329
  %430 = vmatpush.bf16.msra.mxu0 %v325
  %431 = vmatpush.bf16.msra.mxu0 %v321
  %432 = vmatpush.bf16.msra.mxu0 %v317
  %433 = vmatpush.bf16.msra.mxu0 %v313
  %434 = vmatpush.bf16.msra.mxu0 %v309
  %435 = vmatpush.bf16.msra.mxu0 %v305
  %436 = vmatpush.bf16.msra.mxu0 %v301
  %437 = vmatmul.bf16.gmra.mxu0 %v105
  %v438 = vpop.f32.mrf.mxu0
  %v439 = vadd.f32 %v95, %v438
  %v440 = vpop.f32.mrf.mxu0
  %441 = vdwg.mxu0
  %442 = vmatpush.bf16.msra.mxu0 %v361
  %443 = vmatpush.bf16.msra.mxu0 %v357
  %444 = vmatpush.bf16.msra.mxu0 %v353
  %445 = vmatpush.bf16.msra.mxu0 %v349
  %446 = vmatpush.bf16.msra.mxu0 %v345
  %447 = vmatpush.bf16.msra.mxu0 %v341
  %448 = vmatpush.bf16.msra.mxu0 %v337
  %449 = vmatpush.bf16.msra.mxu0 %v333
  %450 = vmatmul.bf16.gmra.mxu0 %v106
  %v451 = vpop.f32.mrf.mxu0
  %v452 = vadd.f32 %v439, %v451
  %v453 = vpop.f32.mrf.mxu0
  %454 = vdwg.mxu0
  %455 = vmatpush.bf16.msra.mxu0 %v330
  %456 = vmatpush.bf16.msra.mxu0 %v326
  %457 = vmatpush.bf16.msra.mxu0 %v322
  %458 = vmatpush.bf16.msra.mxu0 %v318
  %459 = vmatpush.bf16.msra.mxu0 %v314
  %460 = vmatpush.bf16.msra.mxu0 %v310
  %461 = vmatpush.bf16.msra.mxu0 %v306
  %462 = vmatpush.bf16.msra.mxu0 %v302
  %463 = vmatmul.bf16.gmra.mxu0 %v105
  %v464 = vpop.f32.mrf.mxu0
  %v465 = vadd.f32 %v96, %v464
  %v466 = vpop.f32.mrf.mxu0
  %467 = vdwg.mxu0
  %468 = vmatpush.bf16.msra.mxu0 %v362
  %469 = vmatpush.bf16.msra.mxu0 %v358
  %470 = vmatpush.bf16.msra.mxu0 %v354
  %471 = vmatpush.bf16.msra.mxu0 %v350
  %472 = vmatpush.bf16.msra.mxu0 %v346
  %473 = vmatpush.bf16.msra.mxu0 %v342
  %474 = vmatpush.bf16.msra.mxu0 %v338
  %475 = vmatpush.bf16.msra.mxu0 %v334
  %476 = vmatmul.bf16.gmra.mxu0 %v106
  %v477 = vpop.f32.mrf.mxu0
  %v478 = vadd.f32 %v465, %v477
  %v479 = vpop.f32.mrf.mxu0
  %480 = vdwg.mxu0
  %481 = vmatpush.bf16.msra.mxu0 %v331
  %482 = vmatpush.bf16.msra.mxu0 %v327
  %483 = vmatpush.bf16.msra.mxu0 %v323
  %484 = vmatpush.bf16.msra.mxu0 %v319
  %485 = vmatpush.bf16.msra.mxu0 %v315
  %486 = vmatpush.bf16.msra.mxu0 %v311
  %487 = vmatpush.bf16.msra.mxu0 %v307
  %488 = vmatpush.bf16.msra.mxu0 %v303
  %489 = vmatmul.bf16.gmra.mxu0 %v105
  %v490 = vpop.f32.mrf.mxu0
  %v491 = vadd.f32 %v97, %v490
  %v492 = vpop.f32.mrf.mxu0
  %493 = vdwg.mxu0
  %494 = vmatpush.bf16.msra.mxu0 %v363
  %495 = vmatpush.bf16.msra.mxu0 %v359
  %496 = vmatpush.bf16.msra.mxu0 %v355
  %497 = vmatpush.bf16.msra.mxu0 %v351
  %498 = vmatpush.bf16.msra.mxu0 %v347
  %499 = vmatpush.bf16.msra.mxu0 %v343
  %500 = vmatpush.bf16.msra.mxu0 %v339
  %501 = vmatpush.bf16.msra.mxu0 %v335
  %502 = vmatmul.bf16.gmra.mxu0 %v106
  %v503 = vpop.f32.mrf.mxu0
  %v504 = vadd.f32 %v491, %v503
  %v505 = vpop.f32.mrf.mxu0
  %506 = vdwg.mxu0
  %507 = vmatpush.bf16.msra.mxu0 %v332
  %508 = vmatpush.bf16.msra.mxu0 %v328
  %509 = vmatpush.bf16.msra.mxu0 %v324
  %510 = vmatpush.bf16.msra.mxu0 %v320
  %511 = vmatpush.bf16.msra.mxu0 %v316
  %512 = vmatpush.bf16.msra.mxu0 %v312
  %513 = vmatpush.bf16.msra.mxu0 %v308
  %514 = vmatpush.bf16.msra.mxu0 %v304
  %515 = vmatmul.bf16.gmra.mxu0 %v105
  %v516 = vpop.f32.mrf.mxu0
  %v517 = vadd.f32 %v98, %v516
  %v518 = vpop.f32.mrf.mxu0
  %519 = vdwg.mxu0
  %520 = vmatpush.bf16.msra.mxu0 %v364
  %521 = vmatpush.bf16.msra.mxu0 %v360
  %522 = vmatpush.bf16.msra.mxu0 %v356
  %523 = vmatpush.bf16.msra.mxu0 %v352
  %524 = vmatpush.bf16.msra.mxu0 %v348
  %525 = vmatpush.bf16.msra.mxu0 %v344
  %526 = vmatpush.bf16.msra.mxu0 %v340
  %527 = vmatpush.bf16.msra.mxu0 %v336
  %528 = vmatmul.bf16.gmra.mxu0 %v106
  %v529 = vpop.f32.mrf.mxu0
  %v530 = vadd.f32 %v517, %v529
  %v531 = vpop.f32.mrf.mxu0
  %532 = vdwg.mxu0
  %v533 = vmax.f32 %v452, 0.0
  %v534 = vmax.f32 %v478, 0.0
  %v535 = vmax.f32 %v504, 0.0
  %v536 = vmax.f32 %v530, 0.0
  %v537 = vpack.c.bf16 %v533, %v533
  %v538 = vpack.c.bf16 %v534, %v534
  %v539 = vpack.c.bf16 %v535, %v535
  %v540 = vpack.c.bf16 %v536, %v536
  %v541 = vld [vmem:[%s3] sm:$0xff]
  %v542 = vld [vmem:[%s3 + $0x8] sm:$0xff]
  %v543 = vld [vmem:[%s3 + $0x10] sm:$0xff]
  %v544 = vld [vmem:[%s3 + $0x18] sm:$0xff]
  %v545 = vld [vmem:[%s3 + $0x20] sm:$0xff]
  %v546 = vld [vmem:[%s3 + $0x28] sm:$0xff]
  %v547 = vld [vmem:[%s3 + $0x30] sm:$0xff]
  %v548 = vld [vmem:[%s3 + $0x38] sm:$0xff]
  %v549 = vld [vmem:[%s3 + $0x40] sm:$0xff]
  %v550 = vld [vmem:[%s3 + $0x48] sm:$0xff]
  %v551 = vld [vmem:[%s3 + $0x50] sm:$0xff]
  %v552 = vld [vmem:[%s3 + $0x58] sm:$0xff]
  %v553 = vld [vmem:[%s3 + $0x60] sm:$0xff]
  %v554 = vld [vmem:[%s3 + $0x68] sm:$0xff]
  %v555 = vld [vmem:[%s3 + $0x70] sm:$0xff]
  %v556 = vld [vmem:[%s3 + $0x78] sm:$0xff]
  %v557 = vld [vmem:[%s3 + $0x80] sm:$0xff]
  %v558 = vld [vmem:[%s3 + $0x88] sm:$0xff]
  %v559 = vld [vmem:[%s3 + $0x90] sm:$0xff]
  %v560 = vld [vmem:[%s3 + $0x98] sm:$0xff]
  %v561 = vld [vmem:[%s3 + $0xa0] sm:$0xff]
  %v562 = vld [vmem:[%s3 + $0xa8] sm:$0xff]
  %v563 = vld [vmem:[%s3 + $0xb0] sm:$0xff]
  %v564 = vld [vmem:[%s3 + $0xb8] sm:$0xff]
  %v565 = vld [vmem:[%s3 + $0xc0] sm:$0xff]
  %v566 = vld [vmem:[%s3 + $0xc8] sm:$0xff]
  %v567 = vld [vmem:[%s3 + $0xd0] sm:$0xff]
  %v568 = vld [vmem:[%s3 + $0xd8] sm:$0xff]
  %v569 = vld [vmem:[%s3 + $0xe0] sm:$0xff]
  %v570 = vld [vmem:[%s3 + $0xe8] sm:$0xff]
  %v571 = vld [vmem:[%s3 + $0xf0] sm:$0xff]
  %v572 = vld [vmem:[%s3 + $0xf8] sm:$0xff]
  %v573 = vld [vmem:[%s3 + $0x100] sm:$0xff]
  %v574 = vld [vmem:[%s3 + $0x108] sm:$0xff]
  %v575 = vld [vmem:[%s3 + $0x110] sm:$0xff]
  %v576 = vld [vmem:[%s3 + $0x118] sm:$0xff]
  %v577 = vld [vmem:[%s3 + $0x120] sm:$0xff]
  %v578 = vld [vmem:[%s3 + $0x128] sm:$0xff]
  %v579 = vld [vmem:[%s3 + $0x130] sm:$0xff]
  %v580 = vld [vmem:[%s3 + $0x138] sm:$0xff]
  %v581 = vld [vmem:[%s3 + $0x140] sm:$0xff]
  %v582 = vld [vmem:[%s3 + $0x148] sm:$0xff]
  %v583 = vld [vmem:[%s3 + $0x150] sm:$0xff]
  %v584 = vld [vmem:[%s3 + $0x158] sm:$0xff]
  %v585 = vld [vmem:[%s3 + $0x160] sm:$0xff]
  %v586 = vld [vmem:[%s3 + $0x168] sm:$0xff]
  %v587 = vld [vmem:[%s3 + $0x170] sm:$0xff]
  %v588 = vld [vmem:[%s3 + $0x178] sm:$0xff]
  %v589 = vld [vmem:[%s3 + $0x180] sm:$0xff]
  %v590 = vld [vmem:[%s3 + $0x188] sm:$0xff]
  %v591 = vld [vmem:[%s3 + $0x190] sm:$0xff]
  %v592 = vld [vmem:[%s3 + $0x198] sm:$0xff]
  %v593 = vld [vmem:[%s3 + $0x1a0] sm:$0xff]
  %v594 = vld [vmem:[%s3 + $0x1a8] sm:$0xff]
  %v595 = vld [vmem:[%s3 + $0x1b0] sm:$0xff]
  %v596 = vld [vmem:[%s3 + $0x1b8] sm:$0xff]
  %v597 = vld [vmem:[%s3 + $0x1c0] sm:$0xff]
  %v598 = vld [vmem:[%s3 + $0x1c8] sm:$0xff]
  %v599 = vld [vmem:[%s3 + $0x1d0] sm:$0xff]
  %v600 = vld [vmem:[%s3 + $0x1d8] sm:$0xff]
  %v601 = vld [vmem:[%s3 + $0x1e0] sm:$0xff]
  %v602 = vld [vmem:[%s3 + $0x1e8] sm:$0xff]
  %v603 = vld [vmem:[%s3 + $0x1f0] sm:$0xff]
  %v604 = vld [vmem:[%s3 + $0x1f8] sm:$0xff]
  %v605 = vld [vmem:[%s4] sm:$0x3]
  %v607 = vperm.slane %v605, 0
  %v608 = vperm.slane %v605, 1
  %v675 = vunpack.c.l.b16 %v541
  %v676 = vunpack.c.h.b16 %v541
  %v677 = vunpack.c.l.b16 %v542
  %v678 = vunpack.c.h.b16 %v542
  %v679 = vunpack.c.l.b16 %v543
  %v680 = vunpack.c.h.b16 %v543
  %v681 = vunpack.c.l.b16 %v544
  %v682 = vunpack.c.h.b16 %v544
  %v683 = vunpack.c.l.b16 %v545
  %v684 = vunpack.c.h.b16 %v545
  %v685 = vunpack.c.l.b16 %v546
  %v686 = vunpack.c.h.b16 %v546
  %v687 = vunpack.c.l.b16 %v547
  %v688 = vunpack.c.h.b16 %v547
  %v689 = vunpack.c.l.b16 %v548
  %v690 = vunpack.c.h.b16 %v548
  %v691 = vunpack.c.l.b16 %v549
  %v692 = vunpack.c.h.b16 %v549
  %v693 = vunpack.c.l.b16 %v550
  %v694 = vunpack.c.h.b16 %v550
  %v695 = vunpack.c.l.b16 %v551
  %v696 = vunpack.c.h.b16 %v551
  %v697 = vunpack.c.l.b16 %v552
  %v698 = vunpack.c.h.b16 %v552
  %v699 = vunpack.c.l.b16 %v553
  %v700 = vunpack.c.h.b16 %v553
  %v701 = vunpack.c.l.b16 %v554
  %v702 = vunpack.c.h.b16 %v554
  %v703 = vunpack.c.l.b16 %v555
  %v704 = vunpack.c.h.b16 %v555
  %v705 = vunpack.c.l.b16 %v556
  %v706 = vunpack.c.h.b16 %v556
  %v707 = vunpack.c.l.b16 %v557
  %v708 = vunpack.c.h.b16 %v557
  %v709 = vunpack.c.l.b16 %v558
  %v710 = vunpack.c.h.b16 %v558
  %v711 = vunpack.c.l.b16 %v559
  %v712 = vunpack.c.h.b16 %v559
  %v713 = vunpack.c.l.b16 %v560
  %v714 = vunpack.c.h.b16 %v560
  %v715 = vunpack.c.l.b16 %v561
  %v716 = vunpack.c.h.b16 %v561
  %v717 = vunpack.c.l.b16 %v562
  %v718 = vunpack.c.h.b16 %v562
  %v719 = vunpack.c.l.b16 %v563
  %v720 = vunpack.c.h.b16 %v563
  %v721 = vunpack.c.l.b16 %v564
  %v722 = vunpack.c.h.b16 %v564
  %v723 = vunpack.c.l.b16 %v565
  %v724 = vunpack.c.h.b16 %v565
  %v725 = vunpack.c.l.b16 %v566
  %v726 = vunpack.c.h.b16 %v566
  %v727 = vunpack.c.l.b16 %v567
  %v728 = vunpack.c.h.b16 %v567
  %v729 = vunpack.c.l.b16 %v568
  %v730 = vunpack.c.h.b16 %v568
  %v731 = vunpack.c.l.b16 %v569
  %v732 = vunpack.c.h.b16 %v569
  %v733 = vunpack.c.l.b16 %v570
  %v734 = vunpack.c.h.b16 %v570
  %v735 = vunpack.c.l.b16 %v571
  %v736 = vunpack.c.h.b16 %v571
  %v737 = vunpack.c.l.b16 %v572
  %v738 = vunpack.c.h.b16 %v572
  %v739 = vunpack.c.l.b16 %v573
  %v740 = vunpack.c.h.b16 %v573
  %v741 = vunpack.c.l.b16 %v574
  %v742 = vunpack.c.h.b16 %v574
  %v743 = vunpack.c.l.b16 %v575
  %v744 = vunpack.c.h.b16 %v575
  %v745 = vunpack.c.l.b16 %v576
  %v746 = vunpack.c.h.b16 %v576
  %v747 = vunpack.c.l.b16 %v577
  %v748 = vunpack.c.h.b16 %v577
  %v749 = vunpack.c.l.b16 %v578
  %v750 = vunpack.c.h.b16 %v578
  %v751 = vunpack.c.l.b16 %v579
  %v752 = vunpack.c.h.b16 %v579
  %v753 = vunpack.c.l.b16 %v580
  %v754 = vunpack.c.h.b16 %v580
  %v755 = vunpack.c.l.b16 %v581
  %v756 = vunpack.c.h.b16 %v581
  %v757 = vunpack.c.l.b16 %v582
  %v758 = vunpack.c.h.b16 %v582
  %v759 = vunpack.c.l.b16 %v583
  %v760 = vunpack.c.h.b16 %v583
  %v761 = vunpack.c.l.b16 %v584
  %v762 = vunpack.c.h.b16 %v584
  %v763 = vunpack.c.l.b16 %v585
  %v764 = vunpack.c.h.b16 %v585
  %v765 = vunpack.c.l.b16 %v586
  %v766 = vunpack.c.h.b16 %v586
  %v767 = vunpack.c.l.b16 %v587
  %v768 = vunpack.c.h.b16 %v587
  %v769 = vunpack.c.l.b16 %v588
  %v770 = vunpack.c.h.b16 %v588
  %v771 = vunpack.c.l.b16 %v589
  %v772 = vunpack.c.h.b16 %v589
  %v773 = vunpack.c.l.b16 %v590
  %v774 = vunpack.c.h.b16 %v590
  %v775 = vunpack.c.l.b16 %v591
  %v776 = vunpack.c.h.b16 %v591
  %v777 = vunpack.c.l.b16 %v592
  %v778 = vunpack.c.h.b16 %v592
  %v779 = vunpack.c.l.b16 %v593
  %v780 = vunpack.c.h.b16 %v593
  %v781 = vunpack.c.l.b16 %v594
  %v782 = vunpack.c.h.b16 %v594
  %v783 = vunpack.c.l.b16 %v595
  %v784 = vunpack.c.h.b16 %v595
  %v785 = vunpack.c.l.b16 %v596
  %v786 = vunpack.c.h.b16 %v596
  %v787 = vunpack.c.l.b16 %v597
  %v788 = vunpack.c.h.b16 %v597
  %v789 = vunpack.c.l.b16 %v598
  %v790 = vunpack.c.h.b16 %v598
  %v791 = vunpack.c.l.b16 %v599
  %v792 = vunpack.c.h.b16 %v599
  %v793 = vunpack.c.l.b16 %v600
  %v794 = vunpack.c.h.b16 %v600
  %v795 = vunpack.c.l.b16 %v601
  %v796 = vunpack.c.h.b16 %v601
  %v797 = vunpack.c.l.b16 %v602
  %v798 = vunpack.c.h.b16 %v602
  %v799 = vunpack.c.l.b16 %v603
  %v800 = vunpack.c.h.b16 %v603
  %v801 = vunpack.c.l.b16 %v604
  %v802 = vunpack.c.h.b16 %v604
  %v803 = vpack.c.b16 %v677, %v675
  %v804 = vpack.c.b16 %v678, %v676
  %v805 = vpack.c.b16 %v681, %v679
  %v806 = vpack.c.b16 %v682, %v680
  %v807 = vpack.c.b16 %v685, %v683
  %v808 = vpack.c.b16 %v686, %v684
  %v809 = vpack.c.b16 %v689, %v687
  %v810 = vpack.c.b16 %v690, %v688
  %v811 = vpack.c.b16 %v693, %v691
  %v812 = vpack.c.b16 %v694, %v692
  %v813 = vpack.c.b16 %v697, %v695
  %v814 = vpack.c.b16 %v698, %v696
  %v815 = vpack.c.b16 %v701, %v699
  %v816 = vpack.c.b16 %v702, %v700
  %v817 = vpack.c.b16 %v705, %v703
  %v818 = vpack.c.b16 %v706, %v704
  %v819 = vpack.c.b16 %v709, %v707
  %v820 = vpack.c.b16 %v710, %v708
  %v821 = vpack.c.b16 %v713, %v711
  %v822 = vpack.c.b16 %v714, %v712
  %v823 = vpack.c.b16 %v717, %v715
  %v824 = vpack.c.b16 %v718, %v716
  %v825 = vpack.c.b16 %v721, %v719
  %v826 = vpack.c.b16 %v722, %v720
  %v827 = vpack.c.b16 %v725, %v723
  %v828 = vpack.c.b16 %v726, %v724
  %v829 = vpack.c.b16 %v729, %v727
  %v830 = vpack.c.b16 %v730, %v728
  %v831 = vpack.c.b16 %v733, %v731
  %v832 = vpack.c.b16 %v734, %v732
  %v833 = vpack.c.b16 %v737, %v735
  %v834 = vpack.c.b16 %v738, %v736
  %v835 = vpack.c.b16 %v741, %v739
  %v836 = vpack.c.b16 %v742, %v740
  %v837 = vpack.c.b16 %v745, %v743
  %v838 = vpack.c.b16 %v746, %v744
  %v839 = vpack.c.b16 %v749, %v747
  %v840 = vpack.c.b16 %v750, %v748
  %v841 = vpack.c.b16 %v753, %v751
  %v842 = vpack.c.b16 %v754, %v752
  %v843 = vpack.c.b16 %v757, %v755
  %v844 = vpack.c.b16 %v758, %v756
  %v845 = vpack.c.b16 %v761, %v759
  %v846 = vpack.c.b16 %v762, %v760
  %v847 = vpack.c.b16 %v765, %v763
  %v848 = vpack.c.b16 %v766, %v764
  %v849 = vpack.c.b16 %v769, %v767
  %v850 = vpack.c.b16 %v770, %v768
  %v851 = vpack.c.b16 %v773, %v771
  %v852 = vpack.c.b16 %v774, %v772
  %v853 = vpack.c.b16 %v777, %v775
  %v854 = vpack.c.b16 %v778, %v776
  %v855 = vpack.c.b16 %v781, %v779
  %v856 = vpack.c.b16 %v782, %v780
  %v857 = vpack.c.b16 %v785, %v783
  %v858 = vpack.c.b16 %v786, %v784
  %v859 = vpack.c.b16 %v789, %v787
  %v860 = vpack.c.b16 %v790, %v788
  %v861 = vpack.c.b16 %v793, %v791
  %v862 = vpack.c.b16 %v794, %v792
  %v863 = vpack.c.b16 %v797, %v795
  %v864 = vpack.c.b16 %v798, %v796
  %v865 = vpack.c.b16 %v801, %v799
  %v866 = vpack.c.b16 %v802, %v800
  %931 = vmatpush.bf16.msra.mxu0 %v817
  %932 = vmatpush.bf16.msra.mxu0 %v815
  %933 = vmatpush.bf16.msra.mxu0 %v813
  %934 = vmatpush.bf16.msra.mxu0 %v811
  %935 = vmatpush.bf16.msra.mxu0 %v809
  %936 = vmatpush.bf16.msra.mxu0 %v807
  %937 = vmatpush.bf16.msra.mxu0 %v805
  %938 = vmatpush.bf16.msra.mxu0 %v803
  %939 = vmatmul.bf16.gmra.mxu0 %v537
  %v940 = vpop.f32.mrf.mxu0
  %v941 = vadd.f32 %v607, %v940
  %v942 = vpop.f32.mrf.mxu0
  %943 = vdwg.mxu0
  %944 = vmatpush.bf16.msra.mxu0 %v833
  %945 = vmatpush.bf16.msra.mxu0 %v831
  %946 = vmatpush.bf16.msra.mxu0 %v829
  %947 = vmatpush.bf16.msra.mxu0 %v827
  %948 = vmatpush.bf16.msra.mxu0 %v825
  %949 = vmatpush.bf16.msra.mxu0 %v823
  %950 = vmatpush.bf16.msra.mxu0 %v821
  %951 = vmatpush.bf16.msra.mxu0 %v819
  %952 = vmatmul.bf16.gmra.mxu0 %v538
  %v953 = vpop.f32.mrf.mxu0
  %v954 = vadd.f32 %v941, %v953
  %v955 = vpop.f32.mrf.mxu0
  %956 = vdwg.mxu0
  %957 = vmatpush.bf16.msra.mxu0 %v849
  %958 = vmatpush.bf16.msra.mxu0 %v847
  %959 = vmatpush.bf16.msra.mxu0 %v845
  %960 = vmatpush.bf16.msra.mxu0 %v843
  %961 = vmatpush.bf16.msra.mxu0 %v841
  %962 = vmatpush.bf16.msra.mxu0 %v839
  %963 = vmatpush.bf16.msra.mxu0 %v837
  %964 = vmatpush.bf16.msra.mxu0 %v835
  %965 = vmatmul.bf16.gmra.mxu0 %v539
  %v966 = vpop.f32.mrf.mxu0
  %v967 = vadd.f32 %v954, %v966
  %v968 = vpop.f32.mrf.mxu0
  %969 = vdwg.mxu0
  %970 = vmatpush.bf16.msra.mxu0 %v865
  %971 = vmatpush.bf16.msra.mxu0 %v863
  %972 = vmatpush.bf16.msra.mxu0 %v861
  %973 = vmatpush.bf16.msra.mxu0 %v859
  %974 = vmatpush.bf16.msra.mxu0 %v857
  %975 = vmatpush.bf16.msra.mxu0 %v855
  %976 = vmatpush.bf16.msra.mxu0 %v853
  %977 = vmatpush.bf16.msra.mxu0 %v851
  %978 = vmatmul.bf16.gmra.mxu0 %v540
  %v979 = vpop.f32.mrf.mxu0
  %v980 = vadd.f32 %v967, %v979
  %v981 = vpop.f32.mrf.mxu0
  %982 = vdwg.mxu0
  %983 = vmatpush.bf16.msra.mxu0 %v818
  %984 = vmatpush.bf16.msra.mxu0 %v816
  %985 = vmatpush.bf16.msra.mxu0 %v814
  %986 = vmatpush.bf16.msra.mxu0 %v812
  %987 = vmatpush.bf16.msra.mxu0 %v810
  %988 = vmatpush.bf16.msra.mxu0 %v808
  %989 = vmatpush.bf16.msra.mxu0 %v806
  %990 = vmatpush.bf16.msra.mxu0 %v804
  %991 = vmatmul.bf16.gmra.mxu0 %v537
  %v992 = vpop.f32.mrf.mxu0
  %v993 = vadd.f32 %v608, %v992
  %v994 = vpop.f32.mrf.mxu0
  %995 = vdwg.mxu0
  %996 = vmatpush.bf16.msra.mxu0 %v834
  %997 = vmatpush.bf16.msra.mxu0 %v832
  %998 = vmatpush.bf16.msra.mxu0 %v830
  %999 = vmatpush.bf16.msra.mxu0 %v828
  %1000 = vmatpush.bf16.msra.mxu0 %v826
  %1001 = vmatpush.bf16.msra.mxu0 %v824
  %1002 = vmatpush.bf16.msra.mxu0 %v822
  %1003 = vmatpush.bf16.msra.mxu0 %v820
  %1004 = vmatmul.bf16.gmra.mxu0 %v538
  %v1005 = vpop.f32.mrf.mxu0
  %v1006 = vadd.f32 %v993, %v1005
  %v1007 = vpop.f32.mrf.mxu0
  %1008 = vdwg.mxu0
  %1009 = vmatpush.bf16.msra.mxu0 %v850
  %1010 = vmatpush.bf16.msra.mxu0 %v848
  %1011 = vmatpush.bf16.msra.mxu0 %v846
  %1012 = vmatpush.bf16.msra.mxu0 %v844
  %1013 = vmatpush.bf16.msra.mxu0 %v842
  %1014 = vmatpush.bf16.msra.mxu0 %v840
  %1015 = vmatpush.bf16.msra.mxu0 %v838
  %1016 = vmatpush.bf16.msra.mxu0 %v836
  %1017 = vmatmul.bf16.gmra.mxu0 %v539
  %v1018 = vpop.f32.mrf.mxu0
  %v1019 = vadd.f32 %v1006, %v1018
  %v1020 = vpop.f32.mrf.mxu0
  %1021 = vdwg.mxu0
  %1022 = vmatpush.bf16.msra.mxu0 %v866
  %1023 = vmatpush.bf16.msra.mxu0 %v864
  %1024 = vmatpush.bf16.msra.mxu0 %v862
  %1025 = vmatpush.bf16.msra.mxu0 %v860
  %1026 = vmatpush.bf16.msra.mxu0 %v858
  %1027 = vmatpush.bf16.msra.mxu0 %v856
  %1028 = vmatpush.bf16.msra.mxu0 %v854
  %1029 = vmatpush.bf16.msra.mxu0 %v852
  %1030 = vmatmul.bf16.gmra.mxu0 %v540
  %v1031 = vpop.f32.mrf.mxu0
  %v1032 = vadd.f32 %v1019, %v1031
  %v1033 = vpop.f32.mrf.mxu0
  %1034 = vdwg.mxu0
  %v1035 = vand.u32 2147483647, %v980
  %v1036 = vand.u32 2147483647, %v1032
  %v1037 = vsub.f32 0.0, %v1035
  %v1038 = vsub.f32 0.0, %v1036
  %v1039 = vmul.f32 %v1037, 1.442695
  %v1040 = vpow.pop %v1039
  %v1041 = vmul.f32 %v1038, 1.442695
  %v1042 = vpow.pop %v1041
  %v1043 = vadd.f32 %v1040, 1.0
  %v1044 = vadd.f32 %v1042, 1.0
  %v1045 = vrcp.pop %v1043
  %v1046 = vmul.f32 %v1043, %v1045
  %v1047 = vsub.f32 1.0, %v1046
  %v1048 = vmul.f32 %v1045, %v1047
  %v1049 = vadd.f32 %v1045, %v1048
  %vm1050 = vweird.f32 %v1043
  %vm1051 = vweird.f32 %v1045
  %vm1052 = vmor %vm1050, %vm1051
  %v1053 = vsel %vm1052, %v1045, %v1049
  %v1054 = vand.u32 2147483647, %v1043
  %vm1055 = vcmp.eq.f32.partialorder %v1054, 8.507059e+37
  %v1056 = vand.u32 %v1043, 2147483648
  %v1057 = vor.u32 1.1754944e-38, %v1056
  %v1058 = vsel %vm1055, %v1057, %v1053
  %v1059 = vmul.f32 1.0, %v1058
  %v1060 = vrcp.pop %v1044
  %v1061 = vmul.f32 %v1044, %v1060
  %v1062 = vsub.f32 1.0, %v1061
  %v1063 = vmul.f32 %v1060, %v1062
  %v1064 = vadd.f32 %v1060, %v1063
  %vm1065 = vweird.f32 %v1044
  %vm1066 = vweird.f32 %v1060
  %vm1067 = vmor %vm1065, %vm1066
  %v1068 = vsel %vm1067, %v1060, %v1064
  %v1069 = vand.u32 2147483647, %v1044
  %vm1070 = vcmp.eq.f32.partialorder %v1069, 8.507059e+37
  %v1071 = vand.u32 %v1044, 2147483648
  %v1072 = vor.u32 1.1754944e-38, %v1071
  %v1073 = vsel %vm1070, %v1072, %v1068
  %v1074 = vmul.f32 1.0, %v1073
  %vm1075 = vcmp.ge.f32.partialorder %v980, 0.0
  %vm1076 = vcmp.ge.f32.partialorder %v1032, 0.0
  %v1077 = vmul.f32 %v1040, %v1059
  %v1078 = vmul.f32 %v1042, %v1074
  %v1079 = vsel %vm1075, %v1059, %v1077
  %v1080 = vsel %vm1076, %v1074, %v1078
  %v1081 = vld [vmem:[%s5] sm:$0x3]
  %v1083 = vperm.slane %v1081, 0
  %v1084 = vperm.slane %v1081, 1
  %v1087 = vmul.f32 %v1079, %v1083
  %v1088 = vmul.f32 %v1080, %v1084
  %vm1089 = vcmask 1041408
  %v1090 = vsel %vm1089, %v1087, 0.0
  %vm1091 = vcmask 222208
  %v1092 = vsel %vm1091, %v1088, 0.0
  %v1093 = vadd.f32 %v1090, %v1092
  %1094 = vadd.xlane.f32.xlu0 %v1093
  %v1095 = vpop.xlane.xlu0 %1094
  %v1096 = vld [vmem:[#allocation2] sm:$0x1]
  %v1098 = vperm.slane %v1096, 0
  %v1100 = vadd.f32 %v1095, %v1098
  %v1101 = vand.u32 2147483647, %v1100
  %v1102 = vsub.f32 0.0, %v1101
  %v1103 = vmul.f32 %v1102, 1.442695
  %v1104 = vpow.pop %v1103
  %v1105 = vadd.f32 %v1104, 1.0
  %v1106 = vrcp.pop %v1105
  %v1107 = vmul.f32 %v1105, %v1106
  %v1108 = vsub.f32 1.0, %v1107
  %v1109 = vmul.f32 %v1106, %v1108
  %v1110 = vadd.f32 %v1106, %v1109
  %vm1111 = vweird.f32 %v1105
  %vm1112 = vweird.f32 %v1106
  %vm1113 = vmor %vm1111, %vm1112
  %v1114 = vsel %vm1113, %v1106, %v1110
  %v1115 = vand.u32 2147483647, %v1105
  %vm1116 = vcmp.eq.f32.partialorder %v1115, 8.507059e+37
  %v1117 = vand.u32 %v1105, 2147483648
  %v1118 = vor.u32 1.1754944e-38, %v1117
  %v1119 = vsel %vm1116, %v1118, %v1114
  %v1120 = vmul.f32 1.0, %v1119
  %vm1121 = vcmp.ge.f32.partialorder %v1100, 0.0
  %v1122 = vmul.f32 %v1104, %v1120
  %v1123 = vsel %vm1121, %v1120, %v1122
  %vm1124 = vcmask 1024
  %1125 = vst.msk [vmem:[%s7] sm:$0x3] %vm1124, %v1123
  // Predicated region
  $region30: #{pathfinder_forward.9} parent=0 // pred_check
    _
  $region31: #{pathfinder_forward.9} parent=0 // pred_check_branch
    %1127 = sbr.rel (0) target = $region33
  $region32: #{pathfinder_forward.9} parent=0 // pred_region
    _
  $region33: #{pathfinder_forward.9} parent=0 // pred_fallthru
    _
  // Predicated region
  $region34: #{pathfinder_forward.9} parent=0 // pred_check
    _
  $region35: #{pathfinder_forward.9} parent=0 // pred_check_branch
    %1129 = sbr.rel (0) target = $region37
  $region36: #{pathfinder_forward.9} parent=0 // pred_region
    _
  $region37: #{pathfinder_forward.9} parent=0 // pred_fallthru
    _

</llo_original>
